<compile_context>
chip_gen: v5e
topology: v5e:2x2
jax: 0.10.0
libtpu: 0.0.40
codegen_flags: <defaults>
</compile_context>

<pallas_src>
import functools

import jax
import jax.numpy as jnp
from jax import lax
from jax.experimental import pallas as pl
from jax.experimental.pallas import tpu as pltpu


# ---------------------------------------------------------------------------
# In-kernel helpers
# ---------------------------------------------------------------------------
def _conv3x3_taps(load_tap, w_ref, b_ref, n_rows, width, relu):
    """3x3 'same' conv as 9 accumulated shifted-tap MXU matmuls.

    load_tap(dy, dx) -> (n_rows, width, cin) bf16 view of the padded source.
    w_ref: (9, cin, cout) bf16 ref, tap-major (dy*3 + dx).
    b_ref: (1, cout) f32 ref.
    Returns (n_rows, width, cout) f32.
    """
    cout = w_ref.shape[-1]
    acc = jnp.zeros((n_rows * width, cout), jnp.float32)
    for dy in range(3):
        for dx in range(3):
            tap = load_tap(dy, dx)                       # (n_rows, width, cin)
            cin = tap.shape[-1]
            lhs = tap.reshape(n_rows * width, cin)       # bf16 MXU operand
            acc = acc + jnp.dot(lhs, w_ref[dy * 3 + dx],
                                preferred_element_type=jnp.float32)
    acc = acc + b_ref[...]
    if relu:
        acc = jnp.maximum(acc, 0.0)
    return acc.reshape(n_rows, width, cout)


def _mask_rows_outside_image(val, first_row, img_h):
    """Zero slab rows whose image-row index falls outside [0, img_h)."""
    rows = first_row + lax.broadcasted_iota(jnp.int32, (val.shape[0], 1, 1), 0)
    return jnp.where((rows >= 0) & (rows < img_h), val, 0.0)


# ---------------------------------------------------------------------------
# Fused kernel: one batch element x one row tile per grid step.
#   x_ref    : (1, H+6, W+2, 3)   bf16  input, padded 3 rows / 1 col each side
#   w*_ref   : (9, Cin, Cout)     bf16  tap-major conv weights
#   b*_ref   : (1, Cout)          f32
#   o_ref    : (1, TH, W, 3*r*r)  f32   conv-3 output rows of this tile
#   act1_ref : (TH+4, W+2, 64)    bf16  layer-1 activations (+halo, +col pad)
#   act2_ref : (TH+2, W+2, 64)    bf16  layer-2 activations (+halo, +col pad)
# ---------------------------------------------------------------------------
def _sr_fused_kernel(x_ref, w1_ref, b1_ref, w2_ref, b2_ref, w3_ref, b3_ref,
                     o_ref, act1_ref, act2_ref):
    th, width = o_ref.shape[1], o_ref.shape[2]
    img_h = x_ref.shape[1] - 6
    cmid = act1_ref.shape[-1]
    r0 = pl.program_id(1) * th                    # first output row of tile

    # Zero only the 1-wide column borders (conv zero padding); the interior
    # rows are fully overwritten every step.
    act1_ref[:, 0:1, :] = jnp.zeros((th + 4, 1, cmid), act1_ref.dtype)
    act1_ref[:, width + 1:width + 2, :] = jnp.zeros((th + 4, 1, cmid),
                                                    act1_ref.dtype)
    act2_ref[:, 0:1, :] = jnp.zeros((th + 2, 1, cmid), act2_ref.dtype)
    act2_ref[:, width + 1:width + 2, :] = jnp.zeros((th + 2, 1, cmid),
                                                    act2_ref.dtype)

    # ---- layer 1: conv3x3(3 -> 64) + ReLU, image rows [r0-2, r0+TH+2) ------
    s1 = th + 4

    def x_tap(dy, dx):
        return x_ref[0, pl.ds(r0 + dy, s1), dx:dx + width, :]

    a1 = _conv3x3_taps(x_tap, w1_ref, b1_ref, s1, width, relu=True)
    a1 = _mask_rows_outside_image(a1, r0 - 2, img_h)
    act1_ref[:, 1:width + 1, :] = a1.astype(act1_ref.dtype)

    # ---- layer 2: conv3x3(64 -> 64) + ReLU, image rows [r0-1, r0+TH+1) -----
    s2 = th + 2

    def a1_tap(dy, dx):
        return act1_ref[dy:dy + s2, dx:dx + width, :]

    a2 = _conv3x3_taps(a1_tap, w2_ref, b2_ref, s2, width, relu=True)
    a2 = _mask_rows_outside_image(a2, r0 - 1, img_h)
    act2_ref[:, 1:width + 1, :] = a2.astype(act2_ref.dtype)

    # ---- layer 3: conv3x3(64 -> 3*r*r), image rows [r0, r0+TH) -------------
    def a2_tap(dy, dx):
        return act2_ref[dy:dy + th, dx:dx + width, :]

    a3 = _conv3x3_taps(a2_tap, w3_ref, b3_ref, th, width, relu=False)
    # TODO(synk): fuse the PixelShuffle here with a lane-dense (3, TH*r, W*r)
    # store once a robust stride-r lane interleave is available.
    o_ref[0] = a3.astype(o_ref.dtype)


# ---------------------------------------------------------------------------
# Sizing helpers
# ---------------------------------------------------------------------------
def _round_up(x, m):
    return -(-x // m) * m


def _buf_bytes(shape, dtype):
    """Rough VMEM footprint: lanes padded to 128, sublanes to 8 (4B) / 16 (2B)."""
    item = jnp.dtype(dtype).itemsize
    dims = list(shape)
    if dims:
        dims[-1] = _round_up(dims[-1], 128)
    if len(dims) >= 2:
        dims[-2] = _round_up(dims[-2], 8 * (4 // item))
    n = 1
    for d in dims:
        n *= d
    return n * item


def _pick_row_tile(h, w, cmid):
    """Largest divisor of H keeping the two bf16 activation slabs <= ~8 MiB."""
    per_row = 2 * (w + 2) * cmid * 2
    target = max(8, (8 << 20) // max(per_row, 1))
    best = 1
    for d in range(1, h + 1):
        if h % d == 0 and d <= target:
            best = d
    return best


def _pick_vmem_limit_bytes(buffers_bytes):
    """Clamp below the local chip's physical VMEM (leave compiler headroom)."""
    try:
        cap = int(pltpu.get_tpu_info().vmem_capacity_bytes)
    except Exception:
        cap = 64 << 20        # conservative: v7x per-TensorCore VMEM
    return int(min(max(buffers_bytes, 32 << 20), cap - (8 << 20)))


# ---------------------------------------------------------------------------
# PixelShuffle (PyTorch semantics) on the NHWC conv output -> NCHW result.
# out[n, c, h*r+i, w*r+j] = y[n, h, w, c*r*r + i*r + j]
# ---------------------------------------------------------------------------
def pixel_shuffle_nhwc_to_nchw(y, r):
    n, h, w, crr = y.shape
    c = crr // (r * r)
    y = y.reshape(n, h, w, c, r, r)
    y = jnp.transpose(y, (0, 3, 1, 4, 2, 5))      # (N, C, H, r, W, r)
    return y.reshape(n, c, h * r, w * r)


# ---------------------------------------------------------------------------
# Wrapper
# ---------------------------------------------------------------------------
def _super_resolution_pallas(x_nchw, params, scale_factor, row_tile=None):
    n, cin, h, w = x_nchw.shape
    cmid = params["w1"].shape[-1]                 # 64
    cout = params["w3"].shape[-1]                 # 3 * r^2

    th = _pick_row_tile(h, w, cmid) if row_tile is None else row_tile
    if h % th != 0:
        raise ValueError(f"row_tile={th} must divide H={h}")

    # NCHW -> NHWC, zero-pad 3 rows / 1 col per side (receptive field of the
    # three stacked 3x3 convs), cast once to bf16.  One small fused XLA op on
    # the 3-channel input; the 64-channel activations never leave VMEM.
    x = jnp.transpose(x_nchw, (0, 2, 3, 1)).astype(jnp.bfloat16)
    x = jnp.pad(x, ((0, 0), (3, 3), (1, 1), (0, 0)))

    # Tap-major weight layout: HWIO (3, 3, Ci, Co) -> (9, Ci, Co), bf16.
    w1 = params["w1"].reshape(9, cin, cmid).astype(jnp.bfloat16)
    w2 = params["w2"].reshape(9, cmid, cmid).astype(jnp.bfloat16)
    w3 = params["w3"].reshape(9, cmid, cout).astype(jnp.bfloat16)
    b1 = params["b1"].reshape(1, cmid).astype(jnp.float32)
    b2 = params["b2"].reshape(1, cmid).astype(jnp.float32)
    b3 = params["b3"].reshape(1, cout).astype(jnp.float32)

    vmem_est = (
        2 * _buf_bytes((1, h + 6, w + 2, cin), jnp.bfloat16)   # input block x2
        + 2 * _buf_bytes((1, th, w, cout), jnp.float32)        # output block x2
        + _buf_bytes((th + 4, w + 2, cmid), jnp.bfloat16)
        + _buf_bytes((th + 2, w + 2, cmid), jnp.bfloat16)
        + _buf_bytes((9, cin, cmid), jnp.bfloat16)
        + _buf_bytes((9, cmid, cmid), jnp.bfloat16)
        + _buf_bytes((9, cmid, cout), jnp.bfloat16)
        + (4 << 20)                                            # margin
    )

    w_map3 = lambda i, j: (0, 0, 0)
    w_map2 = lambda i, j: (0, 0)

    y = pl.pallas_call(
        _sr_fused_kernel,
        out_shape=jax.ShapeDtypeStruct((n, h, w, cout), jnp.float32),
        grid=(n, h // th),
        in_specs=[
            pl.BlockSpec((1, h + 6, w + 2, cin), lambda i, j: (i, 0, 0, 0)),
            pl.BlockSpec((9, cin, cmid), w_map3),
            pl.BlockSpec((1, cmid), w_map2),
            pl.BlockSpec((9, cmid, cmid), w_map3),
            pl.BlockSpec((1, cmid), w_map2),
            pl.BlockSpec((9, cmid, cout), w_map3),
            pl.BlockSpec((1, cout), w_map2),
        ],
        out_specs=pl.BlockSpec((1, th, w, cout), lambda i, j: (i, j, 0, 0)),
        scratch_shapes=[
            pltpu.VMEM((th + 4, w + 2, cmid), jnp.bfloat16),
            pltpu.VMEM((th + 2, w + 2, cmid), jnp.bfloat16),
        ],
        compiler_params=pltpu.CompilerParams(
            dimension_semantics=("parallel", "parallel"),
            vmem_limit_bytes=_pick_vmem_limit_bytes(vmem_est),
        ),
    )(x, w1, b1, w2, b2, w3, b3)

    return pixel_shuffle_nhwc_to_nchw(y, scale_factor)


# ---------------------------------------------------------------------------
# Full model forward (matches SuperResolutionModelDef.forward)
# ---------------------------------------------------------------------------
def init_params(key, scale_factor=2):
    k1, k2, k3, k4, k5, k6 = jax.random.split(key, 6)
    c_out_last = 3 * scale_factor ** 2

    def conv_w(k, ci, co):
        fan_in = ci * 9
        return (jax.random.normal(k, (3, 3, ci, co), jnp.float32)
                * (1.0 / jnp.sqrt(fan_in)))

    return {
        "w1": conv_w(k1, 3, 64),
        "b1": 0.01 * jax.random.normal(k2, (64,), jnp.float32),
        "w2": conv_w(k3, 64, 64),
        "b2": 0.01 * jax.random.normal(k4, (64,), jnp.float32),
        "w3": conv_w(k5, 64, c_out_last),
        "b3": 0.01 * jax.random.normal(k6, (c_out_last,), jnp.float32),
    }


@functools.partial(jax.jit, static_argnames=("scale_factor", "row_tile"))
def super_resolution_forward(x_nchw, params, scale_factor=2, row_tile=None):
    return _super_resolution_pallas(x_nchw, params, scale_factor, row_tile)


# ---------------------------------------------------------------------------
# Pure-JAX reference (XLA conv, f32 HIGHEST) for correctness check
# ---------------------------------------------------------------------------
def _ref_conv(x_nhwc, w, b, relu):
    y = jax.lax.conv_general_dilated(
        x_nhwc, w, window_strides=(1, 1), padding="SAME",
        dimension_numbers=("NHWC", "HWIO", "NHWC"),
        precision=jax.lax.Precision.HIGHEST) + b
    return jnp.maximum(y, 0.0) if relu else y


def _ref_forward(x_nchw, params, scale_factor=2):
    x = jnp.transpose(x_nchw, (0, 2, 3, 1))
    hdn = _ref_conv(x, params["w1"], params["b1"], True)
    hdn = _ref_conv(hdn, params["w2"], params["b2"], True)
    hdn = _ref_conv(hdn, params["w3"], params["b3"], False)
    return pixel_shuffle_nhwc_to_nchw(hdn, scale_factor)


if __name__ == "__main__":
    key = jax.random.PRNGKey(0)
    kx, kp = jax.random.split(key)

    x = jax.random.normal(kx, (2, 3, 16, 16), jnp.float32)   # NCHW like PyTorch
    params = init_params(kp, scale_factor=2)

    ref = jax.block_until_ready(_ref_forward(x, params, scale_factor=2))

    # Exercise both the multi-row-tile path (2 halo'd tiles of 8 rows) and the
    # single-tile path.
    for row_tile in (8, None):
        out = super_resolution_forward(x, params, scale_factor=2,
                                       row_tile=row_tile)
        out = jax.block_until_ready(out)
        assert out.shape == (2, 3, 32, 32), out.shape
        max_err = float(jnp.max(jnp.abs(out - ref)))
        # bf16 MXU operands with f32 accumulation vs f32 HIGHEST reference.
        assert max_err < 3e-2, f"row_tile={row_tile}: mismatch {max_err}"

    print("KERNEL_OK")
</pallas_src>

<mosaic_0001>
module attributes {stable_mosaic.version = 11 : i64} {
  func.func @_sr_fused_kernel(%arg0: i32, %arg1: i32, %arg2: memref<1x22x18x3xbf16, #tpu.memory_space<vmem>>, %arg3: memref<9x3x64xbf16, #tpu.memory_space<vmem>>, %arg4: memref<1x64xf32, #tpu.memory_space<vmem>>, %arg5: memref<9x64x64xbf16, #tpu.memory_space<vmem>>, %arg6: memref<1x64xf32, #tpu.memory_space<vmem>>, %arg7: memref<9x64x12xbf16, #tpu.memory_space<vmem>>, %arg8: memref<1x12xf32, #tpu.memory_space<vmem>>, %arg9: memref<1x8x16x12xf32, #tpu.memory_space<vmem>>, %arg10: memref<12x18x64xbf16, #tpu.memory_space<vmem>>, %arg11: memref<10x18x64xbf16, #tpu.memory_space<vmem>>) attributes {dimension_semantics = [#tpu.dimension_semantics<parallel>, #tpu.dimension_semantics<parallel>], iteration_bounds = array<i64: 2, 2>, scalar_prefetch = 0 : i64, scratch_operands = 2 : i64, tpu.core_type = #tpu.core_type<tc>, window_params = [{transform_indices = @transform_0, window_bounds = array<i64: 1, 22, 18, 3>}, {pipeline_mode = #tpu.pipeline_mode<synchronous>, transform_indices = @transform_1, window_bounds = array<i64: 9, 3, 64>}, {pipeline_mode = #tpu.pipeline_mode<synchronous>, transform_indices = @transform_2, window_bounds = array<i64: 1, 64>}, {pipeline_mode = #tpu.pipeline_mode<synchronous>, transform_indices = @transform_3, window_bounds = array<i64: 9, 64, 64>}, {pipeline_mode = #tpu.pipeline_mode<synchronous>, transform_indices = @transform_4, window_bounds = array<i64: 1, 64>}, {pipeline_mode = #tpu.pipeline_mode<synchronous>, transform_indices = @transform_5, window_bounds = array<i64: 9, 64, 12>}, {pipeline_mode = #tpu.pipeline_mode<synchronous>, transform_indices = @transform_6, window_bounds = array<i64: 1, 12>}, {transform_indices = @transform_7, window_bounds = array<i64: 1, 8, 16, 12>}]} {
    %c8_i32 = arith.constant 8 : i32
    %0 = arith.muli %arg1, %c8_i32 : i32
    %cst = arith.constant 0.000000e+00 : bf16
    %1 = vector.broadcast %cst : bf16 to vector<12x1x64xbf16>
    %c0 = arith.constant 0 : index
    %c0_0 = arith.constant 0 : index
    %c0_1 = arith.constant 0 : index
    %2 = vector.load %arg10[%c0, %c0_0, %c0_1] : memref<12x18x64xbf16, #tpu.memory_space<vmem>>, vector<12x1x64xbf16>
    tpu.vector_store %arg10[%c0, %c0_0, %c0_1], %1 {strides = array<i32>} : memref<12x18x64xbf16, #tpu.memory_space<vmem>>, vector<12x1x64xbf16>,
    %cst_2 = arith.constant 0.000000e+00 : bf16
    %3 = vector.broadcast %cst_2 : bf16 to vector<12x1x64xbf16>
    %c0_3 = arith.constant 0 : index
    %c17 = arith.constant 17 : index
    %c0_4 = arith.constant 0 : index
    %4 = vector.load %arg10[%c0_3, %c17, %c0_4] : memref<12x18x64xbf16, #tpu.memory_space<vmem>>, vector<12x1x64xbf16>
    tpu.vector_store %arg10[%c0_3, %c17, %c0_4], %3 {strides = array<i32>} : memref<12x18x64xbf16, #tpu.memory_space<vmem>>, vector<12x1x64xbf16>,
    %cst_5 = arith.constant 0.000000e+00 : bf16
    %5 = vector.broadcast %cst_5 : bf16 to vector<10x1x64xbf16>
    %c0_6 = arith.constant 0 : index
    %c0_7 = arith.constant 0 : index
    %c0_8 = arith.constant 0 : index
    %6 = vector.load %arg11[%c0_6, %c0_7, %c0_8] : memref<10x18x64xbf16, #tpu.memory_space<vmem>>, vector<10x1x64xbf16>
    tpu.vector_store %arg11[%c0_6, %c0_7, %c0_8], %5 {strides = array<i32>} : memref<10x18x64xbf16, #tpu.memory_space<vmem>>, vector<10x1x64xbf16>,
    %cst_9 = arith.constant 0.000000e+00 : bf16
    %7 = vector.broadcast %cst_9 : bf16 to vector<10x1x64xbf16>
    %c0_10 = arith.constant 0 : index
    %c17_11 = arith.constant 17 : index
    %c0_12 = arith.constant 0 : index
    %8 = vector.load %arg11[%c0_10, %c17_11, %c0_12] : memref<10x18x64xbf16, #tpu.memory_space<vmem>>, vector<10x1x64xbf16>
    tpu.vector_store %arg11[%c0_10, %c17_11, %c0_12], %7 {strides = array<i32>} : memref<10x18x64xbf16, #tpu.memory_space<vmem>>, vector<10x1x64xbf16>,
    %cst_13 = arith.constant 0.000000e+00 : f32
    %9 = vector.broadcast %cst_13 : f32 to vector<192x64xf32>
    %c0_i32 = arith.constant 0 : i32
    %10 = arith.addi %0, %c0_i32 : i32
    %c0_14 = arith.constant 0 : index
    %11 = arith.index_cast %10 : i32 to index
    %c0_15 = arith.constant 0 : index
    %c0_16 = arith.constant 0 : index
    %12 = vector.load %arg2[%c0_14, %11, %c0_15, %c0_16] : memref<1x22x18x3xbf16, #tpu.memory_space<vmem>>, vector<1x12x16x3xbf16>
    %13 = vector.shape_cast %12 : vector<1x12x16x3xbf16> to vector<12x16x3xbf16>
    %14 = vector.shape_cast %13 : vector<12x16x3xbf16> to vector<192x3xbf16>
    %c0_17 = arith.constant 0 : index
    %c0_18 = arith.constant 0 : index
    %c0_19 = arith.constant 0 : index
    %15 = vector.load %arg3[%c0_17, %c0_18, %c0_19] : memref<9x3x64xbf16, #tpu.memory_space<vmem>>, vector<1x3x64xbf16>
    %16 = vector.shape_cast %15 : vector<1x3x64xbf16> to vector<3x64xbf16>
    %cst_20 = arith.constant dense<0.000000e+00> : vector<192x64xf32>
    %17 = tpu.matmul %14, %16, %cst_20 {dimension_numbers = #tpu.dot_dimension_numbers<[1], [0], [0], [1], [0, 0, 1, 1], [], []>} : vector<192x3xbf16>, vector<3x64xbf16>, vector<192x64xf32> -> vector<192x64xf32>
    %18 = arith.addf %9, %17 : vector<192x64xf32>
    %c0_i32_21 = arith.constant 0 : i32
    %19 = arith.addi %0, %c0_i32_21 : i32
    %c0_22 = arith.constant 0 : index
    %20 = arith.index_cast %19 : i32 to index
    %c1 = arith.constant 1 : index
    %c0_23 = arith.constant 0 : index
    %21 = vector.load %arg2[%c0_22, %20, %c1, %c0_23] : memref<1x22x18x3xbf16, #tpu.memory_space<vmem>>, vector<1x12x16x3xbf16>
    %22 = vector.shape_cast %21 : vector<1x12x16x3xbf16> to vector<12x16x3xbf16>
    %23 = vector.shape_cast %22 : vector<12x16x3xbf16> to vector<192x3xbf16>
    %c1_24 = arith.constant 1 : index
    %c0_25 = arith.constant 0 : index
    %c0_26 = arith.constant 0 : index
    %24 = vector.load %arg3[%c1_24, %c0_25, %c0_26] : memref<9x3x64xbf16, #tpu.memory_space<vmem>>, vector<1x3x64xbf16>
    %25 = vector.shape_cast %24 : vector<1x3x64xbf16> to vector<3x64xbf16>
    %cst_27 = arith.constant dense<0.000000e+00> : vector<192x64xf32>
    %26 = tpu.matmul %23, %25, %cst_27 {dimension_numbers = #tpu.dot_dimension_numbers<[1], [0], [0], [1], [0, 0, 1, 1], [], []>} : vector<192x3xbf16>, vector<3x64xbf16>, vector<192x64xf32> -> vector<192x64xf32>
    %27 = arith.addf %18, %26 : vector<192x64xf32>
    %c0_i32_28 = arith.constant 0 : i32
    %28 = arith.addi %0, %c0_i32_28 : i32
    %c0_29 = arith.constant 0 : index
    %29 = arith.index_cast %28 : i32 to index
    %c2 = arith.constant 2 : index
    %c0_30 = arith.constant 0 : index
    %30 = vector.load %arg2[%c0_29, %29, %c2, %c0_30] : memref<1x22x18x3xbf16, #tpu.memory_space<vmem>>, vector<1x12x16x3xbf16>
    %31 = vector.shape_cast %30 : vector<1x12x16x3xbf16> to vector<12x16x3xbf16>
    %32 = vector.shape_cast %31 : vector<12x16x3xbf16> to vector<192x3xbf16>
    %c2_31 = arith.constant 2 : index
    %c0_32 = arith.constant 0 : index
    %c0_33 = arith.constant 0 : index
    %33 = vector.load %arg3[%c2_31, %c0_32, %c0_33] : memref<9x3x64xbf16, #tpu.memory_space<vmem>>, vector<1x3x64xbf16>
    %34 = vector.shape_cast %33 : vector<1x3x64xbf16> to vector<3x64xbf16>
    %cst_34 = arith.constant dense<0.000000e+00> : vector<192x64xf32>
    %35 = tpu.matmul %32, %34, %cst_34 {dimension_numbers = #tpu.dot_dimension_numbers<[1], [0], [0], [1], [0, 0, 1, 1], [], []>} : vector<192x3xbf16>, vector<3x64xbf16>, vector<192x64xf32> -> vector<192x64xf32>
    %36 = arith.addf %27, %35 : vector<192x64xf32>
    %c1_i32 = arith.constant 1 : i32
    %37 = arith.addi %0, %c1_i32 : i32
    %c0_35 = arith.constant 0 : index
    %38 = arith.index_cast %37 : i32 to index
    %c0_36 = arith.constant 0 : index
    %c0_37 = arith.constant 0 : index
    %39 = vector.load %arg2[%c0_35, %38, %c0_36, %c0_37] : memref<1x22x18x3xbf16, #tpu.memory_space<vmem>>, vector<1x12x16x3xbf16>
    %40 = vector.shape_cast %39 : vector<1x12x16x3xbf16> to vector<12x16x3xbf16>
    %41 = vector.shape_cast %40 : vector<12x16x3xbf16> to vector<192x3xbf16>
    %c3 = arith.constant 3 : index
    %c0_38 = arith.constant 0 : index
    %c0_39 = arith.constant 0 : index
    %42 = vector.load %arg3[%c3, %c0_38, %c0_39] : memref<9x3x64xbf16, #tpu.memory_space<vmem>>, vector<1x3x64xbf16>
    %43 = vector.shape_cast %42 : vector<1x3x64xbf16> to vector<3x64xbf16>
    %cst_40 = arith.constant dense<0.000000e+00> : vector<192x64xf32>
    %44 = tpu.matmul %41, %43, %cst_40 {dimension_numbers = #tpu.dot_dimension_numbers<[1], [0], [0], [1], [0, 0, 1, 1], [], []>} : vector<192x3xbf16>, vector<3x64xbf16>, vector<192x64xf32> -> vector<192x64xf32>
    %45 = arith.addf %36, %44 : vector<192x64xf32>
    %c1_i32_41 = arith.constant 1 : i32
    %46 = arith.addi %0, %c1_i32_41 : i32
    %c0_42 = arith.constant 0 : index
    %47 = arith.index_cast %46 : i32 to index
    %c1_43 = arith.constant 1 : index
    %c0_44 = arith.constant 0 : index
    %48 = vector.load %arg2[%c0_42, %47, %c1_43, %c0_44] : memref<1x22x18x3xbf16, #tpu.memory_space<vmem>>, vector<1x12x16x3xbf16>
    %49 = vector.shape_cast %48 : vector<1x12x16x3xbf16> to vector<12x16x3xbf16>
    %50 = vector.shape_cast %49 : vector<12x16x3xbf16> to vector<192x3xbf16>
    %c4 = arith.constant 4 : index
    %c0_45 = arith.constant 0 : index
    %c0_46 = arith.constant 0 : index
    %51 = vector.load %arg3[%c4, %c0_45, %c0_46] : memref<9x3x64xbf16, #tpu.memory_space<vmem>>, vector<1x3x64xbf16>
    %52 = vector.shape_cast %51 : vector<1x3x64xbf16> to vector<3x64xbf16>
    %cst_47 = arith.constant dense<0.000000e+00> : vector<192x64xf32>
    %53 = tpu.matmul %50, %52, %cst_47 {dimension_numbers = #tpu.dot_dimension_numbers<[1], [0], [0], [1], [0, 0, 1, 1], [], []>} : vector<192x3xbf16>, vector<3x64xbf16>, vector<192x64xf32> -> vector<192x64xf32>
    %54 = arith.addf %45, %53 : vector<192x64xf32>
    %c1_i32_48 = arith.constant 1 : i32
    %55 = arith.addi %0, %c1_i32_48 : i32
    %c0_49 = arith.constant 0 : index
    %56 = arith.index_cast %55 : i32 to index
    %c2_50 = arith.constant 2 : index
    %c0_51 = arith.constant 0 : index
    %57 = vector.load %arg2[%c0_49, %56, %c2_50, %c0_51] : memref<1x22x18x3xbf16, #tpu.memory_space<vmem>>, vector<1x12x16x3xbf16>
    %58 = vector.shape_cast %57 : vector<1x12x16x3xbf16> to vector<12x16x3xbf16>
    %59 = vector.shape_cast %58 : vector<12x16x3xbf16> to vector<192x3xbf16>
    %c5 = arith.constant 5 : index
    %c0_52 = arith.constant 0 : index
    %c0_53 = arith.constant 0 : index
    %60 = vector.load %arg3[%c5, %c0_52, %c0_53] : memref<9x3x64xbf16, #tpu.memory_space<vmem>>, vector<1x3x64xbf16>
    %61 = vector.shape_cast %60 : vector<1x3x64xbf16> to vector<3x64xbf16>
    %cst_54 = arith.constant dense<0.000000e+00> : vector<192x64xf32>
    %62 = tpu.matmul %59, %61, %cst_54 {dimension_numbers = #tpu.dot_dimension_numbers<[1], [0], [0], [1], [0, 0, 1, 1], [], []>} : vector<192x3xbf16>, vector<3x64xbf16>, vector<192x64xf32> -> vector<192x64xf32>
    %63 = arith.addf %54, %62 : vector<192x64xf32>
    %c2_i32 = arith.constant 2 : i32
    %64 = arith.addi %0, %c2_i32 : i32
    %c0_55 = arith.constant 0 : index
    %65 = arith.index_cast %64 : i32 to index
    %c0_56 = arith.constant 0 : index
    %c0_57 = arith.constant 0 : index
    %66 = vector.load %arg2[%c0_55, %65, %c0_56, %c0_57] : memref<1x22x18x3xbf16, #tpu.memory_space<vmem>>, vector<1x12x16x3xbf16>
    %67 = vector.shape_cast %66 : vector<1x12x16x3xbf16> to vector<12x16x3xbf16>
    %68 = vector.shape_cast %67 : vector<12x16x3xbf16> to vector<192x3xbf16>
    %c6 = arith.constant 6 : index
    %c0_58 = arith.constant 0 : index
    %c0_59 = arith.constant 0 : index
    %69 = vector.load %arg3[%c6, %c0_58, %c0_59] : memref<9x3x64xbf16, #tpu.memory_space<vmem>>, vector<1x3x64xbf16>
    %70 = vector.shape_cast %69 : vector<1x3x64xbf16> to vector<3x64xbf16>
    %cst_60 = arith.constant dense<0.000000e+00> : vector<192x64xf32>
    %71 = tpu.matmul %68, %70, %cst_60 {dimension_numbers = #tpu.dot_dimension_numbers<[1], [0], [0], [1], [0, 0, 1, 1], [], []>} : vector<192x3xbf16>, vector<3x64xbf16>, vector<192x64xf32> -> vector<192x64xf32>
    %72 = arith.addf %63, %71 : vector<192x64xf32>
    %c2_i32_61 = arith.constant 2 : i32
    %73 = arith.addi %0, %c2_i32_61 : i32
    %c0_62 = arith.constant 0 : index
    %74 = arith.index_cast %73 : i32 to index
    %c1_63 = arith.constant 1 : index
    %c0_64 = arith.constant 0 : index
    %75 = vector.load %arg2[%c0_62, %74, %c1_63, %c0_64] : memref<1x22x18x3xbf16, #tpu.memory_space<vmem>>, vector<1x12x16x3xbf16>
    %76 = vector.shape_cast %75 : vector<1x12x16x3xbf16> to vector<12x16x3xbf16>
    %77 = vector.shape_cast %76 : vector<12x16x3xbf16> to vector<192x3xbf16>
    %c7 = arith.constant 7 : index
    %c0_65 = arith.constant 0 : index
    %c0_66 = arith.constant 0 : index
    %78 = vector.load %arg3[%c7, %c0_65, %c0_66] : memref<9x3x64xbf16, #tpu.memory_space<vmem>>, vector<1x3x64xbf16>
    %79 = vector.shape_cast %78 : vector<1x3x64xbf16> to vector<3x64xbf16>
    %cst_67 = arith.constant dense<0.000000e+00> : vector<192x64xf32>
    %80 = tpu.matmul %77, %79, %cst_67 {dimension_numbers = #tpu.dot_dimension_numbers<[1], [0], [0], [1], [0, 0, 1, 1], [], []>} : vector<192x3xbf16>, vector<3x64xbf16>, vector<192x64xf32> -> vector<192x64xf32>
    %81 = arith.addf %72, %80 : vector<192x64xf32>
    %c2_i32_68 = arith.constant 2 : i32
    %82 = arith.addi %0, %c2_i32_68 : i32
    %c0_69 = arith.constant 0 : index
    %83 = arith.index_cast %82 : i32 to index
    %c2_70 = arith.constant 2 : index
    %c0_71 = arith.constant 0 : index
    %84 = vector.load %arg2[%c0_69, %83, %c2_70, %c0_71] : memref<1x22x18x3xbf16, #tpu.memory_space<vmem>>, vector<1x12x16x3xbf16>
    %85 = vector.shape_cast %84 : vector<1x12x16x3xbf16> to vector<12x16x3xbf16>
    %86 = vector.shape_cast %85 : vector<12x16x3xbf16> to vector<192x3xbf16>
    %c8 = arith.constant 8 : index
    %c0_72 = arith.constant 0 : index
    %c0_73 = arith.constant 0 : index
    %87 = vector.load %arg3[%c8, %c0_72, %c0_73] : memref<9x3x64xbf16, #tpu.memory_space<vmem>>, vector<1x3x64xbf16>
    %88 = vector.shape_cast %87 : vector<1x3x64xbf16> to vector<3x64xbf16>
    %cst_74 = arith.constant dense<0.000000e+00> : vector<192x64xf32>
    %89 = tpu.matmul %86, %88, %cst_74 {dimension_numbers = #tpu.dot_dimension_numbers<[1], [0], [0], [1], [0, 0, 1, 1], [], []>} : vector<192x3xbf16>, vector<3x64xbf16>, vector<192x64xf32> -> vector<192x64xf32>
    %90 = arith.addf %81, %89 : vector<192x64xf32>
    %c0_75 = arith.constant 0 : index
    %c0_76 = arith.constant 0 : index
    %91 = vector.load %arg4[%c0_75, %c0_76] : memref<1x64xf32, #tpu.memory_space<vmem>>, vector<1x64xf32>
    %92 = vector.broadcast %91 : vector<1x64xf32> to vector<192x64xf32>
    %93 = arith.addf %90, %92 : vector<192x64xf32>
    %cst_77 = arith.constant 0.000000e+00 : f32
    %94 = vector.broadcast %cst_77 : f32 to vector<192x64xf32>
    %95 = arith.maximumf %93, %94 : vector<192x64xf32>
    %96 = vector.shape_cast %95 : vector<192x64xf32> to vector<12x16x64xf32>
    %c2_i32_78 = arith.constant 2 : i32
    %97 = arith.subi %0, %c2_i32_78 : i32
    %98 = tpu.iota {dimensions = array<i32: 0>} : vector<12x1x1xi32>
    %99 = vector.broadcast %97 : i32 to vector<12x1x1xi32>
    %100 = arith.addi %99, %98 : vector<12x1x1xi32>
    %c0_i32_79 = arith.constant 0 : i32
    %101 = vector.broadcast %c0_i32_79 : i32 to vector<12x1x1xi32>
    %102 = arith.cmpi sge, %100, %101 : vector<12x1x1xi32>
    %c16_i32 = arith.constant 16 : i32
    %103 = vector.broadcast %c16_i32 : i32 to vector<12x1x1xi32>
    %104 = arith.cmpi slt, %100, %103 : vector<12x1x1xi32>
    %105 = arith.andi %102, %104 : vector<12x1x1xi1>
    %cst_80 = arith.constant 0.000000e+00 : f32
    %106 = vector.shape_cast %105 : vector<12x1x1xi1> to vector<12x1x1xi1>
    %107 = vector.broadcast %106 : vector<12x1x1xi1> to vector<12x16x64xi1>
    %108 = vector.broadcast %cst_80 : f32 to vector<12x16x64xf32>
    %109 = arith.select %107, %96, %108 : vector<12x16x64xi1>, vector<12x16x64xf32>
    %110 = arith.truncf %109 : vector<12x16x64xf32> to vector<12x16x64xbf16>
    %c0_81 = arith.constant 0 : index
    %c1_82 = arith.constant 1 : index
    %c0_83 = arith.constant 0 : index
    %111 = vector.load %arg10[%c0_81, %c1_82, %c0_83] : memref<12x18x64xbf16, #tpu.memory_space<vmem>>, vector<12x16x64xbf16>
    tpu.vector_store %arg10[%c0_81, %c1_82, %c0_83], %110 {strides = array<i32>} : memref<12x18x64xbf16, #tpu.memory_space<vmem>>, vector<12x16x64xbf16>,
    %cst_84 = arith.constant 0.000000e+00 : f32
    %112 = vector.broadcast %cst_84 : f32 to vector<160x64xf32>
    %c0_85 = arith.constant 0 : index
    %c0_86 = arith.constant 0 : index
    %c0_87 = arith.constant 0 : index
    %113 = vector.load %arg10[%c0_85, %c0_86, %c0_87] : memref<12x18x64xbf16, #tpu.memory_space<vmem>>, vector<10x16x64xbf16>
    %114 = vector.shape_cast %113 : vector<10x16x64xbf16> to vector<160x64xbf16>
    %c0_88 = arith.constant 0 : index
    %c0_89 = arith.constant 0 : index
    %c0_90 = arith.constant 0 : index
    %115 = vector.load %arg5[%c0_88, %c0_89, %c0_90] : memref<9x64x64xbf16, #tpu.memory_space<vmem>>, vector<1x64x64xbf16>
    %116 = vector.shape_cast %115 : vector<1x64x64xbf16> to vector<64x64xbf16>
    %cst_91 = arith.constant dense<0.000000e+00> : vector<160x64xf32>
    %117 = tpu.matmul %114, %116, %cst_91 {dimension_numbers = #tpu.dot_dimension_numbers<[1], [0], [0], [1], [0, 0, 1, 1], [], []>} : vector<160x64xbf16>, vector<64x64xbf16>, vector<160x64xf32> -> vector<160x64xf32>
    %118 = arith.addf %112, %117 : vector<160x64xf32>
    %c0_92 = arith.constant 0 : index
    %c1_93 = arith.constant 1 : index
    %c0_94 = arith.constant 0 : index
    %119 = vector.load %arg10[%c0_92, %c1_93, %c0_94] : memref<12x18x64xbf16, #tpu.memory_space<vmem>>, vector<10x16x64xbf16>
    %120 = vector.shape_cast %119 : vector<10x16x64xbf16> to vector<160x64xbf16>
    %c1_95 = arith.constant 1 : index
    %c0_96 = arith.constant 0 : index
    %c0_97 = arith.constant 0 : index
    %121 = vector.load %arg5[%c1_95, %c0_96, %c0_97] : memref<9x64x64xbf16, #tpu.memory_space<vmem>>, vector<1x64x64xbf16>
    %122 = vector.shape_cast %121 : vector<1x64x64xbf16> to vector<64x64xbf16>
    %cst_98 = arith.constant dense<0.000000e+00> : vector<160x64xf32>
    %123 = tpu.matmul %120, %122, %cst_98 {dimension_numbers = #tpu.dot_dimension_numbers<[1], [0], [0], [1], [0, 0, 1, 1], [], []>} : vector<160x64xbf16>, vector<64x64xbf16>, vector<160x64xf32> -> vector<160x64xf32>
    %124 = arith.addf %118, %123 : vector<160x64xf32>
    %c0_99 = arith.constant 0 : index
    %c2_100 = arith.constant 2 : index
    %c0_101 = arith.constant 0 : index
    %125 = vector.load %arg10[%c0_99, %c2_100, %c0_101] : memref<12x18x64xbf16, #tpu.memory_space<vmem>>, vector<10x16x64xbf16>
    %126 = vector.shape_cast %125 : vector<10x16x64xbf16> to vector<160x64xbf16>
    %c2_102 = arith.constant 2 : index
    %c0_103 = arith.constant 0 : index
    %c0_104 = arith.constant 0 : index
    %127 = vector.load %arg5[%c2_102, %c0_103, %c0_104] : memref<9x64x64xbf16, #tpu.memory_space<vmem>>, vector<1x64x64xbf16>
    %128 = vector.shape_cast %127 : vector<1x64x64xbf16> to vector<64x64xbf16>
    %cst_105 = arith.constant dense<0.000000e+00> : vector<160x64xf32>
    %129 = tpu.matmul %126, %128, %cst_105 {dimension_numbers = #tpu.dot_dimension_numbers<[1], [0], [0], [1], [0, 0, 1, 1], [], []>} : vector<160x64xbf16>, vector<64x64xbf16>, vector<160x64xf32> -> vector<160x64xf32>
    %130 = arith.addf %124, %129 : vector<160x64xf32>
    %c1_106 = arith.constant 1 : index
    %c0_107 = arith.constant 0 : index
    %c0_108 = arith.constant 0 : index
    %131 = vector.load %arg10[%c1_106, %c0_107, %c0_108] : memref<12x18x64xbf16, #tpu.memory_space<vmem>>, vector<10x16x64xbf16>
    %132 = vector.shape_cast %131 : vector<10x16x64xbf16> to vector<160x64xbf16>
    %c3_109 = arith.constant 3 : index
    %c0_110 = arith.constant 0 : index
    %c0_111 = arith.constant 0 : index
    %133 = vector.load %arg5[%c3_109, %c0_110, %c0_111] : memref<9x64x64xbf16, #tpu.memory_space<vmem>>, vector<1x64x64xbf16>
    %134 = vector.shape_cast %133 : vector<1x64x64xbf16> to vector<64x64xbf16>
    %cst_112 = arith.constant dense<0.000000e+00> : vector<160x64xf32>
    %135 = tpu.matmul %132, %134, %cst_112 {dimension_numbers = #tpu.dot_dimension_numbers<[1], [0], [0], [1], [0, 0, 1, 1], [], []>} : vector<160x64xbf16>, vector<64x64xbf16>, vector<160x64xf32> -> vector<160x64xf32>
    %136 = arith.addf %130, %135 : vector<160x64xf32>
    %c1_113 = arith.constant 1 : index
    %c1_114 = arith.constant 1 : index
    %c0_115 = arith.constant 0 : index
    %137 = vector.load %arg10[%c1_113, %c1_114, %c0_115] : memref<12x18x64xbf16, #tpu.memory_space<vmem>>, vector<10x16x64xbf16>
    %138 = vector.shape_cast %137 : vector<10x16x64xbf16> to vector<160x64xbf16>
    %c4_116 = arith.constant 4 : index
    %c0_117 = arith.constant 0 : index
    %c0_118 = arith.constant 0 : index
    %139 = vector.load %arg5[%c4_116, %c0_117, %c0_118] : memref<9x64x64xbf16, #tpu.memory_space<vmem>>, vector<1x64x64xbf16>
    %140 = vector.shape_cast %139 : vector<1x64x64xbf16> to vector<64x64xbf16>
    %cst_119 = arith.constant dense<0.000000e+00> : vector<160x64xf32>
    %141 = tpu.matmul %138, %140, %cst_119 {dimension_numbers = #tpu.dot_dimension_numbers<[1], [0], [0], [1], [0, 0, 1, 1], [], []>} : vector<160x64xbf16>, vector<64x64xbf16>, vector<160x64xf32> -> vector<160x64xf32>
    %142 = arith.addf %136, %141 : vector<160x64xf32>
    %c1_120 = arith.constant 1 : index
    %c2_121 = arith.constant 2 : index
    %c0_122 = arith.constant 0 : index
    %143 = vector.load %arg10[%c1_120, %c2_121, %c0_122] : memref<12x18x64xbf16, #tpu.memory_space<vmem>>, vector<10x16x64xbf16>
    %144 = vector.shape_cast %143 : vector<10x16x64xbf16> to vector<160x64xbf16>
    %c5_123 = arith.constant 5 : index
    %c0_124 = arith.constant 0 : index
    %c0_125 = arith.constant 0 : index
    %145 = vector.load %arg5[%c5_123, %c0_124, %c0_125] : memref<9x64x64xbf16, #tpu.memory_space<vmem>>, vector<1x64x64xbf16>
    %146 = vector.shape_cast %145 : vector<1x64x64xbf16> to vector<64x64xbf16>
    %cst_126 = arith.constant dense<0.000000e+00> : vector<160x64xf32>
    %147 = tpu.matmul %144, %146, %cst_126 {dimension_numbers = #tpu.dot_dimension_numbers<[1], [0], [0], [1], [0, 0, 1, 1], [], []>} : vector<160x64xbf16>, vector<64x64xbf16>, vector<160x64xf32> -> vector<160x64xf32>
    %148 = arith.addf %142, %147 : vector<160x64xf32>
    %c2_127 = arith.constant 2 : index
    %c0_128 = arith.constant 0 : index
    %c0_129 = arith.constant 0 : index
    %149 = vector.load %arg10[%c2_127, %c0_128, %c0_129] : memref<12x18x64xbf16, #tpu.memory_space<vmem>>, vector<10x16x64xbf16>
    %150 = vector.shape_cast %149 : vector<10x16x64xbf16> to vector<160x64xbf16>
    %c6_130 = arith.constant 6 : index
    %c0_131 = arith.constant 0 : index
    %c0_132 = arith.constant 0 : index
    %151 = vector.load %arg5[%c6_130, %c0_131, %c0_132] : memref<9x64x64xbf16, #tpu.memory_space<vmem>>, vector<1x64x64xbf16>
    %152 = vector.shape_cast %151 : vector<1x64x64xbf16> to vector<64x64xbf16>
    %cst_133 = arith.constant dense<0.000000e+00> : vector<160x64xf32>
    %153 = tpu.matmul %150, %152, %cst_133 {dimension_numbers = #tpu.dot_dimension_numbers<[1], [0], [0], [1], [0, 0, 1, 1], [], []>} : vector<160x64xbf16>, vector<64x64xbf16>, vector<160x64xf32> -> vector<160x64xf32>
    %154 = arith.addf %148, %153 : vector<160x64xf32>
    %c2_134 = arith.constant 2 : index
    %c1_135 = arith.constant 1 : index
    %c0_136 = arith.constant 0 : index
    %155 = vector.load %arg10[%c2_134, %c1_135, %c0_136] : memref<12x18x64xbf16, #tpu.memory_space<vmem>>, vector<10x16x64xbf16>
    %156 = vector.shape_cast %155 : vector<10x16x64xbf16> to vector<160x64xbf16>
    %c7_137 = arith.constant 7 : index
    %c0_138 = arith.constant 0 : index
    %c0_139 = arith.constant 0 : index
    %157 = vector.load %arg5[%c7_137, %c0_138, %c0_139] : memref<9x64x64xbf16, #tpu.memory_space<vmem>>, vector<1x64x64xbf16>
    %158 = vector.shape_cast %157 : vector<1x64x64xbf16> to vector<64x64xbf16>
    %cst_140 = arith.constant dense<0.000000e+00> : vector<160x64xf32>
    %159 = tpu.matmul %156, %158, %cst_140 {dimension_numbers = #tpu.dot_dimension_numbers<[1], [0], [0], [1], [0, 0, 1, 1], [], []>} : vector<160x64xbf16>, vector<64x64xbf16>, vector<160x64xf32> -> vector<160x64xf32>
    %160 = arith.addf %154, %159 : vector<160x64xf32>
    %c2_141 = arith.constant 2 : index
    %c2_142 = arith.constant 2 : index
    %c0_143 = arith.constant 0 : index
    %161 = vector.load %arg10[%c2_141, %c2_142, %c0_143] : memref<12x18x64xbf16, #tpu.memory_space<vmem>>, vector<10x16x64xbf16>
    %162 = vector.shape_cast %161 : vector<10x16x64xbf16> to vector<160x64xbf16>
    %c8_144 = arith.constant 8 : index
    %c0_145 = arith.constant 0 : index
    %c0_146 = arith.constant 0 : index
    %163 = vector.load %arg5[%c8_144, %c0_145, %c0_146] : memref<9x64x64xbf16, #tpu.memory_space<vmem>>, vector<1x64x64xbf16>
    %164 = vector.shape_cast %163 : vector<1x64x64xbf16> to vector<64x64xbf16>
    %cst_147 = arith.constant dense<0.000000e+00> : vector<160x64xf32>
    %165 = tpu.matmul %162, %164, %cst_147 {dimension_numbers = #tpu.dot_dimension_numbers<[1], [0], [0], [1], [0, 0, 1, 1], [], []>} : vector<160x64xbf16>, vector<64x64xbf16>, vector<160x64xf32> -> vector<160x64xf32>
    %166 = arith.addf %160, %165 : vector<160x64xf32>
    %c0_148 = arith.constant 0 : index
    %c0_149 = arith.constant 0 : index
    %167 = vector.load %arg6[%c0_148, %c0_149] : memref<1x64xf32, #tpu.memory_space<vmem>>, vector<1x64xf32>
    %168 = vector.broadcast %167 : vector<1x64xf32> to vector<160x64xf32>
    %169 = arith.addf %166, %168 : vector<160x64xf32>
    %cst_150 = arith.constant 0.000000e+00 : f32
    %170 = vector.broadcast %cst_150 : f32 to vector<160x64xf32>
    %171 = arith.maximumf %169, %170 : vector<160x64xf32>
    %172 = vector.shape_cast %171 : vector<160x64xf32> to vector<10x16x64xf32>
    %c1_i32_151 = arith.constant 1 : i32
    %173 = arith.subi %0, %c1_i32_151 : i32
    %174 = tpu.iota {dimensions = array<i32: 0>} : vector<10x1x1xi32>
    %175 = vector.broadcast %173 : i32 to vector<10x1x1xi32>
    %176 = arith.addi %175, %174 : vector<10x1x1xi32>
    %c0_i32_152 = arith.constant 0 : i32
    %177 = vector.broadcast %c0_i32_152 : i32 to vector<10x1x1xi32>
    %178 = arith.cmpi sge, %176, %177 : vector<10x1x1xi32>
    %c16_i32_153 = arith.constant 16 : i32
    %179 = vector.broadcast %c16_i32_153 : i32 to vector<10x1x1xi32>
    %180 = arith.cmpi slt, %176, %179 : vector<10x1x1xi32>
    %181 = arith.andi %178, %180 : vector<10x1x1xi1>
    %cst_154 = arith.constant 0.000000e+00 : f32
    %182 = vector.shape_cast %181 : vector<10x1x1xi1> to vector<10x1x1xi1>
    %183 = vector.broadcast %182 : vector<10x1x1xi1> to vector<10x16x64xi1>
    %184 = vector.broadcast %cst_154 : f32 to vector<10x16x64xf32>
    %185 = arith.select %183, %172, %184 : vector<10x16x64xi1>, vector<10x16x64xf32>
    %186 = arith.truncf %185 : vector<10x16x64xf32> to vector<10x16x64xbf16>
    %c0_155 = arith.constant 0 : index
    %c1_156 = arith.constant 1 : index
    %c0_157 = arith.constant 0 : index
    %187 = vector.load %arg11[%c0_155, %c1_156, %c0_157] : memref<10x18x64xbf16, #tpu.memory_space<vmem>>, vector<10x16x64xbf16>
    tpu.vector_store %arg11[%c0_155, %c1_156, %c0_157], %186 {strides = array<i32>} : memref<10x18x64xbf16, #tpu.memory_space<vmem>>, vector<10x16x64xbf16>,
    %cst_158 = arith.constant 0.000000e+00 : f32
    %188 = vector.broadcast %cst_158 : f32 to vector<128x12xf32>
    %c0_159 = arith.constant 0 : index
    %c0_160 = arith.constant 0 : index
    %c0_161 = arith.constant 0 : index
    %189 = vector.load %arg11[%c0_159, %c0_160, %c0_161] : memref<10x18x64xbf16, #tpu.memory_space<vmem>>, vector<8x16x64xbf16>
    %190 = vector.shape_cast %189 : vector<8x16x64xbf16> to vector<128x64xbf16>
    %c0_162 = arith.constant 0 : index
    %c0_163 = arith.constant 0 : index
    %c0_164 = arith.constant 0 : index
    %191 = vector.load %arg7[%c0_162, %c0_163, %c0_164] : memref<9x64x12xbf16, #tpu.memory_space<vmem>>, vector<1x64x12xbf16>
    %192 = vector.shape_cast %191 : vector<1x64x12xbf16> to vector<64x12xbf16>
    %cst_165 = arith.constant dense<0.000000e+00> : vector<128x12xf32>
    %193 = tpu.matmul %190, %192, %cst_165 {dimension_numbers = #tpu.dot_dimension_numbers<[1], [0], [0], [1], [0, 0, 1, 1], [], []>} : vector<128x64xbf16>, vector<64x12xbf16>, vector<128x12xf32> -> vector<128x12xf32>
    %194 = arith.addf %188, %193 : vector<128x12xf32>
    %c0_166 = arith.constant 0 : index
    %c1_167 = arith.constant 1 : index
    %c0_168 = arith.constant 0 : index
    %195 = vector.load %arg11[%c0_166, %c1_167, %c0_168] : memref<10x18x64xbf16, #tpu.memory_space<vmem>>, vector<8x16x64xbf16>
    %196 = vector.shape_cast %195 : vector<8x16x64xbf16> to vector<128x64xbf16>
    %c1_169 = arith.constant 1 : index
    %c0_170 = arith.constant 0 : index
    %c0_171 = arith.constant 0 : index
    %197 = vector.load %arg7[%c1_169, %c0_170, %c0_171] : memref<9x64x12xbf16, #tpu.memory_space<vmem>>, vector<1x64x12xbf16>
    %198 = vector.shape_cast %197 : vector<1x64x12xbf16> to vector<64x12xbf16>
    %cst_172 = arith.constant dense<0.000000e+00> : vector<128x12xf32>
    %199 = tpu.matmul %196, %198, %cst_172 {dimension_numbers = #tpu.dot_dimension_numbers<[1], [0], [0], [1], [0, 0, 1, 1], [], []>} : vector<128x64xbf16>, vector<64x12xbf16>, vector<128x12xf32> -> vector<128x12xf32>
    %200 = arith.addf %194, %199 : vector<128x12xf32>
    %c0_173 = arith.constant 0 : index
    %c2_174 = arith.constant 2 : index
    %c0_175 = arith.constant 0 : index
    %201 = vector.load %arg11[%c0_173, %c2_174, %c0_175] : memref<10x18x64xbf16, #tpu.memory_space<vmem>>, vector<8x16x64xbf16>
    %202 = vector.shape_cast %201 : vector<8x16x64xbf16> to vector<128x64xbf16>
    %c2_176 = arith.constant 2 : index
    %c0_177 = arith.constant 0 : index
    %c0_178 = arith.constant 0 : index
    %203 = vector.load %arg7[%c2_176, %c0_177, %c0_178] : memref<9x64x12xbf16, #tpu.memory_space<vmem>>, vector<1x64x12xbf16>
    %204 = vector.shape_cast %203 : vector<1x64x12xbf16> to vector<64x12xbf16>
    %cst_179 = arith.constant dense<0.000000e+00> : vector<128x12xf32>
    %205 = tpu.matmul %202, %204, %cst_179 {dimension_numbers = #tpu.dot_dimension_numbers<[1], [0], [0], [1], [0, 0, 1, 1], [], []>} : vector<128x64xbf16>, vector<64x12xbf16>, vector<128x12xf32> -> vector<128x12xf32>
    %206 = arith.addf %200, %205 : vector<128x12xf32>
    %c1_180 = arith.constant 1 : index
    %c0_181 = arith.constant 0 : index
    %c0_182 = arith.constant 0 : index
    %207 = vector.load %arg11[%c1_180, %c0_181, %c0_182] : memref<10x18x64xbf16, #tpu.memory_space<vmem>>, vector<8x16x64xbf16>
    %208 = vector.shape_cast %207 : vector<8x16x64xbf16> to vector<128x64xbf16>
    %c3_183 = arith.constant 3 : index
    %c0_184 = arith.constant 0 : index
    %c0_185 = arith.constant 0 : index
    %209 = vector.load %arg7[%c3_183, %c0_184, %c0_185] : memref<9x64x12xbf16, #tpu.memory_space<vmem>>, vector<1x64x12xbf16>
    %210 = vector.shape_cast %209 : vector<1x64x12xbf16> to vector<64x12xbf16>
    %cst_186 = arith.constant dense<0.000000e+00> : vector<128x12xf32>
    %211 = tpu.matmul %208, %210, %cst_186 {dimension_numbers = #tpu.dot_dimension_numbers<[1], [0], [0], [1], [0, 0, 1, 1], [], []>} : vector<128x64xbf16>, vector<64x12xbf16>, vector<128x12xf32> -> vector<128x12xf32>
    %212 = arith.addf %206, %211 : vector<128x12xf32>
    %c1_187 = arith.constant 1 : index
    %c1_188 = arith.constant 1 : index
    %c0_189 = arith.constant 0 : index
    %213 = vector.load %arg11[%c1_187, %c1_188, %c0_189] : memref<10x18x64xbf16, #tpu.memory_space<vmem>>, vector<8x16x64xbf16>
    %214 = vector.shape_cast %213 : vector<8x16x64xbf16> to vector<128x64xbf16>
    %c4_190 = arith.constant 4 : index
    %c0_191 = arith.constant 0 : index
    %c0_192 = arith.constant 0 : index
    %215 = vector.load %arg7[%c4_190, %c0_191, %c0_192] : memref<9x64x12xbf16, #tpu.memory_space<vmem>>, vector<1x64x12xbf16>
    %216 = vector.shape_cast %215 : vector<1x64x12xbf16> to vector<64x12xbf16>
    %cst_193 = arith.constant dense<0.000000e+00> : vector<128x12xf32>
    %217 = tpu.matmul %214, %216, %cst_193 {dimension_numbers = #tpu.dot_dimension_numbers<[1], [0], [0], [1], [0, 0, 1, 1], [], []>} : vector<128x64xbf16>, vector<64x12xbf16>, vector<128x12xf32> -> vector<128x12xf32>
    %218 = arith.addf %212, %217 : vector<128x12xf32>
    %c1_194 = arith.constant 1 : index
    %c2_195 = arith.constant 2 : index
    %c0_196 = arith.constant 0 : index
    %219 = vector.load %arg11[%c1_194, %c2_195, %c0_196] : memref<10x18x64xbf16, #tpu.memory_space<vmem>>, vector<8x16x64xbf16>
    %220 = vector.shape_cast %219 : vector<8x16x64xbf16> to vector<128x64xbf16>
    %c5_197 = arith.constant 5 : index
    %c0_198 = arith.constant 0 : index
    %c0_199 = arith.constant 0 : index
    %221 = vector.load %arg7[%c5_197, %c0_198, %c0_199] : memref<9x64x12xbf16, #tpu.memory_space<vmem>>, vector<1x64x12xbf16>
    %222 = vector.shape_cast %221 : vector<1x64x12xbf16> to vector<64x12xbf16>
    %cst_200 = arith.constant dense<0.000000e+00> : vector<128x12xf32>
    %223 = tpu.matmul %220, %222, %cst_200 {dimension_numbers = #tpu.dot_dimension_numbers<[1], [0], [0], [1], [0, 0, 1, 1], [], []>} : vector<128x64xbf16>, vector<64x12xbf16>, vector<128x12xf32> -> vector<128x12xf32>
    %224 = arith.addf %218, %223 : vector<128x12xf32>
    %c2_201 = arith.constant 2 : index
    %c0_202 = arith.constant 0 : index
    %c0_203 = arith.constant 0 : index
    %225 = vector.load %arg11[%c2_201, %c0_202, %c0_203] : memref<10x18x64xbf16, #tpu.memory_space<vmem>>, vector<8x16x64xbf16>
    %226 = vector.shape_cast %225 : vector<8x16x64xbf16> to vector<128x64xbf16>
    %c6_204 = arith.constant 6 : index
    %c0_205 = arith.constant 0 : index
    %c0_206 = arith.constant 0 : index
    %227 = vector.load %arg7[%c6_204, %c0_205, %c0_206] : memref<9x64x12xbf16, #tpu.memory_space<vmem>>, vector<1x64x12xbf16>
    %228 = vector.shape_cast %227 : vector<1x64x12xbf16> to vector<64x12xbf16>
    %cst_207 = arith.constant dense<0.000000e+00> : vector<128x12xf32>
    %229 = tpu.matmul %226, %228, %cst_207 {dimension_numbers = #tpu.dot_dimension_numbers<[1], [0], [0], [1], [0, 0, 1, 1], [], []>} : vector<128x64xbf16>, vector<64x12xbf16>, vector<128x12xf32> -> vector<128x12xf32>
    %230 = arith.addf %224, %229 : vector<128x12xf32>
    %c2_208 = arith.constant 2 : index
    %c1_209 = arith.constant 1 : index
    %c0_210 = arith.constant 0 : index
    %231 = vector.load %arg11[%c2_208, %c1_209, %c0_210] : memref<10x18x64xbf16, #tpu.memory_space<vmem>>, vector<8x16x64xbf16>
    %232 = vector.shape_cast %231 : vector<8x16x64xbf16> to vector<128x64xbf16>
    %c7_211 = arith.constant 7 : index
    %c0_212 = arith.constant 0 : index
    %c0_213 = arith.constant 0 : index
    %233 = vector.load %arg7[%c7_211, %c0_212, %c0_213] : memref<9x64x12xbf16, #tpu.memory_space<vmem>>, vector<1x64x12xbf16>
    %234 = vector.shape_cast %233 : vector<1x64x12xbf16> to vector<64x12xbf16>
    %cst_214 = arith.constant dense<0.000000e+00> : vector<128x12xf32>
    %235 = tpu.matmul %232, %234, %cst_214 {dimension_numbers = #tpu.dot_dimension_numbers<[1], [0], [0], [1], [0, 0, 1, 1], [], []>} : vector<128x64xbf16>, vector<64x12xbf16>, vector<128x12xf32> -> vector<128x12xf32>
    %236 = arith.addf %230, %235 : vector<128x12xf32>
    %c2_215 = arith.constant 2 : index
    %c2_216 = arith.constant 2 : index
    %c0_217 = arith.constant 0 : index
    %237 = vector.load %arg11[%c2_215, %c2_216, %c0_217] : memref<10x18x64xbf16, #tpu.memory_space<vmem>>, vector<8x16x64xbf16>
    %238 = vector.shape_cast %237 : vector<8x16x64xbf16> to vector<128x64xbf16>
    %c8_218 = arith.constant 8 : index
    %c0_219 = arith.constant 0 : index
    %c0_220 = arith.constant 0 : index
    %239 = vector.load %arg7[%c8_218, %c0_219, %c0_220] : memref<9x64x12xbf16, #tpu.memory_space<vmem>>, vector<1x64x12xbf16>
    %240 = vector.shape_cast %239 : vector<1x64x12xbf16> to vector<64x12xbf16>
    %cst_221 = arith.constant dense<0.000000e+00> : vector<128x12xf32>
    %241 = tpu.matmul %238, %240, %cst_221 {dimension_numbers = #tpu.dot_dimension_numbers<[1], [0], [0], [1], [0, 0, 1, 1], [], []>} : vector<128x64xbf16>, vector<64x12xbf16>, vector<128x12xf32> -> vector<128x12xf32>
    %242 = arith.addf %236, %241 : vector<128x12xf32>
    %c0_222 = arith.constant 0 : index
    %c0_223 = arith.constant 0 : index
    %243 = vector.load %arg8[%c0_222, %c0_223] : memref<1x12xf32, #tpu.memory_space<vmem>>, vector<1x12xf32>
    %244 = vector.broadcast %243 : vector<1x12xf32> to vector<128x12xf32>
    %245 = arith.addf %242, %244 : vector<128x12xf32>
    %246 = vector.shape_cast %245 : vector<128x12xf32> to vector<8x16x12xf32>
    %c0_224 = arith.constant 0 : index
    %c0_225 = arith.constant 0 : index
    %c0_226 = arith.constant 0 : index
    %c0_227 = arith.constant 0 : index
    %247 = vector.load %arg9[%c0_224, %c0_225, %c0_226, %c0_227] : memref<1x8x16x12xf32, #tpu.memory_space<vmem>>, vector<1x8x16x12xf32>
    %248 = vector.shape_cast %247 : vector<1x8x16x12xf32> to vector<8x16x12xf32>
    %249 = vector.shape_cast %246 : vector<8x16x12xf32> to vector<1x8x16x12xf32>
    tpu.vector_store %arg9[%c0_224, %c0_225, %c0_226, %c0_227], %249 {strides = array<i32>} : memref<1x8x16x12xf32, #tpu.memory_space<vmem>>, vector<1x8x16x12xf32>,
    return
  }
  func.func @transform_0(%arg0: i32, %arg1: i32) -> (i32, i32, i32, i32) {
    %c0_i32 = arith.constant 0 : i32
    %c0_i32_0 = arith.constant 0 : i32
    %c0_i32_1 = arith.constant 0 : i32
    %c0_i32_2 = arith.constant 0 : i32
    return %arg0, %c0_i32, %c0_i32_0, %c0_i32_1 : i32, i32, i32, i32
  }
  func.func @transform_1(%arg0: i32, %arg1: i32) -> (i32, i32, i32) {
    %c0_i32 = arith.constant 0 : i32
    %c0_i32_0 = arith.constant 0 : i32
    %c0_i32_1 = arith.constant 0 : i32
    %c0_i32_2 = arith.constant 0 : i32
    return %c0_i32, %c0_i32_0, %c0_i32_1 : i32, i32, i32
  }
  func.func @transform_2(%arg0: i32, %arg1: i32) -> (i32, i32) {
    %c0_i32 = arith.constant 0 : i32
    %c0_i32_0 = arith.constant 0 : i32
    %c0_i32_1 = arith.constant 0 : i32
    return %c0_i32, %c0_i32_0 : i32, i32
  }
  func.func @transform_3(%arg0: i32, %arg1: i32) -> (i32, i32, i32) {
    %c0_i32 = arith.constant 0 : i32
    %c0_i32_0 = arith.constant 0 : i32
    %c0_i32_1 = arith.constant 0 : i32
    %c0_i32_2 = arith.constant 0 : i32
    return %c0_i32, %c0_i32_0, %c0_i32_1 : i32, i32, i32
  }
  func.func @transform_4(%arg0: i32, %arg1: i32) -> (i32, i32) {
    %c0_i32 = arith.constant 0 : i32
    %c0_i32_0 = arith.constant 0 : i32
    %c0_i32_1 = arith.constant 0 : i32
    return %c0_i32, %c0_i32_0 : i32, i32
  }
  func.func @transform_5(%arg0: i32, %arg1: i32) -> (i32, i32, i32) {
    %c0_i32 = arith.constant 0 : i32
    %c0_i32_0 = arith.constant 0 : i32
    %c0_i32_1 = arith.constant 0 : i32
    %c0_i32_2 = arith.constant 0 : i32
    return %c0_i32, %c0_i32_0, %c0_i32_1 : i32, i32, i32
  }
  func.func @transform_6(%arg0: i32, %arg1: i32) -> (i32, i32) {
    %c0_i32 = arith.constant 0 : i32
    %c0_i32_0 = arith.constant 0 : i32
    %c0_i32_1 = arith.constant 0 : i32
    return %c0_i32, %c0_i32_0 : i32, i32
  }
  func.func @transform_7(%arg0: i32, %arg1: i32) -> (i32, i32, i32, i32) {
    %c0_i32 = arith.constant 0 : i32
    %c0_i32_0 = arith.constant 0 : i32
    %c0_i32_1 = arith.constant 0 : i32
    return %arg0, %arg1, %c0_i32, %c0_i32_0 : i32, i32, i32, i32
  }
}

</mosaic_0001>

<llo_original>
// kernel: super_resolution_forward.1
$region0: #{super_resolution_forward.1}
  #allocation0 [shape = 'u32[]', space=smem, size = 0x4, offset = 0x4, fixed_abs, tag = 'smem constant byte address 0x4 - core index']
  #allocation1 [shape = 'u32[72,128]{1,0:T(1,128)}', space=vmem, size = 0x9000, scoped, tag = 'internal scratch']
  #allocation2 [shape = 'bf16[12,18,64]{2,1,0:T(8,128)(2,1)}', space=vmem, size = 0x12000, scoped, tag = 'scratch operand']
  #allocation3 [shape = 'bf16[10,18,64]{2,1,0:T(8,128)(2,1)}', space=vmem, size = 0xf000, scoped, tag = 'scratch operand']
  %s0 = inlined_call_operand.vmem [shape: bf16[2,22,18,3], index: 0, kind: input, shape index: {}]
  %s1 = inlined_call_operand.vmem [shape: bf16[9,3,64], index: 1, kind: input, shape index: {}]
  %s2 = inlined_call_operand.hbm [shape: f32[1,64], index: 2, kind: input, shape index: {}]
  %s3 = inlined_call_operand.vmem [shape: bf16[9,64,64], index: 3, kind: input, shape index: {}]
  %s4 = inlined_call_operand.hbm [shape: f32[1,64], index: 4, kind: input, shape index: {}]
  %s5 = inlined_call_operand.vmem [shape: bf16[9,64,12], index: 5, kind: input, shape index: {}]
  %s6 = inlined_call_operand.hbm [shape: f32[1,12], index: 6, kind: input, shape index: {}]
  %s7 = inlined_call_operand.vmem [shape: f32[2,16,16,12], index: 7, kind: output, shape index: {}]
  %s8 = sld [smem:[#allocation0]]
  $region73: #{super_resolution_forward.1} parent=0
    _
  %s10 = ssub.s32 1, %s8
  %s11 = scalar_select 0, %s10, %s8
  $region1: #{super_resolution_forward.1} parent=0
    #allocation4 [shape = 'u8[512]{0}', space=vmem, size = 0x400, scoped, tag = 'input window, operand 2, single buffered']
    #allocation5 [shape = 's32[2]{0}', space=sflag, size = 0x8, scoped, tag = 'scoped memory for super_resolution_forward.1']
    #allocation6 [shape = 'u8[512]{0}', space=vmem, size = 0x400, scoped, tag = 'input window, operand 4, single buffered']
    #allocation7 [shape = 's32[1]{0}', space=sflag, size = 0x4, scoped, tag = 'scoped memory for super_resolution_forward.1']
    #allocation8 [shape = 'u8[512]{0}', space=vmem, size = 0x400, scoped, tag = 'input window, operand 6, single buffered']
    %12 = vsyncpa [#allocation5], 0
    %13 = vsyncpa [#allocation7], 0
    loop: start=0, step=1, limit=6
    $region2: #{super_resolution_forward.1} parent=1 // loop_pre_header
      _
    $region3: #{super_resolution_forward.1} parent=1 // loop_header
      %s15 = sphi 0, %s19
      %p16 = scmp.ge.s32.totalorder %s15, 6
      %s22 = sphi 0, %s34
      %s23 = sphi 0, %s30
      %s24 = sphi 0, %s22
      %s25 = sphi 0, %s23
      %s26 = sphi 0, %s24
      %s27 = sphi 0, %s25
      %s37 = sphi 0, %s39
      %s40 = sphi 0, %s37
      %s41 = sphi 0, %s40
      %s57 = sphi 0, %s41
      %s61 = sphi 0, %s61
      %s63 = sphi 0, %s61
      %s64 = sphi 0, %s63
      %s78 = sphi 0, %s64
      %s82 = sphi 0, %s82
      %s84 = sphi 0, %s82
      %s85 = sphi 0, %s84
      %s99 = sphi 0, %s85
      %s103 = sphi 0, %s103
      %s105 = sphi 0, %s103
      %s106 = sphi 0, %s105
      %s120 = sphi 0, %s106
      %s124 = sphi 0, %s124
      %s126 = sphi 0, %s124
      %s127 = sphi 0, %s126
      %s141 = sphi 0, %s127
      %s145 = sphi 0, %s145
      %s147 = sphi 0, %s145
      %s148 = sphi 0, %s147
      %s162 = sphi 0, %s148
      %s166 = sphi 0, %s166
      %s168 = sphi 0, %s166
      %s169 = sphi 0, %s168
      %s183 = sphi 0, %s169
      %s191 = sphi 0, %s193
      %s194 = sphi 0, %s191
      %s195 = sphi 0, %s194
      %s211 = sphi 0, %s195
    $region4: #{super_resolution_forward.1} parent=1 // loop_header_branch
      %18 = sbr.rel (%p16) target = $region8
    $region5: #{super_resolution_forward.1} parent=1 // loop_body
      %s20 = ssub.s32 %s15, 1
      %s21 = ssub.s32 %s15, 2
      %s28 = sadd.s32 1, %s23
      %p29 = scmp.ge.s32.totalorder %s28, 2
      %s30 = scalar_select %p29, 0, %s28
      %s31 = sadd.s32 1, %s22
      %s32 = scalar_select %p29, %s31, %s22
      %p33 = scmp.ge.s32.totalorder %s32, 2
      %s34 = scalar_select %p33, 0, %s32
      %s35 = ssub.s32 %s22, %s34
      %p36 = scmp.eq.s32.totalorder %s35, 0
      %s38 = sadd.s32 %s37, 1
      %s39 = scalar_select %p36, %s37, %s38
      %p42 = pneg %p36
      %p43 = scmp.eq.s32.totalorder %s15, 3
      %p44 = por %p42, %p43
      %p45 = scmp.ne.s32.totalorder %s37, %s40
      %p46 = scmp.eq.s32.totalorder %s15, 0
      %p47 = por %p45, %p46
      %p48 = scmp.ne.s32.totalorder %s37, %s40
      %p49 = scmp.eq.s32.totalorder %s20, 3
      %p50 = por %p48, %p49
      %p51 = scmp.ne.s32.totalorder %s40, %s41
      %p52 = scmp.eq.s32.totalorder %s20, 0
      %p53 = por %p51, %p52
      %p54 = scmp.ne.s32.totalorder %s40, %s41
      %p55 = scmp.eq.s32.totalorder %s21, 3
      %p56 = por %p54, %p55
      %p58 = scmp.ne.s32.totalorder %s41, %s57
      %p59 = scmp.eq.s32.totalorder %s21, 0
      %p60 = por %p58, %p59
      %s62 = sadd.s32 %s61, 1
      %p65 = scmp.eq.s32.totalorder %s15, 3
      %p66 = scmp.ne.s32.totalorder %s61, %s63
      %p67 = scmp.eq.s32.totalorder %s15, 0
      %p68 = por %p66, %p67
      %p69 = scmp.ne.s32.totalorder %s61, %s63
      %p70 = scmp.eq.s32.totalorder %s20, 3
      %p71 = por %p69, %p70
      %p72 = scmp.ne.s32.totalorder %s63, %s64
      %p73 = scmp.eq.s32.totalorder %s20, 0
      %p74 = por %p72, %p73
      %p75 = scmp.ne.s32.totalorder %s63, %s64
      %p76 = scmp.eq.s32.totalorder %s21, 3
      %p77 = por %p75, %p76
      %p79 = scmp.ne.s32.totalorder %s64, %s78
      %p80 = scmp.eq.s32.totalorder %s21, 0
      %p81 = por %p79, %p80
      %s83 = sadd.s32 %s82, 1
      %p86 = scmp.eq.s32.totalorder %s15, 3
      %p87 = scmp.ne.s32.totalorder %s82, %s84
      %p88 = scmp.eq.s32.totalorder %s15, 0
      %p89 = por %p87, %p88
      %p90 = scmp.ne.s32.totalorder %s82, %s84
      %p91 = scmp.eq.s32.totalorder %s20, 3
      %p92 = por %p90, %p91
      %p93 = scmp.ne.s32.totalorder %s84, %s85
      %p94 = scmp.eq.s32.totalorder %s20, 0
      %p95 = por %p93, %p94
      %p96 = scmp.ne.s32.totalorder %s84, %s85
      %p97 = scmp.eq.s32.totalorder %s21, 3
      %p98 = por %p96, %p97
      %p100 = scmp.ne.s32.totalorder %s85, %s99
      %p101 = scmp.eq.s32.totalorder %s21, 0
      %p102 = por %p100, %p101
      %s104 = sadd.s32 %s103, 1
      %p107 = scmp.eq.s32.totalorder %s15, 3
      %p108 = scmp.ne.s32.totalorder %s103, %s105
      %p109 = scmp.eq.s32.totalorder %s15, 0
      %p110 = por %p108, %p109
      %p111 = scmp.ne.s32.totalorder %s103, %s105
      %p112 = scmp.eq.s32.totalorder %s20, 3
      %p113 = por %p111, %p112
      %p114 = scmp.ne.s32.totalorder %s105, %s106
      %p115 = scmp.eq.s32.totalorder %s20, 0
      %p116 = por %p114, %p115
      %p117 = scmp.ne.s32.totalorder %s105, %s106
      %p118 = scmp.eq.s32.totalorder %s21, 3
      %p119 = por %p117, %p118
      %p121 = scmp.ne.s32.totalorder %s106, %s120
      %p122 = scmp.eq.s32.totalorder %s21, 0
      %p123 = por %p121, %p122
      %s125 = sadd.s32 %s124, 1
      %p128 = scmp.eq.s32.totalorder %s15, 3
      %p129 = scmp.ne.s32.totalorder %s124, %s126
      %p130 = scmp.eq.s32.totalorder %s15, 0
      %p131 = por %p129, %p130
      %p132 = scmp.ne.s32.totalorder %s124, %s126
      %p133 = scmp.eq.s32.totalorder %s20, 3
      %p134 = por %p132, %p133
      %p135 = scmp.ne.s32.totalorder %s126, %s127
      %p136 = scmp.eq.s32.totalorder %s20, 0
      %p137 = por %p135, %p136
      %p138 = scmp.ne.s32.totalorder %s126, %s127
      %p139 = scmp.eq.s32.totalorder %s21, 3
      %p140 = por %p138, %p139
      %p142 = scmp.ne.s32.totalorder %s127, %s141
      %p143 = scmp.eq.s32.totalorder %s21, 0
      %p144 = por %p142, %p143
      %s146 = sadd.s32 %s145, 1
      %p149 = scmp.eq.s32.totalorder %s15, 3
      %p150 = scmp.ne.s32.totalorder %s145, %s147
      %p151 = scmp.eq.s32.totalorder %s15, 0
      %p152 = por %p150, %p151
      %p153 = scmp.ne.s32.totalorder %s145, %s147
      %p154 = scmp.eq.s32.totalorder %s20, 3
      %p155 = por %p153, %p154
      %p156 = scmp.ne.s32.totalorder %s147, %s148
      %p157 = scmp.eq.s32.totalorder %s20, 0
      %p158 = por %p156, %p157
      %p159 = scmp.ne.s32.totalorder %s147, %s148
      %p160 = scmp.eq.s32.totalorder %s21, 3
      %p161 = por %p159, %p160
      %p163 = scmp.ne.s32.totalorder %s148, %s162
      %p164 = scmp.eq.s32.totalorder %s21, 0
      %p165 = por %p163, %p164
      %s167 = sadd.s32 %s166, 1
      %p170 = scmp.eq.s32.totalorder %s15, 3
      %p171 = scmp.ne.s32.totalorder %s166, %s168
      %p172 = scmp.eq.s32.totalorder %s15, 0
      %p173 = por %p171, %p172
      %p174 = scmp.ne.s32.totalorder %s166, %s168
      %p175 = scmp.eq.s32.totalorder %s20, 3
      %p176 = por %p174, %p175
      %p177 = scmp.ne.s32.totalorder %s168, %s169
      %p178 = scmp.eq.s32.totalorder %s20, 0
      %p179 = por %p177, %p178
      %p180 = scmp.ne.s32.totalorder %s168, %s169
      %p181 = scmp.eq.s32.totalorder %s21, 3
      %p182 = por %p180, %p181
      %p184 = scmp.ne.s32.totalorder %s169, %s183
      %p185 = scmp.eq.s32.totalorder %s21, 0
      %p186 = por %p184, %p185
      %s187 = ssub.s32 %s22, %s34
      %s188 = ssub.s32 %s23, %s30
      %s189 = sor.u32 %s187, %s188
      %p190 = scmp.eq.s32.totalorder %s189, 0
      %s192 = sadd.s32 %s191, 1
      %s193 = scalar_select %p190, %s191, %s192
      %p196 = pneg %p190
      %p197 = scmp.eq.s32.totalorder %s15, 3
      %p198 = por %p196, %p197
      %p199 = scmp.ne.s32.totalorder %s191, %s194
      %p200 = scmp.eq.s32.totalorder %s15, 0
      %p201 = por %p199, %p200
      %p202 = scmp.ne.s32.totalorder %s191, %s194
      %p203 = scmp.eq.s32.totalorder %s20, 3
      %p204 = por %p202, %p203
      %p205 = scmp.ne.s32.totalorder %s194, %s195
      %p206 = scmp.eq.s32.totalorder %s20, 0
      %p207 = por %p205, %p206
      %p208 = scmp.ne.s32.totalorder %s194, %s195
      %p209 = scmp.eq.s32.totalorder %s21, 3
      %p210 = por %p208, %p209
      %p212 = scmp.ne.s32.totalorder %s195, %s211
      %p213 = scmp.eq.s32.totalorder %s21, 0
      %p214 = por %p212, %p213
      %p215 = scmp.le.s32.totalorder 1, %s15
      %p216 = scmp.lt.s32.totalorder %s15, 5
      %p217 = pnand %p215, %p216
      %p218 = pneg %p217
      // Predicated region
      $region9: #{super_resolution_forward.1} parent=5 // pred_check
        _
      $region10: #{super_resolution_forward.1} parent=5 // pred_check_branch
        %220 = sbr.rel (%p217) target = $region12
      $region11: #{super_resolution_forward.1} parent=5 // pred_region
        %s221 = ssub.s32 %s15, 1
        // Predicated region
        $region13: #{super_resolution_forward.1} parent=11 // pred_check
          %p222 = pneg %p74
        $region14: #{super_resolution_forward.1} parent=11 // pred_check_branch
          %224 = sbr.rel (%p222) target = $region16
        $region15: #{super_resolution_forward.1} parent=11 // pred_region
          _
        $region16: #{super_resolution_forward.1} parent=11 // pred_fallthru
          _
        // Predicated region
        $region17: #{super_resolution_forward.1} parent=11 // pred_check
          %p225 = pneg %p95
        $region18: #{super_resolution_forward.1} parent=11 // pred_check_branch
          %227 = sbr.rel (%p225) target = $region20
        $region19: #{super_resolution_forward.1} parent=11 // pred_region
          %229 = vsyncadd [#allocation5], 0
          %s231 = sshll.u32 %s2, 4
          %s232 = int_to_ptr.hbm [resolvable:$true] %s231
          %s233 = sshll.u32 [#allocation4], 4
          %s234 = int_to_ptr.vmem [resolvable:$true] %s233
          %236 = dma.hbm_to_vmem [thread:$0]  %s232, 16, %s234, [#allocation5]
        $region20: #{super_resolution_forward.1} parent=11 // pred_fallthru
          _
        // Predicated region
        $region21: #{super_resolution_forward.1} parent=11 // pred_check
          %p237 = pneg %p116
        $region22: #{super_resolution_forward.1} parent=11 // pred_check_branch
          %239 = sbr.rel (%p237) target = $region24
        $region23: #{super_resolution_forward.1} parent=11 // pred_region
          _
        $region24: #{super_resolution_forward.1} parent=11 // pred_fallthru
          _
        // Predicated region
        $region25: #{super_resolution_forward.1} parent=11 // pred_check
          %p240 = pneg %p137
        $region26: #{super_resolution_forward.1} parent=11 // pred_check_branch
          %242 = sbr.rel (%p240) target = $region28
        $region27: #{super_resolution_forward.1} parent=11 // pred_region
          %244 = vsyncadd [#allocation7], 0
          %s246 = sshll.u32 %s4, 4
          %s247 = int_to_ptr.hbm [resolvable:$true] %s246
          %s248 = sshll.u32 [#allocation6], 4
          %s249 = int_to_ptr.vmem [resolvable:$true] %s248
          %251 = dma.hbm_to_vmem [thread:$0]  %s247, 16, %s249, [#allocation7]
        $region28: #{super_resolution_forward.1} parent=11 // pred_fallthru
          _
        // Predicated region
        $region29: #{super_resolution_forward.1} parent=11 // pred_check
          %p252 = pneg %p158
        $region30: #{super_resolution_forward.1} parent=11 // pred_check_branch
          %254 = sbr.rel (%p252) target = $region32
        $region31: #{super_resolution_forward.1} parent=11 // pred_region
          _
        $region32: #{super_resolution_forward.1} parent=11 // pred_fallthru
          _
        // Predicated region
        $region33: #{super_resolution_forward.1} parent=11 // pred_check
          %p255 = pneg %p179
        $region34: #{super_resolution_forward.1} parent=11 // pred_check_branch
          %257 = sbr.rel (%p255) target = $region36
        $region35: #{super_resolution_forward.1} parent=11 // pred_region
          %259 = vsyncadd [#allocation7], 0
          %s261 = sshll.u32 %s6, 4
          %s262 = int_to_ptr.hbm [resolvable:$true] %s261
          %s263 = sshll.u32 [#allocation8], 4
          %s264 = int_to_ptr.vmem [resolvable:$true] %s263
          %266 = dma.hbm_to_vmem [thread:$0]  %s262, 16, %s264, [#allocation7]
        $region36: #{super_resolution_forward.1} parent=11 // pred_fallthru
          _
      $region12: #{super_resolution_forward.1} parent=5 // pred_fallthru
        _
      %p267 = scmp.lt.s32.totalorder %s15, 4
      // Predicated region
      $region37: #{super_resolution_forward.1} parent=5 // pred_check
        %p268 = pneg %p267
      $region38: #{super_resolution_forward.1} parent=5 // pred_check_branch
        %270 = sbr.rel (%p268) target = $region40
      $region39: #{super_resolution_forward.1} parent=5 // pred_region
        // Predicated region
        $region41: #{super_resolution_forward.1} parent=39 // pred_check
          %p271 = pneg %p47
        $region42: #{super_resolution_forward.1} parent=39 // pred_check_branch
          %273 = sbr.rel (%p271) target = $region44
        $region43: #{super_resolution_forward.1} parent=39 // pred_region
          %p274 = scmp.lt.s32.totalorder %s22, 1
          %s275 = scalar_select %p274, %s22, 1
          %s276 = smul.addr %s275, 66
          %s277 = smul.addr %s276, 4
          %s278 = scalar_lea.vmem %s0, %s277
        $region44: #{super_resolution_forward.1} parent=39 // pred_fallthru
          _
      $region40: #{super_resolution_forward.1} parent=5 // pred_fallthru
        _
      %p279 = scmp.le.s32.totalorder 1, %s15
      %p280 = scmp.lt.s32.totalorder %s15, 5
      %p281 = pnand %p279, %p280
      %p282 = pneg %p281
      // Predicated region
      $region45: #{super_resolution_forward.1} parent=5 // pred_check
        _
      $region46: #{super_resolution_forward.1} parent=5 // pred_check_branch
        %284 = sbr.rel (%p281) target = $region48
      $region47: #{super_resolution_forward.1} parent=5 // pred_region
        %s285 = ssub.s32 %s15, 1
        // Predicated region
        $region49: #{super_resolution_forward.1} parent=47 // pred_check
          %p286 = pneg %p95
        $region50: #{super_resolution_forward.1} parent=47 // pred_check_branch
          %288 = sbr.rel (%p286) target = $region52
        $region51: #{super_resolution_forward.1} parent=47 // pred_region
          %290 = dma.done [#allocation5], 16
        $region52: #{super_resolution_forward.1} parent=47 // pred_fallthru
          _
        // Predicated region
        $region53: #{super_resolution_forward.1} parent=47 // pred_check
          %p291 = pneg %p137
        $region54: #{super_resolution_forward.1} parent=47 // pred_check_branch
          %293 = sbr.rel (%p291) target = $region56
        $region55: #{super_resolution_forward.1} parent=47 // pred_region
          %295 = dma.done [#allocation7], 16
        $region56: #{super_resolution_forward.1} parent=47 // pred_fallthru
          _
        // Predicated region
        $region57: #{super_resolution_forward.1} parent=47 // pred_check
          %p296 = pneg %p179
        $region58: #{super_resolution_forward.1} parent=47 // pred_check_branch
          %298 = sbr.rel (%p296) target = $region60
        $region59: #{super_resolution_forward.1} parent=47 // pred_region
          %300 = dma.done [#allocation7], 16
        $region60: #{super_resolution_forward.1} parent=47 // pred_fallthru
          _
        %p301 = scmp.lt.s32.totalorder %s24, 1
        %s302 = scalar_select %p301, %s24, 1
        %s303 = smul.addr %s302, 66
        %s304 = smul.addr %s303, 4
        %s305 = scalar_lea.vmem %s0, %s304
        %p306 = pneg %p53
        %p307 = pneg %p50
        %p308 = pneg %p74
        %p309 = pneg %p71
        %p310 = pneg %p95
        %p311 = pneg %p92
        %p312 = pneg %p116
        %p313 = pneg %p113
        %p314 = pneg %p137
        %p315 = pneg %p134
        %p316 = pneg %p158
        %p317 = pneg %p155
        %p318 = pneg %p179
        %p319 = pneg %p176
        %p320 = pneg %p207
        %p321 = pneg %p204
        %s322 = smul.u32 8, %s25
        %p323 = scmp.lt.s32.totalorder %s24, 1
        %s324 = scalar_select %p323, %s24, 1
        %p325 = scmp.lt.s32.totalorder %s322, 15
        %s326 = scalar_select %p325, %s322, 15
        %s327 = smul.addr %s326, 2
        %s328 = smul.addr %s324, 32
        %s329 = sadd.s32 %s327, %s328
        %s330 = smul.addr %s329, 8
        %s331 = scalar_lea.vmem %s7, %s330
        %p332 = scmp.lt.s32.totalorder %s24, 1
        %s333 = scalar_select %p332, %s24, 1
        %s334 = smul.addr %s333, 66
        %s335 = smul.addr %s334, 4
        %s336 = scalar_lea.vmem %s0, %s335
        %s337 = smul.u32 8, %s25
        %p338 = scmp.lt.s32.totalorder %s24, 1
        %s339 = scalar_select %p338, %s24, 1
        %p340 = scmp.lt.s32.totalorder %s337, 15
        %s341 = scalar_select %p340, %s337, 15
        %s342 = smul.addr %s341, 2
        %s343 = smul.addr %s339, 32
        %s344 = sadd.s32 %s342, %s343
        %s345 = smul.addr %s344, 8
        %s346 = scalar_lea.vmem %s7, %s345
        %s347 = smul.u32 8, %s25
        %s349 = smul.u32 %s25, 8
        %vm350 = vcmask 516096
        %vm351 = vsmask.f32 256
        %vm352 = vmand %vm350, %vm351
        %v353 = vld [vmem:[#allocation2] sm:$0x1]
        %v354 = vsel %vm352, 0, %v353
        %355 = vst [vmem:[#allocation2] sm:$0x1] %v354
        %v356 = vld [vmem:[#allocation2 + $0xc] sm:$0x1]
        %v357 = vsel %vm352, 0, %v356
        %358 = vst [vmem:[#allocation2 + $0xc] sm:$0x1] %v357
        %v359 = vld [vmem:[#allocation2 + $0x18] sm:$0x1]
        %v360 = vsel %vm352, 0, %v359
        %361 = vst [vmem:[#allocation2 + $0x18] sm:$0x1] %v360
        %v362 = vld [vmem:[#allocation2 + $0x24] sm:$0x1]
        %v363 = vsel %vm352, 0, %v362
        %364 = vst [vmem:[#allocation2 + $0x24] sm:$0x1] %v363
        %v365 = vld [vmem:[#allocation2 + $0x30] sm:$0x1]
        %v366 = vsel %vm352, 0, %v365
        %367 = vst [vmem:[#allocation2 + $0x30] sm:$0x1] %v366
        %v368 = vld [vmem:[#allocation2 + $0x3c] sm:$0x1]
        %v369 = vsel %vm352, 0, %v368
        %370 = vst [vmem:[#allocation2 + $0x3c] sm:$0x1] %v369
        %v371 = vld [vmem:[#allocation2 + $0x48] sm:$0x1]
        %v372 = vsel %vm352, 0, %v371
        %373 = vst [vmem:[#allocation2 + $0x48] sm:$0x1] %v372
        %v374 = vld [vmem:[#allocation2 + $0x54] sm:$0x1]
        %v375 = vsel %vm352, 0, %v374
        %376 = vst [vmem:[#allocation2 + $0x54] sm:$0x1] %v375
        %v377 = vld [vmem:[#allocation2 + $0x60] sm:$0x1]
        %v378 = vsel %vm352, 0, %v377
        %379 = vst [vmem:[#allocation2 + $0x60] sm:$0x1] %v378
        %v380 = vld [vmem:[#allocation2 + $0x6c] sm:$0x1]
        %v381 = vsel %vm352, 0, %v380
        %382 = vst [vmem:[#allocation2 + $0x6c] sm:$0x1] %v381
        %v383 = vld [vmem:[#allocation2 + $0x78] sm:$0x1]
        %v384 = vsel %vm352, 0, %v383
        %385 = vst [vmem:[#allocation2 + $0x78] sm:$0x1] %v384
        %v386 = vld [vmem:[#allocation2 + $0x84] sm:$0x1]
        %v387 = vsel %vm352, 0, %v386
        %388 = vst [vmem:[#allocation2 + $0x84] sm:$0x1] %v387
        %vm389 = vsmask.f32 7938
        %vm390 = vmand %vm350, %vm389
        %v391 = vld [vmem:[#allocation2 + $0x8] sm:$0x1]
        %v392 = vsel %vm390, 0, %v391
        %393 = vst [vmem:[#allocation2 + $0x8] sm:$0x1] %v392
        %v394 = vld [vmem:[#allocation2 + $0x14] sm:$0x1]
        %v395 = vsel %vm390, 0, %v394
        %396 = vst [vmem:[#allocation2 + $0x14] sm:$0x1] %v395
        %v397 = vld [vmem:[#allocation2 + $0x20] sm:$0x1]
        %v398 = vsel %vm390, 0, %v397
        %399 = vst [vmem:[#allocation2 + $0x20] sm:$0x1] %v398
        %v400 = vld [vmem:[#allocation2 + $0x2c] sm:$0x1]
        %v401 = vsel %vm390, 0, %v400
        %402 = vst [vmem:[#allocation2 + $0x2c] sm:$0x1] %v401
        %v403 = vld [vmem:[#allocation2 + $0x38] sm:$0x1]
        %v404 = vsel %vm390, 0, %v403
        %405 = vst [vmem:[#allocation2 + $0x38] sm:$0x1] %v404
        %v406 = vld [vmem:[#allocation2 + $0x44] sm:$0x1]
        %v407 = vsel %vm390, 0, %v406
        %408 = vst [vmem:[#allocation2 + $0x44] sm:$0x1] %v407
        %v409 = vld [vmem:[#allocation2 + $0x50] sm:$0x1]
        %v410 = vsel %vm390, 0, %v409
        %411 = vst [vmem:[#allocation2 + $0x50] sm:$0x1] %v410
        %v412 = vld [vmem:[#allocation2 + $0x5c] sm:$0x1]
        %v413 = vsel %vm390, 0, %v412
        %414 = vst [vmem:[#allocation2 + $0x5c] sm:$0x1] %v413
        %v415 = vld [vmem:[#allocation2 + $0x68] sm:$0x1]
        %v416 = vsel %vm390, 0, %v415
        %417 = vst [vmem:[#allocation2 + $0x68] sm:$0x1] %v416
        %v418 = vld [vmem:[#allocation2 + $0x74] sm:$0x1]
        %v419 = vsel %vm390, 0, %v418
        %420 = vst [vmem:[#allocation2 + $0x74] sm:$0x1] %v419
        %v421 = vld [vmem:[#allocation2 + $0x80] sm:$0x1]
        %v422 = vsel %vm390, 0, %v421
        %423 = vst [vmem:[#allocation2 + $0x80] sm:$0x1] %v422
        %v424 = vld [vmem:[#allocation2 + $0x8c] sm:$0x1]
        %v425 = vsel %vm390, 0, %v424
        %426 = vst [vmem:[#allocation2 + $0x8c] sm:$0x1] %v425
        %v427 = vld [vmem:[#allocation3] sm:$0x1]
        %v428 = vsel %vm352, 0, %v427
        %429 = vst [vmem:[#allocation3] sm:$0x1] %v428
        %v430 = vld [vmem:[#allocation3 + $0xc] sm:$0x1]
        %v431 = vsel %vm352, 0, %v430
        %432 = vst [vmem:[#allocation3 + $0xc] sm:$0x1] %v431
        %v433 = vld [vmem:[#allocation3 + $0x18] sm:$0x1]
        %v434 = vsel %vm352, 0, %v433
        %435 = vst [vmem:[#allocation3 + $0x18] sm:$0x1] %v434
        %v436 = vld [vmem:[#allocation3 + $0x24] sm:$0x1]
        %v437 = vsel %vm352, 0, %v436
        %438 = vst [vmem:[#allocation3 + $0x24] sm:$0x1] %v437
        %v439 = vld [vmem:[#allocation3 + $0x30] sm:$0x1]
        %v440 = vsel %vm352, 0, %v439
        %441 = vst [vmem:[#allocation3 + $0x30] sm:$0x1] %v440
        %v442 = vld [vmem:[#allocation3 + $0x3c] sm:$0x1]
        %v443 = vsel %vm352, 0, %v442
        %444 = vst [vmem:[#allocation3 + $0x3c] sm:$0x1] %v443
        %v445 = vld [vmem:[#allocation3 + $0x48] sm:$0x1]
        %v446 = vsel %vm352, 0, %v445
        %447 = vst [vmem:[#allocation3 + $0x48] sm:$0x1] %v446
        %v448 = vld [vmem:[#allocation3 + $0x54] sm:$0x1]
        %v449 = vsel %vm352, 0, %v448
        %450 = vst [vmem:[#allocation3 + $0x54] sm:$0x1] %v449
        %v451 = vld [vmem:[#allocation3 + $0x60] sm:$0x1]
        %v452 = vsel %vm352, 0, %v451
        %453 = vst [vmem:[#allocation3 + $0x60] sm:$0x1] %v452
        %v454 = vld [vmem:[#allocation3 + $0x6c] sm:$0x1]
        %v455 = vsel %vm352, 0, %v454
        %456 = vst [vmem:[#allocation3 + $0x6c] sm:$0x1] %v455
        %v457 = vld [vmem:[#allocation3 + $0x8] sm:$0x1]
        %v458 = vsel %vm390, 0, %v457
        %459 = vst [vmem:[#allocation3 + $0x8] sm:$0x1] %v458
        %v460 = vld [vmem:[#allocation3 + $0x14] sm:$0x1]
        %v461 = vsel %vm390, 0, %v460
        %462 = vst [vmem:[#allocation3 + $0x14] sm:$0x1] %v461
        %v463 = vld [vmem:[#allocation3 + $0x20] sm:$0x1]
        %v464 = vsel %vm390, 0, %v463
        %465 = vst [vmem:[#allocation3 + $0x20] sm:$0x1] %v464
        %v466 = vld [vmem:[#allocation3 + $0x2c] sm:$0x1]
        %v467 = vsel %vm390, 0, %v466
        %468 = vst [vmem:[#allocation3 + $0x2c] sm:$0x1] %v467
        %v469 = vld [vmem:[#allocation3 + $0x38] sm:$0x1]
        %v470 = vsel %vm390, 0, %v469
        %471 = vst [vmem:[#allocation3 + $0x38] sm:$0x1] %v470
        %v472 = vld [vmem:[#allocation3 + $0x44] sm:$0x1]
        %v473 = vsel %vm390, 0, %v472
        %474 = vst [vmem:[#allocation3 + $0x44] sm:$0x1] %v473
        %v475 = vld [vmem:[#allocation3 + $0x50] sm:$0x1]
        %v476 = vsel %vm390, 0, %v475
        %477 = vst [vmem:[#allocation3 + $0x50] sm:$0x1] %v476
        %v478 = vld [vmem:[#allocation3 + $0x5c] sm:$0x1]
        %v479 = vsel %vm390, 0, %v478
        %480 = vst [vmem:[#allocation3 + $0x5c] sm:$0x1] %v479
        %v481 = vld [vmem:[#allocation3 + $0x68] sm:$0x1]
        %v482 = vsel %vm390, 0, %v481
        %483 = vst [vmem:[#allocation3 + $0x68] sm:$0x1] %v482
        %v484 = vld [vmem:[#allocation3 + $0x74] sm:$0x1]
        %v485 = vsel %vm390, 0, %v484
        %486 = vst [vmem:[#allocation3 + $0x74] sm:$0x1] %v485
        %s487 = smul.u32 %s349, 3
        %s488 = smul.addr %s487, 4
        %s489 = scalar_lea.vmem %s336, %s488
        %v490 = vld [vmem:[%s489] sm:$0xf]
        %v491 = vld [vmem:[%s489 + $0x4] sm:$0xf]
        %v492 = vld [vmem:[%s489 + $0xc] sm:$0xf]
        %v493 = vld [vmem:[%s489 + $0x10] sm:$0xf]
        %v494 = vld [vmem:[%s489 + $0x18] sm:$0xf]
        %v495 = vld [vmem:[%s489 + $0x1c] sm:$0xf]
        %v496 = vld [vmem:[%s489 + $0x24] sm:$0xf]
        %v497 = vld [vmem:[%s489 + $0x28] sm:$0xf]
        %v498 = vld [vmem:[%s489 + $0x30] sm:$0xf]
        %v499 = vld [vmem:[%s489 + $0x34] sm:$0xf]
        %v500 = vld [vmem:[%s489 + $0x3c] sm:$0xf]
        %v501 = vld [vmem:[%s489 + $0x40] sm:$0xf]
        %v502 = vld [vmem:[%s489 + $0x48] sm:$0xf]
        %v503 = vld [vmem:[%s489 + $0x4c] sm:$0xf]
        %v504 = vld [vmem:[%s489 + $0x54] sm:$0xf]
        %v505 = vld [vmem:[%s489 + $0x58] sm:$0xf]
        %v506 = vld [vmem:[%s489 + $0x60] sm:$0xf]
        %v507 = vld [vmem:[%s489 + $0x64] sm:$0xf]
        %v508 = vld [vmem:[%s489 + $0x6c] sm:$0xf]
        %v509 = vld [vmem:[%s489 + $0x70] sm:$0xf]
        %v510 = vld [vmem:[%s489 + $0x78] sm:$0xf]
        %v511 = vld [vmem:[%s489 + $0x7c] sm:$0xf]
        %v512 = vld [vmem:[%s489 + $0x84] sm:$0xf]
        %v513 = vld [vmem:[%s489 + $0x88] sm:$0xf]
        %v514 = vld [vmem:[%s1] sm:$0x3]
        %v515 = vld [vmem:[%s489 + $0x8] sm:$0x1]
        %v516 = vld [vmem:[%s489 + $0x14] sm:$0x1]
        %v517 = vld [vmem:[%s489 + $0x20] sm:$0x1]
        %v518 = vld [vmem:[%s489 + $0x2c] sm:$0x1]
        %v519 = vld [vmem:[%s489 + $0x38] sm:$0x1]
        %v520 = vld [vmem:[%s489 + $0x44] sm:$0x1]
        %v521 = vld [vmem:[%s489 + $0x50] sm:$0x1]
        %v522 = vld [vmem:[%s489 + $0x5c] sm:$0x1]
        %v523 = vld [vmem:[%s489 + $0x68] sm:$0x1]
        %v524 = vld [vmem:[%s489 + $0x74] sm:$0x1]
        %v525 = vld [vmem:[%s489 + $0x80] sm:$0x1]
        %v526 = vld [vmem:[%s489 + $0x8c] sm:$0x1]
        %vm527 = vsmask.f32 3328
        %vm528 = vsmask.f32 7440
        %vm529 = vmor %vm527, %vm528
        %v531 = vshrl.u32 %v490, 16
        %v533 = vrot.slane %v531, 4
        %v534 = vshll.u32 %v490, 16
        %v536 = vrot.slane %v534, 5
        %v537 = vor.u32 %v533, %v536
        %v538 = vrot.slane %v537, 4
        %v540 = vshll.u32 %v491, 16
        %v542 = vrot.slane %v540, 5
        %v543 = vsel %vm529, %v538, %v542
        %v544 = vshrl.u32 %v491, 16
        %v546 = vrot.slane %v544, 4
        %v547 = vor.u32 %v546, %v542
        %v548 = vrot.slane %v547, 4
        %v550 = vshll.u32 %v515, 16
        %v552 = vrot.slane %v550, 5
        %v553 = vsel %vm529, %v548, %v552
        %v555 = vshrl.u32 %v492, 16
        %v557 = vrot.slane %v555, 4
        %v558 = vshll.u32 %v492, 16
        %v560 = vrot.slane %v558, 5
        %v561 = vor.u32 %v557, %v560
        %v562 = vrot.slane %v561, 4
        %v564 = vshll.u32 %v493, 16
        %v566 = vrot.slane %v564, 5
        %v567 = vsel %vm529, %v562, %v566
        %v568 = vshrl.u32 %v493, 16
        %v570 = vrot.slane %v568, 4
        %v571 = vor.u32 %v570, %v566
        %v572 = vrot.slane %v571, 4
        %v574 = vshll.u32 %v516, 16
        %v576 = vrot.slane %v574, 5
        %v577 = vsel %vm529, %v572, %v576
        %v579 = vshrl.u32 %v494, 16
        %v581 = vrot.slane %v579, 4
        %v582 = vshll.u32 %v494, 16
        %v584 = vrot.slane %v582, 5
        %v585 = vor.u32 %v581, %v584
        %v586 = vrot.slane %v585, 4
        %v588 = vshll.u32 %v495, 16
        %v590 = vrot.slane %v588, 5
        %v591 = vsel %vm529, %v586, %v590
        %v592 = vshrl.u32 %v495, 16
        %v594 = vrot.slane %v592, 4
        %v595 = vor.u32 %v594, %v590
        %v596 = vrot.slane %v595, 4
        %v598 = vshll.u32 %v517, 16
        %v600 = vrot.slane %v598, 5
        %v601 = vsel %vm529, %v596, %v600
        %v603 = vshrl.u32 %v496, 16
        %v605 = vrot.slane %v603, 4
        %v606 = vshll.u32 %v496, 16
        %v608 = vrot.slane %v606, 5
        %v609 = vor.u32 %v605, %v608
        %v610 = vrot.slane %v609, 4
        %v612 = vshll.u32 %v497, 16
        %v614 = vrot.slane %v612, 5
        %v615 = vsel %vm529, %v610, %v614
        %v616 = vshrl.u32 %v497, 16
        %v618 = vrot.slane %v616, 4
        %v619 = vor.u32 %v618, %v614
        %v620 = vrot.slane %v619, 4
        %v622 = vshll.u32 %v518, 16
        %v624 = vrot.slane %v622, 5
        %v625 = vsel %vm529, %v620, %v624
        %v627 = vshrl.u32 %v498, 16
        %v629 = vrot.slane %v627, 4
        %v630 = vshll.u32 %v498, 16
        %v632 = vrot.slane %v630, 5
        %v633 = vor.u32 %v629, %v632
        %v634 = vrot.slane %v633, 4
        %v636 = vshll.u32 %v499, 16
        %v638 = vrot.slane %v636, 5
        %v639 = vsel %vm529, %v634, %v638
        %v640 = vshrl.u32 %v499, 16
        %v642 = vrot.slane %v640, 4
        %v643 = vor.u32 %v642, %v638
        %v644 = vrot.slane %v643, 4
        %v646 = vshll.u32 %v519, 16
        %v648 = vrot.slane %v646, 5
        %v649 = vsel %vm529, %v644, %v648
        %v651 = vshrl.u32 %v500, 16
        %v653 = vrot.slane %v651, 4
        %v654 = vshll.u32 %v500, 16
        %v656 = vrot.slane %v654, 5
        %v657 = vor.u32 %v653, %v656
        %v658 = vrot.slane %v657, 4
        %v660 = vshll.u32 %v501, 16
        %v662 = vrot.slane %v660, 5
        %v663 = vsel %vm529, %v658, %v662
        %v664 = vshrl.u32 %v501, 16
        %v666 = vrot.slane %v664, 4
        %v667 = vor.u32 %v666, %v662
        %v668 = vrot.slane %v667, 4
        %v670 = vshll.u32 %v520, 16
        %v672 = vrot.slane %v670, 5
        %v673 = vsel %vm529, %v668, %v672
        %v675 = vshrl.u32 %v502, 16
        %v677 = vrot.slane %v675, 4
        %v678 = vshll.u32 %v502, 16
        %v680 = vrot.slane %v678, 5
        %v681 = vor.u32 %v677, %v680
        %v682 = vrot.slane %v681, 4
        %v684 = vshll.u32 %v503, 16
        %v686 = vrot.slane %v684, 5
        %v687 = vsel %vm529, %v682, %v686
        %v688 = vshrl.u32 %v503, 16
        %v690 = vrot.slane %v688, 4
        %v691 = vor.u32 %v690, %v686
        %v692 = vrot.slane %v691, 4
        %v694 = vshll.u32 %v521, 16
        %v696 = vrot.slane %v694, 5
        %v697 = vsel %vm529, %v692, %v696
        %v699 = vshrl.u32 %v504, 16
        %v701 = vrot.slane %v699, 4
        %v702 = vshll.u32 %v504, 16
        %v704 = vrot.slane %v702, 5
        %v705 = vor.u32 %v701, %v704
        %v706 = vrot.slane %v705, 4
        %v708 = vshll.u32 %v505, 16
        %v710 = vrot.slane %v708, 5
        %v711 = vsel %vm529, %v706, %v710
        %v712 = vshrl.u32 %v505, 16
        %v714 = vrot.slane %v712, 4
        %v715 = vor.u32 %v714, %v710
        %v716 = vrot.slane %v715, 4
        %v718 = vshll.u32 %v522, 16
        %v720 = vrot.slane %v718, 5
        %v721 = vsel %vm529, %v716, %v720
        %v723 = vshrl.u32 %v506, 16
        %v725 = vrot.slane %v723, 4
        %v726 = vshll.u32 %v506, 16
        %v728 = vrot.slane %v726, 5
        %v729 = vor.u32 %v725, %v728
        %v730 = vrot.slane %v729, 4
        %v732 = vshll.u32 %v507, 16
        %v734 = vrot.slane %v732, 5
        %v735 = vsel %vm529, %v730, %v734
        %v736 = vshrl.u32 %v507, 16
        %v738 = vrot.slane %v736, 4
        %v739 = vor.u32 %v738, %v734
        %v740 = vrot.slane %v739, 4
        %v742 = vshll.u32 %v523, 16
        %v744 = vrot.slane %v742, 5
        %v745 = vsel %vm529, %v740, %v744
        %v747 = vshrl.u32 %v508, 16
        %v749 = vrot.slane %v747, 4
        %v750 = vshll.u32 %v508, 16
        %v752 = vrot.slane %v750, 5
        %v753 = vor.u32 %v749, %v752
        %v754 = vrot.slane %v753, 4
        %v756 = vshll.u32 %v509, 16
        %v758 = vrot.slane %v756, 5
        %v759 = vsel %vm529, %v754, %v758
        %v760 = vshrl.u32 %v509, 16
        %v762 = vrot.slane %v760, 4
        %v763 = vor.u32 %v762, %v758
        %v764 = vrot.slane %v763, 4
        %v766 = vshll.u32 %v524, 16
        %v768 = vrot.slane %v766, 5
        %v769 = vsel %vm529, %v764, %v768
        %v771 = vshrl.u32 %v510, 16
        %v773 = vrot.slane %v771, 4
        %v774 = vshll.u32 %v510, 16
        %v776 = vrot.slane %v774, 5
        %v777 = vor.u32 %v773, %v776
        %v778 = vrot.slane %v777, 4
        %v780 = vshll.u32 %v511, 16
        %v782 = vrot.slane %v780, 5
        %v783 = vsel %vm529, %v778, %v782
        %v784 = vshrl.u32 %v511, 16
        %v786 = vrot.slane %v784, 4
        %v787 = vor.u32 %v786, %v782
        %v788 = vrot.slane %v787, 4
        %v790 = vshll.u32 %v525, 16
        %v792 = vrot.slane %v790, 5
        %v793 = vsel %vm529, %v788, %v792
        %v795 = vshrl.u32 %v512, 16
        %v797 = vrot.slane %v795, 4
        %v798 = vshll.u32 %v512, 16
        %v800 = vrot.slane %v798, 5
        %v801 = vor.u32 %v797, %v800
        %v802 = vrot.slane %v801, 4
        %v804 = vshll.u32 %v513, 16
        %v806 = vrot.slane %v804, 5
        %v807 = vsel %vm529, %v802, %v806
        %v808 = vshrl.u32 %v513, 16
        %v810 = vrot.slane %v808, 4
        %v811 = vor.u32 %v810, %v806
        %v812 = vrot.slane %v811, 4
        %v814 = vshll.u32 %v526, 16
        %v816 = vrot.slane %v814, 5
        %v817 = vsel %vm529, %v812, %v816
        %s818 = scalar_lea.vmem %s1, 2
        %v819 = vld [vmem:[%s818] sm:$0x3]
        %v820 = vunpack.c.l.b16 %v543
        %v821 = vunpack.c.l.b16 %v553
        %v822 = vunpack.c.l.b16 %v567
        %v823 = vunpack.c.l.b16 %v577
        %v824 = vunpack.c.l.b16 %v591
        %v825 = vunpack.c.l.b16 %v601
        %v826 = vunpack.c.l.b16 %v615
        %v827 = vunpack.c.l.b16 %v625
        %v828 = vunpack.c.l.b16 %v639
        %v829 = vunpack.c.l.b16 %v649
        %v830 = vunpack.c.l.b16 %v663
        %v831 = vunpack.c.l.b16 %v673
        %v832 = vunpack.c.l.b16 %v687
        %v833 = vunpack.c.l.b16 %v697
        %v834 = vunpack.c.l.b16 %v711
        %v835 = vunpack.c.l.b16 %v721
        %v836 = vunpack.c.l.b16 %v735
        %v837 = vunpack.c.l.b16 %v745
        %v838 = vunpack.c.l.b16 %v759
        %v839 = vunpack.c.l.b16 %v769
        %v840 = vunpack.c.l.b16 %v783
        %v841 = vunpack.c.l.b16 %v793
        %v842 = vunpack.c.l.b16 %v807
        %v843 = vunpack.c.l.b16 %v817
        %v844 = vpack.c.b16 %v821, %v820
        %v845 = vpack.c.b16 %v823, %v822
        %v846 = vpack.c.b16 %v825, %v824
        %v847 = vpack.c.b16 %v827, %v826
        %v848 = vpack.c.b16 %v829, %v828
        %v849 = vpack.c.b16 %v831, %v830
        %v850 = vpack.c.b16 %v833, %v832
        %v851 = vpack.c.b16 %v835, %v834
        %v852 = vpack.c.b16 %v837, %v836
        %v853 = vpack.c.b16 %v839, %v838
        %v854 = vpack.c.b16 %v841, %v840
        %v855 = vpack.c.b16 %v843, %v842
        %vm856 = vcmask 23552
        %v858 = vsel %vm856, %v844, 0
        %v861 = vsel %vm856, %v845, 0
        %v864 = vsel %vm856, %v846, 0
        %v867 = vsel %vm856, %v847, 0
        %v870 = vsel %vm856, %v848, 0
        %v873 = vsel %vm856, %v849, 0
        %v876 = vsel %vm856, %v850, 0
        %v879 = vsel %vm856, %v851, 0
        %v882 = vsel %vm856, %v852, 0
        %v885 = vsel %vm856, %v853, 0
        %v888 = vsel %vm856, %v854, 0
        %v891 = vsel %vm856, %v855, 0
        %vm893 = vcmask 1040384
        %vm894 = vcmask 1041408
        %v895 = vsel %vm893, 4294967295, 65535
        %v896 = vsel %vm894, %v895, 0
        %v898 = vand.u32 %v819, %v896
        %900 = vmatpush.bf16.msra.mxu0 0
        %901 = vmatpush.bf16.msra.mxu0 0
        %902 = vmatpush.bf16.msra.mxu0 0
        %903 = vmatpush.bf16.msra.mxu0 0
        %904 = vmatpush.bf16.msra.mxu0 0
        %905 = vmatpush.bf16.msra.mxu0 0
        %906 = vmatpush.bf16.msra.mxu0 0
        %907 = vmatpush.bf16.msra.mxu0 %v898
        %908 = vmatmul.bf16.gmra.mxu0 %v858
        %v909 = vpop.f32.mrf.mxu0
        %v910 = vadd.f32 0.0, %v909
        %v911 = vpop.f32.mrf.mxu0
        %v912 = vadd.f32 0.0, %v911
        %913 = vmatmul.bf16.gmra.mxu0 %v861
        %v914 = vpop.f32.mrf.mxu0
        %v915 = vadd.f32 0.0, %v914
        %v916 = vpop.f32.mrf.mxu0
        %v917 = vadd.f32 0.0, %v916
        %918 = vmatmul.bf16.gmra.mxu0 %v864
        %v919 = vpop.f32.mrf.mxu0
        %v920 = vadd.f32 0.0, %v919
        %v921 = vpop.f32.mrf.mxu0
        %v922 = vadd.f32 0.0, %v921
        %923 = vmatmul.bf16.gmra.mxu0 %v867
        %v924 = vpop.f32.mrf.mxu0
        %v925 = vadd.f32 0.0, %v924
        %v926 = vpop.f32.mrf.mxu0
        %v927 = vadd.f32 0.0, %v926
        %928 = vmatmul.bf16.gmra.mxu0 %v870
        %v929 = vpop.f32.mrf.mxu0
        %v930 = vadd.f32 0.0, %v929
        %v931 = vpop.f32.mrf.mxu0
        %v932 = vadd.f32 0.0, %v931
        %933 = vmatmul.bf16.gmra.mxu0 %v873
        %v934 = vpop.f32.mrf.mxu0
        %v935 = vadd.f32 0.0, %v934
        %v936 = vpop.f32.mrf.mxu0
        %v937 = vadd.f32 0.0, %v936
        %938 = vmatmul.bf16.gmra.mxu0 %v876
        %v939 = vpop.f32.mrf.mxu0
        %v940 = vadd.f32 0.0, %v939
        %v941 = vpop.f32.mrf.mxu0
        %v942 = vadd.f32 0.0, %v941
        %943 = vmatmul.bf16.gmra.mxu0 %v879
        %v944 = vpop.f32.mrf.mxu0
        %v945 = vadd.f32 0.0, %v944
        %v946 = vpop.f32.mrf.mxu0
        %v947 = vadd.f32 0.0, %v946
        %948 = vmatmul.bf16.gmra.mxu0 %v882
        %v949 = vpop.f32.mrf.mxu0
        %v950 = vadd.f32 0.0, %v949
        %v951 = vpop.f32.mrf.mxu0
        %v952 = vadd.f32 0.0, %v951
        %953 = vmatmul.bf16.gmra.mxu0 %v885
        %v954 = vpop.f32.mrf.mxu0
        %v955 = vadd.f32 0.0, %v954
        %v956 = vpop.f32.mrf.mxu0
        %v957 = vadd.f32 0.0, %v956
        %958 = vmatmul.bf16.gmra.mxu0 %v888
        %v959 = vpop.f32.mrf.mxu0
        %v960 = vadd.f32 0.0, %v959
        %v961 = vpop.f32.mrf.mxu0
        %v962 = vadd.f32 0.0, %v961
        %963 = vmatmul.bf16.gmra.mxu0 %v891
        %v964 = vpop.f32.mrf.mxu0
        %v965 = vadd.f32 0.0, %v964
        %v966 = vpop.f32.mrf.mxu0
        %v967 = vadd.f32 0.0, %v966
        %968 = vdwg.mxu0
        %v993 = vunpack.c.l.b16 %v490
        %v994 = vunpack.c.l.b16 %v491
        %v995 = vunpack.c.l.b16 %v492
        %v996 = vunpack.c.l.b16 %v493
        %v997 = vunpack.c.l.b16 %v494
        %v998 = vunpack.c.l.b16 %v495
        %v999 = vunpack.c.l.b16 %v496
        %v1000 = vunpack.c.l.b16 %v497
        %v1001 = vunpack.c.l.b16 %v498
        %v1002 = vunpack.c.l.b16 %v499
        %v1003 = vunpack.c.l.b16 %v500
        %v1004 = vunpack.c.l.b16 %v501
        %v1005 = vunpack.c.l.b16 %v502
        %v1006 = vunpack.c.l.b16 %v503
        %v1007 = vunpack.c.l.b16 %v504
        %v1008 = vunpack.c.l.b16 %v505
        %v1009 = vunpack.c.l.b16 %v506
        %v1010 = vunpack.c.l.b16 %v507
        %v1011 = vunpack.c.l.b16 %v508
        %v1012 = vunpack.c.l.b16 %v509
        %v1013 = vunpack.c.l.b16 %v510
        %v1014 = vunpack.c.l.b16 %v511
        %v1015 = vunpack.c.l.b16 %v512
        %v1016 = vunpack.c.l.b16 %v513
        %v1017 = vpack.c.b16 %v994, %v993
        %v1018 = vpack.c.b16 %v996, %v995
        %v1019 = vpack.c.b16 %v998, %v997
        %v1020 = vpack.c.b16 %v1000, %v999
        %v1021 = vpack.c.b16 %v1002, %v1001
        %v1022 = vpack.c.b16 %v1004, %v1003
        %v1023 = vpack.c.b16 %v1006, %v1005
        %v1024 = vpack.c.b16 %v1008, %v1007
        %v1025 = vpack.c.b16 %v1010, %v1009
        %v1026 = vpack.c.b16 %v1012, %v1011
        %v1027 = vpack.c.b16 %v1014, %v1013
        %v1028 = vpack.c.b16 %v1016, %v1015
        %v1030 = vsel %vm856, %v1017, 0
        %v1033 = vsel %vm856, %v1018, 0
        %v1036 = vsel %vm856, %v1019, 0
        %v1039 = vsel %vm856, %v1020, 0
        %v1042 = vsel %vm856, %v1021, 0
        %v1045 = vsel %vm856, %v1022, 0
        %v1048 = vsel %vm856, %v1023, 0
        %v1051 = vsel %vm856, %v1024, 0
        %v1054 = vsel %vm856, %v1025, 0
        %v1057 = vsel %vm856, %v1026, 0
        %v1060 = vsel %vm856, %v1027, 0
        %v1063 = vsel %vm856, %v1028, 0
        %v1066 = vand.u32 %v514, %v896
        %1068 = vmatpush.bf16.msra.mxu0 0
        %1069 = vmatpush.bf16.msra.mxu0 0
        %1070 = vmatpush.bf16.msra.mxu0 0
        %1071 = vmatpush.bf16.msra.mxu0 0
        %1072 = vmatpush.bf16.msra.mxu0 0
        %1073 = vmatpush.bf16.msra.mxu0 0
        %1074 = vmatpush.bf16.msra.mxu0 0
        %1075 = vmatpush.bf16.msra.mxu0 %v1066
        %1076 = vmatmul.bf16.gmra.mxu0 %v1030
        %v1077 = vpop.f32.mrf.mxu0
        %v1078 = vadd.f32 %v910, %v1077
        %v1079 = vpop.f32.mrf.mxu0
        %v1080 = vadd.f32 %v912, %v1079
        %1081 = vmatmul.bf16.gmra.mxu0 %v1033
        %v1082 = vpop.f32.mrf.mxu0
        %v1083 = vadd.f32 %v915, %v1082
        %v1084 = vpop.f32.mrf.mxu0
        %v1085 = vadd.f32 %v917, %v1084
        %1086 = vmatmul.bf16.gmra.mxu0 %v1036
        %v1087 = vpop.f32.mrf.mxu0
        %v1088 = vadd.f32 %v920, %v1087
        %v1089 = vpop.f32.mrf.mxu0
        %v1090 = vadd.f32 %v922, %v1089
        %1091 = vmatmul.bf16.gmra.mxu0 %v1039
        %v1092 = vpop.f32.mrf.mxu0
        %v1093 = vadd.f32 %v925, %v1092
        %v1094 = vpop.f32.mrf.mxu0
        %v1095 = vadd.f32 %v927, %v1094
        %1096 = vmatmul.bf16.gmra.mxu0 %v1042
        %v1097 = vpop.f32.mrf.mxu0
        %v1098 = vadd.f32 %v930, %v1097
        %v1099 = vpop.f32.mrf.mxu0
        %v1100 = vadd.f32 %v932, %v1099
        %1101 = vmatmul.bf16.gmra.mxu0 %v1045
        %v1102 = vpop.f32.mrf.mxu0
        %v1103 = vadd.f32 %v935, %v1102
        %v1104 = vpop.f32.mrf.mxu0
        %v1105 = vadd.f32 %v937, %v1104
        %1106 = vmatmul.bf16.gmra.mxu0 %v1048
        %v1107 = vpop.f32.mrf.mxu0
        %v1108 = vadd.f32 %v940, %v1107
        %v1109 = vpop.f32.mrf.mxu0
        %v1110 = vadd.f32 %v942, %v1109
        %1111 = vmatmul.bf16.gmra.mxu0 %v1051
        %v1112 = vpop.f32.mrf.mxu0
        %v1113 = vadd.f32 %v945, %v1112
        %v1114 = vpop.f32.mrf.mxu0
        %v1115 = vadd.f32 %v947, %v1114
        %1116 = vmatmul.bf16.gmra.mxu0 %v1054
        %v1117 = vpop.f32.mrf.mxu0
        %v1118 = vadd.f32 %v950, %v1117
        %v1119 = vpop.f32.mrf.mxu0
        %v1120 = vadd.f32 %v952, %v1119
        %1121 = vmatmul.bf16.gmra.mxu0 %v1057
        %v1122 = vpop.f32.mrf.mxu0
        %v1123 = vadd.f32 %v955, %v1122
        %v1124 = vpop.f32.mrf.mxu0
        %v1125 = vadd.f32 %v957, %v1124
        %1126 = vmatmul.bf16.gmra.mxu0 %v1060
        %v1127 = vpop.f32.mrf.mxu0
        %v1128 = vadd.f32 %v960, %v1127
        %v1129 = vpop.f32.mrf.mxu0
        %v1130 = vadd.f32 %v962, %v1129
        %1131 = vmatmul.bf16.gmra.mxu0 %v1063
        %v1132 = vpop.f32.mrf.mxu0
        %v1133 = vadd.f32 %v965, %v1132
        %v1134 = vpop.f32.mrf.mxu0
        %v1135 = vadd.f32 %v967, %v1134
        %1136 = vdwg.mxu0
        %v1137 = vld [vmem:[%s489] sm:$0xe]
        %v1138 = vld [vmem:[%s489 + $0xc] sm:$0xe]
        %v1139 = vld [vmem:[%s489 + $0x18] sm:$0xe]
        %v1140 = vld [vmem:[%s489 + $0x24] sm:$0xe]
        %v1141 = vld [vmem:[%s489 + $0x30] sm:$0xe]
        %v1142 = vld [vmem:[%s489 + $0x3c] sm:$0xe]
        %v1143 = vld [vmem:[%s489 + $0x48] sm:$0xe]
        %v1144 = vld [vmem:[%s489 + $0x54] sm:$0xe]
        %v1145 = vld [vmem:[%s489 + $0x60] sm:$0xe]
        %v1146 = vld [vmem:[%s489 + $0x6c] sm:$0xe]
        %v1147 = vld [vmem:[%s489 + $0x78] sm:$0xe]
        %v1148 = vld [vmem:[%s489 + $0x84] sm:$0xe]
        %vm1173 = vcmask 1042432
        %vm1174 = vcmask 1046532
        %vm1175 = vmor %vm1173, %vm1174
        %v1176 = vrot.slane %v1137, 5
        %v1177 = vrot.slane %v1176, 4
        %v1178 = vrot.slane %v491, 5
        %v1179 = vsel %vm1175, %v1177, %v1178
        %v1180 = vrot.slane %v1178, 4
        %v1181 = vrot.slane %v515, 5
        %v1182 = vsel %vm1175, %v1180, %v1181
        %v1183 = vrot.slane %v1138, 5
        %v1184 = vrot.slane %v1183, 4
        %v1185 = vrot.slane %v493, 5
        %v1186 = vsel %vm1175, %v1184, %v1185
        %v1187 = vrot.slane %v1185, 4
        %v1188 = vrot.slane %v516, 5
        %v1189 = vsel %vm1175, %v1187, %v1188
        %v1190 = vrot.slane %v1139, 5
        %v1191 = vrot.slane %v1190, 4
        %v1192 = vrot.slane %v495, 5
        %v1193 = vsel %vm1175, %v1191, %v1192
        %v1194 = vrot.slane %v1192, 4
        %v1195 = vrot.slane %v517, 5
        %v1196 = vsel %vm1175, %v1194, %v1195
        %v1197 = vrot.slane %v1140, 5
        %v1198 = vrot.slane %v1197, 4
        %v1199 = vrot.slane %v497, 5
        %v1200 = vsel %vm1175, %v1198, %v1199
        %v1201 = vrot.slane %v1199, 4
        %v1202 = vrot.slane %v518, 5
        %v1203 = vsel %vm1175, %v1201, %v1202
        %v1204 = vrot.slane %v1141, 5
        %v1205 = vrot.slane %v1204, 4
        %v1206 = vrot.slane %v499, 5
        %v1207 = vsel %vm1175, %v1205, %v1206
        %v1208 = vrot.slane %v1206, 4
        %v1209 = vrot.slane %v519, 5
        %v1210 = vsel %vm1175, %v1208, %v1209
        %v1211 = vrot.slane %v1142, 5
        %v1212 = vrot.slane %v1211, 4
        %v1213 = vrot.slane %v501, 5
        %v1214 = vsel %vm1175, %v1212, %v1213
        %v1215 = vrot.slane %v1213, 4
        %v1216 = vrot.slane %v520, 5
        %v1217 = vsel %vm1175, %v1215, %v1216
        %v1218 = vrot.slane %v1143, 5
        %v1219 = vrot.slane %v1218, 4
        %v1220 = vrot.slane %v503, 5
        %v1221 = vsel %vm1175, %v1219, %v1220
        %v1222 = vrot.slane %v1220, 4
        %v1223 = vrot.slane %v521, 5
        %v1224 = vsel %vm1175, %v1222, %v1223
        %v1225 = vrot.slane %v1144, 5
        %v1226 = vrot.slane %v1225, 4
        %v1227 = vrot.slane %v505, 5
        %v1228 = vsel %vm1175, %v1226, %v1227
        %v1229 = vrot.slane %v1227, 4
        %v1230 = vrot.slane %v522, 5
        %v1231 = vsel %vm1175, %v1229, %v1230
        %v1232 = vrot.slane %v1145, 5
        %v1233 = vrot.slane %v1232, 4
        %v1234 = vrot.slane %v507, 5
        %v1235 = vsel %vm1175, %v1233, %v1234
        %v1236 = vrot.slane %v1234, 4
        %v1237 = vrot.slane %v523, 5
        %v1238 = vsel %vm1175, %v1236, %v1237
        %v1239 = vrot.slane %v1146, 5
        %v1240 = vrot.slane %v1239, 4
        %v1241 = vrot.slane %v509, 5
        %v1242 = vsel %vm1175, %v1240, %v1241
        %v1243 = vrot.slane %v1241, 4
        %v1244 = vrot.slane %v524, 5
        %v1245 = vsel %vm1175, %v1243, %v1244
        %v1246 = vrot.slane %v1147, 5
        %v1247 = vrot.slane %v1246, 4
        %v1248 = vrot.slane %v511, 5
        %v1249 = vsel %vm1175, %v1247, %v1248
        %v1250 = vrot.slane %v1248, 4
        %v1251 = vrot.slane %v525, 5
        %v1252 = vsel %vm1175, %v1250, %v1251
        %v1253 = vrot.slane %v1148, 5
        %v1254 = vrot.slane %v1253, 4
        %v1255 = vrot.slane %v513, 5
        %v1256 = vsel %vm1175, %v1254, %v1255
        %v1257 = vrot.slane %v1255, 4
        %v1258 = vrot.slane %v526, 5
        %v1259 = vsel %vm1175, %v1257, %v1258
        %s1260 = scalar_lea.vmem %s1, 4
        %v1261 = vld [vmem:[%s1260] sm:$0x3]
        %v1262 = vunpack.c.l.b16 %v1179
        %v1263 = vunpack.c.l.b16 %v1182
        %v1264 = vunpack.c.l.b16 %v1186
        %v1265 = vunpack.c.l.b16 %v1189
        %v1266 = vunpack.c.l.b16 %v1193
        %v1267 = vunpack.c.l.b16 %v1196
        %v1268 = vunpack.c.l.b16 %v1200
        %v1269 = vunpack.c.l.b16 %v1203
        %v1270 = vunpack.c.l.b16 %v1207
        %v1271 = vunpack.c.l.b16 %v1210
        %v1272 = vunpack.c.l.b16 %v1214
        %v1273 = vunpack.c.l.b16 %v1217
        %v1274 = vunpack.c.l.b16 %v1221
        %v1275 = vunpack.c.l.b16 %v1224
        %v1276 = vunpack.c.l.b16 %v1228
        %v1277 = vunpack.c.l.b16 %v1231
        %v1278 = vunpack.c.l.b16 %v1235
        %v1279 = vunpack.c.l.b16 %v1238
        %v1280 = vunpack.c.l.b16 %v1242
        %v1281 = vunpack.c.l.b16 %v1245
        %v1282 = vunpack.c.l.b16 %v1249
        %v1283 = vunpack.c.l.b16 %v1252
        %v1284 = vunpack.c.l.b16 %v1256
        %v1285 = vunpack.c.l.b16 %v1259
        %v1286 = vpack.c.b16 %v1263, %v1262
        %v1287 = vpack.c.b16 %v1265, %v1264
        %v1288 = vpack.c.b16 %v1267, %v1266
        %v1289 = vpack.c.b16 %v1269, %v1268
        %v1290 = vpack.c.b16 %v1271, %v1270
        %v1291 = vpack.c.b16 %v1273, %v1272
        %v1292 = vpack.c.b16 %v1275, %v1274
        %v1293 = vpack.c.b16 %v1277, %v1276
        %v1294 = vpack.c.b16 %v1279, %v1278
        %v1295 = vpack.c.b16 %v1281, %v1280
        %v1296 = vpack.c.b16 %v1283, %v1282
        %v1297 = vpack.c.b16 %v1285, %v1284
        %v1299 = vsel %vm856, %v1286, 0
        %v1302 = vsel %vm856, %v1287, 0
        %v1305 = vsel %vm856, %v1288, 0
        %v1308 = vsel %vm856, %v1289, 0
        %v1311 = vsel %vm856, %v1290, 0
        %v1314 = vsel %vm856, %v1291, 0
        %v1317 = vsel %vm856, %v1292, 0
        %v1320 = vsel %vm856, %v1293, 0
        %v1323 = vsel %vm856, %v1294, 0
        %v1326 = vsel %vm856, %v1295, 0
        %v1329 = vsel %vm856, %v1296, 0
        %v1332 = vsel %vm856, %v1297, 0
        %v1335 = vand.u32 %v1261, %v896
        %1337 = vmatpush.bf16.msra.mxu0 0
        %1338 = vmatpush.bf16.msra.mxu0 0
        %1339 = vmatpush.bf16.msra.mxu0 0
        %1340 = vmatpush.bf16.msra.mxu0 0
        %1341 = vmatpush.bf16.msra.mxu0 0
        %1342 = vmatpush.bf16.msra.mxu0 0
        %1343 = vmatpush.bf16.msra.mxu0 0
        %1344 = vmatpush.bf16.msra.mxu0 %v1335
        %1345 = vmatmul.bf16.gmra.mxu0 %v1299
        %v1346 = vpop.f32.mrf.mxu0
        %v1347 = vadd.f32 0.0, %v1346
        %v1348 = vpop.f32.mrf.mxu0
        %v1349 = vadd.f32 0.0, %v1348
        %1350 = vmatmul.bf16.gmra.mxu0 %v1302
        %v1351 = vpop.f32.mrf.mxu0
        %v1352 = vadd.f32 0.0, %v1351
        %v1353 = vpop.f32.mrf.mxu0
        %v1354 = vadd.f32 0.0, %v1353
        %1355 = vmatmul.bf16.gmra.mxu0 %v1305
        %v1356 = vpop.f32.mrf.mxu0
        %v1357 = vadd.f32 0.0, %v1356
        %v1358 = vpop.f32.mrf.mxu0
        %v1359 = vadd.f32 0.0, %v1358
        %1360 = vmatmul.bf16.gmra.mxu0 %v1308
        %v1361 = vpop.f32.mrf.mxu0
        %v1362 = vadd.f32 0.0, %v1361
        %v1363 = vpop.f32.mrf.mxu0
        %v1364 = vadd.f32 0.0, %v1363
        %1365 = vmatmul.bf16.gmra.mxu0 %v1311
        %v1366 = vpop.f32.mrf.mxu0
        %v1367 = vadd.f32 0.0, %v1366
        %v1368 = vpop.f32.mrf.mxu0
        %v1369 = vadd.f32 0.0, %v1368
        %1370 = vmatmul.bf16.gmra.mxu0 %v1314
        %v1371 = vpop.f32.mrf.mxu0
        %v1372 = vadd.f32 0.0, %v1371
        %v1373 = vpop.f32.mrf.mxu0
        %v1374 = vadd.f32 0.0, %v1373
        %1375 = vmatmul.bf16.gmra.mxu0 %v1317
        %v1376 = vpop.f32.mrf.mxu0
        %v1377 = vadd.f32 0.0, %v1376
        %v1378 = vpop.f32.mrf.mxu0
        %v1379 = vadd.f32 0.0, %v1378
        %1380 = vmatmul.bf16.gmra.mxu0 %v1320
        %v1381 = vpop.f32.mrf.mxu0
        %v1382 = vadd.f32 0.0, %v1381
        %v1383 = vpop.f32.mrf.mxu0
        %v1384 = vadd.f32 0.0, %v1383
        %1385 = vmatmul.bf16.gmra.mxu0 %v1323
        %v1386 = vpop.f32.mrf.mxu0
        %v1387 = vadd.f32 0.0, %v1386
        %v1388 = vpop.f32.mrf.mxu0
        %v1389 = vadd.f32 0.0, %v1388
        %1390 = vmatmul.bf16.gmra.mxu0 %v1326
        %v1391 = vpop.f32.mrf.mxu0
        %v1392 = vadd.f32 0.0, %v1391
        %v1393 = vpop.f32.mrf.mxu0
        %v1394 = vadd.f32 0.0, %v1393
        %1395 = vmatmul.bf16.gmra.mxu0 %v1329
        %v1396 = vpop.f32.mrf.mxu0
        %v1397 = vadd.f32 0.0, %v1396
        %v1398 = vpop.f32.mrf.mxu0
        %v1399 = vadd.f32 0.0, %v1398
        %1400 = vmatmul.bf16.gmra.mxu0 %v1332
        %v1401 = vpop.f32.mrf.mxu0
        %v1402 = vadd.f32 0.0, %v1401
        %v1403 = vpop.f32.mrf.mxu0
        %v1404 = vadd.f32 0.0, %v1403
        %1405 = vdwg.mxu0
        %v1406 = vadd.f32 %v1078, %v1347
        %v1407 = vadd.f32 %v1080, %v1349
        %v1408 = vadd.f32 %v1083, %v1352
        %v1409 = vadd.f32 %v1085, %v1354
        %v1410 = vadd.f32 %v1088, %v1357
        %v1411 = vadd.f32 %v1090, %v1359
        %v1412 = vadd.f32 %v1093, %v1362
        %v1413 = vadd.f32 %v1095, %v1364
        %v1414 = vadd.f32 %v1098, %v1367
        %v1415 = vadd.f32 %v1100, %v1369
        %v1416 = vadd.f32 %v1103, %v1372
        %v1417 = vadd.f32 %v1105, %v1374
        %v1418 = vadd.f32 %v1108, %v1377
        %v1419 = vadd.f32 %v1110, %v1379
        %v1420 = vadd.f32 %v1113, %v1382
        %v1421 = vadd.f32 %v1115, %v1384
        %v1422 = vadd.f32 %v1118, %v1387
        %v1423 = vadd.f32 %v1120, %v1389
        %v1424 = vadd.f32 %v1123, %v1392
        %v1425 = vadd.f32 %v1125, %v1394
        %v1426 = vadd.f32 %v1128, %v1397
        %v1427 = vadd.f32 %v1130, %v1399
        %v1428 = vadd.f32 %v1133, %v1402
        %v1429 = vadd.f32 %v1135, %v1404
        %s1430 = sadd.s32 %s349, 1
        %s1431 = smul.u32 %s1430, 3
        %s1432 = smul.addr %s1431, 4
        %s1433 = scalar_lea.vmem %s336, %s1432
        %v1434 = vld [vmem:[%s1433] sm:$0xf]
        %v1435 = vld [vmem:[%s1433 + $0x4] sm:$0xf]
        %v1436 = vld [vmem:[%s1433 + $0xc] sm:$0xf]
        %v1437 = vld [vmem:[%s1433 + $0x10] sm:$0xf]
        %v1438 = vld [vmem:[%s1433 + $0x18] sm:$0xf]
        %v1439 = vld [vmem:[%s1433 + $0x1c] sm:$0xf]
        %v1440 = vld [vmem:[%s1433 + $0x24] sm:$0xf]
        %v1441 = vld [vmem:[%s1433 + $0x28] sm:$0xf]
        %v1442 = vld [vmem:[%s1433 + $0x30] sm:$0xf]
        %v1443 = vld [vmem:[%s1433 + $0x34] sm:$0xf]
        %v1444 = vld [vmem:[%s1433 + $0x3c] sm:$0xf]
        %v1445 = vld [vmem:[%s1433 + $0x40] sm:$0xf]
        %v1446 = vld [vmem:[%s1433 + $0x48] sm:$0xf]
        %v1447 = vld [vmem:[%s1433 + $0x4c] sm:$0xf]
        %v1448 = vld [vmem:[%s1433 + $0x54] sm:$0xf]
        %v1449 = vld [vmem:[%s1433 + $0x58] sm:$0xf]
        %v1450 = vld [vmem:[%s1433 + $0x60] sm:$0xf]
        %v1451 = vld [vmem:[%s1433 + $0x64] sm:$0xf]
        %v1452 = vld [vmem:[%s1433 + $0x6c] sm:$0xf]
        %v1453 = vld [vmem:[%s1433 + $0x70] sm:$0xf]
        %v1454 = vld [vmem:[%s1433 + $0x78] sm:$0xf]
        %v1455 = vld [vmem:[%s1433 + $0x7c] sm:$0xf]
        %v1456 = vld [vmem:[%s1433 + $0x84] sm:$0xf]
        %v1457 = vld [vmem:[%s1433 + $0x88] sm:$0xf]
        %s1458 = scalar_lea.vmem %s1, 6
        %v1459 = vld [vmem:[%s1458] sm:$0x3]
        %v1484 = vunpack.c.l.b16 %v1434
        %v1485 = vunpack.c.l.b16 %v1435
        %v1486 = vunpack.c.l.b16 %v1436
        %v1487 = vunpack.c.l.b16 %v1437
        %v1488 = vunpack.c.l.b16 %v1438
        %v1489 = vunpack.c.l.b16 %v1439
        %v1490 = vunpack.c.l.b16 %v1440
        %v1491 = vunpack.c.l.b16 %v1441
        %v1492 = vunpack.c.l.b16 %v1442
        %v1493 = vunpack.c.l.b16 %v1443
        %v1494 = vunpack.c.l.b16 %v1444
        %v1495 = vunpack.c.l.b16 %v1445
        %v1496 = vunpack.c.l.b16 %v1446
        %v1497 = vunpack.c.l.b16 %v1447
        %v1498 = vunpack.c.l.b16 %v1448
        %v1499 = vunpack.c.l.b16 %v1449
        %v1500 = vunpack.c.l.b16 %v1450
        %v1501 = vunpack.c.l.b16 %v1451
        %v1502 = vunpack.c.l.b16 %v1452
        %v1503 = vunpack.c.l.b16 %v1453
        %v1504 = vunpack.c.l.b16 %v1454
        %v1505 = vunpack.c.l.b16 %v1455
        %v1506 = vunpack.c.l.b16 %v1456
        %v1507 = vunpack.c.l.b16 %v1457
        %v1508 = vpack.c.b16 %v1485, %v1484
        %v1509 = vpack.c.b16 %v1487, %v1486
        %v1510 = vpack.c.b16 %v1489, %v1488
        %v1511 = vpack.c.b16 %v1491, %v1490
        %v1512 = vpack.c.b16 %v1493, %v1492
        %v1513 = vpack.c.b16 %v1495, %v1494
        %v1514 = vpack.c.b16 %v1497, %v1496
        %v1515 = vpack.c.b16 %v1499, %v1498
        %v1516 = vpack.c.b16 %v1501, %v1500
        %v1517 = vpack.c.b16 %v1503, %v1502
        %v1518 = vpack.c.b16 %v1505, %v1504
        %v1519 = vpack.c.b16 %v1507, %v1506
        %v1521 = vsel %vm856, %v1508, 0
        %v1524 = vsel %vm856, %v1509, 0
        %v1527 = vsel %vm856, %v1510, 0
        %v1530 = vsel %vm856, %v1511, 0
        %v1533 = vsel %vm856, %v1512, 0
        %v1536 = vsel %vm856, %v1513, 0
        %v1539 = vsel %vm856, %v1514, 0
        %v1542 = vsel %vm856, %v1515, 0
        %v1545 = vsel %vm856, %v1516, 0
        %v1548 = vsel %vm856, %v1517, 0
        %v1551 = vsel %vm856, %v1518, 0
        %v1554 = vsel %vm856, %v1519, 0
        %v1557 = vand.u32 %v1459, %v896
        %1559 = vmatpush.bf16.msra.mxu0 0
        %1560 = vmatpush.bf16.msra.mxu0 0
        %1561 = vmatpush.bf16.msra.mxu0 0
        %1562 = vmatpush.bf16.msra.mxu0 0
        %1563 = vmatpush.bf16.msra.mxu0 0
        %1564 = vmatpush.bf16.msra.mxu0 0
        %1565 = vmatpush.bf16.msra.mxu0 0
        %1566 = vmatpush.bf16.msra.mxu0 %v1557
        %1567 = vmatmul.bf16.gmra.mxu0 %v1521
        %v1568 = vpop.f32.mrf.mxu0
        %v1569 = vadd.f32 0.0, %v1568
        %v1570 = vpop.f32.mrf.mxu0
        %v1571 = vadd.f32 0.0, %v1570
        %1572 = vmatmul.bf16.gmra.mxu0 %v1524
        %v1573 = vpop.f32.mrf.mxu0
        %v1574 = vadd.f32 0.0, %v1573
        %v1575 = vpop.f32.mrf.mxu0
        %v1576 = vadd.f32 0.0, %v1575
        %1577 = vmatmul.bf16.gmra.mxu0 %v1527
        %v1578 = vpop.f32.mrf.mxu0
        %v1579 = vadd.f32 0.0, %v1578
        %v1580 = vpop.f32.mrf.mxu0
        %v1581 = vadd.f32 0.0, %v1580
        %1582 = vmatmul.bf16.gmra.mxu0 %v1530
        %v1583 = vpop.f32.mrf.mxu0
        %v1584 = vadd.f32 0.0, %v1583
        %v1585 = vpop.f32.mrf.mxu0
        %v1586 = vadd.f32 0.0, %v1585
        %1587 = vmatmul.bf16.gmra.mxu0 %v1533
        %v1588 = vpop.f32.mrf.mxu0
        %v1589 = vadd.f32 0.0, %v1588
        %v1590 = vpop.f32.mrf.mxu0
        %v1591 = vadd.f32 0.0, %v1590
        %1592 = vmatmul.bf16.gmra.mxu0 %v1536
        %v1593 = vpop.f32.mrf.mxu0
        %v1594 = vadd.f32 0.0, %v1593
        %v1595 = vpop.f32.mrf.mxu0
        %v1596 = vadd.f32 0.0, %v1595
        %1597 = vmatmul.bf16.gmra.mxu0 %v1539
        %v1598 = vpop.f32.mrf.mxu0
        %v1599 = vadd.f32 0.0, %v1598
        %v1600 = vpop.f32.mrf.mxu0
        %v1601 = vadd.f32 0.0, %v1600
        %1602 = vmatmul.bf16.gmra.mxu0 %v1542
        %v1603 = vpop.f32.mrf.mxu0
        %v1604 = vadd.f32 0.0, %v1603
        %v1605 = vpop.f32.mrf.mxu0
        %v1606 = vadd.f32 0.0, %v1605
        %1607 = vmatmul.bf16.gmra.mxu0 %v1545
        %v1608 = vpop.f32.mrf.mxu0
        %v1609 = vadd.f32 0.0, %v1608
        %v1610 = vpop.f32.mrf.mxu0
        %v1611 = vadd.f32 0.0, %v1610
        %1612 = vmatmul.bf16.gmra.mxu0 %v1548
        %v1613 = vpop.f32.mrf.mxu0
        %v1614 = vadd.f32 0.0, %v1613
        %v1615 = vpop.f32.mrf.mxu0
        %v1616 = vadd.f32 0.0, %v1615
        %1617 = vmatmul.bf16.gmra.mxu0 %v1551
        %v1618 = vpop.f32.mrf.mxu0
        %v1619 = vadd.f32 0.0, %v1618
        %v1620 = vpop.f32.mrf.mxu0
        %v1621 = vadd.f32 0.0, %v1620
        %1622 = vmatmul.bf16.gmra.mxu0 %v1554
        %v1623 = vpop.f32.mrf.mxu0
        %v1624 = vadd.f32 0.0, %v1623
        %v1625 = vpop.f32.mrf.mxu0
        %v1626 = vadd.f32 0.0, %v1625
        %1627 = vdwg.mxu0
        %v1628 = vadd.f32 %v1406, %v1569
        %v1629 = vadd.f32 %v1407, %v1571
        %v1630 = vadd.f32 %v1408, %v1574
        %v1631 = vadd.f32 %v1409, %v1576
        %v1632 = vadd.f32 %v1410, %v1579
        %v1633 = vadd.f32 %v1411, %v1581
        %v1634 = vadd.f32 %v1412, %v1584
        %v1635 = vadd.f32 %v1413, %v1586
        %v1636 = vadd.f32 %v1414, %v1589
        %v1637 = vadd.f32 %v1415, %v1591
        %v1638 = vadd.f32 %v1416, %v1594
        %v1639 = vadd.f32 %v1417, %v1596
        %v1640 = vadd.f32 %v1418, %v1599
        %v1641 = vadd.f32 %v1419, %v1601
        %v1642 = vadd.f32 %v1420, %v1604
        %v1643 = vadd.f32 %v1421, %v1606
        %v1644 = vadd.f32 %v1422, %v1609
        %v1645 = vadd.f32 %v1423, %v1611
        %v1646 = vadd.f32 %v1424, %v1614
        %v1647 = vadd.f32 %v1425, %v1616
        %v1648 = vadd.f32 %v1426, %v1619
        %v1649 = vadd.f32 %v1427, %v1621
        %v1650 = vadd.f32 %v1428, %v1624
        %v1651 = vadd.f32 %v1429, %v1626
        %v1652 = vld [vmem:[%s1433] sm:$0xf]
        %v1653 = vld [vmem:[%s1433 + $0x4] sm:$0xf]
        %v1654 = vld [vmem:[%s1433 + $0x8] sm:$0x1]
        %v1655 = vld [vmem:[%s1433 + $0xc] sm:$0xf]
        %v1656 = vld [vmem:[%s1433 + $0x10] sm:$0xf]
        %v1657 = vld [vmem:[%s1433 + $0x14] sm:$0x1]
        %v1658 = vld [vmem:[%s1433 + $0x18] sm:$0xf]
        %v1659 = vld [vmem:[%s1433 + $0x1c] sm:$0xf]
        %v1660 = vld [vmem:[%s1433 + $0x20] sm:$0x1]
        %v1661 = vld [vmem:[%s1433 + $0x24] sm:$0xf]
        %v1662 = vld [vmem:[%s1433 + $0x28] sm:$0xf]
        %v1663 = vld [vmem:[%s1433 + $0x2c] sm:$0x1]
        %v1664 = vld [vmem:[%s1433 + $0x30] sm:$0xf]
        %v1665 = vld [vmem:[%s1433 + $0x34] sm:$0xf]
        %v1666 = vld [vmem:[%s1433 + $0x38] sm:$0x1]
        %v1667 = vld [vmem:[%s1433 + $0x3c] sm:$0xf]
        %v1668 = vld [vmem:[%s1433 + $0x40] sm:$0xf]
        %v1669 = vld [vmem:[%s1433 + $0x44] sm:$0x1]
        %v1670 = vld [vmem:[%s1433 + $0x48] sm:$0xf]
        %v1671 = vld [vmem:[%s1433 + $0x4c] sm:$0xf]
        %v1672 = vld [vmem:[%s1433 + $0x50] sm:$0x1]
        %v1673 = vld [vmem:[%s1433 + $0x54] sm:$0xf]
        %v1674 = vld [vmem:[%s1433 + $0x58] sm:$0xf]
        %v1675 = vld [vmem:[%s1433 + $0x5c] sm:$0x1]
        %v1676 = vld [vmem:[%s1433 + $0x60] sm:$0xf]
        %v1677 = vld [vmem:[%s1433 + $0x64] sm:$0xf]
        %v1678 = vld [vmem:[%s1433 + $0x68] sm:$0x1]
        %v1679 = vld [vmem:[%s1433 + $0x6c] sm:$0xf]
        %v1680 = vld [vmem:[%s1433 + $0x70] sm:$0xf]
        %v1681 = vld [vmem:[%s1433 + $0x74] sm:$0x1]
        %v1682 = vld [vmem:[%s1433 + $0x78] sm:$0xf]
        %v1683 = vld [vmem:[%s1433 + $0x7c] sm:$0xf]
        %v1684 = vld [vmem:[%s1433 + $0x80] sm:$0x1]
        %v1685 = vld [vmem:[%s1433 + $0x84] sm:$0xf]
        %v1686 = vld [vmem:[%s1433 + $0x88] sm:$0xf]
        %v1687 = vld [vmem:[%s1433 + $0x8c] sm:$0x1]
        %v1689 = vshrl.u32 %v1652, 16
        %v1691 = vrot.slane %v1689, 4
        %v1692 = vshll.u32 %v1652, 16
        %v1694 = vrot.slane %v1692, 5
        %v1695 = vor.u32 %v1691, %v1694
        %v1696 = vrot.slane %v1695, 4
        %v1698 = vshll.u32 %v1653, 16
        %v1700 = vrot.slane %v1698, 5
        %v1701 = vsel %vm529, %v1696, %v1700
        %v1702 = vshrl.u32 %v1653, 16
        %v1704 = vrot.slane %v1702, 4
        %v1705 = vor.u32 %v1704, %v1700
        %v1706 = vrot.slane %v1705, 4
        %v1708 = vshll.u32 %v1654, 16
        %v1710 = vrot.slane %v1708, 5
        %v1711 = vsel %vm529, %v1706, %v1710
        %v1713 = vshrl.u32 %v1655, 16
        %v1715 = vrot.slane %v1713, 4
        %v1716 = vshll.u32 %v1655, 16
        %v1718 = vrot.slane %v1716, 5
        %v1719 = vor.u32 %v1715, %v1718
        %v1720 = vrot.slane %v1719, 4
        %v1722 = vshll.u32 %v1656, 16
        %v1724 = vrot.slane %v1722, 5
        %v1725 = vsel %vm529, %v1720, %v1724
        %v1726 = vshrl.u32 %v1656, 16
        %v1728 = vrot.slane %v1726, 4
        %v1729 = vor.u32 %v1728, %v1724
        %v1730 = vrot.slane %v1729, 4
        %v1732 = vshll.u32 %v1657, 16
        %v1734 = vrot.slane %v1732, 5
        %v1735 = vsel %vm529, %v1730, %v1734
        %v1737 = vshrl.u32 %v1658, 16
        %v1739 = vrot.slane %v1737, 4
        %v1740 = vshll.u32 %v1658, 16
        %v1742 = vrot.slane %v1740, 5
        %v1743 = vor.u32 %v1739, %v1742
        %v1744 = vrot.slane %v1743, 4
        %v1746 = vshll.u32 %v1659, 16
        %v1748 = vrot.slane %v1746, 5
        %v1749 = vsel %vm529, %v1744, %v1748
        %v1750 = vshrl.u32 %v1659, 16
        %v1752 = vrot.slane %v1750, 4
        %v1753 = vor.u32 %v1752, %v1748
        %v1754 = vrot.slane %v1753, 4
        %v1756 = vshll.u32 %v1660, 16
        %v1758 = vrot.slane %v1756, 5
        %v1759 = vsel %vm529, %v1754, %v1758
        %v1761 = vshrl.u32 %v1661, 16
        %v1763 = vrot.slane %v1761, 4
        %v1764 = vshll.u32 %v1661, 16
        %v1766 = vrot.slane %v1764, 5
        %v1767 = vor.u32 %v1763, %v1766
        %v1768 = vrot.slane %v1767, 4
        %v1770 = vshll.u32 %v1662, 16
        %v1772 = vrot.slane %v1770, 5
        %v1773 = vsel %vm529, %v1768, %v1772
        %v1774 = vshrl.u32 %v1662, 16
        %v1776 = vrot.slane %v1774, 4
        %v1777 = vor.u32 %v1776, %v1772
        %v1778 = vrot.slane %v1777, 4
        %v1780 = vshll.u32 %v1663, 16
        %v1782 = vrot.slane %v1780, 5
        %v1783 = vsel %vm529, %v1778, %v1782
        %v1785 = vshrl.u32 %v1664, 16
        %v1787 = vrot.slane %v1785, 4
        %v1788 = vshll.u32 %v1664, 16
        %v1790 = vrot.slane %v1788, 5
        %v1791 = vor.u32 %v1787, %v1790
        %v1792 = vrot.slane %v1791, 4
        %v1794 = vshll.u32 %v1665, 16
        %v1796 = vrot.slane %v1794, 5
        %v1797 = vsel %vm529, %v1792, %v1796
        %v1798 = vshrl.u32 %v1665, 16
        %v1800 = vrot.slane %v1798, 4
        %v1801 = vor.u32 %v1800, %v1796
        %v1802 = vrot.slane %v1801, 4
        %v1804 = vshll.u32 %v1666, 16
        %v1806 = vrot.slane %v1804, 5
        %v1807 = vsel %vm529, %v1802, %v1806
        %v1809 = vshrl.u32 %v1667, 16
        %v1811 = vrot.slane %v1809, 4
        %v1812 = vshll.u32 %v1667, 16
        %v1814 = vrot.slane %v1812, 5
        %v1815 = vor.u32 %v1811, %v1814
        %v1816 = vrot.slane %v1815, 4
        %v1818 = vshll.u32 %v1668, 16
        %v1820 = vrot.slane %v1818, 5
        %v1821 = vsel %vm529, %v1816, %v1820
        %v1822 = vshrl.u32 %v1668, 16
        %v1824 = vrot.slane %v1822, 4
        %v1825 = vor.u32 %v1824, %v1820
        %v1826 = vrot.slane %v1825, 4
        %v1828 = vshll.u32 %v1669, 16
        %v1830 = vrot.slane %v1828, 5
        %v1831 = vsel %vm529, %v1826, %v1830
        %v1833 = vshrl.u32 %v1670, 16
        %v1835 = vrot.slane %v1833, 4
        %v1836 = vshll.u32 %v1670, 16
        %v1838 = vrot.slane %v1836, 5
        %v1839 = vor.u32 %v1835, %v1838
        %v1840 = vrot.slane %v1839, 4
        %v1842 = vshll.u32 %v1671, 16
        %v1844 = vrot.slane %v1842, 5
        %v1845 = vsel %vm529, %v1840, %v1844
        %v1846 = vshrl.u32 %v1671, 16
        %v1848 = vrot.slane %v1846, 4
        %v1849 = vor.u32 %v1848, %v1844
        %v1850 = vrot.slane %v1849, 4
        %v1852 = vshll.u32 %v1672, 16
        %v1854 = vrot.slane %v1852, 5
        %v1855 = vsel %vm529, %v1850, %v1854
        %v1857 = vshrl.u32 %v1673, 16
        %v1859 = vrot.slane %v1857, 4
        %v1860 = vshll.u32 %v1673, 16
        %v1862 = vrot.slane %v1860, 5
        %v1863 = vor.u32 %v1859, %v1862
        %v1864 = vrot.slane %v1863, 4
        %v1866 = vshll.u32 %v1674, 16
        %v1868 = vrot.slane %v1866, 5
        %v1869 = vsel %vm529, %v1864, %v1868
        %v1870 = vshrl.u32 %v1674, 16
        %v1872 = vrot.slane %v1870, 4
        %v1873 = vor.u32 %v1872, %v1868
        %v1874 = vrot.slane %v1873, 4
        %v1876 = vshll.u32 %v1675, 16
        %v1878 = vrot.slane %v1876, 5
        %v1879 = vsel %vm529, %v1874, %v1878
        %v1881 = vshrl.u32 %v1676, 16
        %v1883 = vrot.slane %v1881, 4
        %v1884 = vshll.u32 %v1676, 16
        %v1886 = vrot.slane %v1884, 5
        %v1887 = vor.u32 %v1883, %v1886
        %v1888 = vrot.slane %v1887, 4
        %v1890 = vshll.u32 %v1677, 16
        %v1892 = vrot.slane %v1890, 5
        %v1893 = vsel %vm529, %v1888, %v1892
        %v1894 = vshrl.u32 %v1677, 16
        %v1896 = vrot.slane %v1894, 4
        %v1897 = vor.u32 %v1896, %v1892
        %v1898 = vrot.slane %v1897, 4
        %v1900 = vshll.u32 %v1678, 16
        %v1902 = vrot.slane %v1900, 5
        %v1903 = vsel %vm529, %v1898, %v1902
        %v1905 = vshrl.u32 %v1679, 16
        %v1907 = vrot.slane %v1905, 4
        %v1908 = vshll.u32 %v1679, 16
        %v1910 = vrot.slane %v1908, 5
        %v1911 = vor.u32 %v1907, %v1910
        %v1912 = vrot.slane %v1911, 4
        %v1914 = vshll.u32 %v1680, 16
        %v1916 = vrot.slane %v1914, 5
        %v1917 = vsel %vm529, %v1912, %v1916
        %v1918 = vshrl.u32 %v1680, 16
        %v1920 = vrot.slane %v1918, 4
        %v1921 = vor.u32 %v1920, %v1916
        %v1922 = vrot.slane %v1921, 4
        %v1924 = vshll.u32 %v1681, 16
        %v1926 = vrot.slane %v1924, 5
        %v1927 = vsel %vm529, %v1922, %v1926
        %v1929 = vshrl.u32 %v1682, 16
        %v1931 = vrot.slane %v1929, 4
        %v1932 = vshll.u32 %v1682, 16
        %v1934 = vrot.slane %v1932, 5
        %v1935 = vor.u32 %v1931, %v1934
        %v1936 = vrot.slane %v1935, 4
        %v1938 = vshll.u32 %v1683, 16
        %v1940 = vrot.slane %v1938, 5
        %v1941 = vsel %vm529, %v1936, %v1940
        %v1942 = vshrl.u32 %v1683, 16
        %v1944 = vrot.slane %v1942, 4
        %v1945 = vor.u32 %v1944, %v1940
        %v1946 = vrot.slane %v1945, 4
        %v1948 = vshll.u32 %v1684, 16
        %v1950 = vrot.slane %v1948, 5
        %v1951 = vsel %vm529, %v1946, %v1950
        %v1953 = vshrl.u32 %v1685, 16
        %v1955 = vrot.slane %v1953, 4
        %v1956 = vshll.u32 %v1685, 16
        %v1958 = vrot.slane %v1956, 5
        %v1959 = vor.u32 %v1955, %v1958
        %v1960 = vrot.slane %v1959, 4
        %v1962 = vshll.u32 %v1686, 16
        %v1964 = vrot.slane %v1962, 5
        %v1965 = vsel %vm529, %v1960, %v1964
        %v1966 = vshrl.u32 %v1686, 16
        %v1968 = vrot.slane %v1966, 4
        %v1969 = vor.u32 %v1968, %v1964
        %v1970 = vrot.slane %v1969, 4
        %v1972 = vshll.u32 %v1687, 16
        %v1974 = vrot.slane %v1972, 5
        %v1975 = vsel %vm529, %v1970, %v1974
        %s1976 = scalar_lea.vmem %s1, 8
        %v1977 = vld [vmem:[%s1976] sm:$0x3]
        %v1978 = vunpack.c.l.b16 %v1701
        %v1979 = vunpack.c.l.b16 %v1711
        %v1980 = vunpack.c.l.b16 %v1725
        %v1981 = vunpack.c.l.b16 %v1735
        %v1982 = vunpack.c.l.b16 %v1749
        %v1983 = vunpack.c.l.b16 %v1759
        %v1984 = vunpack.c.l.b16 %v1773
        %v1985 = vunpack.c.l.b16 %v1783
        %v1986 = vunpack.c.l.b16 %v1797
        %v1987 = vunpack.c.l.b16 %v1807
        %v1988 = vunpack.c.l.b16 %v1821
        %v1989 = vunpack.c.l.b16 %v1831
        %v1990 = vunpack.c.l.b16 %v1845
        %v1991 = vunpack.c.l.b16 %v1855
        %v1992 = vunpack.c.l.b16 %v1869
        %v1993 = vunpack.c.l.b16 %v1879
        %v1994 = vunpack.c.l.b16 %v1893
        %v1995 = vunpack.c.l.b16 %v1903
        %v1996 = vunpack.c.l.b16 %v1917
        %v1997 = vunpack.c.l.b16 %v1927
        %v1998 = vunpack.c.l.b16 %v1941
        %v1999 = vunpack.c.l.b16 %v1951
        %v2000 = vunpack.c.l.b16 %v1965
        %v2001 = vunpack.c.l.b16 %v1975
        %v2002 = vpack.c.b16 %v1979, %v1978
        %v2003 = vpack.c.b16 %v1981, %v1980
        %v2004 = vpack.c.b16 %v1983, %v1982
        %v2005 = vpack.c.b16 %v1985, %v1984
        %v2006 = vpack.c.b16 %v1987, %v1986
        %v2007 = vpack.c.b16 %v1989, %v1988
        %v2008 = vpack.c.b16 %v1991, %v1990
        %v2009 = vpack.c.b16 %v1993, %v1992
        %v2010 = vpack.c.b16 %v1995, %v1994
        %v2011 = vpack.c.b16 %v1997, %v1996
        %v2012 = vpack.c.b16 %v1999, %v1998
        %v2013 = vpack.c.b16 %v2001, %v2000
        %v2015 = vsel %vm856, %v2002, 0
        %v2018 = vsel %vm856, %v2003, 0
        %v2021 = vsel %vm856, %v2004, 0
        %v2024 = vsel %vm856, %v2005, 0
        %v2027 = vsel %vm856, %v2006, 0
        %v2030 = vsel %vm856, %v2007, 0
        %v2033 = vsel %vm856, %v2008, 0
        %v2036 = vsel %vm856, %v2009, 0
        %v2039 = vsel %vm856, %v2010, 0
        %v2042 = vsel %vm856, %v2011, 0
        %v2045 = vsel %vm856, %v2012, 0
        %v2048 = vsel %vm856, %v2013, 0
        %v2051 = vand.u32 %v1977, %v896
        %2053 = vmatpush.bf16.msra.mxu0 0
        %2054 = vmatpush.bf16.msra.mxu0 0
        %2055 = vmatpush.bf16.msra.mxu0 0
        %2056 = vmatpush.bf16.msra.mxu0 0
        %2057 = vmatpush.bf16.msra.mxu0 0
        %2058 = vmatpush.bf16.msra.mxu0 0
        %2059 = vmatpush.bf16.msra.mxu0 0
        %2060 = vmatpush.bf16.msra.mxu0 %v2051
        %2061 = vmatmul.bf16.gmra.mxu0 %v2015
        %v2062 = vpop.f32.mrf.mxu0
        %v2063 = vadd.f32 0.0, %v2062
        %v2064 = vpop.f32.mrf.mxu0
        %v2065 = vadd.f32 0.0, %v2064
        %2066 = vmatmul.bf16.gmra.mxu0 %v2018
        %v2067 = vpop.f32.mrf.mxu0
        %v2068 = vadd.f32 0.0, %v2067
        %v2069 = vpop.f32.mrf.mxu0
        %v2070 = vadd.f32 0.0, %v2069
        %2071 = vmatmul.bf16.gmra.mxu0 %v2021
        %v2072 = vpop.f32.mrf.mxu0
        %v2073 = vadd.f32 0.0, %v2072
        %v2074 = vpop.f32.mrf.mxu0
        %v2075 = vadd.f32 0.0, %v2074
        %2076 = vmatmul.bf16.gmra.mxu0 %v2024
        %v2077 = vpop.f32.mrf.mxu0
        %v2078 = vadd.f32 0.0, %v2077
        %v2079 = vpop.f32.mrf.mxu0
        %v2080 = vadd.f32 0.0, %v2079
        %2081 = vmatmul.bf16.gmra.mxu0 %v2027
        %v2082 = vpop.f32.mrf.mxu0
        %v2083 = vadd.f32 0.0, %v2082
        %v2084 = vpop.f32.mrf.mxu0
        %v2085 = vadd.f32 0.0, %v2084
        %2086 = vmatmul.bf16.gmra.mxu0 %v2030
        %v2087 = vpop.f32.mrf.mxu0
        %v2088 = vadd.f32 0.0, %v2087
        %v2089 = vpop.f32.mrf.mxu0
        %v2090 = vadd.f32 0.0, %v2089
        %2091 = vmatmul.bf16.gmra.mxu0 %v2033
        %v2092 = vpop.f32.mrf.mxu0
        %v2093 = vadd.f32 0.0, %v2092
        %v2094 = vpop.f32.mrf.mxu0
        %v2095 = vadd.f32 0.0, %v2094
        %2096 = vmatmul.bf16.gmra.mxu0 %v2036
        %v2097 = vpop.f32.mrf.mxu0
        %v2098 = vadd.f32 0.0, %v2097
        %v2099 = vpop.f32.mrf.mxu0
        %v2100 = vadd.f32 0.0, %v2099
        %2101 = vmatmul.bf16.gmra.mxu0 %v2039
        %v2102 = vpop.f32.mrf.mxu0
        %v2103 = vadd.f32 0.0, %v2102
        %v2104 = vpop.f32.mrf.mxu0
        %v2105 = vadd.f32 0.0, %v2104
        %2106 = vmatmul.bf16.gmra.mxu0 %v2042
        %v2107 = vpop.f32.mrf.mxu0
        %v2108 = vadd.f32 0.0, %v2107
        %v2109 = vpop.f32.mrf.mxu0
        %v2110 = vadd.f32 0.0, %v2109
        %2111 = vmatmul.bf16.gmra.mxu0 %v2045
        %v2112 = vpop.f32.mrf.mxu0
        %v2113 = vadd.f32 0.0, %v2112
        %v2114 = vpop.f32.mrf.mxu0
        %v2115 = vadd.f32 0.0, %v2114
        %2116 = vmatmul.bf16.gmra.mxu0 %v2048
        %v2117 = vpop.f32.mrf.mxu0
        %v2118 = vadd.f32 0.0, %v2117
        %v2119 = vpop.f32.mrf.mxu0
        %v2120 = vadd.f32 0.0, %v2119
        %2121 = vdwg.mxu0
        %v2122 = vadd.f32 %v1628, %v2063
        %v2123 = vadd.f32 %v1629, %v2065
        %v2124 = vadd.f32 %v1630, %v2068
        %v2125 = vadd.f32 %v1631, %v2070
        %v2126 = vadd.f32 %v1632, %v2073
        %v2127 = vadd.f32 %v1633, %v2075
        %v2128 = vadd.f32 %v1634, %v2078
        %v2129 = vadd.f32 %v1635, %v2080
        %v2130 = vadd.f32 %v1636, %v2083
        %v2131 = vadd.f32 %v1637, %v2085
        %v2132 = vadd.f32 %v1638, %v2088
        %v2133 = vadd.f32 %v1639, %v2090
        %v2134 = vadd.f32 %v1640, %v2093
        %v2135 = vadd.f32 %v1641, %v2095
        %v2136 = vadd.f32 %v1642, %v2098
        %v2137 = vadd.f32 %v1643, %v2100
        %v2138 = vadd.f32 %v1644, %v2103
        %v2139 = vadd.f32 %v1645, %v2105
        %v2140 = vadd.f32 %v1646, %v2108
        %v2141 = vadd.f32 %v1647, %v2110
        %v2142 = vadd.f32 %v1648, %v2113
        %v2143 = vadd.f32 %v1649, %v2115
        %v2144 = vadd.f32 %v1650, %v2118
        %v2145 = vadd.f32 %v1651, %v2120
        %v2146 = vld [vmem:[%s1433] sm:$0xe]
        %v2147 = vld [vmem:[%s1433 + $0xc] sm:$0xe]
        %v2148 = vld [vmem:[%s1433 + $0x18] sm:$0xe]
        %v2149 = vld [vmem:[%s1433 + $0x24] sm:$0xe]
        %v2150 = vld [vmem:[%s1433 + $0x30] sm:$0xe]
        %v2151 = vld [vmem:[%s1433 + $0x3c] sm:$0xe]
        %v2152 = vld [vmem:[%s1433 + $0x48] sm:$0xe]
        %v2153 = vld [vmem:[%s1433 + $0x54] sm:$0xe]
        %v2154 = vld [vmem:[%s1433 + $0x60] sm:$0xe]
        %v2155 = vld [vmem:[%s1433 + $0x6c] sm:$0xe]
        %v2156 = vld [vmem:[%s1433 + $0x78] sm:$0xe]
        %v2157 = vld [vmem:[%s1433 + $0x84] sm:$0xe]
        %v2194 = vrot.slane %v2146, 5
        %v2195 = vrot.slane %v2194, 4
        %v2196 = vrot.slane %v1653, 5
        %v2197 = vsel %vm1175, %v2195, %v2196
        %v2198 = vrot.slane %v2196, 4
        %v2199 = vrot.slane %v1654, 5
        %v2200 = vsel %vm1175, %v2198, %v2199
        %v2201 = vrot.slane %v2147, 5
        %v2202 = vrot.slane %v2201, 4
        %v2203 = vrot.slane %v1656, 5
        %v2204 = vsel %vm1175, %v2202, %v2203
        %v2205 = vrot.slane %v2203, 4
        %v2206 = vrot.slane %v1657, 5
        %v2207 = vsel %vm1175, %v2205, %v2206
        %v2208 = vrot.slane %v2148, 5
        %v2209 = vrot.slane %v2208, 4
        %v2210 = vrot.slane %v1659, 5
        %v2211 = vsel %vm1175, %v2209, %v2210
        %v2212 = vrot.slane %v2210, 4
        %v2213 = vrot.slane %v1660, 5
        %v2214 = vsel %vm1175, %v2212, %v2213
        %v2215 = vrot.slane %v2149, 5
        %v2216 = vrot.slane %v2215, 4
        %v2217 = vrot.slane %v1662, 5
        %v2218 = vsel %vm1175, %v2216, %v2217
        %v2219 = vrot.slane %v2217, 4
        %v2220 = vrot.slane %v1663, 5
        %v2221 = vsel %vm1175, %v2219, %v2220
        %v2222 = vrot.slane %v2150, 5
        %v2223 = vrot.slane %v2222, 4
        %v2224 = vrot.slane %v1665, 5
        %v2225 = vsel %vm1175, %v2223, %v2224
        %v2226 = vrot.slane %v2224, 4
        %v2227 = vrot.slane %v1666, 5
        %v2228 = vsel %vm1175, %v2226, %v2227
        %v2229 = vrot.slane %v2151, 5
        %v2230 = vrot.slane %v2229, 4
        %v2231 = vrot.slane %v1668, 5
        %v2232 = vsel %vm1175, %v2230, %v2231
        %v2233 = vrot.slane %v2231, 4
        %v2234 = vrot.slane %v1669, 5
        %v2235 = vsel %vm1175, %v2233, %v2234
        %v2236 = vrot.slane %v2152, 5
        %v2237 = vrot.slane %v2236, 4
        %v2238 = vrot.slane %v1671, 5
        %v2239 = vsel %vm1175, %v2237, %v2238
        %v2240 = vrot.slane %v2238, 4
        %v2241 = vrot.slane %v1672, 5
        %v2242 = vsel %vm1175, %v2240, %v2241
        %v2243 = vrot.slane %v2153, 5
        %v2244 = vrot.slane %v2243, 4
        %v2245 = vrot.slane %v1674, 5
        %v2246 = vsel %vm1175, %v2244, %v2245
        %v2247 = vrot.slane %v2245, 4
        %v2248 = vrot.slane %v1675, 5
        %v2249 = vsel %vm1175, %v2247, %v2248
        %v2250 = vrot.slane %v2154, 5
        %v2251 = vrot.slane %v2250, 4
        %v2252 = vrot.slane %v1677, 5
        %v2253 = vsel %vm1175, %v2251, %v2252
        %v2254 = vrot.slane %v2252, 4
        %v2255 = vrot.slane %v1678, 5
        %v2256 = vsel %vm1175, %v2254, %v2255
        %v2257 = vrot.slane %v2155, 5
        %v2258 = vrot.slane %v2257, 4
        %v2259 = vrot.slane %v1680, 5
        %v2260 = vsel %vm1175, %v2258, %v2259
        %v2261 = vrot.slane %v2259, 4
        %v2262 = vrot.slane %v1681, 5
        %v2263 = vsel %vm1175, %v2261, %v2262
        %v2264 = vrot.slane %v2156, 5
        %v2265 = vrot.slane %v2264, 4
        %v2266 = vrot.slane %v1683, 5
        %v2267 = vsel %vm1175, %v2265, %v2266
        %v2268 = vrot.slane %v2266, 4
        %v2269 = vrot.slane %v1684, 5
        %v2270 = vsel %vm1175, %v2268, %v2269
        %v2271 = vrot.slane %v2157, 5
        %v2272 = vrot.slane %v2271, 4
        %v2273 = vrot.slane %v1686, 5
        %v2274 = vsel %vm1175, %v2272, %v2273
        %v2275 = vrot.slane %v2273, 4
        %v2276 = vrot.slane %v1687, 5
        %v2277 = vsel %vm1175, %v2275, %v2276
        %s2278 = scalar_lea.vmem %s1, 10
        %v2279 = vld [vmem:[%s2278] sm:$0x3]
        %v2280 = vunpack.c.l.b16 %v2197
        %v2281 = vunpack.c.l.b16 %v2200
        %v2282 = vunpack.c.l.b16 %v2204
        %v2283 = vunpack.c.l.b16 %v2207
        %v2284 = vunpack.c.l.b16 %v2211
        %v2285 = vunpack.c.l.b16 %v2214
        %v2286 = vunpack.c.l.b16 %v2218
        %v2287 = vunpack.c.l.b16 %v2221
        %v2288 = vunpack.c.l.b16 %v2225
        %v2289 = vunpack.c.l.b16 %v2228
        %v2290 = vunpack.c.l.b16 %v2232
        %v2291 = vunpack.c.l.b16 %v2235
        %v2292 = vunpack.c.l.b16 %v2239
        %v2293 = vunpack.c.l.b16 %v2242
        %v2294 = vunpack.c.l.b16 %v2246
        %v2295 = vunpack.c.l.b16 %v2249
        %v2296 = vunpack.c.l.b16 %v2253
        %v2297 = vunpack.c.l.b16 %v2256
        %v2298 = vunpack.c.l.b16 %v2260
        %v2299 = vunpack.c.l.b16 %v2263
        %v2300 = vunpack.c.l.b16 %v2267
        %v2301 = vunpack.c.l.b16 %v2270
        %v2302 = vunpack.c.l.b16 %v2274
        %v2303 = vunpack.c.l.b16 %v2277
        %v2304 = vpack.c.b16 %v2281, %v2280
        %v2305 = vpack.c.b16 %v2283, %v2282
        %v2306 = vpack.c.b16 %v2285, %v2284
        %v2307 = vpack.c.b16 %v2287, %v2286
        %v2308 = vpack.c.b16 %v2289, %v2288
        %v2309 = vpack.c.b16 %v2291, %v2290
        %v2310 = vpack.c.b16 %v2293, %v2292
        %v2311 = vpack.c.b16 %v2295, %v2294
        %v2312 = vpack.c.b16 %v2297, %v2296
        %v2313 = vpack.c.b16 %v2299, %v2298
        %v2314 = vpack.c.b16 %v2301, %v2300
        %v2315 = vpack.c.b16 %v2303, %v2302
        %v2317 = vsel %vm856, %v2304, 0
        %v2320 = vsel %vm856, %v2305, 0
        %v2323 = vsel %vm856, %v2306, 0
        %v2326 = vsel %vm856, %v2307, 0
        %v2329 = vsel %vm856, %v2308, 0
        %v2332 = vsel %vm856, %v2309, 0
        %v2335 = vsel %vm856, %v2310, 0
        %v2338 = vsel %vm856, %v2311, 0
        %v2341 = vsel %vm856, %v2312, 0
        %v2344 = vsel %vm856, %v2313, 0
        %v2347 = vsel %vm856, %v2314, 0
        %v2350 = vsel %vm856, %v2315, 0
        %v2353 = vand.u32 %v2279, %v896
        %2355 = vmatpush.bf16.msra.mxu0 0
        %2356 = vmatpush.bf16.msra.mxu0 0
        %2357 = vmatpush.bf16.msra.mxu0 0
        %2358 = vmatpush.bf16.msra.mxu0 0
        %2359 = vmatpush.bf16.msra.mxu0 0
        %2360 = vmatpush.bf16.msra.mxu0 0
        %2361 = vmatpush.bf16.msra.mxu0 0
        %2362 = vmatpush.bf16.msra.mxu0 %v2353
        %2363 = vmatmul.bf16.gmra.mxu0 %v2317
        %v2364 = vpop.f32.mrf.mxu0
        %v2365 = vadd.f32 0.0, %v2364
        %v2366 = vpop.f32.mrf.mxu0
        %v2367 = vadd.f32 0.0, %v2366
        %2368 = vmatmul.bf16.gmra.mxu0 %v2320
        %v2369 = vpop.f32.mrf.mxu0
        %v2370 = vadd.f32 0.0, %v2369
        %v2371 = vpop.f32.mrf.mxu0
        %v2372 = vadd.f32 0.0, %v2371
        %2373 = vmatmul.bf16.gmra.mxu0 %v2323
        %v2374 = vpop.f32.mrf.mxu0
        %v2375 = vadd.f32 0.0, %v2374
        %v2376 = vpop.f32.mrf.mxu0
        %v2377 = vadd.f32 0.0, %v2376
        %2378 = vmatmul.bf16.gmra.mxu0 %v2326
        %v2379 = vpop.f32.mrf.mxu0
        %v2380 = vadd.f32 0.0, %v2379
        %v2381 = vpop.f32.mrf.mxu0
        %v2382 = vadd.f32 0.0, %v2381
        %2383 = vmatmul.bf16.gmra.mxu0 %v2329
        %v2384 = vpop.f32.mrf.mxu0
        %v2385 = vadd.f32 0.0, %v2384
        %v2386 = vpop.f32.mrf.mxu0
        %v2387 = vadd.f32 0.0, %v2386
        %2388 = vmatmul.bf16.gmra.mxu0 %v2332
        %v2389 = vpop.f32.mrf.mxu0
        %v2390 = vadd.f32 0.0, %v2389
        %v2391 = vpop.f32.mrf.mxu0
        %v2392 = vadd.f32 0.0, %v2391
        %2393 = vmatmul.bf16.gmra.mxu0 %v2335
        %v2394 = vpop.f32.mrf.mxu0
        %v2395 = vadd.f32 0.0, %v2394
        %v2396 = vpop.f32.mrf.mxu0
        %v2397 = vadd.f32 0.0, %v2396
        %2398 = vmatmul.bf16.gmra.mxu0 %v2338
        %v2399 = vpop.f32.mrf.mxu0
        %v2400 = vadd.f32 0.0, %v2399
        %v2401 = vpop.f32.mrf.mxu0
        %v2402 = vadd.f32 0.0, %v2401
        %2403 = vmatmul.bf16.gmra.mxu0 %v2341
        %v2404 = vpop.f32.mrf.mxu0
        %v2405 = vadd.f32 0.0, %v2404
        %v2406 = vpop.f32.mrf.mxu0
        %v2407 = vadd.f32 0.0, %v2406
        %2408 = vmatmul.bf16.gmra.mxu0 %v2344
        %v2409 = vpop.f32.mrf.mxu0
        %v2410 = vadd.f32 0.0, %v2409
        %v2411 = vpop.f32.mrf.mxu0
        %v2412 = vadd.f32 0.0, %v2411
        %2413 = vmatmul.bf16.gmra.mxu0 %v2347
        %v2414 = vpop.f32.mrf.mxu0
        %v2415 = vadd.f32 0.0, %v2414
        %v2416 = vpop.f32.mrf.mxu0
        %v2417 = vadd.f32 0.0, %v2416
        %2418 = vmatmul.bf16.gmra.mxu0 %v2350
        %v2419 = vpop.f32.mrf.mxu0
        %v2420 = vadd.f32 0.0, %v2419
        %v2421 = vpop.f32.mrf.mxu0
        %v2422 = vadd.f32 0.0, %v2421
        %2423 = vdwg.mxu0
        %v2424 = vadd.f32 %v2122, %v2365
        %v2425 = vadd.f32 %v2123, %v2367
        %v2426 = vadd.f32 %v2124, %v2370
        %v2427 = vadd.f32 %v2125, %v2372
        %v2428 = vadd.f32 %v2126, %v2375
        %v2429 = vadd.f32 %v2127, %v2377
        %v2430 = vadd.f32 %v2128, %v2380
        %v2431 = vadd.f32 %v2129, %v2382
        %v2432 = vadd.f32 %v2130, %v2385
        %v2433 = vadd.f32 %v2131, %v2387
        %v2434 = vadd.f32 %v2132, %v2390
        %v2435 = vadd.f32 %v2133, %v2392
        %v2436 = vadd.f32 %v2134, %v2395
        %v2437 = vadd.f32 %v2135, %v2397
        %v2438 = vadd.f32 %v2136, %v2400
        %v2439 = vadd.f32 %v2137, %v2402
        %v2440 = vadd.f32 %v2138, %v2405
        %v2441 = vadd.f32 %v2139, %v2407
        %v2442 = vadd.f32 %v2140, %v2410
        %v2443 = vadd.f32 %v2141, %v2412
        %v2444 = vadd.f32 %v2142, %v2415
        %v2445 = vadd.f32 %v2143, %v2417
        %v2446 = vadd.f32 %v2144, %v2420
        %v2447 = vadd.f32 %v2145, %v2422
        %s2448 = sadd.s32 %s349, 2
        %s2449 = smul.u32 %s2448, 3
        %s2450 = smul.addr %s2449, 4
        %s2451 = scalar_lea.vmem %s336, %s2450
        %v2452 = vld [vmem:[%s2451] sm:$0xf]
        %v2453 = vld [vmem:[%s2451 + $0x4] sm:$0xf]
        %v2454 = vld [vmem:[%s2451 + $0xc] sm:$0xf]
        %v2455 = vld [vmem:[%s2451 + $0x10] sm:$0xf]
        %v2456 = vld [vmem:[%s2451 + $0x18] sm:$0xf]
        %v2457 = vld [vmem:[%s2451 + $0x1c] sm:$0xf]
        %v2458 = vld [vmem:[%s2451 + $0x24] sm:$0xf]
        %v2459 = vld [vmem:[%s2451 + $0x28] sm:$0xf]
        %v2460 = vld [vmem:[%s2451 + $0x30] sm:$0xf]
        %v2461 = vld [vmem:[%s2451 + $0x34] sm:$0xf]
        %v2462 = vld [vmem:[%s2451 + $0x3c] sm:$0xf]
        %v2463 = vld [vmem:[%s2451 + $0x40] sm:$0xf]
        %v2464 = vld [vmem:[%s2451 + $0x48] sm:$0xf]
        %v2465 = vld [vmem:[%s2451 + $0x4c] sm:$0xf]
        %v2466 = vld [vmem:[%s2451 + $0x54] sm:$0xf]
        %v2467 = vld [vmem:[%s2451 + $0x58] sm:$0xf]
        %v2468 = vld [vmem:[%s2451 + $0x60] sm:$0xf]
        %v2469 = vld [vmem:[%s2451 + $0x64] sm:$0xf]
        %v2470 = vld [vmem:[%s2451 + $0x6c] sm:$0xf]
        %v2471 = vld [vmem:[%s2451 + $0x70] sm:$0xf]
        %v2472 = vld [vmem:[%s2451 + $0x78] sm:$0xf]
        %v2473 = vld [vmem:[%s2451 + $0x7c] sm:$0xf]
        %v2474 = vld [vmem:[%s2451 + $0x84] sm:$0xf]
        %v2475 = vld [vmem:[%s2451 + $0x88] sm:$0xf]
        %s2476 = scalar_lea.vmem %s1, 12
        %v2477 = vld [vmem:[%s2476] sm:$0x3]
        %v2502 = vunpack.c.l.b16 %v2452
        %v2503 = vunpack.c.l.b16 %v2453
        %v2504 = vunpack.c.l.b16 %v2454
        %v2505 = vunpack.c.l.b16 %v2455
        %v2506 = vunpack.c.l.b16 %v2456
        %v2507 = vunpack.c.l.b16 %v2457
        %v2508 = vunpack.c.l.b16 %v2458
        %v2509 = vunpack.c.l.b16 %v2459
        %v2510 = vunpack.c.l.b16 %v2460
        %v2511 = vunpack.c.l.b16 %v2461
        %v2512 = vunpack.c.l.b16 %v2462
        %v2513 = vunpack.c.l.b16 %v2463
        %v2514 = vunpack.c.l.b16 %v2464
        %v2515 = vunpack.c.l.b16 %v2465
        %v2516 = vunpack.c.l.b16 %v2466
        %v2517 = vunpack.c.l.b16 %v2467
        %v2518 = vunpack.c.l.b16 %v2468
        %v2519 = vunpack.c.l.b16 %v2469
        %v2520 = vunpack.c.l.b16 %v2470
        %v2521 = vunpack.c.l.b16 %v2471
        %v2522 = vunpack.c.l.b16 %v2472
        %v2523 = vunpack.c.l.b16 %v2473
        %v2524 = vunpack.c.l.b16 %v2474
        %v2525 = vunpack.c.l.b16 %v2475
        %v2526 = vpack.c.b16 %v2503, %v2502
        %v2527 = vpack.c.b16 %v2505, %v2504
        %v2528 = vpack.c.b16 %v2507, %v2506
        %v2529 = vpack.c.b16 %v2509, %v2508
        %v2530 = vpack.c.b16 %v2511, %v2510
        %v2531 = vpack.c.b16 %v2513, %v2512
        %v2532 = vpack.c.b16 %v2515, %v2514
        %v2533 = vpack.c.b16 %v2517, %v2516
        %v2534 = vpack.c.b16 %v2519, %v2518
        %v2535 = vpack.c.b16 %v2521, %v2520
        %v2536 = vpack.c.b16 %v2523, %v2522
        %v2537 = vpack.c.b16 %v2525, %v2524
        %v2539 = vsel %vm856, %v2526, 0
        %v2542 = vsel %vm856, %v2527, 0
        %v2545 = vsel %vm856, %v2528, 0
        %v2548 = vsel %vm856, %v2529, 0
        %v2551 = vsel %vm856, %v2530, 0
        %v2554 = vsel %vm856, %v2531, 0
        %v2557 = vsel %vm856, %v2532, 0
        %v2560 = vsel %vm856, %v2533, 0
        %v2563 = vsel %vm856, %v2534, 0
        %v2566 = vsel %vm856, %v2535, 0
        %v2569 = vsel %vm856, %v2536, 0
        %v2572 = vsel %vm856, %v2537, 0
        %v2575 = vand.u32 %v2477, %v896
        %2577 = vmatpush.bf16.msra.mxu0 0
        %2578 = vmatpush.bf16.msra.mxu0 0
        %2579 = vmatpush.bf16.msra.mxu0 0
        %2580 = vmatpush.bf16.msra.mxu0 0
        %2581 = vmatpush.bf16.msra.mxu0 0
        %2582 = vmatpush.bf16.msra.mxu0 0
        %2583 = vmatpush.bf16.msra.mxu0 0
        %2584 = vmatpush.bf16.msra.mxu0 %v2575
        %2585 = vmatmul.bf16.gmra.mxu0 %v2539
        %v2586 = vpop.f32.mrf.mxu0
        %v2587 = vadd.f32 0.0, %v2586
        %v2588 = vpop.f32.mrf.mxu0
        %v2589 = vadd.f32 0.0, %v2588
        %2590 = vmatmul.bf16.gmra.mxu0 %v2542
        %v2591 = vpop.f32.mrf.mxu0
        %v2592 = vadd.f32 0.0, %v2591
        %v2593 = vpop.f32.mrf.mxu0
        %v2594 = vadd.f32 0.0, %v2593
        %2595 = vmatmul.bf16.gmra.mxu0 %v2545
        %v2596 = vpop.f32.mrf.mxu0
        %v2597 = vadd.f32 0.0, %v2596
        %v2598 = vpop.f32.mrf.mxu0
        %v2599 = vadd.f32 0.0, %v2598
        %2600 = vmatmul.bf16.gmra.mxu0 %v2548
        %v2601 = vpop.f32.mrf.mxu0
        %v2602 = vadd.f32 0.0, %v2601
        %v2603 = vpop.f32.mrf.mxu0
        %v2604 = vadd.f32 0.0, %v2603
        %2605 = vmatmul.bf16.gmra.mxu0 %v2551
        %v2606 = vpop.f32.mrf.mxu0
        %v2607 = vadd.f32 0.0, %v2606
        %v2608 = vpop.f32.mrf.mxu0
        %v2609 = vadd.f32 0.0, %v2608
        %2610 = vmatmul.bf16.gmra.mxu0 %v2554
        %v2611 = vpop.f32.mrf.mxu0
        %v2612 = vadd.f32 0.0, %v2611
        %v2613 = vpop.f32.mrf.mxu0
        %v2614 = vadd.f32 0.0, %v2613
        %2615 = vmatmul.bf16.gmra.mxu0 %v2557
        %v2616 = vpop.f32.mrf.mxu0
        %v2617 = vadd.f32 0.0, %v2616
        %v2618 = vpop.f32.mrf.mxu0
        %v2619 = vadd.f32 0.0, %v2618
        %2620 = vmatmul.bf16.gmra.mxu0 %v2560
        %v2621 = vpop.f32.mrf.mxu0
        %v2622 = vadd.f32 0.0, %v2621
        %v2623 = vpop.f32.mrf.mxu0
        %v2624 = vadd.f32 0.0, %v2623
        %2625 = vmatmul.bf16.gmra.mxu0 %v2563
        %v2626 = vpop.f32.mrf.mxu0
        %v2627 = vadd.f32 0.0, %v2626
        %v2628 = vpop.f32.mrf.mxu0
        %v2629 = vadd.f32 0.0, %v2628
        %2630 = vmatmul.bf16.gmra.mxu0 %v2566
        %v2631 = vpop.f32.mrf.mxu0
        %v2632 = vadd.f32 0.0, %v2631
        %v2633 = vpop.f32.mrf.mxu0
        %v2634 = vadd.f32 0.0, %v2633
        %2635 = vmatmul.bf16.gmra.mxu0 %v2569
        %v2636 = vpop.f32.mrf.mxu0
        %v2637 = vadd.f32 0.0, %v2636
        %v2638 = vpop.f32.mrf.mxu0
        %v2639 = vadd.f32 0.0, %v2638
        %2640 = vmatmul.bf16.gmra.mxu0 %v2572
        %v2641 = vpop.f32.mrf.mxu0
        %v2642 = vadd.f32 0.0, %v2641
        %v2643 = vpop.f32.mrf.mxu0
        %v2644 = vadd.f32 0.0, %v2643
        %2645 = vdwg.mxu0
        %v2646 = vadd.f32 %v2424, %v2587
        %v2647 = vadd.f32 %v2425, %v2589
        %v2648 = vadd.f32 %v2426, %v2592
        %v2649 = vadd.f32 %v2427, %v2594
        %v2650 = vadd.f32 %v2428, %v2597
        %v2651 = vadd.f32 %v2429, %v2599
        %v2652 = vadd.f32 %v2430, %v2602
        %v2653 = vadd.f32 %v2431, %v2604
        %v2654 = vadd.f32 %v2432, %v2607
        %v2655 = vadd.f32 %v2433, %v2609
        %v2656 = vadd.f32 %v2434, %v2612
        %v2657 = vadd.f32 %v2435, %v2614
        %v2658 = vadd.f32 %v2436, %v2617
        %v2659 = vadd.f32 %v2437, %v2619
        %v2660 = vadd.f32 %v2438, %v2622
        %v2661 = vadd.f32 %v2439, %v2624
        %v2662 = vadd.f32 %v2440, %v2627
        %v2663 = vadd.f32 %v2441, %v2629
        %v2664 = vadd.f32 %v2442, %v2632
        %v2665 = vadd.f32 %v2443, %v2634
        %v2666 = vadd.f32 %v2444, %v2637
        %v2667 = vadd.f32 %v2445, %v2639
        %v2668 = vadd.f32 %v2446, %v2642
        %v2669 = vadd.f32 %v2447, %v2644
        %v2670 = vld [vmem:[%s2451] sm:$0xf]
        %v2671 = vld [vmem:[%s2451 + $0x4] sm:$0xf]
        %v2672 = vld [vmem:[%s2451 + $0x8] sm:$0x1]
        %v2673 = vld [vmem:[%s2451 + $0xc] sm:$0xf]
        %v2674 = vld [vmem:[%s2451 + $0x10] sm:$0xf]
        %v2675 = vld [vmem:[%s2451 + $0x14] sm:$0x1]
        %v2676 = vld [vmem:[%s2451 + $0x18] sm:$0xf]
        %v2677 = vld [vmem:[%s2451 + $0x1c] sm:$0xf]
        %v2678 = vld [vmem:[%s2451 + $0x20] sm:$0x1]
        %v2679 = vld [vmem:[%s2451 + $0x24] sm:$0xf]
        %v2680 = vld [vmem:[%s2451 + $0x28] sm:$0xf]
        %v2681 = vld [vmem:[%s2451 + $0x2c] sm:$0x1]
        %v2682 = vld [vmem:[%s2451 + $0x30] sm:$0xf]
        %v2683 = vld [vmem:[%s2451 + $0x34] sm:$0xf]
        %v2684 = vld [vmem:[%s2451 + $0x38] sm:$0x1]
        %v2685 = vld [vmem:[%s2451 + $0x3c] sm:$0xf]
        %v2686 = vld [vmem:[%s2451 + $0x40] sm:$0xf]
        %v2687 = vld [vmem:[%s2451 + $0x44] sm:$0x1]
        %v2688 = vld [vmem:[%s2451 + $0x48] sm:$0xf]
        %v2689 = vld [vmem:[%s2451 + $0x4c] sm:$0xf]
        %v2690 = vld [vmem:[%s2451 + $0x50] sm:$0x1]
        %v2691 = vld [vmem:[%s2451 + $0x54] sm:$0xf]
        %v2692 = vld [vmem:[%s2451 + $0x58] sm:$0xf]
        %v2693 = vld [vmem:[%s2451 + $0x5c] sm:$0x1]
        %v2694 = vld [vmem:[%s2451 + $0x60] sm:$0xf]
        %v2695 = vld [vmem:[%s2451 + $0x64] sm:$0xf]
        %v2696 = vld [vmem:[%s2451 + $0x68] sm:$0x1]
        %v2697 = vld [vmem:[%s2451 + $0x6c] sm:$0xf]
        %v2698 = vld [vmem:[%s2451 + $0x70] sm:$0xf]
        %v2699 = vld [vmem:[%s2451 + $0x74] sm:$0x1]
        %v2700 = vld [vmem:[%s2451 + $0x78] sm:$0xf]
        %v2701 = vld [vmem:[%s2451 + $0x7c] sm:$0xf]
        %v2702 = vld [vmem:[%s2451 + $0x80] sm:$0x1]
        %v2703 = vld [vmem:[%s2451 + $0x84] sm:$0xf]
        %v2704 = vld [vmem:[%s2451 + $0x88] sm:$0xf]
        %v2705 = vld [vmem:[%s2451 + $0x8c] sm:$0x1]
        %v2707 = vshrl.u32 %v2670, 16
        %v2709 = vrot.slane %v2707, 4
        %v2710 = vshll.u32 %v2670, 16
        %v2712 = vrot.slane %v2710, 5
        %v2713 = vor.u32 %v2709, %v2712
        %v2714 = vrot.slane %v2713, 4
        %v2716 = vshll.u32 %v2671, 16
        %v2718 = vrot.slane %v2716, 5
        %v2719 = vsel %vm529, %v2714, %v2718
        %v2720 = vshrl.u32 %v2671, 16
        %v2722 = vrot.slane %v2720, 4
        %v2723 = vor.u32 %v2722, %v2718
        %v2724 = vrot.slane %v2723, 4
        %v2726 = vshll.u32 %v2672, 16
        %v2728 = vrot.slane %v2726, 5
        %v2729 = vsel %vm529, %v2724, %v2728
        %v2731 = vshrl.u32 %v2673, 16
        %v2733 = vrot.slane %v2731, 4
        %v2734 = vshll.u32 %v2673, 16
        %v2736 = vrot.slane %v2734, 5
        %v2737 = vor.u32 %v2733, %v2736
        %v2738 = vrot.slane %v2737, 4
        %v2740 = vshll.u32 %v2674, 16
        %v2742 = vrot.slane %v2740, 5
        %v2743 = vsel %vm529, %v2738, %v2742
        %v2744 = vshrl.u32 %v2674, 16
        %v2746 = vrot.slane %v2744, 4
        %v2747 = vor.u32 %v2746, %v2742
        %v2748 = vrot.slane %v2747, 4
        %v2750 = vshll.u32 %v2675, 16
        %v2752 = vrot.slane %v2750, 5
        %v2753 = vsel %vm529, %v2748, %v2752
        %v2755 = vshrl.u32 %v2676, 16
        %v2757 = vrot.slane %v2755, 4
        %v2758 = vshll.u32 %v2676, 16
        %v2760 = vrot.slane %v2758, 5
        %v2761 = vor.u32 %v2757, %v2760
        %v2762 = vrot.slane %v2761, 4
        %v2764 = vshll.u32 %v2677, 16
        %v2766 = vrot.slane %v2764, 5
        %v2767 = vsel %vm529, %v2762, %v2766
        %v2768 = vshrl.u32 %v2677, 16
        %v2770 = vrot.slane %v2768, 4
        %v2771 = vor.u32 %v2770, %v2766
        %v2772 = vrot.slane %v2771, 4
        %v2774 = vshll.u32 %v2678, 16
        %v2776 = vrot.slane %v2774, 5
        %v2777 = vsel %vm529, %v2772, %v2776
        %v2779 = vshrl.u32 %v2679, 16
        %v2781 = vrot.slane %v2779, 4
        %v2782 = vshll.u32 %v2679, 16
        %v2784 = vrot.slane %v2782, 5
        %v2785 = vor.u32 %v2781, %v2784
        %v2786 = vrot.slane %v2785, 4
        %v2788 = vshll.u32 %v2680, 16
        %v2790 = vrot.slane %v2788, 5
        %v2791 = vsel %vm529, %v2786, %v2790
        %v2792 = vshrl.u32 %v2680, 16
        %v2794 = vrot.slane %v2792, 4
        %v2795 = vor.u32 %v2794, %v2790
        %v2796 = vrot.slane %v2795, 4
        %v2798 = vshll.u32 %v2681, 16
        %v2800 = vrot.slane %v2798, 5
        %v2801 = vsel %vm529, %v2796, %v2800
        %v2803 = vshrl.u32 %v2682, 16
        %v2805 = vrot.slane %v2803, 4
        %v2806 = vshll.u32 %v2682, 16
        %v2808 = vrot.slane %v2806, 5
        %v2809 = vor.u32 %v2805, %v2808
        %v2810 = vrot.slane %v2809, 4
        %v2812 = vshll.u32 %v2683, 16
        %v2814 = vrot.slane %v2812, 5
        %v2815 = vsel %vm529, %v2810, %v2814
        %v2816 = vshrl.u32 %v2683, 16
        %v2818 = vrot.slane %v2816, 4
        %v2819 = vor.u32 %v2818, %v2814
        %v2820 = vrot.slane %v2819, 4
        %v2822 = vshll.u32 %v2684, 16
        %v2824 = vrot.slane %v2822, 5
        %v2825 = vsel %vm529, %v2820, %v2824
        %v2827 = vshrl.u32 %v2685, 16
        %v2829 = vrot.slane %v2827, 4
        %v2830 = vshll.u32 %v2685, 16
        %v2832 = vrot.slane %v2830, 5
        %v2833 = vor.u32 %v2829, %v2832
        %v2834 = vrot.slane %v2833, 4
        %v2836 = vshll.u32 %v2686, 16
        %v2838 = vrot.slane %v2836, 5
        %v2839 = vsel %vm529, %v2834, %v2838
        %v2840 = vshrl.u32 %v2686, 16
        %v2842 = vrot.slane %v2840, 4
        %v2843 = vor.u32 %v2842, %v2838
        %v2844 = vrot.slane %v2843, 4
        %v2846 = vshll.u32 %v2687, 16
        %v2848 = vrot.slane %v2846, 5
        %v2849 = vsel %vm529, %v2844, %v2848
        %v2851 = vshrl.u32 %v2688, 16
        %v2853 = vrot.slane %v2851, 4
        %v2854 = vshll.u32 %v2688, 16
        %v2856 = vrot.slane %v2854, 5
        %v2857 = vor.u32 %v2853, %v2856
        %v2858 = vrot.slane %v2857, 4
        %v2860 = vshll.u32 %v2689, 16
        %v2862 = vrot.slane %v2860, 5
        %v2863 = vsel %vm529, %v2858, %v2862
        %v2864 = vshrl.u32 %v2689, 16
        %v2866 = vrot.slane %v2864, 4
        %v2867 = vor.u32 %v2866, %v2862
        %v2868 = vrot.slane %v2867, 4
        %v2870 = vshll.u32 %v2690, 16
        %v2872 = vrot.slane %v2870, 5
        %v2873 = vsel %vm529, %v2868, %v2872
        %v2875 = vshrl.u32 %v2691, 16
        %v2877 = vrot.slane %v2875, 4
        %v2878 = vshll.u32 %v2691, 16
        %v2880 = vrot.slane %v2878, 5
        %v2881 = vor.u32 %v2877, %v2880
        %v2882 = vrot.slane %v2881, 4
        %v2884 = vshll.u32 %v2692, 16
        %v2886 = vrot.slane %v2884, 5
        %v2887 = vsel %vm529, %v2882, %v2886
        %v2888 = vshrl.u32 %v2692, 16
        %v2890 = vrot.slane %v2888, 4
        %v2891 = vor.u32 %v2890, %v2886
        %v2892 = vrot.slane %v2891, 4
        %v2894 = vshll.u32 %v2693, 16
        %v2896 = vrot.slane %v2894, 5
        %v2897 = vsel %vm529, %v2892, %v2896
        %v2899 = vshrl.u32 %v2694, 16
        %v2901 = vrot.slane %v2899, 4
        %v2902 = vshll.u32 %v2694, 16
        %v2904 = vrot.slane %v2902, 5
        %v2905 = vor.u32 %v2901, %v2904
        %v2906 = vrot.slane %v2905, 4
        %v2908 = vshll.u32 %v2695, 16
        %v2910 = vrot.slane %v2908, 5
        %v2911 = vsel %vm529, %v2906, %v2910
        %v2912 = vshrl.u32 %v2695, 16
        %v2914 = vrot.slane %v2912, 4
        %v2915 = vor.u32 %v2914, %v2910
        %v2916 = vrot.slane %v2915, 4
        %v2918 = vshll.u32 %v2696, 16
        %v2920 = vrot.slane %v2918, 5
        %v2921 = vsel %vm529, %v2916, %v2920
        %v2923 = vshrl.u32 %v2697, 16
        %v2925 = vrot.slane %v2923, 4
        %v2926 = vshll.u32 %v2697, 16
        %v2928 = vrot.slane %v2926, 5
        %v2929 = vor.u32 %v2925, %v2928
        %v2930 = vrot.slane %v2929, 4
        %v2932 = vshll.u32 %v2698, 16
        %v2934 = vrot.slane %v2932, 5
        %v2935 = vsel %vm529, %v2930, %v2934
        %v2936 = vshrl.u32 %v2698, 16
        %v2938 = vrot.slane %v2936, 4
        %v2939 = vor.u32 %v2938, %v2934
        %v2940 = vrot.slane %v2939, 4
        %v2942 = vshll.u32 %v2699, 16
        %v2944 = vrot.slane %v2942, 5
        %v2945 = vsel %vm529, %v2940, %v2944
        %v2947 = vshrl.u32 %v2700, 16
        %v2949 = vrot.slane %v2947, 4
        %v2950 = vshll.u32 %v2700, 16
        %v2952 = vrot.slane %v2950, 5
        %v2953 = vor.u32 %v2949, %v2952
        %v2954 = vrot.slane %v2953, 4
        %v2956 = vshll.u32 %v2701, 16
        %v2958 = vrot.slane %v2956, 5
        %v2959 = vsel %vm529, %v2954, %v2958
        %v2960 = vshrl.u32 %v2701, 16
        %v2962 = vrot.slane %v2960, 4
        %v2963 = vor.u32 %v2962, %v2958
        %v2964 = vrot.slane %v2963, 4
        %v2966 = vshll.u32 %v2702, 16
        %v2968 = vrot.slane %v2966, 5
        %v2969 = vsel %vm529, %v2964, %v2968
        %v2971 = vshrl.u32 %v2703, 16
        %v2973 = vrot.slane %v2971, 4
        %v2974 = vshll.u32 %v2703, 16
        %v2976 = vrot.slane %v2974, 5
        %v2977 = vor.u32 %v2973, %v2976
        %v2978 = vrot.slane %v2977, 4
        %v2980 = vshll.u32 %v2704, 16
        %v2982 = vrot.slane %v2980, 5
        %v2983 = vsel %vm529, %v2978, %v2982
        %v2984 = vshrl.u32 %v2704, 16
        %v2986 = vrot.slane %v2984, 4
        %v2987 = vor.u32 %v2986, %v2982
        %v2988 = vrot.slane %v2987, 4
        %v2990 = vshll.u32 %v2705, 16
        %v2992 = vrot.slane %v2990, 5
        %v2993 = vsel %vm529, %v2988, %v2992
        %s2994 = scalar_lea.vmem %s1, 14
        %v2995 = vld [vmem:[%s2994] sm:$0x3]
        %v2996 = vunpack.c.l.b16 %v2719
        %v2997 = vunpack.c.l.b16 %v2729
        %v2998 = vunpack.c.l.b16 %v2743
        %v2999 = vunpack.c.l.b16 %v2753
        %v3000 = vunpack.c.l.b16 %v2767
        %v3001 = vunpack.c.l.b16 %v2777
        %v3002 = vunpack.c.l.b16 %v2791
        %v3003 = vunpack.c.l.b16 %v2801
        %v3004 = vunpack.c.l.b16 %v2815
        %v3005 = vunpack.c.l.b16 %v2825
        %v3006 = vunpack.c.l.b16 %v2839
        %v3007 = vunpack.c.l.b16 %v2849
        %v3008 = vunpack.c.l.b16 %v2863
        %v3009 = vunpack.c.l.b16 %v2873
        %v3010 = vunpack.c.l.b16 %v2887
        %v3011 = vunpack.c.l.b16 %v2897
        %v3012 = vunpack.c.l.b16 %v2911
        %v3013 = vunpack.c.l.b16 %v2921
        %v3014 = vunpack.c.l.b16 %v2935
        %v3015 = vunpack.c.l.b16 %v2945
        %v3016 = vunpack.c.l.b16 %v2959
        %v3017 = vunpack.c.l.b16 %v2969
        %v3018 = vunpack.c.l.b16 %v2983
        %v3019 = vunpack.c.l.b16 %v2993
        %v3020 = vpack.c.b16 %v2997, %v2996
        %v3021 = vpack.c.b16 %v2999, %v2998
        %v3022 = vpack.c.b16 %v3001, %v3000
        %v3023 = vpack.c.b16 %v3003, %v3002
        %v3024 = vpack.c.b16 %v3005, %v3004
        %v3025 = vpack.c.b16 %v3007, %v3006
        %v3026 = vpack.c.b16 %v3009, %v3008
        %v3027 = vpack.c.b16 %v3011, %v3010
        %v3028 = vpack.c.b16 %v3013, %v3012
        %v3029 = vpack.c.b16 %v3015, %v3014
        %v3030 = vpack.c.b16 %v3017, %v3016
        %v3031 = vpack.c.b16 %v3019, %v3018
        %v3033 = vsel %vm856, %v3020, 0
        %v3036 = vsel %vm856, %v3021, 0
        %v3039 = vsel %vm856, %v3022, 0
        %v3042 = vsel %vm856, %v3023, 0
        %v3045 = vsel %vm856, %v3024, 0
        %v3048 = vsel %vm856, %v3025, 0
        %v3051 = vsel %vm856, %v3026, 0
        %v3054 = vsel %vm856, %v3027, 0
        %v3057 = vsel %vm856, %v3028, 0
        %v3060 = vsel %vm856, %v3029, 0
        %v3063 = vsel %vm856, %v3030, 0
        %v3066 = vsel %vm856, %v3031, 0
        %v3069 = vand.u32 %v2995, %v896
        %3071 = vmatpush.bf16.msra.mxu0 0
        %3072 = vmatpush.bf16.msra.mxu0 0
        %3073 = vmatpush.bf16.msra.mxu0 0
        %3074 = vmatpush.bf16.msra.mxu0 0
        %3075 = vmatpush.bf16.msra.mxu0 0
        %3076 = vmatpush.bf16.msra.mxu0 0
        %3077 = vmatpush.bf16.msra.mxu0 0
        %3078 = vmatpush.bf16.msra.mxu0 %v3069
        %3079 = vmatmul.bf16.gmra.mxu0 %v3033
        %v3080 = vpop.f32.mrf.mxu0
        %v3081 = vadd.f32 0.0, %v3080
        %v3082 = vpop.f32.mrf.mxu0
        %v3083 = vadd.f32 0.0, %v3082
        %3084 = vmatmul.bf16.gmra.mxu0 %v3036
        %v3085 = vpop.f32.mrf.mxu0
        %v3086 = vadd.f32 0.0, %v3085
        %v3087 = vpop.f32.mrf.mxu0
        %v3088 = vadd.f32 0.0, %v3087
        %3089 = vmatmul.bf16.gmra.mxu0 %v3039
        %v3090 = vpop.f32.mrf.mxu0
        %v3091 = vadd.f32 0.0, %v3090
        %v3092 = vpop.f32.mrf.mxu0
        %v3093 = vadd.f32 0.0, %v3092
        %3094 = vmatmul.bf16.gmra.mxu0 %v3042
        %v3095 = vpop.f32.mrf.mxu0
        %v3096 = vadd.f32 0.0, %v3095
        %v3097 = vpop.f32.mrf.mxu0
        %v3098 = vadd.f32 0.0, %v3097
        %3099 = vmatmul.bf16.gmra.mxu0 %v3045
        %v3100 = vpop.f32.mrf.mxu0
        %v3101 = vadd.f32 0.0, %v3100
        %v3102 = vpop.f32.mrf.mxu0
        %v3103 = vadd.f32 0.0, %v3102
        %3104 = vmatmul.bf16.gmra.mxu0 %v3048
        %v3105 = vpop.f32.mrf.mxu0
        %v3106 = vadd.f32 0.0, %v3105
        %v3107 = vpop.f32.mrf.mxu0
        %v3108 = vadd.f32 0.0, %v3107
        %3109 = vmatmul.bf16.gmra.mxu0 %v3051
        %v3110 = vpop.f32.mrf.mxu0
        %v3111 = vadd.f32 0.0, %v3110
        %v3112 = vpop.f32.mrf.mxu0
        %v3113 = vadd.f32 0.0, %v3112
        %3114 = vmatmul.bf16.gmra.mxu0 %v3054
        %v3115 = vpop.f32.mrf.mxu0
        %v3116 = vadd.f32 0.0, %v3115
        %v3117 = vpop.f32.mrf.mxu0
        %v3118 = vadd.f32 0.0, %v3117
        %3119 = vmatmul.bf16.gmra.mxu0 %v3057
        %v3120 = vpop.f32.mrf.mxu0
        %v3121 = vadd.f32 0.0, %v3120
        %v3122 = vpop.f32.mrf.mxu0
        %v3123 = vadd.f32 0.0, %v3122
        %3124 = vmatmul.bf16.gmra.mxu0 %v3060
        %v3125 = vpop.f32.mrf.mxu0
        %v3126 = vadd.f32 0.0, %v3125
        %v3127 = vpop.f32.mrf.mxu0
        %v3128 = vadd.f32 0.0, %v3127
        %3129 = vmatmul.bf16.gmra.mxu0 %v3063
        %v3130 = vpop.f32.mrf.mxu0
        %v3131 = vadd.f32 0.0, %v3130
        %v3132 = vpop.f32.mrf.mxu0
        %v3133 = vadd.f32 0.0, %v3132
        %3134 = vmatmul.bf16.gmra.mxu0 %v3066
        %v3135 = vpop.f32.mrf.mxu0
        %v3136 = vadd.f32 0.0, %v3135
        %v3137 = vpop.f32.mrf.mxu0
        %v3138 = vadd.f32 0.0, %v3137
        %3139 = vdwg.mxu0
        %v3140 = vadd.f32 %v2646, %v3081
        %v3141 = vadd.f32 %v2647, %v3083
        %v3142 = vadd.f32 %v2648, %v3086
        %v3143 = vadd.f32 %v2649, %v3088
        %v3144 = vadd.f32 %v2650, %v3091
        %v3145 = vadd.f32 %v2651, %v3093
        %v3146 = vadd.f32 %v2652, %v3096
        %v3147 = vadd.f32 %v2653, %v3098
        %v3148 = vadd.f32 %v2654, %v3101
        %v3149 = vadd.f32 %v2655, %v3103
        %v3150 = vadd.f32 %v2656, %v3106
        %v3151 = vadd.f32 %v2657, %v3108
        %v3152 = vadd.f32 %v2658, %v3111
        %v3153 = vadd.f32 %v2659, %v3113
        %v3154 = vadd.f32 %v2660, %v3116
        %v3155 = vadd.f32 %v2661, %v3118
        %v3156 = vadd.f32 %v2662, %v3121
        %v3157 = vadd.f32 %v2663, %v3123
        %v3158 = vadd.f32 %v2664, %v3126
        %v3159 = vadd.f32 %v2665, %v3128
        %v3160 = vadd.f32 %v2666, %v3131
        %v3161 = vadd.f32 %v2667, %v3133
        %v3162 = vadd.f32 %v2668, %v3136
        %v3163 = vadd.f32 %v2669, %v3138
        %v3164 = vld [vmem:[%s2451] sm:$0xe]
        %v3165 = vld [vmem:[%s2451 + $0xc] sm:$0xe]
        %v3166 = vld [vmem:[%s2451 + $0x18] sm:$0xe]
        %v3167 = vld [vmem:[%s2451 + $0x24] sm:$0xe]
        %v3168 = vld [vmem:[%s2451 + $0x30] sm:$0xe]
        %v3169 = vld [vmem:[%s2451 + $0x3c] sm:$0xe]
        %v3170 = vld [vmem:[%s2451 + $0x48] sm:$0xe]
        %v3171 = vld [vmem:[%s2451 + $0x54] sm:$0xe]
        %v3172 = vld [vmem:[%s2451 + $0x60] sm:$0xe]
        %v3173 = vld [vmem:[%s2451 + $0x6c] sm:$0xe]
        %v3174 = vld [vmem:[%s2451 + $0x78] sm:$0xe]
        %v3175 = vld [vmem:[%s2451 + $0x84] sm:$0xe]
        %v3212 = vrot.slane %v3164, 5
        %v3213 = vrot.slane %v3212, 4
        %v3214 = vrot.slane %v2671, 5
        %v3215 = vsel %vm1175, %v3213, %v3214
        %v3216 = vrot.slane %v3214, 4
        %v3217 = vrot.slane %v2672, 5
        %v3218 = vsel %vm1175, %v3216, %v3217
        %v3219 = vrot.slane %v3165, 5
        %v3220 = vrot.slane %v3219, 4
        %v3221 = vrot.slane %v2674, 5
        %v3222 = vsel %vm1175, %v3220, %v3221
        %v3223 = vrot.slane %v3221, 4
        %v3224 = vrot.slane %v2675, 5
        %v3225 = vsel %vm1175, %v3223, %v3224
        %v3226 = vrot.slane %v3166, 5
        %v3227 = vrot.slane %v3226, 4
        %v3228 = vrot.slane %v2677, 5
        %v3229 = vsel %vm1175, %v3227, %v3228
        %v3230 = vrot.slane %v3228, 4
        %v3231 = vrot.slane %v2678, 5
        %v3232 = vsel %vm1175, %v3230, %v3231
        %v3233 = vrot.slane %v3167, 5
        %v3234 = vrot.slane %v3233, 4
        %v3235 = vrot.slane %v2680, 5
        %v3236 = vsel %vm1175, %v3234, %v3235
        %v3237 = vrot.slane %v3235, 4
        %v3238 = vrot.slane %v2681, 5
        %v3239 = vsel %vm1175, %v3237, %v3238
        %v3240 = vrot.slane %v3168, 5
        %v3241 = vrot.slane %v3240, 4
        %v3242 = vrot.slane %v2683, 5
        %v3243 = vsel %vm1175, %v3241, %v3242
        %v3244 = vrot.slane %v3242, 4
        %v3245 = vrot.slane %v2684, 5
        %v3246 = vsel %vm1175, %v3244, %v3245
        %v3247 = vrot.slane %v3169, 5
        %v3248 = vrot.slane %v3247, 4
        %v3249 = vrot.slane %v2686, 5
        %v3250 = vsel %vm1175, %v3248, %v3249
        %v3251 = vrot.slane %v3249, 4
        %v3252 = vrot.slane %v2687, 5
        %v3253 = vsel %vm1175, %v3251, %v3252
        %v3254 = vrot.slane %v3170, 5
        %v3255 = vrot.slane %v3254, 4
        %v3256 = vrot.slane %v2689, 5
        %v3257 = vsel %vm1175, %v3255, %v3256
        %v3258 = vrot.slane %v3256, 4
        %v3259 = vrot.slane %v2690, 5
        %v3260 = vsel %vm1175, %v3258, %v3259
        %v3261 = vrot.slane %v3171, 5
        %v3262 = vrot.slane %v3261, 4
        %v3263 = vrot.slane %v2692, 5
        %v3264 = vsel %vm1175, %v3262, %v3263
        %v3265 = vrot.slane %v3263, 4
        %v3266 = vrot.slane %v2693, 5
        %v3267 = vsel %vm1175, %v3265, %v3266
        %v3268 = vrot.slane %v3172, 5
        %v3269 = vrot.slane %v3268, 4
        %v3270 = vrot.slane %v2695, 5
        %v3271 = vsel %vm1175, %v3269, %v3270
        %v3272 = vrot.slane %v3270, 4
        %v3273 = vrot.slane %v2696, 5
        %v3274 = vsel %vm1175, %v3272, %v3273
        %v3275 = vrot.slane %v3173, 5
        %v3276 = vrot.slane %v3275, 4
        %v3277 = vrot.slane %v2698, 5
        %v3278 = vsel %vm1175, %v3276, %v3277
        %v3279 = vrot.slane %v3277, 4
        %v3280 = vrot.slane %v2699, 5
        %v3281 = vsel %vm1175, %v3279, %v3280
        %v3282 = vrot.slane %v3174, 5
        %v3283 = vrot.slane %v3282, 4
        %v3284 = vrot.slane %v2701, 5
        %v3285 = vsel %vm1175, %v3283, %v3284
        %v3286 = vrot.slane %v3284, 4
        %v3287 = vrot.slane %v2702, 5
        %v3288 = vsel %vm1175, %v3286, %v3287
        %v3289 = vrot.slane %v3175, 5
        %v3290 = vrot.slane %v3289, 4
        %v3291 = vrot.slane %v2704, 5
        %v3292 = vsel %vm1175, %v3290, %v3291
        %v3293 = vrot.slane %v3291, 4
        %v3294 = vrot.slane %v2705, 5
        %v3295 = vsel %vm1175, %v3293, %v3294
        %s3296 = scalar_lea.vmem %s1, 16
        %v3297 = vld [vmem:[%s3296] sm:$0x3]
        %v3298 = vunpack.c.l.b16 %v3215
        %v3299 = vunpack.c.l.b16 %v3218
        %v3300 = vunpack.c.l.b16 %v3222
        %v3301 = vunpack.c.l.b16 %v3225
        %v3302 = vunpack.c.l.b16 %v3229
        %v3303 = vunpack.c.l.b16 %v3232
        %v3304 = vunpack.c.l.b16 %v3236
        %v3305 = vunpack.c.l.b16 %v3239
        %v3306 = vunpack.c.l.b16 %v3243
        %v3307 = vunpack.c.l.b16 %v3246
        %v3308 = vunpack.c.l.b16 %v3250
        %v3309 = vunpack.c.l.b16 %v3253
        %v3310 = vunpack.c.l.b16 %v3257
        %v3311 = vunpack.c.l.b16 %v3260
        %v3312 = vunpack.c.l.b16 %v3264
        %v3313 = vunpack.c.l.b16 %v3267
        %v3314 = vunpack.c.l.b16 %v3271
        %v3315 = vunpack.c.l.b16 %v3274
        %v3316 = vunpack.c.l.b16 %v3278
        %v3317 = vunpack.c.l.b16 %v3281
        %v3318 = vunpack.c.l.b16 %v3285
        %v3319 = vunpack.c.l.b16 %v3288
        %v3320 = vunpack.c.l.b16 %v3292
        %v3321 = vunpack.c.l.b16 %v3295
        %v3322 = vpack.c.b16 %v3299, %v3298
        %v3323 = vpack.c.b16 %v3301, %v3300
        %v3324 = vpack.c.b16 %v3303, %v3302
        %v3325 = vpack.c.b16 %v3305, %v3304
        %v3326 = vpack.c.b16 %v3307, %v3306
        %v3327 = vpack.c.b16 %v3309, %v3308
        %v3328 = vpack.c.b16 %v3311, %v3310
        %v3329 = vpack.c.b16 %v3313, %v3312
        %v3330 = vpack.c.b16 %v3315, %v3314
        %v3331 = vpack.c.b16 %v3317, %v3316
        %v3332 = vpack.c.b16 %v3319, %v3318
        %v3333 = vpack.c.b16 %v3321, %v3320
        %v3335 = vsel %vm856, %v3322, 0
        %v3338 = vsel %vm856, %v3323, 0
        %v3341 = vsel %vm856, %v3324, 0
        %v3344 = vsel %vm856, %v3325, 0
        %v3347 = vsel %vm856, %v3326, 0
        %v3350 = vsel %vm856, %v3327, 0
        %v3353 = vsel %vm856, %v3328, 0
        %v3356 = vsel %vm856, %v3329, 0
        %v3359 = vsel %vm856, %v3330, 0
        %v3362 = vsel %vm856, %v3331, 0
        %v3365 = vsel %vm856, %v3332, 0
        %v3368 = vsel %vm856, %v3333, 0
        %v3371 = vand.u32 %v3297, %v896
        %3373 = vmatpush.bf16.msra.mxu0 0
        %3374 = vmatpush.bf16.msra.mxu0 0
        %3375 = vmatpush.bf16.msra.mxu0 0
        %3376 = vmatpush.bf16.msra.mxu0 0
        %3377 = vmatpush.bf16.msra.mxu0 0
        %3378 = vmatpush.bf16.msra.mxu0 0
        %3379 = vmatpush.bf16.msra.mxu0 0
        %3380 = vmatpush.bf16.msra.mxu0 %v3371
        %3381 = vmatmul.bf16.gmra.mxu0 %v3335
        %v3382 = vpop.f32.mrf.mxu0
        %v3383 = vadd.f32 0.0, %v3382
        %v3384 = vpop.f32.mrf.mxu0
        %v3385 = vadd.f32 0.0, %v3384
        %3386 = vmatmul.bf16.gmra.mxu0 %v3338
        %v3387 = vpop.f32.mrf.mxu0
        %v3388 = vadd.f32 0.0, %v3387
        %v3389 = vpop.f32.mrf.mxu0
        %v3390 = vadd.f32 0.0, %v3389
        %3391 = vmatmul.bf16.gmra.mxu0 %v3341
        %v3392 = vpop.f32.mrf.mxu0
        %v3393 = vadd.f32 0.0, %v3392
        %v3394 = vpop.f32.mrf.mxu0
        %v3395 = vadd.f32 0.0, %v3394
        %3396 = vmatmul.bf16.gmra.mxu0 %v3344
        %v3397 = vpop.f32.mrf.mxu0
        %v3398 = vadd.f32 0.0, %v3397
        %v3399 = vpop.f32.mrf.mxu0
        %v3400 = vadd.f32 0.0, %v3399
        %3401 = vmatmul.bf16.gmra.mxu0 %v3347
        %v3402 = vpop.f32.mrf.mxu0
        %v3403 = vadd.f32 0.0, %v3402
        %v3404 = vpop.f32.mrf.mxu0
        %v3405 = vadd.f32 0.0, %v3404
        %3406 = vmatmul.bf16.gmra.mxu0 %v3350
        %v3407 = vpop.f32.mrf.mxu0
        %v3408 = vadd.f32 0.0, %v3407
        %v3409 = vpop.f32.mrf.mxu0
        %v3410 = vadd.f32 0.0, %v3409
        %3411 = vmatmul.bf16.gmra.mxu0 %v3353
        %v3412 = vpop.f32.mrf.mxu0
        %v3413 = vadd.f32 0.0, %v3412
        %v3414 = vpop.f32.mrf.mxu0
        %v3415 = vadd.f32 0.0, %v3414
        %3416 = vmatmul.bf16.gmra.mxu0 %v3356
        %v3417 = vpop.f32.mrf.mxu0
        %v3418 = vadd.f32 0.0, %v3417
        %v3419 = vpop.f32.mrf.mxu0
        %v3420 = vadd.f32 0.0, %v3419
        %3421 = vmatmul.bf16.gmra.mxu0 %v3359
        %v3422 = vpop.f32.mrf.mxu0
        %v3423 = vadd.f32 0.0, %v3422
        %v3424 = vpop.f32.mrf.mxu0
        %v3425 = vadd.f32 0.0, %v3424
        %3426 = vmatmul.bf16.gmra.mxu0 %v3362
        %v3427 = vpop.f32.mrf.mxu0
        %v3428 = vadd.f32 0.0, %v3427
        %v3429 = vpop.f32.mrf.mxu0
        %v3430 = vadd.f32 0.0, %v3429
        %3431 = vmatmul.bf16.gmra.mxu0 %v3365
        %v3432 = vpop.f32.mrf.mxu0
        %v3433 = vadd.f32 0.0, %v3432
        %v3434 = vpop.f32.mrf.mxu0
        %v3435 = vadd.f32 0.0, %v3434
        %3436 = vmatmul.bf16.gmra.mxu0 %v3368
        %v3437 = vpop.f32.mrf.mxu0
        %v3438 = vadd.f32 0.0, %v3437
        %v3439 = vpop.f32.mrf.mxu0
        %v3440 = vadd.f32 0.0, %v3439
        %3441 = vdwg.mxu0
        %v3442 = vadd.f32 %v3140, %v3383
        %v3443 = vadd.f32 %v3141, %v3385
        %v3444 = vadd.f32 %v3142, %v3388
        %v3445 = vadd.f32 %v3143, %v3390
        %v3446 = vadd.f32 %v3144, %v3393
        %v3447 = vadd.f32 %v3145, %v3395
        %v3448 = vadd.f32 %v3146, %v3398
        %v3449 = vadd.f32 %v3147, %v3400
        %v3450 = vadd.f32 %v3148, %v3403
        %v3451 = vadd.f32 %v3149, %v3405
        %v3452 = vadd.f32 %v3150, %v3408
        %v3453 = vadd.f32 %v3151, %v3410
        %v3454 = vadd.f32 %v3152, %v3413
        %v3455 = vadd.f32 %v3153, %v3415
        %v3456 = vadd.f32 %v3154, %v3418
        %v3457 = vadd.f32 %v3155, %v3420
        %v3458 = vadd.f32 %v3156, %v3423
        %v3459 = vadd.f32 %v3157, %v3425
        %v3460 = vadd.f32 %v3158, %v3428
        %v3461 = vadd.f32 %v3159, %v3430
        %v3462 = vadd.f32 %v3160, %v3433
        %v3463 = vadd.f32 %v3161, %v3435
        %v3464 = vadd.f32 %v3162, %v3438
        %v3465 = vadd.f32 %v3163, %v3440
        %v3466 = vld [vmem:[#allocation4] sm:$0x1]
        %v3468 = vperm.slane %v3466, 0
        %v3470 = vadd.f32 %v3442, %v3468
        %v3471 = vadd.f32 %v3443, %v3468
        %v3472 = vadd.f32 %v3444, %v3468
        %v3473 = vadd.f32 %v3445, %v3468
        %v3474 = vadd.f32 %v3446, %v3468
        %v3475 = vadd.f32 %v3447, %v3468
        %v3476 = vadd.f32 %v3448, %v3468
        %v3477 = vadd.f32 %v3449, %v3468
        %v3478 = vadd.f32 %v3450, %v3468
        %v3479 = vadd.f32 %v3451, %v3468
        %v3480 = vadd.f32 %v3452, %v3468
        %v3481 = vadd.f32 %v3453, %v3468
        %v3482 = vadd.f32 %v3454, %v3468
        %v3483 = vadd.f32 %v3455, %v3468
        %v3484 = vadd.f32 %v3456, %v3468
        %v3485 = vadd.f32 %v3457, %v3468
        %v3486 = vadd.f32 %v3458, %v3468
        %v3487 = vadd.f32 %v3459, %v3468
        %v3488 = vadd.f32 %v3460, %v3468
        %v3489 = vadd.f32 %v3461, %v3468
        %v3490 = vadd.f32 %v3462, %v3468
        %v3491 = vadd.f32 %v3463, %v3468
        %v3492 = vadd.f32 %v3464, %v3468
        %v3493 = vadd.f32 %v3465, %v3468
        %v3494 = vmax.f32 %v3470, 0.0
        %v3495 = vmax.f32 %v3471, 0.0
        %v3496 = vmax.f32 %v3472, 0.0
        %v3497 = vmax.f32 %v3473, 0.0
        %v3498 = vmax.f32 %v3474, 0.0
        %v3499 = vmax.f32 %v3475, 0.0
        %v3500 = vmax.f32 %v3476, 0.0
        %v3501 = vmax.f32 %v3477, 0.0
        %v3502 = vmax.f32 %v3478, 0.0
        %v3503 = vmax.f32 %v3479, 0.0
        %v3504 = vmax.f32 %v3480, 0.0
        %v3505 = vmax.f32 %v3481, 0.0
        %v3506 = vmax.f32 %v3482, 0.0
        %v3507 = vmax.f32 %v3483, 0.0
        %v3508 = vmax.f32 %v3484, 0.0
        %v3509 = vmax.f32 %v3485, 0.0
        %v3510 = vmax.f32 %v3486, 0.0
        %v3511 = vmax.f32 %v3487, 0.0
        %v3512 = vmax.f32 %v3488, 0.0
        %v3513 = vmax.f32 %v3489, 0.0
        %v3514 = vmax.f32 %v3490, 0.0
        %v3515 = vmax.f32 %v3491, 0.0
        %v3516 = vmax.f32 %v3492, 0.0
        %v3517 = vmax.f32 %v3493, 0.0
        %s3518 = ssub.s32 %s349, 2
        %v3519 = vstv %s3518
        %v3520 = vadd.s32 %v3519, 1
        %v3521 = vadd.s32 %v3519, 2
        %v3522 = vadd.s32 %v3519, 3
        %v3523 = vadd.s32 %v3519, 4
        %v3524 = vadd.s32 %v3519, 5
        %v3525 = vadd.s32 %v3519, 6
        %v3526 = vadd.s32 %v3519, 7
        %v3527 = vadd.s32 %v3519, 8
        %v3528 = vadd.s32 %v3519, 9
        %v3529 = vadd.s32 %v3519, 10
        %v3530 = vadd.s32 %v3519, 11
        %vm3531 = vcmp.ge.s32.totalorder %v3519, 0
        %vm3532 = vcmp.ge.s32.totalorder %v3520, 0
        %vm3533 = vcmp.ge.s32.totalorder %v3521, 0
        %vm3534 = vcmp.ge.s32.totalorder %v3522, 0
        %vm3535 = vcmp.ge.s32.totalorder %v3523, 0
        %vm3536 = vcmp.ge.s32.totalorder %v3524, 0
        %vm3537 = vcmp.ge.s32.totalorder %v3525, 0
        %vm3538 = vcmp.ge.s32.totalorder %v3526, 0
        %vm3539 = vcmp.ge.s32.totalorder %v3527, 0
        %vm3540 = vcmp.ge.s32.totalorder %v3528, 0
        %vm3541 = vcmp.ge.s32.totalorder %v3529, 0
        %vm3542 = vcmp.ge.s32.totalorder %v3530, 0
        %vm3543 = vcmp.lt.s32.totalorder %v3519, 16
        %vm3544 = vcmp.lt.s32.totalorder %v3520, 16
        %vm3545 = vcmp.lt.s32.totalorder %v3521, 16
        %vm3546 = vcmp.lt.s32.totalorder %v3522, 16
        %vm3547 = vcmp.lt.s32.totalorder %v3523, 16
        %vm3548 = vcmp.lt.s32.totalorder %v3524, 16
        %vm3549 = vcmp.lt.s32.totalorder %v3525, 16
        %vm3550 = vcmp.lt.s32.totalorder %v3526, 16
        %vm3551 = vcmp.lt.s32.totalorder %v3527, 16
        %vm3552 = vcmp.lt.s32.totalorder %v3528, 16
        %vm3553 = vcmp.lt.s32.totalorder %v3529, 16
        %vm3554 = vcmp.lt.s32.totalorder %v3530, 16
        %vm3555 = vmand %vm3531, %vm3543
        %vm3556 = vmand %vm3532, %vm3544
        %vm3557 = vmand %vm3533, %vm3545
        %vm3558 = vmand %vm3534, %vm3546
        %vm3559 = vmand %vm3535, %vm3547
        %vm3560 = vmand %vm3536, %vm3548
        %vm3561 = vmand %vm3537, %vm3549
        %vm3562 = vmand %vm3538, %vm3550
        %vm3563 = vmand %vm3539, %vm3551
        %vm3564 = vmand %vm3540, %vm3552
        %vm3565 = vmand %vm3541, %vm3553
        %vm3566 = vmand %vm3542, %vm3554
        %v3567 = vsel %vm3555, 1, 0
        %v3568 = vsel %vm3556, 1, 0
        %v3569 = vsel %vm3557, 1, 0
        %v3570 = vsel %vm3558, 1, 0
        %v3571 = vsel %vm3559, 1, 0
        %v3572 = vsel %vm3560, 1, 0
        %v3573 = vsel %vm3561, 1, 0
        %v3574 = vsel %vm3562, 1, 0
        %v3575 = vsel %vm3563, 1, 0
        %v3576 = vsel %vm3564, 1, 0
        %v3577 = vsel %vm3565, 1, 0
        %v3578 = vsel %vm3566, 1, 0
        %vm3579 = vcmp.eq.s32.totalorder %v3567, 1
        %vm3580 = vcmp.eq.s32.totalorder %v3568, 1
        %vm3581 = vcmp.eq.s32.totalorder %v3569, 1
        %vm3582 = vcmp.eq.s32.totalorder %v3570, 1
        %vm3583 = vcmp.eq.s32.totalorder %v3571, 1
        %vm3584 = vcmp.eq.s32.totalorder %v3572, 1
        %vm3585 = vcmp.eq.s32.totalorder %v3573, 1
        %vm3586 = vcmp.eq.s32.totalorder %v3574, 1
        %vm3587 = vcmp.eq.s32.totalorder %v3575, 1
        %vm3588 = vcmp.eq.s32.totalorder %v3576, 1
        %vm3589 = vcmp.eq.s32.totalorder %v3577, 1
        %vm3590 = vcmp.eq.s32.totalorder %v3578, 1
        %v3591 = vsel %vm3579, %v3494, 0.0
        %v3592 = vsel %vm3579, %v3495, 0.0
        %v3593 = vsel %vm3580, %v3496, 0.0
        %v3594 = vsel %vm3580, %v3497, 0.0
        %v3595 = vsel %vm3581, %v3498, 0.0
        %v3596 = vsel %vm3581, %v3499, 0.0
        %v3597 = vsel %vm3582, %v3500, 0.0
        %v3598 = vsel %vm3582, %v3501, 0.0
        %v3599 = vsel %vm3583, %v3502, 0.0
        %v3600 = vsel %vm3583, %v3503, 0.0
        %v3601 = vsel %vm3584, %v3504, 0.0
        %v3602 = vsel %vm3584, %v3505, 0.0
        %v3603 = vsel %vm3585, %v3506, 0.0
        %v3604 = vsel %vm3585, %v3507, 0.0
        %v3605 = vsel %vm3586, %v3508, 0.0
        %v3606 = vsel %vm3586, %v3509, 0.0
        %v3607 = vsel %vm3587, %v3510, 0.0
        %v3608 = vsel %vm3587, %v3511, 0.0
        %v3609 = vsel %vm3588, %v3512, 0.0
        %v3610 = vsel %vm3588, %v3513, 0.0
        %v3611 = vsel %vm3589, %v3514, 0.0
        %v3612 = vsel %vm3589, %v3515, 0.0
        %v3613 = vsel %vm3590, %v3516, 0.0
        %v3614 = vsel %vm3590, %v3517, 0.0
        %v3615 = vpack.c.bf16 %v3591, %v3591
        %v3616 = vpack.c.bf16 %v3592, %v3592
        %v3617 = vpack.c.bf16 %v3593, %v3593
        %v3618 = vpack.c.bf16 %v3594, %v3594
        %v3619 = vpack.c.bf16 %v3595, %v3595
        %v3620 = vpack.c.bf16 %v3596, %v3596
        %v3621 = vpack.c.bf16 %v3597, %v3597
        %v3622 = vpack.c.bf16 %v3598, %v3598
        %v3623 = vpack.c.bf16 %v3599, %v3599
        %v3624 = vpack.c.bf16 %v3600, %v3600
        %v3625 = vpack.c.bf16 %v3601, %v3601
        %v3626 = vpack.c.bf16 %v3602, %v3602
        %v3627 = vpack.c.bf16 %v3603, %v3603
        %v3628 = vpack.c.bf16 %v3604, %v3604
        %v3629 = vpack.c.bf16 %v3605, %v3605
        %v3630 = vpack.c.bf16 %v3606, %v3606
        %v3631 = vpack.c.bf16 %v3607, %v3607
        %v3632 = vpack.c.bf16 %v3608, %v3608
        %v3633 = vpack.c.bf16 %v3609, %v3609
        %v3634 = vpack.c.bf16 %v3610, %v3610
        %v3635 = vpack.c.bf16 %v3611, %v3611
        %v3636 = vpack.c.bf16 %v3612, %v3612
        %v3637 = vpack.c.bf16 %v3613, %v3613
        %v3638 = vpack.c.bf16 %v3614, %v3614
        %vm3639 = vsmask.f32 4368
        %vm3640 = vmor %vm351, %vm3639
        %v3642 = vshrl.u32 %v3615, 16
        %v3644 = vrot.slane %v3642, 7
        %v3645 = vshll.u32 %v3615, 16
        %v3647 = vor.u32 %v3644, %v3645
        %v3648 = vrot.slane %v3644, 4
        %v3650 = vshrl.u32 %v3616, 16
        %v3652 = vrot.slane %v3650, 7
        %v3653 = vshll.u32 %v3616, 16
        %v3655 = vor.u32 %v3652, %v3653
        %v3656 = vsel %vm3640, %v3648, %v3655
        %v3657 = vrot.slane %v3652, 4
        %v3659 = vshrl.u32 %v3617, 16
        %v3661 = vrot.slane %v3659, 7
        %v3662 = vshll.u32 %v3617, 16
        %v3664 = vor.u32 %v3661, %v3662
        %v3665 = vrot.slane %v3661, 4
        %v3667 = vshrl.u32 %v3618, 16
        %v3669 = vrot.slane %v3667, 7
        %v3670 = vshll.u32 %v3618, 16
        %v3672 = vor.u32 %v3669, %v3670
        %v3673 = vsel %vm3640, %v3665, %v3672
        %v3674 = vrot.slane %v3669, 4
        %v3676 = vshrl.u32 %v3619, 16
        %v3678 = vrot.slane %v3676, 7
        %v3679 = vshll.u32 %v3619, 16
        %v3681 = vor.u32 %v3678, %v3679
        %v3682 = vrot.slane %v3678, 4
        %v3684 = vshrl.u32 %v3620, 16
        %v3686 = vrot.slane %v3684, 7
        %v3687 = vshll.u32 %v3620, 16
        %v3689 = vor.u32 %v3686, %v3687
        %v3690 = vsel %vm3640, %v3682, %v3689
        %v3691 = vrot.slane %v3686, 4
        %v3693 = vshrl.u32 %v3621, 16
        %v3695 = vrot.slane %v3693, 7
        %v3696 = vshll.u32 %v3621, 16
        %v3698 = vor.u32 %v3695, %v3696
        %v3699 = vrot.slane %v3695, 4
        %v3701 = vshrl.u32 %v3622, 16
        %v3703 = vrot.slane %v3701, 7
        %v3704 = vshll.u32 %v3622, 16
        %v3706 = vor.u32 %v3703, %v3704
        %v3707 = vsel %vm3640, %v3699, %v3706
        %v3708 = vrot.slane %v3703, 4
        %v3710 = vshrl.u32 %v3623, 16
        %v3712 = vrot.slane %v3710, 7
        %v3713 = vshll.u32 %v3623, 16
        %v3715 = vor.u32 %v3712, %v3713
        %v3716 = vrot.slane %v3712, 4
        %v3718 = vshrl.u32 %v3624, 16
        %v3720 = vrot.slane %v3718, 7
        %v3721 = vshll.u32 %v3624, 16
        %v3723 = vor.u32 %v3720, %v3721
        %v3724 = vsel %vm3640, %v3716, %v3723
        %v3725 = vrot.slane %v3720, 4
        %v3727 = vshrl.u32 %v3625, 16
        %v3729 = vrot.slane %v3727, 7
        %v3730 = vshll.u32 %v3625, 16
        %v3732 = vor.u32 %v3729, %v3730
        %v3733 = vrot.slane %v3729, 4
        %v3735 = vshrl.u32 %v3626, 16
        %v3737 = vrot.slane %v3735, 7
        %v3738 = vshll.u32 %v3626, 16
        %v3740 = vor.u32 %v3737, %v3738
        %v3741 = vsel %vm3640, %v3733, %v3740
        %v3742 = vrot.slane %v3737, 4
        %v3744 = vshrl.u32 %v3627, 16
        %v3746 = vrot.slane %v3744, 7
        %v3747 = vshll.u32 %v3627, 16
        %v3749 = vor.u32 %v3746, %v3747
        %v3750 = vrot.slane %v3746, 4
        %v3752 = vshrl.u32 %v3628, 16
        %v3754 = vrot.slane %v3752, 7
        %v3755 = vshll.u32 %v3628, 16
        %v3757 = vor.u32 %v3754, %v3755
        %v3758 = vsel %vm3640, %v3750, %v3757
        %v3759 = vrot.slane %v3754, 4
        %v3761 = vshrl.u32 %v3629, 16
        %v3763 = vrot.slane %v3761, 7
        %v3764 = vshll.u32 %v3629, 16
        %v3766 = vor.u32 %v3763, %v3764
        %v3767 = vrot.slane %v3763, 4
        %v3769 = vshrl.u32 %v3630, 16
        %v3771 = vrot.slane %v3769, 7
        %v3772 = vshll.u32 %v3630, 16
        %v3774 = vor.u32 %v3771, %v3772
        %v3775 = vsel %vm3640, %v3767, %v3774
        %v3776 = vrot.slane %v3771, 4
        %v3778 = vshrl.u32 %v3631, 16
        %v3780 = vrot.slane %v3778, 7
        %v3781 = vshll.u32 %v3631, 16
        %v3783 = vor.u32 %v3780, %v3781
        %v3784 = vrot.slane %v3780, 4
        %v3786 = vshrl.u32 %v3632, 16
        %v3788 = vrot.slane %v3786, 7
        %v3789 = vshll.u32 %v3632, 16
        %v3791 = vor.u32 %v3788, %v3789
        %v3792 = vsel %vm3640, %v3784, %v3791
        %v3793 = vrot.slane %v3788, 4
        %v3795 = vshrl.u32 %v3633, 16
        %v3797 = vrot.slane %v3795, 7
        %v3798 = vshll.u32 %v3633, 16
        %v3800 = vor.u32 %v3797, %v3798
        %v3801 = vrot.slane %v3797, 4
        %v3803 = vshrl.u32 %v3634, 16
        %v3805 = vrot.slane %v3803, 7
        %v3806 = vshll.u32 %v3634, 16
        %v3808 = vor.u32 %v3805, %v3806
        %v3809 = vsel %vm3640, %v3801, %v3808
        %v3810 = vrot.slane %v3805, 4
        %v3812 = vshrl.u32 %v3635, 16
        %v3814 = vrot.slane %v3812, 7
        %v3815 = vshll.u32 %v3635, 16
        %v3817 = vor.u32 %v3814, %v3815
        %v3818 = vrot.slane %v3814, 4
        %v3820 = vshrl.u32 %v3636, 16
        %v3822 = vrot.slane %v3820, 7
        %v3823 = vshll.u32 %v3636, 16
        %v3825 = vor.u32 %v3822, %v3823
        %v3826 = vsel %vm3640, %v3818, %v3825
        %v3827 = vrot.slane %v3822, 4
        %v3829 = vshrl.u32 %v3637, 16
        %v3831 = vrot.slane %v3829, 7
        %v3832 = vshll.u32 %v3637, 16
        %v3834 = vor.u32 %v3831, %v3832
        %v3835 = vrot.slane %v3831, 4
        %v3837 = vshrl.u32 %v3638, 16
        %v3839 = vrot.slane %v3837, 7
        %v3840 = vshll.u32 %v3638, 16
        %v3842 = vor.u32 %v3839, %v3840
        %v3843 = vsel %vm3640, %v3835, %v3842
        %v3844 = vrot.slane %v3839, 4
        %vm3881 = vcmask 519168
        %vm3882 = vmand %vm3881, %vm389
        %v3883 = vld [vmem:[#allocation2] sm:$0xf]
        %v3884 = vsel %vm3882, %v3647, %v3883
        %3885 = vst [vmem:[#allocation2] sm:$0xf] %v3884
        %vm3886 = vcmask 519168
        %3887 = vst.msk [vmem:[#allocation2 + $0x4] sm:$0xf] %vm3886, %v3656
        %v3888 = vld [vmem:[#allocation2 + $0x8] sm:$0x1]
        %v3889 = vsel %vm352, %v3657, %v3888
        %3890 = vst [vmem:[#allocation2 + $0x8] sm:$0x1] %v3889
        %v3891 = vld [vmem:[#allocation2 + $0xc] sm:$0xf]
        %v3892 = vsel %vm3882, %v3664, %v3891
        %3893 = vst [vmem:[#allocation2 + $0xc] sm:$0xf] %v3892
        %3894 = vst.msk [vmem:[#allocation2 + $0x10] sm:$0xf] %vm3886, %v3673
        %v3895 = vld [vmem:[#allocation2 + $0x14] sm:$0x1]
        %v3896 = vsel %vm352, %v3674, %v3895
        %3897 = vst [vmem:[#allocation2 + $0x14] sm:$0x1] %v3896
        %v3898 = vld [vmem:[#allocation2 + $0x18] sm:$0xf]
        %v3899 = vsel %vm3882, %v3681, %v3898
        %3900 = vst [vmem:[#allocation2 + $0x18] sm:$0xf] %v3899
        %3901 = vst.msk [vmem:[#allocation2 + $0x1c] sm:$0xf] %vm3886, %v3690
        %v3902 = vld [vmem:[#allocation2 + $0x20] sm:$0x1]
        %v3903 = vsel %vm352, %v3691, %v3902
        %3904 = vst [vmem:[#allocation2 + $0x20] sm:$0x1] %v3903
        %v3905 = vld [vmem:[#allocation2 + $0x24] sm:$0xf]
        %v3906 = vsel %vm3882, %v3698, %v3905
        %3907 = vst [vmem:[#allocation2 + $0x24] sm:$0xf] %v3906
        %3908 = vst.msk [vmem:[#allocation2 + $0x28] sm:$0xf] %vm3886, %v3707
        %v3909 = vld [vmem:[#allocation2 + $0x2c] sm:$0x1]
        %v3910 = vsel %vm352, %v3708, %v3909
        %3911 = vst [vmem:[#allocation2 + $0x2c] sm:$0x1] %v3910
        %v3912 = vld [vmem:[#allocation2 + $0x30] sm:$0xf]
        %v3913 = vsel %vm3882, %v3715, %v3912
        %3914 = vst [vmem:[#allocation2 + $0x30] sm:$0xf] %v3913
        %3915 = vst.msk [vmem:[#allocation2 + $0x34] sm:$0xf] %vm3886, %v3724
        %v3916 = vld [vmem:[#allocation2 + $0x38] sm:$0x1]
        %v3917 = vsel %vm352, %v3725, %v3916
        %3918 = vst [vmem:[#allocation2 + $0x38] sm:$0x1] %v3917
        %v3919 = vld [vmem:[#allocation2 + $0x3c] sm:$0xf]
        %v3920 = vsel %vm3882, %v3732, %v3919
        %3921 = vst [vmem:[#allocation2 + $0x3c] sm:$0xf] %v3920
        %3922 = vst.msk [vmem:[#allocation2 + $0x40] sm:$0xf] %vm3886, %v3741
        %v3923 = vld [vmem:[#allocation2 + $0x44] sm:$0x1]
        %v3924 = vsel %vm352, %v3742, %v3923
        %3925 = vst [vmem:[#allocation2 + $0x44] sm:$0x1] %v3924
        %v3926 = vld [vmem:[#allocation2 + $0x48] sm:$0xf]
        %v3927 = vsel %vm3882, %v3749, %v3926
        %3928 = vst [vmem:[#allocation2 + $0x48] sm:$0xf] %v3927
        %3929 = vst.msk [vmem:[#allocation2 + $0x4c] sm:$0xf] %vm3886, %v3758
        %v3930 = vld [vmem:[#allocation2 + $0x50] sm:$0x1]
        %v3931 = vsel %vm352, %v3759, %v3930
        %3932 = vst [vmem:[#allocation2 + $0x50] sm:$0x1] %v3931
        %v3933 = vld [vmem:[#allocation2 + $0x54] sm:$0xf]
        %v3934 = vsel %vm3882, %v3766, %v3933
        %3935 = vst [vmem:[#allocation2 + $0x54] sm:$0xf] %v3934
        %3936 = vst.msk [vmem:[#allocation2 + $0x58] sm:$0xf] %vm3886, %v3775
        %v3937 = vld [vmem:[#allocation2 + $0x5c] sm:$0x1]
        %v3938 = vsel %vm352, %v3776, %v3937
        %3939 = vst [vmem:[#allocation2 + $0x5c] sm:$0x1] %v3938
        %v3940 = vld [vmem:[#allocation2 + $0x60] sm:$0xf]
        %v3941 = vsel %vm3882, %v3783, %v3940
        %3942 = vst [vmem:[#allocation2 + $0x60] sm:$0xf] %v3941
        %3943 = vst.msk [vmem:[#allocation2 + $0x64] sm:$0xf] %vm3886, %v3792
        %v3944 = vld [vmem:[#allocation2 + $0x68] sm:$0x1]
        %v3945 = vsel %vm352, %v3793, %v3944
        %3946 = vst [vmem:[#allocation2 + $0x68] sm:$0x1] %v3945
        %v3947 = vld [vmem:[#allocation2 + $0x6c] sm:$0xf]
        %v3948 = vsel %vm3882, %v3800, %v3947
        %3949 = vst [vmem:[#allocation2 + $0x6c] sm:$0xf] %v3948
        %3950 = vst.msk [vmem:[#allocation2 + $0x70] sm:$0xf] %vm3886, %v3809
        %v3951 = vld [vmem:[#allocation2 + $0x74] sm:$0x1]
        %v3952 = vsel %vm352, %v3810, %v3951
        %3953 = vst [vmem:[#allocation2 + $0x74] sm:$0x1] %v3952
        %v3954 = vld [vmem:[#allocation2 + $0x78] sm:$0xf]
        %v3955 = vsel %vm3882, %v3817, %v3954
        %3956 = vst [vmem:[#allocation2 + $0x78] sm:$0xf] %v3955
        %3957 = vst.msk [vmem:[#allocation2 + $0x7c] sm:$0xf] %vm3886, %v3826
        %v3958 = vld [vmem:[#allocation2 + $0x80] sm:$0x1]
        %v3959 = vsel %vm352, %v3827, %v3958
        %3960 = vst [vmem:[#allocation2 + $0x80] sm:$0x1] %v3959
        %v3961 = vld [vmem:[#allocation2 + $0x84] sm:$0xf]
        %v3962 = vsel %vm3882, %v3834, %v3961
        %3963 = vst [vmem:[#allocation2 + $0x84] sm:$0xf] %v3962
        %3964 = vst.msk [vmem:[#allocation2 + $0x88] sm:$0xf] %vm3886, %v3843
        %v3965 = vld [vmem:[#allocation2 + $0x8c] sm:$0x1]
        %v3966 = vsel %vm352, %v3844, %v3965
        %3967 = vst [vmem:[#allocation2 + $0x8c] sm:$0x1] %v3966
        %v3968 = vld [vmem:[#allocation2] sm:$0xf]
        %v3969 = vld [vmem:[#allocation2 + $0x4] sm:$0xf]
        %v3970 = vld [vmem:[#allocation2 + $0xc] sm:$0xf]
        %v3971 = vld [vmem:[#allocation2 + $0x10] sm:$0xf]
        %v3972 = vld [vmem:[#allocation2 + $0x18] sm:$0xf]
        %v3973 = vld [vmem:[#allocation2 + $0x1c] sm:$0xf]
        %v3974 = vld [vmem:[#allocation2 + $0x24] sm:$0xf]
        %v3975 = vld [vmem:[#allocation2 + $0x28] sm:$0xf]
        %v3976 = vld [vmem:[#allocation2 + $0x30] sm:$0xf]
        %v3977 = vld [vmem:[#allocation2 + $0x34] sm:$0xf]
        %v3978 = vld [vmem:[#allocation2 + $0x3c] sm:$0xf]
        %v3979 = vld [vmem:[#allocation2 + $0x40] sm:$0xf]
        %v3980 = vld [vmem:[#allocation2 + $0x48] sm:$0xf]
        %v3981 = vld [vmem:[#allocation2 + $0x4c] sm:$0xf]
        %v3982 = vld [vmem:[#allocation2 + $0x54] sm:$0xf]
        %v3983 = vld [vmem:[#allocation2 + $0x58] sm:$0xf]
        %v3984 = vld [vmem:[#allocation2 + $0x60] sm:$0xf]
        %v3985 = vld [vmem:[#allocation2 + $0x64] sm:$0xf]
        %v3986 = vld [vmem:[#allocation2 + $0x6c] sm:$0xf]
        %v3987 = vld [vmem:[#allocation2 + $0x70] sm:$0xf]
        %v3988 = vld [vmem:[%s3] sm:$0xf]
        %v3989 = vld [vmem:[%s3 + $0x4] sm:$0xf]
        %v3990 = vld [vmem:[%s3 + $0x8] sm:$0xf]
        %v3991 = vld [vmem:[%s3 + $0xc] sm:$0xf]
        %v3992 = vld [vmem:[%s3 + $0x10] sm:$0xf]
        %v3993 = vld [vmem:[%s3 + $0x14] sm:$0xf]
        %v3994 = vld [vmem:[%s3 + $0x18] sm:$0xf]
        %v3995 = vld [vmem:[%s3 + $0x1c] sm:$0xf]
        %v3996 = vld [vmem:[#allocation2 + $0x8] sm:$0x1]
        %v3997 = vld [vmem:[#allocation2 + $0x14] sm:$0x1]
        %v3998 = vld [vmem:[#allocation2 + $0x20] sm:$0x1]
        %v3999 = vld [vmem:[#allocation2 + $0x2c] sm:$0x1]
        %v4000 = vld [vmem:[#allocation2 + $0x38] sm:$0x1]
        %v4001 = vld [vmem:[#allocation2 + $0x44] sm:$0x1]
        %v4002 = vld [vmem:[#allocation2 + $0x50] sm:$0x1]
        %v4003 = vld [vmem:[#allocation2 + $0x5c] sm:$0x1]
        %v4004 = vld [vmem:[#allocation2 + $0x68] sm:$0x1]
        %v4005 = vld [vmem:[#allocation2 + $0x74] sm:$0x1]
        %v4007 = vshrl.u32 %v3968, 16
        %v4009 = vrot.slane %v4007, 4
        %v4010 = vshll.u32 %v3968, 16
        %v4012 = vrot.slane %v4010, 5
        %v4013 = vor.u32 %v4009, %v4012
        %v4014 = vrot.slane %v4013, 4
        %v4016 = vshll.u32 %v3969, 16
        %v4018 = vrot.slane %v4016, 5
        %v4019 = vsel %vm529, %v4014, %v4018
        %v4020 = vshrl.u32 %v3969, 16
        %v4022 = vrot.slane %v4020, 4
        %v4023 = vor.u32 %v4022, %v4018
        %v4024 = vrot.slane %v4023, 4
        %v4026 = vshll.u32 %v3996, 16
        %v4028 = vrot.slane %v4026, 5
        %v4029 = vsel %vm529, %v4024, %v4028
        %v4031 = vshrl.u32 %v3970, 16
        %v4033 = vrot.slane %v4031, 4
        %v4034 = vshll.u32 %v3970, 16
        %v4036 = vrot.slane %v4034, 5
        %v4037 = vor.u32 %v4033, %v4036
        %v4038 = vrot.slane %v4037, 4
        %v4040 = vshll.u32 %v3971, 16
        %v4042 = vrot.slane %v4040, 5
        %v4043 = vsel %vm529, %v4038, %v4042
        %v4044 = vshrl.u32 %v3971, 16
        %v4046 = vrot.slane %v4044, 4
        %v4047 = vor.u32 %v4046, %v4042
        %v4048 = vrot.slane %v4047, 4
        %v4050 = vshll.u32 %v3997, 16
        %v4052 = vrot.slane %v4050, 5
        %v4053 = vsel %vm529, %v4048, %v4052
        %v4055 = vshrl.u32 %v3972, 16
        %v4057 = vrot.slane %v4055, 4
        %v4058 = vshll.u32 %v3972, 16
        %v4060 = vrot.slane %v4058, 5
        %v4061 = vor.u32 %v4057, %v4060
        %v4062 = vrot.slane %v4061, 4
        %v4064 = vshll.u32 %v3973, 16
        %v4066 = vrot.slane %v4064, 5
        %v4067 = vsel %vm529, %v4062, %v4066
        %v4068 = vshrl.u32 %v3973, 16
        %v4070 = vrot.slane %v4068, 4
        %v4071 = vor.u32 %v4070, %v4066
        %v4072 = vrot.slane %v4071, 4
        %v4074 = vshll.u32 %v3998, 16
        %v4076 = vrot.slane %v4074, 5
        %v4077 = vsel %vm529, %v4072, %v4076
        %v4079 = vshrl.u32 %v3974, 16
        %v4081 = vrot.slane %v4079, 4
        %v4082 = vshll.u32 %v3974, 16
        %v4084 = vrot.slane %v4082, 5
        %v4085 = vor.u32 %v4081, %v4084
        %v4086 = vrot.slane %v4085, 4
        %v4088 = vshll.u32 %v3975, 16
        %v4090 = vrot.slane %v4088, 5
        %v4091 = vsel %vm529, %v4086, %v4090
        %v4092 = vshrl.u32 %v3975, 16
        %v4094 = vrot.slane %v4092, 4
        %v4095 = vor.u32 %v4094, %v4090
        %v4096 = vrot.slane %v4095, 4
        %v4098 = vshll.u32 %v3999, 16
        %v4100 = vrot.slane %v4098, 5
        %v4101 = vsel %vm529, %v4096, %v4100
        %v4103 = vshrl.u32 %v3976, 16
        %v4105 = vrot.slane %v4103, 4
        %v4106 = vshll.u32 %v3976, 16
        %v4108 = vrot.slane %v4106, 5
        %v4109 = vor.u32 %v4105, %v4108
        %v4110 = vrot.slane %v4109, 4
        %v4112 = vshll.u32 %v3977, 16
        %v4114 = vrot.slane %v4112, 5
        %v4115 = vsel %vm529, %v4110, %v4114
        %v4116 = vshrl.u32 %v3977, 16
        %v4118 = vrot.slane %v4116, 4
        %v4119 = vor.u32 %v4118, %v4114
        %v4120 = vrot.slane %v4119, 4
        %v4122 = vshll.u32 %v4000, 16
        %v4124 = vrot.slane %v4122, 5
        %v4125 = vsel %vm529, %v4120, %v4124
        %v4127 = vshrl.u32 %v3978, 16
        %v4129 = vrot.slane %v4127, 4
        %v4130 = vshll.u32 %v3978, 16
        %v4132 = vrot.slane %v4130, 5
        %v4133 = vor.u32 %v4129, %v4132
        %v4134 = vrot.slane %v4133, 4
        %v4136 = vshll.u32 %v3979, 16
        %v4138 = vrot.slane %v4136, 5
        %v4139 = vsel %vm529, %v4134, %v4138
        %v4140 = vshrl.u32 %v3979, 16
        %v4142 = vrot.slane %v4140, 4
        %v4143 = vor.u32 %v4142, %v4138
        %v4144 = vrot.slane %v4143, 4
        %v4146 = vshll.u32 %v4001, 16
        %v4148 = vrot.slane %v4146, 5
        %v4149 = vsel %vm529, %v4144, %v4148
        %v4151 = vshrl.u32 %v3980, 16
        %v4153 = vrot.slane %v4151, 4
        %v4154 = vshll.u32 %v3980, 16
        %v4156 = vrot.slane %v4154, 5
        %v4157 = vor.u32 %v4153, %v4156
        %v4158 = vrot.slane %v4157, 4
        %v4160 = vshll.u32 %v3981, 16
        %v4162 = vrot.slane %v4160, 5
        %v4163 = vsel %vm529, %v4158, %v4162
        %v4164 = vshrl.u32 %v3981, 16
        %v4166 = vrot.slane %v4164, 4
        %v4167 = vor.u32 %v4166, %v4162
        %v4168 = vrot.slane %v4167, 4
        %v4170 = vshll.u32 %v4002, 16
        %v4172 = vrot.slane %v4170, 5
        %v4173 = vsel %vm529, %v4168, %v4172
        %v4175 = vshrl.u32 %v3982, 16
        %v4177 = vrot.slane %v4175, 4
        %v4178 = vshll.u32 %v3982, 16
        %v4180 = vrot.slane %v4178, 5
        %v4181 = vor.u32 %v4177, %v4180
        %v4182 = vrot.slane %v4181, 4
        %v4184 = vshll.u32 %v3983, 16
        %v4186 = vrot.slane %v4184, 5
        %v4187 = vsel %vm529, %v4182, %v4186
        %v4188 = vshrl.u32 %v3983, 16
        %v4190 = vrot.slane %v4188, 4
        %v4191 = vor.u32 %v4190, %v4186
        %v4192 = vrot.slane %v4191, 4
        %v4194 = vshll.u32 %v4003, 16
        %v4196 = vrot.slane %v4194, 5
        %v4197 = vsel %vm529, %v4192, %v4196
        %v4199 = vshrl.u32 %v3984, 16
        %v4201 = vrot.slane %v4199, 4
        %v4202 = vshll.u32 %v3984, 16
        %v4204 = vrot.slane %v4202, 5
        %v4205 = vor.u32 %v4201, %v4204
        %v4206 = vrot.slane %v4205, 4
        %v4208 = vshll.u32 %v3985, 16
        %v4210 = vrot.slane %v4208, 5
        %v4211 = vsel %vm529, %v4206, %v4210
        %v4212 = vshrl.u32 %v3985, 16
        %v4214 = vrot.slane %v4212, 4
        %v4215 = vor.u32 %v4214, %v4210
        %v4216 = vrot.slane %v4215, 4
        %v4218 = vshll.u32 %v4004, 16
        %v4220 = vrot.slane %v4218, 5
        %v4221 = vsel %vm529, %v4216, %v4220
        %v4223 = vshrl.u32 %v3986, 16
        %v4225 = vrot.slane %v4223, 4
        %v4226 = vshll.u32 %v3986, 16
        %v4228 = vrot.slane %v4226, 5
        %v4229 = vor.u32 %v4225, %v4228
        %v4230 = vrot.slane %v4229, 4
        %v4232 = vshll.u32 %v3987, 16
        %v4234 = vrot.slane %v4232, 5
        %v4235 = vsel %vm529, %v4230, %v4234
        %v4236 = vshrl.u32 %v3987, 16
        %v4238 = vrot.slane %v4236, 4
        %v4239 = vor.u32 %v4238, %v4234
        %v4240 = vrot.slane %v4239, 4
        %v4242 = vshll.u32 %v4005, 16
        %v4244 = vrot.slane %v4242, 5
        %v4245 = vsel %vm529, %v4240, %v4244
        %s4246 = scalar_lea.vmem %s3, 32
        %v4247 = vld [vmem:[%s4246] sm:$0xf]
        %v4248 = vld [vmem:[%s4246 + $0x4] sm:$0xf]
        %v4249 = vld [vmem:[%s4246 + $0x8] sm:$0xf]
        %v4250 = vld [vmem:[%s4246 + $0xc] sm:$0xf]
        %v4251 = vld [vmem:[%s4246 + $0x10] sm:$0xf]
        %v4252 = vld [vmem:[%s4246 + $0x14] sm:$0xf]
        %v4253 = vld [vmem:[%s4246 + $0x18] sm:$0xf]
        %v4254 = vld [vmem:[%s4246 + $0x1c] sm:$0xf]
        %v4255 = vunpack.c.l.b16 %v4019
        %v4256 = vunpack.c.l.b16 %v4029
        %v4257 = vunpack.c.l.b16 %v4043
        %v4258 = vunpack.c.l.b16 %v4053
        %v4259 = vunpack.c.l.b16 %v4067
        %v4260 = vunpack.c.l.b16 %v4077
        %v4261 = vunpack.c.l.b16 %v4091
        %v4262 = vunpack.c.l.b16 %v4101
        %v4263 = vunpack.c.l.b16 %v4115
        %v4264 = vunpack.c.l.b16 %v4125
        %v4265 = vunpack.c.l.b16 %v4139
        %v4266 = vunpack.c.l.b16 %v4149
        %v4267 = vunpack.c.l.b16 %v4163
        %v4268 = vunpack.c.l.b16 %v4173
        %v4269 = vunpack.c.l.b16 %v4187
        %v4270 = vunpack.c.l.b16 %v4197
        %v4271 = vunpack.c.l.b16 %v4211
        %v4272 = vunpack.c.l.b16 %v4221
        %v4273 = vunpack.c.l.b16 %v4235
        %v4274 = vunpack.c.l.b16 %v4245
        %v4275 = vpack.c.b16 %v4256, %v4255
        %v4276 = vpack.c.b16 %v4258, %v4257
        %v4277 = vpack.c.b16 %v4260, %v4259
        %v4278 = vpack.c.b16 %v4262, %v4261
        %v4279 = vpack.c.b16 %v4264, %v4263
        %v4280 = vpack.c.b16 %v4266, %v4265
        %v4281 = vpack.c.b16 %v4268, %v4267
        %v4282 = vpack.c.b16 %v4270, %v4269
        %v4283 = vpack.c.b16 %v4272, %v4271
        %v4284 = vpack.c.b16 %v4274, %v4273
        %v4293 = vunpack.c.l.b16 %v4247
        %v4294 = vunpack.c.l.b16 %v4248
        %v4295 = vunpack.c.l.b16 %v4249
        %v4296 = vunpack.c.l.b16 %v4250
        %v4297 = vunpack.c.l.b16 %v4251
        %v4298 = vunpack.c.l.b16 %v4252
        %v4299 = vunpack.c.l.b16 %v4253
        %v4300 = vunpack.c.l.b16 %v4254
        %v4301 = vpack.c.b16 %v4294, %v4293
        %v4302 = vpack.c.b16 %v4296, %v4295
        %v4303 = vpack.c.b16 %v4298, %v4297
        %v4304 = vpack.c.b16 %v4300, %v4299
        %vm4309 = vcmask 523264
        %v4311 = vsel %vm4309, %v4275, 0
        %v4314 = vsel %vm4309, %v4276, 0
        %v4317 = vsel %vm4309, %v4277, 0
        %v4320 = vsel %vm4309, %v4278, 0
        %v4323 = vsel %vm4309, %v4279, 0
        %v4326 = vsel %vm4309, %v4280, 0
        %v4329 = vsel %vm4309, %v4281, 0
        %v4332 = vsel %vm4309, %v4282, 0
        %v4335 = vsel %vm4309, %v4283, 0
        %v4338 = vsel %vm4309, %v4284, 0
        %4340 = vmatpush.bf16.msra.mxu0 0
        %4341 = vmatpush.bf16.msra.mxu0 0
        %4342 = vmatpush.bf16.msra.mxu0 0
        %4343 = vmatpush.bf16.msra.mxu0 0
        %4344 = vmatpush.bf16.msra.mxu0 %v4304
        %4345 = vmatpush.bf16.msra.mxu0 %v4303
        %4346 = vmatpush.bf16.msra.mxu0 %v4302
        %4347 = vmatpush.bf16.msra.mxu0 %v4301
        %4348 = vmatmul.bf16.gmra.mxu0 %v4311
        %v4349 = vpop.f32.mrf.mxu0
        %v4350 = vadd.f32 0.0, %v4349
        %v4351 = vpop.f32.mrf.mxu0
        %v4352 = vadd.f32 0.0, %v4351
        %4353 = vmatmul.bf16.gmra.mxu0 %v4314
        %v4354 = vpop.f32.mrf.mxu0
        %v4355 = vadd.f32 0.0, %v4354
        %v4356 = vpop.f32.mrf.mxu0
        %v4357 = vadd.f32 0.0, %v4356
        %4358 = vmatmul.bf16.gmra.mxu0 %v4317
        %v4359 = vpop.f32.mrf.mxu0
        %v4360 = vadd.f32 0.0, %v4359
        %v4361 = vpop.f32.mrf.mxu0
        %v4362 = vadd.f32 0.0, %v4361
        %4363 = vmatmul.bf16.gmra.mxu0 %v4320
        %v4364 = vpop.f32.mrf.mxu0
        %v4365 = vadd.f32 0.0, %v4364
        %v4366 = vpop.f32.mrf.mxu0
        %v4367 = vadd.f32 0.0, %v4366
        %4368 = vmatmul.bf16.gmra.mxu0 %v4323
        %v4369 = vpop.f32.mrf.mxu0
        %v4370 = vadd.f32 0.0, %v4369
        %v4371 = vpop.f32.mrf.mxu0
        %v4372 = vadd.f32 0.0, %v4371
        %4373 = vmatmul.bf16.gmra.mxu0 %v4326
        %v4374 = vpop.f32.mrf.mxu0
        %v4375 = vadd.f32 0.0, %v4374
        %v4376 = vpop.f32.mrf.mxu0
        %v4377 = vadd.f32 0.0, %v4376
        %4378 = vmatmul.bf16.gmra.mxu0 %v4329
        %v4379 = vpop.f32.mrf.mxu0
        %v4380 = vadd.f32 0.0, %v4379
        %v4381 = vpop.f32.mrf.mxu0
        %v4382 = vadd.f32 0.0, %v4381
        %4383 = vmatmul.bf16.gmra.mxu0 %v4332
        %v4384 = vpop.f32.mrf.mxu0
        %v4385 = vadd.f32 0.0, %v4384
        %v4386 = vpop.f32.mrf.mxu0
        %v4387 = vadd.f32 0.0, %v4386
        %4388 = vmatmul.bf16.gmra.mxu0 %v4335
        %v4389 = vpop.f32.mrf.mxu0
        %v4390 = vadd.f32 0.0, %v4389
        %v4391 = vpop.f32.mrf.mxu0
        %v4392 = vadd.f32 0.0, %v4391
        %4393 = vmatmul.bf16.gmra.mxu0 %v4338
        %v4394 = vpop.f32.mrf.mxu0
        %v4395 = vadd.f32 0.0, %v4394
        %v4396 = vpop.f32.mrf.mxu0
        %v4397 = vadd.f32 0.0, %v4396
        %4398 = vdwg.mxu0
        %v4419 = vunpack.c.l.b16 %v3968
        %v4420 = vunpack.c.l.b16 %v3969
        %v4421 = vunpack.c.l.b16 %v3970
        %v4422 = vunpack.c.l.b16 %v3971
        %v4423 = vunpack.c.l.b16 %v3972
        %v4424 = vunpack.c.l.b16 %v3973
        %v4425 = vunpack.c.l.b16 %v3974
        %v4426 = vunpack.c.l.b16 %v3975
        %v4427 = vunpack.c.l.b16 %v3976
        %v4428 = vunpack.c.l.b16 %v3977
        %v4429 = vunpack.c.l.b16 %v3978
        %v4430 = vunpack.c.l.b16 %v3979
        %v4431 = vunpack.c.l.b16 %v3980
        %v4432 = vunpack.c.l.b16 %v3981
        %v4433 = vunpack.c.l.b16 %v3982
        %v4434 = vunpack.c.l.b16 %v3983
        %v4435 = vunpack.c.l.b16 %v3984
        %v4436 = vunpack.c.l.b16 %v3985
        %v4437 = vunpack.c.l.b16 %v3986
        %v4438 = vunpack.c.l.b16 %v3987
        %v4439 = vpack.c.b16 %v4420, %v4419
        %v4440 = vpack.c.b16 %v4422, %v4421
        %v4441 = vpack.c.b16 %v4424, %v4423
        %v4442 = vpack.c.b16 %v4426, %v4425
        %v4443 = vpack.c.b16 %v4428, %v4427
        %v4444 = vpack.c.b16 %v4430, %v4429
        %v4445 = vpack.c.b16 %v4432, %v4431
        %v4446 = vpack.c.b16 %v4434, %v4433
        %v4447 = vpack.c.b16 %v4436, %v4435
        %v4448 = vpack.c.b16 %v4438, %v4437
        %v4457 = vunpack.c.l.b16 %v3988
        %v4458 = vunpack.c.l.b16 %v3989
        %v4459 = vunpack.c.l.b16 %v3990
        %v4460 = vunpack.c.l.b16 %v3991
        %v4461 = vunpack.c.l.b16 %v3992
        %v4462 = vunpack.c.l.b16 %v3993
        %v4463 = vunpack.c.l.b16 %v3994
        %v4464 = vunpack.c.l.b16 %v3995
        %v4465 = vpack.c.b16 %v4458, %v4457
        %v4466 = vpack.c.b16 %v4460, %v4459
        %v4467 = vpack.c.b16 %v4462, %v4461
        %v4468 = vpack.c.b16 %v4464, %v4463
        %v4474 = vsel %vm4309, %v4439, 0
        %v4477 = vsel %vm4309, %v4440, 0
        %v4480 = vsel %vm4309, %v4441, 0
        %v4483 = vsel %vm4309, %v4442, 0
        %v4486 = vsel %vm4309, %v4443, 0
        %v4489 = vsel %vm4309, %v4444, 0
        %v4492 = vsel %vm4309, %v4445, 0
        %v4495 = vsel %vm4309, %v4446, 0
        %v4498 = vsel %vm4309, %v4447, 0
        %v4501 = vsel %vm4309, %v4448, 0
        %4503 = vmatpush.bf16.msra.mxu0 0
        %4504 = vmatpush.bf16.msra.mxu0 0
        %4505 = vmatpush.bf16.msra.mxu0 0
        %4506 = vmatpush.bf16.msra.mxu0 0
        %4507 = vmatpush.bf16.msra.mxu0 %v4468
        %4508 = vmatpush.bf16.msra.mxu0 %v4467
        %4509 = vmatpush.bf16.msra.mxu0 %v4466
        %4510 = vmatpush.bf16.msra.mxu0 %v4465
        %4511 = vmatmul.bf16.gmra.mxu0 %v4474
        %v4512 = vpop.f32.mrf.mxu0
        %v4513 = vadd.f32 %v4350, %v4512
        %v4514 = vpop.f32.mrf.mxu0
        %v4515 = vadd.f32 %v4352, %v4514
        %4516 = vmatmul.bf16.gmra.mxu0 %v4477
        %v4517 = vpop.f32.mrf.mxu0
        %v4518 = vadd.f32 %v4355, %v4517
        %v4519 = vpop.f32.mrf.mxu0
        %v4520 = vadd.f32 %v4357, %v4519
        %4521 = vmatmul.bf16.gmra.mxu0 %v4480
        %v4522 = vpop.f32.mrf.mxu0
        %v4523 = vadd.f32 %v4360, %v4522
        %v4524 = vpop.f32.mrf.mxu0
        %v4525 = vadd.f32 %v4362, %v4524
        %4526 = vmatmul.bf16.gmra.mxu0 %v4483
        %v4527 = vpop.f32.mrf.mxu0
        %v4528 = vadd.f32 %v4365, %v4527
        %v4529 = vpop.f32.mrf.mxu0
        %v4530 = vadd.f32 %v4367, %v4529
        %4531 = vmatmul.bf16.gmra.mxu0 %v4486
        %v4532 = vpop.f32.mrf.mxu0
        %v4533 = vadd.f32 %v4370, %v4532
        %v4534 = vpop.f32.mrf.mxu0
        %v4535 = vadd.f32 %v4372, %v4534
        %4536 = vmatmul.bf16.gmra.mxu0 %v4489
        %v4537 = vpop.f32.mrf.mxu0
        %v4538 = vadd.f32 %v4375, %v4537
        %v4539 = vpop.f32.mrf.mxu0
        %v4540 = vadd.f32 %v4377, %v4539
        %4541 = vmatmul.bf16.gmra.mxu0 %v4492
        %v4542 = vpop.f32.mrf.mxu0
        %v4543 = vadd.f32 %v4380, %v4542
        %v4544 = vpop.f32.mrf.mxu0
        %v4545 = vadd.f32 %v4382, %v4544
        %4546 = vmatmul.bf16.gmra.mxu0 %v4495
        %v4547 = vpop.f32.mrf.mxu0
        %v4548 = vadd.f32 %v4385, %v4547
        %v4549 = vpop.f32.mrf.mxu0
        %v4550 = vadd.f32 %v4387, %v4549
        %4551 = vmatmul.bf16.gmra.mxu0 %v4498
        %v4552 = vpop.f32.mrf.mxu0
        %v4553 = vadd.f32 %v4390, %v4552
        %v4554 = vpop.f32.mrf.mxu0
        %v4555 = vadd.f32 %v4392, %v4554
        %4556 = vmatmul.bf16.gmra.mxu0 %v4501
        %v4557 = vpop.f32.mrf.mxu0
        %v4558 = vadd.f32 %v4395, %v4557
        %v4559 = vpop.f32.mrf.mxu0
        %v4560 = vadd.f32 %v4397, %v4559
        %4561 = vdwg.mxu0
        %v4562 = vld [vmem:[#allocation2] sm:$0xe]
        %v4563 = vld [vmem:[#allocation2 + $0xc] sm:$0xe]
        %v4564 = vld [vmem:[#allocation2 + $0x18] sm:$0xe]
        %v4565 = vld [vmem:[#allocation2 + $0x24] sm:$0xe]
        %v4566 = vld [vmem:[#allocation2 + $0x30] sm:$0xe]
        %v4567 = vld [vmem:[#allocation2 + $0x3c] sm:$0xe]
        %v4568 = vld [vmem:[#allocation2 + $0x48] sm:$0xe]
        %v4569 = vld [vmem:[#allocation2 + $0x54] sm:$0xe]
        %v4570 = vld [vmem:[#allocation2 + $0x60] sm:$0xe]
        %v4571 = vld [vmem:[#allocation2 + $0x6c] sm:$0xe]
        %v4592 = vrot.slane %v4562, 5
        %v4593 = vrot.slane %v4592, 4
        %v4594 = vrot.slane %v3969, 5
        %v4595 = vsel %vm1175, %v4593, %v4594
        %v4596 = vrot.slane %v4594, 4
        %v4597 = vrot.slane %v3996, 5
        %v4598 = vsel %vm1175, %v4596, %v4597
        %v4599 = vrot.slane %v4563, 5
        %v4600 = vrot.slane %v4599, 4
        %v4601 = vrot.slane %v3971, 5
        %v4602 = vsel %vm1175, %v4600, %v4601
        %v4603 = vrot.slane %v4601, 4
        %v4604 = vrot.slane %v3997, 5
        %v4605 = vsel %vm1175, %v4603, %v4604
        %v4606 = vrot.slane %v4564, 5
        %v4607 = vrot.slane %v4606, 4
        %v4608 = vrot.slane %v3973, 5
        %v4609 = vsel %vm1175, %v4607, %v4608
        %v4610 = vrot.slane %v4608, 4
        %v4611 = vrot.slane %v3998, 5
        %v4612 = vsel %vm1175, %v4610, %v4611
        %v4613 = vrot.slane %v4565, 5
        %v4614 = vrot.slane %v4613, 4
        %v4615 = vrot.slane %v3975, 5
        %v4616 = vsel %vm1175, %v4614, %v4615
        %v4617 = vrot.slane %v4615, 4
        %v4618 = vrot.slane %v3999, 5
        %v4619 = vsel %vm1175, %v4617, %v4618
        %v4620 = vrot.slane %v4566, 5
        %v4621 = vrot.slane %v4620, 4
        %v4622 = vrot.slane %v3977, 5
        %v4623 = vsel %vm1175, %v4621, %v4622
        %v4624 = vrot.slane %v4622, 4
        %v4625 = vrot.slane %v4000, 5
        %v4626 = vsel %vm1175, %v4624, %v4625
        %v4627 = vrot.slane %v4567, 5
        %v4628 = vrot.slane %v4627, 4
        %v4629 = vrot.slane %v3979, 5
        %v4630 = vsel %vm1175, %v4628, %v4629
        %v4631 = vrot.slane %v4629, 4
        %v4632 = vrot.slane %v4001, 5
        %v4633 = vsel %vm1175, %v4631, %v4632
        %v4634 = vrot.slane %v4568, 5
        %v4635 = vrot.slane %v4634, 4
        %v4636 = vrot.slane %v3981, 5
        %v4637 = vsel %vm1175, %v4635, %v4636
        %v4638 = vrot.slane %v4636, 4
        %v4639 = vrot.slane %v4002, 5
        %v4640 = vsel %vm1175, %v4638, %v4639
        %v4641 = vrot.slane %v4569, 5
        %v4642 = vrot.slane %v4641, 4
        %v4643 = vrot.slane %v3983, 5
        %v4644 = vsel %vm1175, %v4642, %v4643
        %v4645 = vrot.slane %v4643, 4
        %v4646 = vrot.slane %v4003, 5
        %v4647 = vsel %vm1175, %v4645, %v4646
        %v4648 = vrot.slane %v4570, 5
        %v4649 = vrot.slane %v4648, 4
        %v4650 = vrot.slane %v3985, 5
        %v4651 = vsel %vm1175, %v4649, %v4650
        %v4652 = vrot.slane %v4650, 4
        %v4653 = vrot.slane %v4004, 5
        %v4654 = vsel %vm1175, %v4652, %v4653
        %v4655 = vrot.slane %v4571, 5
        %v4656 = vrot.slane %v4655, 4
        %v4657 = vrot.slane %v3987, 5
        %v4658 = vsel %vm1175, %v4656, %v4657
        %v4659 = vrot.slane %v4657, 4
        %v4660 = vrot.slane %v4005, 5
        %v4661 = vsel %vm1175, %v4659, %v4660
        %s4662 = scalar_lea.vmem %s3, 64
        %v4663 = vld [vmem:[%s4662] sm:$0xf]
        %v4664 = vld [vmem:[%s4662 + $0x4] sm:$0xf]
        %v4665 = vld [vmem:[%s4662 + $0x8] sm:$0xf]
        %v4666 = vld [vmem:[%s4662 + $0xc] sm:$0xf]
        %v4667 = vld [vmem:[%s4662 + $0x10] sm:$0xf]
        %v4668 = vld [vmem:[%s4662 + $0x14] sm:$0xf]
        %v4669 = vld [vmem:[%s4662 + $0x18] sm:$0xf]
        %v4670 = vld [vmem:[%s4662 + $0x1c] sm:$0xf]
        %v4671 = vunpack.c.l.b16 %v4595
        %v4672 = vunpack.c.l.b16 %v4598
        %v4673 = vunpack.c.l.b16 %v4602
        %v4674 = vunpack.c.l.b16 %v4605
        %v4675 = vunpack.c.l.b16 %v4609
        %v4676 = vunpack.c.l.b16 %v4612
        %v4677 = vunpack.c.l.b16 %v4616
        %v4678 = vunpack.c.l.b16 %v4619
        %v4679 = vunpack.c.l.b16 %v4623
        %v4680 = vunpack.c.l.b16 %v4626
        %v4681 = vunpack.c.l.b16 %v4630
        %v4682 = vunpack.c.l.b16 %v4633
        %v4683 = vunpack.c.l.b16 %v4637
        %v4684 = vunpack.c.l.b16 %v4640
        %v4685 = vunpack.c.l.b16 %v4644
        %v4686 = vunpack.c.l.b16 %v4647
        %v4687 = vunpack.c.l.b16 %v4651
        %v4688 = vunpack.c.l.b16 %v4654
        %v4689 = vunpack.c.l.b16 %v4658
        %v4690 = vunpack.c.l.b16 %v4661
        %v4691 = vpack.c.b16 %v4672, %v4671
        %v4692 = vpack.c.b16 %v4674, %v4673
        %v4693 = vpack.c.b16 %v4676, %v4675
        %v4694 = vpack.c.b16 %v4678, %v4677
        %v4695 = vpack.c.b16 %v4680, %v4679
        %v4696 = vpack.c.b16 %v4682, %v4681
        %v4697 = vpack.c.b16 %v4684, %v4683
        %v4698 = vpack.c.b16 %v4686, %v4685
        %v4699 = vpack.c.b16 %v4688, %v4687
        %v4700 = vpack.c.b16 %v4690, %v4689
        %v4709 = vunpack.c.l.b16 %v4663
        %v4710 = vunpack.c.l.b16 %v4664
        %v4711 = vunpack.c.l.b16 %v4665
        %v4712 = vunpack.c.l.b16 %v4666
        %v4713 = vunpack.c.l.b16 %v4667
        %v4714 = vunpack.c.l.b16 %v4668
        %v4715 = vunpack.c.l.b16 %v4669
        %v4716 = vunpack.c.l.b16 %v4670
        %v4717 = vpack.c.b16 %v4710, %v4709
        %v4718 = vpack.c.b16 %v4712, %v4711
        %v4719 = vpack.c.b16 %v4714, %v4713
        %v4720 = vpack.c.b16 %v4716, %v4715
        %v4726 = vsel %vm4309, %v4691, 0
        %v4729 = vsel %vm4309, %v4692, 0
        %v4732 = vsel %vm4309, %v4693, 0
        %v4735 = vsel %vm4309, %v4694, 0
        %v4738 = vsel %vm4309, %v4695, 0
        %v4741 = vsel %vm4309, %v4696, 0
        %v4744 = vsel %vm4309, %v4697, 0
        %v4747 = vsel %vm4309, %v4698, 0
        %v4750 = vsel %vm4309, %v4699, 0
        %v4753 = vsel %vm4309, %v4700, 0
        %4755 = vmatpush.bf16.msra.mxu0 0
        %4756 = vmatpush.bf16.msra.mxu0 0
        %4757 = vmatpush.bf16.msra.mxu0 0
        %4758 = vmatpush.bf16.msra.mxu0 0
        %4759 = vmatpush.bf16.msra.mxu0 %v4720
        %4760 = vmatpush.bf16.msra.mxu0 %v4719
        %4761 = vmatpush.bf16.msra.mxu0 %v4718
        %4762 = vmatpush.bf16.msra.mxu0 %v4717
        %4763 = vmatmul.bf16.gmra.mxu0 %v4726
        %v4764 = vpop.f32.mrf.mxu0
        %v4765 = vadd.f32 0.0, %v4764
        %v4766 = vpop.f32.mrf.mxu0
        %v4767 = vadd.f32 0.0, %v4766
        %4768 = vmatmul.bf16.gmra.mxu0 %v4729
        %v4769 = vpop.f32.mrf.mxu0
        %v4770 = vadd.f32 0.0, %v4769
        %v4771 = vpop.f32.mrf.mxu0
        %v4772 = vadd.f32 0.0, %v4771
        %4773 = vmatmul.bf16.gmra.mxu0 %v4732
        %v4774 = vpop.f32.mrf.mxu0
        %v4775 = vadd.f32 0.0, %v4774
        %v4776 = vpop.f32.mrf.mxu0
        %v4777 = vadd.f32 0.0, %v4776
        %4778 = vmatmul.bf16.gmra.mxu0 %v4735
        %v4779 = vpop.f32.mrf.mxu0
        %v4780 = vadd.f32 0.0, %v4779
        %v4781 = vpop.f32.mrf.mxu0
        %v4782 = vadd.f32 0.0, %v4781
        %4783 = vmatmul.bf16.gmra.mxu0 %v4738
        %v4784 = vpop.f32.mrf.mxu0
        %v4785 = vadd.f32 0.0, %v4784
        %v4786 = vpop.f32.mrf.mxu0
        %v4787 = vadd.f32 0.0, %v4786
        %4788 = vmatmul.bf16.gmra.mxu0 %v4741
        %v4789 = vpop.f32.mrf.mxu0
        %v4790 = vadd.f32 0.0, %v4789
        %v4791 = vpop.f32.mrf.mxu0
        %v4792 = vadd.f32 0.0, %v4791
        %4793 = vmatmul.bf16.gmra.mxu0 %v4744
        %v4794 = vpop.f32.mrf.mxu0
        %v4795 = vadd.f32 0.0, %v4794
        %v4796 = vpop.f32.mrf.mxu0
        %v4797 = vadd.f32 0.0, %v4796
        %4798 = vmatmul.bf16.gmra.mxu0 %v4747
        %v4799 = vpop.f32.mrf.mxu0
        %v4800 = vadd.f32 0.0, %v4799
        %v4801 = vpop.f32.mrf.mxu0
        %v4802 = vadd.f32 0.0, %v4801
        %4803 = vmatmul.bf16.gmra.mxu0 %v4750
        %v4804 = vpop.f32.mrf.mxu0
        %v4805 = vadd.f32 0.0, %v4804
        %v4806 = vpop.f32.mrf.mxu0
        %v4807 = vadd.f32 0.0, %v4806
        %4808 = vmatmul.bf16.gmra.mxu0 %v4753
        %v4809 = vpop.f32.mrf.mxu0
        %v4810 = vadd.f32 0.0, %v4809
        %v4811 = vpop.f32.mrf.mxu0
        %v4812 = vadd.f32 0.0, %v4811
        %4813 = vdwg.mxu0
        %v4814 = vadd.f32 %v4513, %v4765
        %v4815 = vadd.f32 %v4515, %v4767
        %v4816 = vadd.f32 %v4518, %v4770
        %v4817 = vadd.f32 %v4520, %v4772
        %v4818 = vadd.f32 %v4523, %v4775
        %v4819 = vadd.f32 %v4525, %v4777
        %v4820 = vadd.f32 %v4528, %v4780
        %v4821 = vadd.f32 %v4530, %v4782
        %v4822 = vadd.f32 %v4533, %v4785
        %v4823 = vadd.f32 %v4535, %v4787
        %v4824 = vadd.f32 %v4538, %v4790
        %v4825 = vadd.f32 %v4540, %v4792
        %v4826 = vadd.f32 %v4543, %v4795
        %v4827 = vadd.f32 %v4545, %v4797
        %v4828 = vadd.f32 %v4548, %v4800
        %v4829 = vadd.f32 %v4550, %v4802
        %v4830 = vadd.f32 %v4553, %v4805
        %v4831 = vadd.f32 %v4555, %v4807
        %v4832 = vadd.f32 %v4558, %v4810
        %v4833 = vadd.f32 %v4560, %v4812
        %s4834 = scalar_lea.vmem [#allocation2], 12
        %v4835 = vld [vmem:[%s4834] sm:$0xf]
        %v4836 = vld [vmem:[%s4834 + $0x4] sm:$0xf]
        %v4837 = vld [vmem:[%s4834 + $0xc] sm:$0xf]
        %v4838 = vld [vmem:[%s4834 + $0x10] sm:$0xf]
        %v4839 = vld [vmem:[%s4834 + $0x18] sm:$0xf]
        %v4840 = vld [vmem:[%s4834 + $0x1c] sm:$0xf]
        %v4841 = vld [vmem:[%s4834 + $0x24] sm:$0xf]
        %v4842 = vld [vmem:[%s4834 + $0x28] sm:$0xf]
        %v4843 = vld [vmem:[%s4834 + $0x30] sm:$0xf]
        %v4844 = vld [vmem:[%s4834 + $0x34] sm:$0xf]
        %v4845 = vld [vmem:[%s4834 + $0x3c] sm:$0xf]
        %v4846 = vld [vmem:[%s4834 + $0x40] sm:$0xf]
        %v4847 = vld [vmem:[%s4834 + $0x48] sm:$0xf]
        %v4848 = vld [vmem:[%s4834 + $0x4c] sm:$0xf]
        %v4849 = vld [vmem:[%s4834 + $0x54] sm:$0xf]
        %v4850 = vld [vmem:[%s4834 + $0x58] sm:$0xf]
        %v4851 = vld [vmem:[%s4834 + $0x60] sm:$0xf]
        %v4852 = vld [vmem:[%s4834 + $0x64] sm:$0xf]
        %v4853 = vld [vmem:[%s4834 + $0x6c] sm:$0xf]
        %v4854 = vld [vmem:[%s4834 + $0x70] sm:$0xf]
        %s4855 = scalar_lea.vmem %s3, 96
        %v4856 = vld [vmem:[%s4855] sm:$0xf]
        %v4857 = vld [vmem:[%s4855 + $0x4] sm:$0xf]
        %v4858 = vld [vmem:[%s4855 + $0x8] sm:$0xf]
        %v4859 = vld [vmem:[%s4855 + $0xc] sm:$0xf]
        %v4860 = vld [vmem:[%s4855 + $0x10] sm:$0xf]
        %v4861 = vld [vmem:[%s4855 + $0x14] sm:$0xf]
        %v4862 = vld [vmem:[%s4855 + $0x18] sm:$0xf]
        %v4863 = vld [vmem:[%s4855 + $0x1c] sm:$0xf]
        %v4884 = vunpack.c.l.b16 %v4835
        %v4885 = vunpack.c.l.b16 %v4836
        %v4886 = vunpack.c.l.b16 %v4837
        %v4887 = vunpack.c.l.b16 %v4838
        %v4888 = vunpack.c.l.b16 %v4839
        %v4889 = vunpack.c.l.b16 %v4840
        %v4890 = vunpack.c.l.b16 %v4841
        %v4891 = vunpack.c.l.b16 %v4842
        %v4892 = vunpack.c.l.b16 %v4843
        %v4893 = vunpack.c.l.b16 %v4844
        %v4894 = vunpack.c.l.b16 %v4845
        %v4895 = vunpack.c.l.b16 %v4846
        %v4896 = vunpack.c.l.b16 %v4847
        %v4897 = vunpack.c.l.b16 %v4848
        %v4898 = vunpack.c.l.b16 %v4849
        %v4899 = vunpack.c.l.b16 %v4850
        %v4900 = vunpack.c.l.b16 %v4851
        %v4901 = vunpack.c.l.b16 %v4852
        %v4902 = vunpack.c.l.b16 %v4853
        %v4903 = vunpack.c.l.b16 %v4854
        %v4904 = vpack.c.b16 %v4885, %v4884
        %v4905 = vpack.c.b16 %v4887, %v4886
        %v4906 = vpack.c.b16 %v4889, %v4888
        %v4907 = vpack.c.b16 %v4891, %v4890
        %v4908 = vpack.c.b16 %v4893, %v4892
        %v4909 = vpack.c.b16 %v4895, %v4894
        %v4910 = vpack.c.b16 %v4897, %v4896
        %v4911 = vpack.c.b16 %v4899, %v4898
        %v4912 = vpack.c.b16 %v4901, %v4900
        %v4913 = vpack.c.b16 %v4903, %v4902
        %v4922 = vunpack.c.l.b16 %v4856
        %v4923 = vunpack.c.l.b16 %v4857
        %v4924 = vunpack.c.l.b16 %v4858
        %v4925 = vunpack.c.l.b16 %v4859
        %v4926 = vunpack.c.l.b16 %v4860
        %v4927 = vunpack.c.l.b16 %v4861
        %v4928 = vunpack.c.l.b16 %v4862
        %v4929 = vunpack.c.l.b16 %v4863
        %v4930 = vpack.c.b16 %v4923, %v4922
        %v4931 = vpack.c.b16 %v4925, %v4924
        %v4932 = vpack.c.b16 %v4927, %v4926
        %v4933 = vpack.c.b16 %v4929, %v4928
        %v4939 = vsel %vm4309, %v4904, 0
        %v4942 = vsel %vm4309, %v4905, 0
        %v4945 = vsel %vm4309, %v4906, 0
        %v4948 = vsel %vm4309, %v4907, 0
        %v4951 = vsel %vm4309, %v4908, 0
        %v4954 = vsel %vm4309, %v4909, 0
        %v4957 = vsel %vm4309, %v4910, 0
        %v4960 = vsel %vm4309, %v4911, 0
        %v4963 = vsel %vm4309, %v4912, 0
        %v4966 = vsel %vm4309, %v4913, 0
        %4968 = vmatpush.bf16.msra.mxu0 0
        %4969 = vmatpush.bf16.msra.mxu0 0
        %4970 = vmatpush.bf16.msra.mxu0 0
        %4971 = vmatpush.bf16.msra.mxu0 0
        %4972 = vmatpush.bf16.msra.mxu0 %v4933
        %4973 = vmatpush.bf16.msra.mxu0 %v4932
        %4974 = vmatpush.bf16.msra.mxu0 %v4931
        %4975 = vmatpush.bf16.msra.mxu0 %v4930
        %4976 = vmatmul.bf16.gmra.mxu0 %v4939
        %v4977 = vpop.f32.mrf.mxu0
        %v4978 = vadd.f32 0.0, %v4977
        %v4979 = vpop.f32.mrf.mxu0
        %v4980 = vadd.f32 0.0, %v4979
        %4981 = vmatmul.bf16.gmra.mxu0 %v4942
        %v4982 = vpop.f32.mrf.mxu0
        %v4983 = vadd.f32 0.0, %v4982
        %v4984 = vpop.f32.mrf.mxu0
        %v4985 = vadd.f32 0.0, %v4984
        %4986 = vmatmul.bf16.gmra.mxu0 %v4945
        %v4987 = vpop.f32.mrf.mxu0
        %v4988 = vadd.f32 0.0, %v4987
        %v4989 = vpop.f32.mrf.mxu0
        %v4990 = vadd.f32 0.0, %v4989
        %4991 = vmatmul.bf16.gmra.mxu0 %v4948
        %v4992 = vpop.f32.mrf.mxu0
        %v4993 = vadd.f32 0.0, %v4992
        %v4994 = vpop.f32.mrf.mxu0
        %v4995 = vadd.f32 0.0, %v4994
        %4996 = vmatmul.bf16.gmra.mxu0 %v4951
        %v4997 = vpop.f32.mrf.mxu0
        %v4998 = vadd.f32 0.0, %v4997
        %v4999 = vpop.f32.mrf.mxu0
        %v5000 = vadd.f32 0.0, %v4999
        %5001 = vmatmul.bf16.gmra.mxu0 %v4954
        %v5002 = vpop.f32.mrf.mxu0
        %v5003 = vadd.f32 0.0, %v5002
        %v5004 = vpop.f32.mrf.mxu0
        %v5005 = vadd.f32 0.0, %v5004
        %5006 = vmatmul.bf16.gmra.mxu0 %v4957
        %v5007 = vpop.f32.mrf.mxu0
        %v5008 = vadd.f32 0.0, %v5007
        %v5009 = vpop.f32.mrf.mxu0
        %v5010 = vadd.f32 0.0, %v5009
        %5011 = vmatmul.bf16.gmra.mxu0 %v4960
        %v5012 = vpop.f32.mrf.mxu0
        %v5013 = vadd.f32 0.0, %v5012
        %v5014 = vpop.f32.mrf.mxu0
        %v5015 = vadd.f32 0.0, %v5014
        %5016 = vmatmul.bf16.gmra.mxu0 %v4963
        %v5017 = vpop.f32.mrf.mxu0
        %v5018 = vadd.f32 0.0, %v5017
        %v5019 = vpop.f32.mrf.mxu0
        %v5020 = vadd.f32 0.0, %v5019
        %5021 = vmatmul.bf16.gmra.mxu0 %v4966
        %v5022 = vpop.f32.mrf.mxu0
        %v5023 = vadd.f32 0.0, %v5022
        %v5024 = vpop.f32.mrf.mxu0
        %v5025 = vadd.f32 0.0, %v5024
        %5026 = vdwg.mxu0
        %v5027 = vadd.f32 %v4814, %v4978
        %v5028 = vadd.f32 %v4815, %v4980
        %v5029 = vadd.f32 %v4816, %v4983
        %v5030 = vadd.f32 %v4817, %v4985
        %v5031 = vadd.f32 %v4818, %v4988
        %v5032 = vadd.f32 %v4819, %v4990
        %v5033 = vadd.f32 %v4820, %v4993
        %v5034 = vadd.f32 %v4821, %v4995
        %v5035 = vadd.f32 %v4822, %v4998
        %v5036 = vadd.f32 %v4823, %v5000
        %v5037 = vadd.f32 %v4824, %v5003
        %v5038 = vadd.f32 %v4825, %v5005
        %v5039 = vadd.f32 %v4826, %v5008
        %v5040 = vadd.f32 %v4827, %v5010
        %v5041 = vadd.f32 %v4828, %v5013
        %v5042 = vadd.f32 %v4829, %v5015
        %v5043 = vadd.f32 %v4830, %v5018
        %v5044 = vadd.f32 %v4831, %v5020
        %v5045 = vadd.f32 %v4832, %v5023
        %v5046 = vadd.f32 %v4833, %v5025
        %v5047 = vld [vmem:[%s4834] sm:$0xf]
        %v5048 = vld [vmem:[%s4834 + $0x4] sm:$0xf]
        %v5049 = vld [vmem:[%s4834 + $0x8] sm:$0x1]
        %v5050 = vld [vmem:[%s4834 + $0xc] sm:$0xf]
        %v5051 = vld [vmem:[%s4834 + $0x10] sm:$0xf]
        %v5052 = vld [vmem:[%s4834 + $0x14] sm:$0x1]
        %v5053 = vld [vmem:[%s4834 + $0x18] sm:$0xf]
        %v5054 = vld [vmem:[%s4834 + $0x1c] sm:$0xf]
        %v5055 = vld [vmem:[%s4834 + $0x20] sm:$0x1]
        %v5056 = vld [vmem:[%s4834 + $0x24] sm:$0xf]
        %v5057 = vld [vmem:[%s4834 + $0x28] sm:$0xf]
        %v5058 = vld [vmem:[%s4834 + $0x2c] sm:$0x1]
        %v5059 = vld [vmem:[%s4834 + $0x30] sm:$0xf]
        %v5060 = vld [vmem:[%s4834 + $0x34] sm:$0xf]
        %v5061 = vld [vmem:[%s4834 + $0x38] sm:$0x1]
        %v5062 = vld [vmem:[%s4834 + $0x3c] sm:$0xf]
        %v5063 = vld [vmem:[%s4834 + $0x40] sm:$0xf]
        %v5064 = vld [vmem:[%s4834 + $0x44] sm:$0x1]
        %v5065 = vld [vmem:[%s4834 + $0x48] sm:$0xf]
        %v5066 = vld [vmem:[%s4834 + $0x4c] sm:$0xf]
        %v5067 = vld [vmem:[%s4834 + $0x50] sm:$0x1]
        %v5068 = vld [vmem:[%s4834 + $0x54] sm:$0xf]
        %v5069 = vld [vmem:[%s4834 + $0x58] sm:$0xf]
        %v5070 = vld [vmem:[%s4834 + $0x5c] sm:$0x1]
        %v5071 = vld [vmem:[%s4834 + $0x60] sm:$0xf]
        %v5072 = vld [vmem:[%s4834 + $0x64] sm:$0xf]
        %v5073 = vld [vmem:[%s4834 + $0x68] sm:$0x1]
        %v5074 = vld [vmem:[%s4834 + $0x6c] sm:$0xf]
        %v5075 = vld [vmem:[%s4834 + $0x70] sm:$0xf]
        %v5076 = vld [vmem:[%s4834 + $0x74] sm:$0x1]
        %v5078 = vshrl.u32 %v5047, 16
        %v5080 = vrot.slane %v5078, 4
        %v5081 = vshll.u32 %v5047, 16
        %v5083 = vrot.slane %v5081, 5
        %v5084 = vor.u32 %v5080, %v5083
        %v5085 = vrot.slane %v5084, 4
        %v5087 = vshll.u32 %v5048, 16
        %v5089 = vrot.slane %v5087, 5
        %v5090 = vsel %vm529, %v5085, %v5089
        %v5091 = vshrl.u32 %v5048, 16
        %v5093 = vrot.slane %v5091, 4
        %v5094 = vor.u32 %v5093, %v5089
        %v5095 = vrot.slane %v5094, 4
        %v5097 = vshll.u32 %v5049, 16
        %v5099 = vrot.slane %v5097, 5
        %v5100 = vsel %vm529, %v5095, %v5099
        %v5102 = vshrl.u32 %v5050, 16
        %v5104 = vrot.slane %v5102, 4
        %v5105 = vshll.u32 %v5050, 16
        %v5107 = vrot.slane %v5105, 5
        %v5108 = vor.u32 %v5104, %v5107
        %v5109 = vrot.slane %v5108, 4
        %v5111 = vshll.u32 %v5051, 16
        %v5113 = vrot.slane %v5111, 5
        %v5114 = vsel %vm529, %v5109, %v5113
        %v5115 = vshrl.u32 %v5051, 16
        %v5117 = vrot.slane %v5115, 4
        %v5118 = vor.u32 %v5117, %v5113
        %v5119 = vrot.slane %v5118, 4
        %v5121 = vshll.u32 %v5052, 16
        %v5123 = vrot.slane %v5121, 5
        %v5124 = vsel %vm529, %v5119, %v5123
        %v5126 = vshrl.u32 %v5053, 16
        %v5128 = vrot.slane %v5126, 4
        %v5129 = vshll.u32 %v5053, 16
        %v5131 = vrot.slane %v5129, 5
        %v5132 = vor.u32 %v5128, %v5131
        %v5133 = vrot.slane %v5132, 4
        %v5135 = vshll.u32 %v5054, 16
        %v5137 = vrot.slane %v5135, 5
        %v5138 = vsel %vm529, %v5133, %v5137
        %v5139 = vshrl.u32 %v5054, 16
        %v5141 = vrot.slane %v5139, 4
        %v5142 = vor.u32 %v5141, %v5137
        %v5143 = vrot.slane %v5142, 4
        %v5145 = vshll.u32 %v5055, 16
        %v5147 = vrot.slane %v5145, 5
        %v5148 = vsel %vm529, %v5143, %v5147
        %v5150 = vshrl.u32 %v5056, 16
        %v5152 = vrot.slane %v5150, 4
        %v5153 = vshll.u32 %v5056, 16
        %v5155 = vrot.slane %v5153, 5
        %v5156 = vor.u32 %v5152, %v5155
        %v5157 = vrot.slane %v5156, 4
        %v5159 = vshll.u32 %v5057, 16
        %v5161 = vrot.slane %v5159, 5
        %v5162 = vsel %vm529, %v5157, %v5161
        %v5163 = vshrl.u32 %v5057, 16
        %v5165 = vrot.slane %v5163, 4
        %v5166 = vor.u32 %v5165, %v5161
        %v5167 = vrot.slane %v5166, 4
        %v5169 = vshll.u32 %v5058, 16
        %v5171 = vrot.slane %v5169, 5
        %v5172 = vsel %vm529, %v5167, %v5171
        %v5174 = vshrl.u32 %v5059, 16
        %v5176 = vrot.slane %v5174, 4
        %v5177 = vshll.u32 %v5059, 16
        %v5179 = vrot.slane %v5177, 5
        %v5180 = vor.u32 %v5176, %v5179
        %v5181 = vrot.slane %v5180, 4
        %v5183 = vshll.u32 %v5060, 16
        %v5185 = vrot.slane %v5183, 5
        %v5186 = vsel %vm529, %v5181, %v5185
        %v5187 = vshrl.u32 %v5060, 16
        %v5189 = vrot.slane %v5187, 4
        %v5190 = vor.u32 %v5189, %v5185
        %v5191 = vrot.slane %v5190, 4
        %v5193 = vshll.u32 %v5061, 16
        %v5195 = vrot.slane %v5193, 5
        %v5196 = vsel %vm529, %v5191, %v5195
        %v5198 = vshrl.u32 %v5062, 16
        %v5200 = vrot.slane %v5198, 4
        %v5201 = vshll.u32 %v5062, 16
        %v5203 = vrot.slane %v5201, 5
        %v5204 = vor.u32 %v5200, %v5203
        %v5205 = vrot.slane %v5204, 4
        %v5207 = vshll.u32 %v5063, 16
        %v5209 = vrot.slane %v5207, 5
        %v5210 = vsel %vm529, %v5205, %v5209
        %v5211 = vshrl.u32 %v5063, 16
        %v5213 = vrot.slane %v5211, 4
        %v5214 = vor.u32 %v5213, %v5209
        %v5215 = vrot.slane %v5214, 4
        %v5217 = vshll.u32 %v5064, 16
        %v5219 = vrot.slane %v5217, 5
        %v5220 = vsel %vm529, %v5215, %v5219
        %v5222 = vshrl.u32 %v5065, 16
        %v5224 = vrot.slane %v5222, 4
        %v5225 = vshll.u32 %v5065, 16
        %v5227 = vrot.slane %v5225, 5
        %v5228 = vor.u32 %v5224, %v5227
        %v5229 = vrot.slane %v5228, 4
        %v5231 = vshll.u32 %v5066, 16
        %v5233 = vrot.slane %v5231, 5
        %v5234 = vsel %vm529, %v5229, %v5233
        %v5235 = vshrl.u32 %v5066, 16
        %v5237 = vrot.slane %v5235, 4
        %v5238 = vor.u32 %v5237, %v5233
        %v5239 = vrot.slane %v5238, 4
        %v5241 = vshll.u32 %v5067, 16
        %v5243 = vrot.slane %v5241, 5
        %v5244 = vsel %vm529, %v5239, %v5243
        %v5246 = vshrl.u32 %v5068, 16
        %v5248 = vrot.slane %v5246, 4
        %v5249 = vshll.u32 %v5068, 16
        %v5251 = vrot.slane %v5249, 5
        %v5252 = vor.u32 %v5248, %v5251
        %v5253 = vrot.slane %v5252, 4
        %v5255 = vshll.u32 %v5069, 16
        %v5257 = vrot.slane %v5255, 5
        %v5258 = vsel %vm529, %v5253, %v5257
        %v5259 = vshrl.u32 %v5069, 16
        %v5261 = vrot.slane %v5259, 4
        %v5262 = vor.u32 %v5261, %v5257
        %v5263 = vrot.slane %v5262, 4
        %v5265 = vshll.u32 %v5070, 16
        %v5267 = vrot.slane %v5265, 5
        %v5268 = vsel %vm529, %v5263, %v5267
        %v5270 = vshrl.u32 %v5071, 16
        %v5272 = vrot.slane %v5270, 4
        %v5273 = vshll.u32 %v5071, 16
        %v5275 = vrot.slane %v5273, 5
        %v5276 = vor.u32 %v5272, %v5275
        %v5277 = vrot.slane %v5276, 4
        %v5279 = vshll.u32 %v5072, 16
        %v5281 = vrot.slane %v5279, 5
        %v5282 = vsel %vm529, %v5277, %v5281
        %v5283 = vshrl.u32 %v5072, 16
        %v5285 = vrot.slane %v5283, 4
        %v5286 = vor.u32 %v5285, %v5281
        %v5287 = vrot.slane %v5286, 4
        %v5289 = vshll.u32 %v5073, 16
        %v5291 = vrot.slane %v5289, 5
        %v5292 = vsel %vm529, %v5287, %v5291
        %v5294 = vshrl.u32 %v5074, 16
        %v5296 = vrot.slane %v5294, 4
        %v5297 = vshll.u32 %v5074, 16
        %v5299 = vrot.slane %v5297, 5
        %v5300 = vor.u32 %v5296, %v5299
        %v5301 = vrot.slane %v5300, 4
        %v5303 = vshll.u32 %v5075, 16
        %v5305 = vrot.slane %v5303, 5
        %v5306 = vsel %vm529, %v5301, %v5305
        %v5307 = vshrl.u32 %v5075, 16
        %v5309 = vrot.slane %v5307, 4
        %v5310 = vor.u32 %v5309, %v5305
        %v5311 = vrot.slane %v5310, 4
        %v5313 = vshll.u32 %v5076, 16
        %v5315 = vrot.slane %v5313, 5
        %v5316 = vsel %vm529, %v5311, %v5315
        %s5317 = scalar_lea.vmem %s3, 128
        %v5318 = vld [vmem:[%s5317] sm:$0xf]
        %v5319 = vld [vmem:[%s5317 + $0x4] sm:$0xf]
        %v5320 = vld [vmem:[%s5317 + $0x8] sm:$0xf]
        %v5321 = vld [vmem:[%s5317 + $0xc] sm:$0xf]
        %v5322 = vld [vmem:[%s5317 + $0x10] sm:$0xf]
        %v5323 = vld [vmem:[%s5317 + $0x14] sm:$0xf]
        %v5324 = vld [vmem:[%s5317 + $0x18] sm:$0xf]
        %v5325 = vld [vmem:[%s5317 + $0x1c] sm:$0xf]
        %v5326 = vunpack.c.l.b16 %v5090
        %v5327 = vunpack.c.l.b16 %v5100
        %v5328 = vunpack.c.l.b16 %v5114
        %v5329 = vunpack.c.l.b16 %v5124
        %v5330 = vunpack.c.l.b16 %v5138
        %v5331 = vunpack.c.l.b16 %v5148
        %v5332 = vunpack.c.l.b16 %v5162
        %v5333 = vunpack.c.l.b16 %v5172
        %v5334 = vunpack.c.l.b16 %v5186
        %v5335 = vunpack.c.l.b16 %v5196
        %v5336 = vunpack.c.l.b16 %v5210
        %v5337 = vunpack.c.l.b16 %v5220
        %v5338 = vunpack.c.l.b16 %v5234
        %v5339 = vunpack.c.l.b16 %v5244
        %v5340 = vunpack.c.l.b16 %v5258
        %v5341 = vunpack.c.l.b16 %v5268
        %v5342 = vunpack.c.l.b16 %v5282
        %v5343 = vunpack.c.l.b16 %v5292
        %v5344 = vunpack.c.l.b16 %v5306
        %v5345 = vunpack.c.l.b16 %v5316
        %v5346 = vpack.c.b16 %v5327, %v5326
        %v5347 = vpack.c.b16 %v5329, %v5328
        %v5348 = vpack.c.b16 %v5331, %v5330
        %v5349 = vpack.c.b16 %v5333, %v5332
        %v5350 = vpack.c.b16 %v5335, %v5334
        %v5351 = vpack.c.b16 %v5337, %v5336
        %v5352 = vpack.c.b16 %v5339, %v5338
        %v5353 = vpack.c.b16 %v5341, %v5340
        %v5354 = vpack.c.b16 %v5343, %v5342
        %v5355 = vpack.c.b16 %v5345, %v5344
        %v5364 = vunpack.c.l.b16 %v5318
        %v5365 = vunpack.c.l.b16 %v5319
        %v5366 = vunpack.c.l.b16 %v5320
        %v5367 = vunpack.c.l.b16 %v5321
        %v5368 = vunpack.c.l.b16 %v5322
        %v5369 = vunpack.c.l.b16 %v5323
        %v5370 = vunpack.c.l.b16 %v5324
        %v5371 = vunpack.c.l.b16 %v5325
        %v5372 = vpack.c.b16 %v5365, %v5364
        %v5373 = vpack.c.b16 %v5367, %v5366
        %v5374 = vpack.c.b16 %v5369, %v5368
        %v5375 = vpack.c.b16 %v5371, %v5370
        %v5381 = vsel %vm4309, %v5346, 0
        %v5384 = vsel %vm4309, %v5347, 0
        %v5387 = vsel %vm4309, %v5348, 0
        %v5390 = vsel %vm4309, %v5349, 0
        %v5393 = vsel %vm4309, %v5350, 0
        %v5396 = vsel %vm4309, %v5351, 0
        %v5399 = vsel %vm4309, %v5352, 0
        %v5402 = vsel %vm4309, %v5353, 0
        %v5405 = vsel %vm4309, %v5354, 0
        %v5408 = vsel %vm4309, %v5355, 0
        %5410 = vmatpush.bf16.msra.mxu0 0
        %5411 = vmatpush.bf16.msra.mxu0 0
        %5412 = vmatpush.bf16.msra.mxu0 0
        %5413 = vmatpush.bf16.msra.mxu0 0
        %5414 = vmatpush.bf16.msra.mxu0 %v5375
        %5415 = vmatpush.bf16.msra.mxu0 %v5374
        %5416 = vmatpush.bf16.msra.mxu0 %v5373
        %5417 = vmatpush.bf16.msra.mxu0 %v5372
        %5418 = vmatmul.bf16.gmra.mxu0 %v5381
        %v5419 = vpop.f32.mrf.mxu0
        %v5420 = vadd.f32 0.0, %v5419
        %v5421 = vpop.f32.mrf.mxu0
        %v5422 = vadd.f32 0.0, %v5421
        %5423 = vmatmul.bf16.gmra.mxu0 %v5384
        %v5424 = vpop.f32.mrf.mxu0
        %v5425 = vadd.f32 0.0, %v5424
        %v5426 = vpop.f32.mrf.mxu0
        %v5427 = vadd.f32 0.0, %v5426
        %5428 = vmatmul.bf16.gmra.mxu0 %v5387
        %v5429 = vpop.f32.mrf.mxu0
        %v5430 = vadd.f32 0.0, %v5429
        %v5431 = vpop.f32.mrf.mxu0
        %v5432 = vadd.f32 0.0, %v5431
        %5433 = vmatmul.bf16.gmra.mxu0 %v5390
        %v5434 = vpop.f32.mrf.mxu0
        %v5435 = vadd.f32 0.0, %v5434
        %v5436 = vpop.f32.mrf.mxu0
        %v5437 = vadd.f32 0.0, %v5436
        %5438 = vmatmul.bf16.gmra.mxu0 %v5393
        %v5439 = vpop.f32.mrf.mxu0
        %v5440 = vadd.f32 0.0, %v5439
        %v5441 = vpop.f32.mrf.mxu0
        %v5442 = vadd.f32 0.0, %v5441
        %5443 = vmatmul.bf16.gmra.mxu0 %v5396
        %v5444 = vpop.f32.mrf.mxu0
        %v5445 = vadd.f32 0.0, %v5444
        %v5446 = vpop.f32.mrf.mxu0
        %v5447 = vadd.f32 0.0, %v5446
        %5448 = vmatmul.bf16.gmra.mxu0 %v5399
        %v5449 = vpop.f32.mrf.mxu0
        %v5450 = vadd.f32 0.0, %v5449
        %v5451 = vpop.f32.mrf.mxu0
        %v5452 = vadd.f32 0.0, %v5451
        %5453 = vmatmul.bf16.gmra.mxu0 %v5402
        %v5454 = vpop.f32.mrf.mxu0
        %v5455 = vadd.f32 0.0, %v5454
        %v5456 = vpop.f32.mrf.mxu0
        %v5457 = vadd.f32 0.0, %v5456
        %5458 = vmatmul.bf16.gmra.mxu0 %v5405
        %v5459 = vpop.f32.mrf.mxu0
        %v5460 = vadd.f32 0.0, %v5459
        %v5461 = vpop.f32.mrf.mxu0
        %v5462 = vadd.f32 0.0, %v5461
        %5463 = vmatmul.bf16.gmra.mxu0 %v5408
        %v5464 = vpop.f32.mrf.mxu0
        %v5465 = vadd.f32 0.0, %v5464
        %v5466 = vpop.f32.mrf.mxu0
        %v5467 = vadd.f32 0.0, %v5466
        %5468 = vdwg.mxu0
        %v5469 = vadd.f32 %v5027, %v5420
        %v5470 = vadd.f32 %v5028, %v5422
        %v5471 = vadd.f32 %v5029, %v5425
        %v5472 = vadd.f32 %v5030, %v5427
        %v5473 = vadd.f32 %v5031, %v5430
        %v5474 = vadd.f32 %v5032, %v5432
        %v5475 = vadd.f32 %v5033, %v5435
        %v5476 = vadd.f32 %v5034, %v5437
        %v5477 = vadd.f32 %v5035, %v5440
        %v5478 = vadd.f32 %v5036, %v5442
        %v5479 = vadd.f32 %v5037, %v5445
        %v5480 = vadd.f32 %v5038, %v5447
        %v5481 = vadd.f32 %v5039, %v5450
        %v5482 = vadd.f32 %v5040, %v5452
        %v5483 = vadd.f32 %v5041, %v5455
        %v5484 = vadd.f32 %v5042, %v5457
        %v5485 = vadd.f32 %v5043, %v5460
        %v5486 = vadd.f32 %v5044, %v5462
        %v5487 = vadd.f32 %v5045, %v5465
        %v5488 = vadd.f32 %v5046, %v5467
        %v5489 = vld [vmem:[%s4834] sm:$0xe]
        %v5490 = vld [vmem:[%s4834 + $0xc] sm:$0xe]
        %v5491 = vld [vmem:[%s4834 + $0x18] sm:$0xe]
        %v5492 = vld [vmem:[%s4834 + $0x24] sm:$0xe]
        %v5493 = vld [vmem:[%s4834 + $0x30] sm:$0xe]
        %v5494 = vld [vmem:[%s4834 + $0x3c] sm:$0xe]
        %v5495 = vld [vmem:[%s4834 + $0x48] sm:$0xe]
        %v5496 = vld [vmem:[%s4834 + $0x54] sm:$0xe]
        %v5497 = vld [vmem:[%s4834 + $0x60] sm:$0xe]
        %v5498 = vld [vmem:[%s4834 + $0x6c] sm:$0xe]
        %v5529 = vrot.slane %v5489, 5
        %v5530 = vrot.slane %v5529, 4
        %v5531 = vrot.slane %v5048, 5
        %v5532 = vsel %vm1175, %v5530, %v5531
        %v5533 = vrot.slane %v5531, 4
        %v5534 = vrot.slane %v5049, 5
        %v5535 = vsel %vm1175, %v5533, %v5534
        %v5536 = vrot.slane %v5490, 5
        %v5537 = vrot.slane %v5536, 4
        %v5538 = vrot.slane %v5051, 5
        %v5539 = vsel %vm1175, %v5537, %v5538
        %v5540 = vrot.slane %v5538, 4
        %v5541 = vrot.slane %v5052, 5
        %v5542 = vsel %vm1175, %v5540, %v5541
        %v5543 = vrot.slane %v5491, 5
        %v5544 = vrot.slane %v5543, 4
        %v5545 = vrot.slane %v5054, 5
        %v5546 = vsel %vm1175, %v5544, %v5545
        %v5547 = vrot.slane %v5545, 4
        %v5548 = vrot.slane %v5055, 5
        %v5549 = vsel %vm1175, %v5547, %v5548
        %v5550 = vrot.slane %v5492, 5
        %v5551 = vrot.slane %v5550, 4
        %v5552 = vrot.slane %v5057, 5
        %v5553 = vsel %vm1175, %v5551, %v5552
        %v5554 = vrot.slane %v5552, 4
        %v5555 = vrot.slane %v5058, 5
        %v5556 = vsel %vm1175, %v5554, %v5555
        %v5557 = vrot.slane %v5493, 5
        %v5558 = vrot.slane %v5557, 4
        %v5559 = vrot.slane %v5060, 5
        %v5560 = vsel %vm1175, %v5558, %v5559
        %v5561 = vrot.slane %v5559, 4
        %v5562 = vrot.slane %v5061, 5
        %v5563 = vsel %vm1175, %v5561, %v5562
        %v5564 = vrot.slane %v5494, 5
        %v5565 = vrot.slane %v5564, 4
        %v5566 = vrot.slane %v5063, 5
        %v5567 = vsel %vm1175, %v5565, %v5566
        %v5568 = vrot.slane %v5566, 4
        %v5569 = vrot.slane %v5064, 5
        %v5570 = vsel %vm1175, %v5568, %v5569
        %v5571 = vrot.slane %v5495, 5
        %v5572 = vrot.slane %v5571, 4
        %v5573 = vrot.slane %v5066, 5
        %v5574 = vsel %vm1175, %v5572, %v5573
        %v5575 = vrot.slane %v5573, 4
        %v5576 = vrot.slane %v5067, 5
        %v5577 = vsel %vm1175, %v5575, %v5576
        %v5578 = vrot.slane %v5496, 5
        %v5579 = vrot.slane %v5578, 4
        %v5580 = vrot.slane %v5069, 5
        %v5581 = vsel %vm1175, %v5579, %v5580
        %v5582 = vrot.slane %v5580, 4
        %v5583 = vrot.slane %v5070, 5
        %v5584 = vsel %vm1175, %v5582, %v5583
        %v5585 = vrot.slane %v5497, 5
        %v5586 = vrot.slane %v5585, 4
        %v5587 = vrot.slane %v5072, 5
        %v5588 = vsel %vm1175, %v5586, %v5587
        %v5589 = vrot.slane %v5587, 4
        %v5590 = vrot.slane %v5073, 5
        %v5591 = vsel %vm1175, %v5589, %v5590
        %v5592 = vrot.slane %v5498, 5
        %v5593 = vrot.slane %v5592, 4
        %v5594 = vrot.slane %v5075, 5
        %v5595 = vsel %vm1175, %v5593, %v5594
        %v5596 = vrot.slane %v5594, 4
        %v5597 = vrot.slane %v5076, 5
        %v5598 = vsel %vm1175, %v5596, %v5597
        %s5599 = scalar_lea.vmem %s3, 160
        %v5600 = vld [vmem:[%s5599] sm:$0xf]
        %v5601 = vld [vmem:[%s5599 + $0x4] sm:$0xf]
        %v5602 = vld [vmem:[%s5599 + $0x8] sm:$0xf]
        %v5603 = vld [vmem:[%s5599 + $0xc] sm:$0xf]
        %v5604 = vld [vmem:[%s5599 + $0x10] sm:$0xf]
        %v5605 = vld [vmem:[%s5599 + $0x14] sm:$0xf]
        %v5606 = vld [vmem:[%s5599 + $0x18] sm:$0xf]
        %v5607 = vld [vmem:[%s5599 + $0x1c] sm:$0xf]
        %v5608 = vunpack.c.l.b16 %v5532
        %v5609 = vunpack.c.l.b16 %v5535
        %v5610 = vunpack.c.l.b16 %v5539
        %v5611 = vunpack.c.l.b16 %v5542
        %v5612 = vunpack.c.l.b16 %v5546
        %v5613 = vunpack.c.l.b16 %v5549
        %v5614 = vunpack.c.l.b16 %v5553
        %v5615 = vunpack.c.l.b16 %v5556
        %v5616 = vunpack.c.l.b16 %v5560
        %v5617 = vunpack.c.l.b16 %v5563
        %v5618 = vunpack.c.l.b16 %v5567
        %v5619 = vunpack.c.l.b16 %v5570
        %v5620 = vunpack.c.l.b16 %v5574
        %v5621 = vunpack.c.l.b16 %v5577
        %v5622 = vunpack.c.l.b16 %v5581
        %v5623 = vunpack.c.l.b16 %v5584
        %v5624 = vunpack.c.l.b16 %v5588
        %v5625 = vunpack.c.l.b16 %v5591
        %v5626 = vunpack.c.l.b16 %v5595
        %v5627 = vunpack.c.l.b16 %v5598
        %v5628 = vpack.c.b16 %v5609, %v5608
        %v5629 = vpack.c.b16 %v5611, %v5610
        %v5630 = vpack.c.b16 %v5613, %v5612
        %v5631 = vpack.c.b16 %v5615, %v5614
        %v5632 = vpack.c.b16 %v5617, %v5616
        %v5633 = vpack.c.b16 %v5619, %v5618
        %v5634 = vpack.c.b16 %v5621, %v5620
        %v5635 = vpack.c.b16 %v5623, %v5622
        %v5636 = vpack.c.b16 %v5625, %v5624
        %v5637 = vpack.c.b16 %v5627, %v5626
        %v5646 = vunpack.c.l.b16 %v5600
        %v5647 = vunpack.c.l.b16 %v5601
        %v5648 = vunpack.c.l.b16 %v5602
        %v5649 = vunpack.c.l.b16 %v5603
        %v5650 = vunpack.c.l.b16 %v5604
        %v5651 = vunpack.c.l.b16 %v5605
        %v5652 = vunpack.c.l.b16 %v5606
        %v5653 = vunpack.c.l.b16 %v5607
        %v5654 = vpack.c.b16 %v5647, %v5646
        %v5655 = vpack.c.b16 %v5649, %v5648
        %v5656 = vpack.c.b16 %v5651, %v5650
        %v5657 = vpack.c.b16 %v5653, %v5652
        %v5663 = vsel %vm4309, %v5628, 0
        %v5666 = vsel %vm4309, %v5629, 0
        %v5669 = vsel %vm4309, %v5630, 0
        %v5672 = vsel %vm4309, %v5631, 0
        %v5675 = vsel %vm4309, %v5632, 0
        %v5678 = vsel %vm4309, %v5633, 0
        %v5681 = vsel %vm4309, %v5634, 0
        %v5684 = vsel %vm4309, %v5635, 0
        %v5687 = vsel %vm4309, %v5636, 0
        %v5690 = vsel %vm4309, %v5637, 0
        %5692 = vmatpush.bf16.msra.mxu0 0
        %5693 = vmatpush.bf16.msra.mxu0 0
        %5694 = vmatpush.bf16.msra.mxu0 0
        %5695 = vmatpush.bf16.msra.mxu0 0
        %5696 = vmatpush.bf16.msra.mxu0 %v5657
        %5697 = vmatpush.bf16.msra.mxu0 %v5656
        %5698 = vmatpush.bf16.msra.mxu0 %v5655
        %5699 = vmatpush.bf16.msra.mxu0 %v5654
        %5700 = vmatmul.bf16.gmra.mxu0 %v5663
        %v5701 = vpop.f32.mrf.mxu0
        %v5702 = vadd.f32 0.0, %v5701
        %v5703 = vpop.f32.mrf.mxu0
        %v5704 = vadd.f32 0.0, %v5703
        %5705 = vmatmul.bf16.gmra.mxu0 %v5666
        %v5706 = vpop.f32.mrf.mxu0
        %v5707 = vadd.f32 0.0, %v5706
        %v5708 = vpop.f32.mrf.mxu0
        %v5709 = vadd.f32 0.0, %v5708
        %5710 = vmatmul.bf16.gmra.mxu0 %v5669
        %v5711 = vpop.f32.mrf.mxu0
        %v5712 = vadd.f32 0.0, %v5711
        %v5713 = vpop.f32.mrf.mxu0
        %v5714 = vadd.f32 0.0, %v5713
        %5715 = vmatmul.bf16.gmra.mxu0 %v5672
        %v5716 = vpop.f32.mrf.mxu0
        %v5717 = vadd.f32 0.0, %v5716
        %v5718 = vpop.f32.mrf.mxu0
        %v5719 = vadd.f32 0.0, %v5718
        %5720 = vmatmul.bf16.gmra.mxu0 %v5675
        %v5721 = vpop.f32.mrf.mxu0
        %v5722 = vadd.f32 0.0, %v5721
        %v5723 = vpop.f32.mrf.mxu0
        %v5724 = vadd.f32 0.0, %v5723
        %5725 = vmatmul.bf16.gmra.mxu0 %v5678
        %v5726 = vpop.f32.mrf.mxu0
        %v5727 = vadd.f32 0.0, %v5726
        %v5728 = vpop.f32.mrf.mxu0
        %v5729 = vadd.f32 0.0, %v5728
        %5730 = vmatmul.bf16.gmra.mxu0 %v5681
        %v5731 = vpop.f32.mrf.mxu0
        %v5732 = vadd.f32 0.0, %v5731
        %v5733 = vpop.f32.mrf.mxu0
        %v5734 = vadd.f32 0.0, %v5733
        %5735 = vmatmul.bf16.gmra.mxu0 %v5684
        %v5736 = vpop.f32.mrf.mxu0
        %v5737 = vadd.f32 0.0, %v5736
        %v5738 = vpop.f32.mrf.mxu0
        %v5739 = vadd.f32 0.0, %v5738
        %5740 = vmatmul.bf16.gmra.mxu0 %v5687
        %v5741 = vpop.f32.mrf.mxu0
        %v5742 = vadd.f32 0.0, %v5741
        %v5743 = vpop.f32.mrf.mxu0
        %v5744 = vadd.f32 0.0, %v5743
        %5745 = vmatmul.bf16.gmra.mxu0 %v5690
        %v5746 = vpop.f32.mrf.mxu0
        %v5747 = vadd.f32 0.0, %v5746
        %v5748 = vpop.f32.mrf.mxu0
        %v5749 = vadd.f32 0.0, %v5748
        %5750 = vdwg.mxu0
        %v5751 = vadd.f32 %v5469, %v5702
        %v5752 = vadd.f32 %v5470, %v5704
        %v5753 = vadd.f32 %v5471, %v5707
        %v5754 = vadd.f32 %v5472, %v5709
        %v5755 = vadd.f32 %v5473, %v5712
        %v5756 = vadd.f32 %v5474, %v5714
        %v5757 = vadd.f32 %v5475, %v5717
        %v5758 = vadd.f32 %v5476, %v5719
        %v5759 = vadd.f32 %v5477, %v5722
        %v5760 = vadd.f32 %v5478, %v5724
        %v5761 = vadd.f32 %v5479, %v5727
        %v5762 = vadd.f32 %v5480, %v5729
        %v5763 = vadd.f32 %v5481, %v5732
        %v5764 = vadd.f32 %v5482, %v5734
        %v5765 = vadd.f32 %v5483, %v5737
        %v5766 = vadd.f32 %v5484, %v5739
        %v5767 = vadd.f32 %v5485, %v5742
        %v5768 = vadd.f32 %v5486, %v5744
        %v5769 = vadd.f32 %v5487, %v5747
        %v5770 = vadd.f32 %v5488, %v5749
        %s5771 = scalar_lea.vmem [#allocation2], 24
        %v5772 = vld [vmem:[%s5771] sm:$0xf]
        %v5773 = vld [vmem:[%s5771 + $0x4] sm:$0xf]
        %v5774 = vld [vmem:[%s5771 + $0xc] sm:$0xf]
        %v5775 = vld [vmem:[%s5771 + $0x10] sm:$0xf]
        %v5776 = vld [vmem:[%s5771 + $0x18] sm:$0xf]
        %v5777 = vld [vmem:[%s5771 + $0x1c] sm:$0xf]
        %v5778 = vld [vmem:[%s5771 + $0x24] sm:$0xf]
        %v5779 = vld [vmem:[%s5771 + $0x28] sm:$0xf]
        %v5780 = vld [vmem:[%s5771 + $0x30] sm:$0xf]
        %v5781 = vld [vmem:[%s5771 + $0x34] sm:$0xf]
        %v5782 = vld [vmem:[%s5771 + $0x3c] sm:$0xf]
        %v5783 = vld [vmem:[%s5771 + $0x40] sm:$0xf]
        %v5784 = vld [vmem:[%s5771 + $0x48] sm:$0xf]
        %v5785 = vld [vmem:[%s5771 + $0x4c] sm:$0xf]
        %v5786 = vld [vmem:[%s5771 + $0x54] sm:$0xf]
        %v5787 = vld [vmem:[%s5771 + $0x58] sm:$0xf]
        %v5788 = vld [vmem:[%s5771 + $0x60] sm:$0xf]
        %v5789 = vld [vmem:[%s5771 + $0x64] sm:$0xf]
        %v5790 = vld [vmem:[%s5771 + $0x6c] sm:$0xf]
        %v5791 = vld [vmem:[%s5771 + $0x70] sm:$0xf]
        %s5792 = scalar_lea.vmem %s3, 192
        %v5793 = vld [vmem:[%s5792] sm:$0xf]
        %v5794 = vld [vmem:[%s5792 + $0x4] sm:$0xf]
        %v5795 = vld [vmem:[%s5792 + $0x8] sm:$0xf]
        %v5796 = vld [vmem:[%s5792 + $0xc] sm:$0xf]
        %v5797 = vld [vmem:[%s5792 + $0x10] sm:$0xf]
        %v5798 = vld [vmem:[%s5792 + $0x14] sm:$0xf]
        %v5799 = vld [vmem:[%s5792 + $0x18] sm:$0xf]
        %v5800 = vld [vmem:[%s5792 + $0x1c] sm:$0xf]
        %v5821 = vunpack.c.l.b16 %v5772
        %v5822 = vunpack.c.l.b16 %v5773
        %v5823 = vunpack.c.l.b16 %v5774
        %v5824 = vunpack.c.l.b16 %v5775
        %v5825 = vunpack.c.l.b16 %v5776
        %v5826 = vunpack.c.l.b16 %v5777
        %v5827 = vunpack.c.l.b16 %v5778
        %v5828 = vunpack.c.l.b16 %v5779
        %v5829 = vunpack.c.l.b16 %v5780
        %v5830 = vunpack.c.l.b16 %v5781
        %v5831 = vunpack.c.l.b16 %v5782
        %v5832 = vunpack.c.l.b16 %v5783
        %v5833 = vunpack.c.l.b16 %v5784
        %v5834 = vunpack.c.l.b16 %v5785
        %v5835 = vunpack.c.l.b16 %v5786
        %v5836 = vunpack.c.l.b16 %v5787
        %v5837 = vunpack.c.l.b16 %v5788
        %v5838 = vunpack.c.l.b16 %v5789
        %v5839 = vunpack.c.l.b16 %v5790
        %v5840 = vunpack.c.l.b16 %v5791
        %v5841 = vpack.c.b16 %v5822, %v5821
        %v5842 = vpack.c.b16 %v5824, %v5823
        %v5843 = vpack.c.b16 %v5826, %v5825
        %v5844 = vpack.c.b16 %v5828, %v5827
        %v5845 = vpack.c.b16 %v5830, %v5829
        %v5846 = vpack.c.b16 %v5832, %v5831
        %v5847 = vpack.c.b16 %v5834, %v5833
        %v5848 = vpack.c.b16 %v5836, %v5835
        %v5849 = vpack.c.b16 %v5838, %v5837
        %v5850 = vpack.c.b16 %v5840, %v5839
        %v5859 = vunpack.c.l.b16 %v5793
        %v5860 = vunpack.c.l.b16 %v5794
        %v5861 = vunpack.c.l.b16 %v5795
        %v5862 = vunpack.c.l.b16 %v5796
        %v5863 = vunpack.c.l.b16 %v5797
        %v5864 = vunpack.c.l.b16 %v5798
        %v5865 = vunpack.c.l.b16 %v5799
        %v5866 = vunpack.c.l.b16 %v5800
        %v5867 = vpack.c.b16 %v5860, %v5859
        %v5868 = vpack.c.b16 %v5862, %v5861
        %v5869 = vpack.c.b16 %v5864, %v5863
        %v5870 = vpack.c.b16 %v5866, %v5865
        %v5876 = vsel %vm4309, %v5841, 0
        %v5879 = vsel %vm4309, %v5842, 0
        %v5882 = vsel %vm4309, %v5843, 0
        %v5885 = vsel %vm4309, %v5844, 0
        %v5888 = vsel %vm4309, %v5845, 0
        %v5891 = vsel %vm4309, %v5846, 0
        %v5894 = vsel %vm4309, %v5847, 0
        %v5897 = vsel %vm4309, %v5848, 0
        %v5900 = vsel %vm4309, %v5849, 0
        %v5903 = vsel %vm4309, %v5850, 0
        %5905 = vmatpush.bf16.msra.mxu0 0
        %5906 = vmatpush.bf16.msra.mxu0 0
        %5907 = vmatpush.bf16.msra.mxu0 0
        %5908 = vmatpush.bf16.msra.mxu0 0
        %5909 = vmatpush.bf16.msra.mxu0 %v5870
        %5910 = vmatpush.bf16.msra.mxu0 %v5869
        %5911 = vmatpush.bf16.msra.mxu0 %v5868
        %5912 = vmatpush.bf16.msra.mxu0 %v5867
        %5913 = vmatmul.bf16.gmra.mxu0 %v5876
        %v5914 = vpop.f32.mrf.mxu0
        %v5915 = vadd.f32 0.0, %v5914
        %v5916 = vpop.f32.mrf.mxu0
        %v5917 = vadd.f32 0.0, %v5916
        %5918 = vmatmul.bf16.gmra.mxu0 %v5879
        %v5919 = vpop.f32.mrf.mxu0
        %v5920 = vadd.f32 0.0, %v5919
        %v5921 = vpop.f32.mrf.mxu0
        %v5922 = vadd.f32 0.0, %v5921
        %5923 = vmatmul.bf16.gmra.mxu0 %v5882
        %v5924 = vpop.f32.mrf.mxu0
        %v5925 = vadd.f32 0.0, %v5924
        %v5926 = vpop.f32.mrf.mxu0
        %v5927 = vadd.f32 0.0, %v5926
        %5928 = vmatmul.bf16.gmra.mxu0 %v5885
        %v5929 = vpop.f32.mrf.mxu0
        %v5930 = vadd.f32 0.0, %v5929
        %v5931 = vpop.f32.mrf.mxu0
        %v5932 = vadd.f32 0.0, %v5931
        %5933 = vmatmul.bf16.gmra.mxu0 %v5888
        %v5934 = vpop.f32.mrf.mxu0
        %v5935 = vadd.f32 0.0, %v5934
        %v5936 = vpop.f32.mrf.mxu0
        %v5937 = vadd.f32 0.0, %v5936
        %5938 = vmatmul.bf16.gmra.mxu0 %v5891
        %v5939 = vpop.f32.mrf.mxu0
        %v5940 = vadd.f32 0.0, %v5939
        %v5941 = vpop.f32.mrf.mxu0
        %v5942 = vadd.f32 0.0, %v5941
        %5943 = vmatmul.bf16.gmra.mxu0 %v5894
        %v5944 = vpop.f32.mrf.mxu0
        %v5945 = vadd.f32 0.0, %v5944
        %v5946 = vpop.f32.mrf.mxu0
        %v5947 = vadd.f32 0.0, %v5946
        %5948 = vmatmul.bf16.gmra.mxu0 %v5897
        %v5949 = vpop.f32.mrf.mxu0
        %v5950 = vadd.f32 0.0, %v5949
        %v5951 = vpop.f32.mrf.mxu0
        %v5952 = vadd.f32 0.0, %v5951
        %5953 = vmatmul.bf16.gmra.mxu0 %v5900
        %v5954 = vpop.f32.mrf.mxu0
        %v5955 = vadd.f32 0.0, %v5954
        %v5956 = vpop.f32.mrf.mxu0
        %v5957 = vadd.f32 0.0, %v5956
        %5958 = vmatmul.bf16.gmra.mxu0 %v5903
        %v5959 = vpop.f32.mrf.mxu0
        %v5960 = vadd.f32 0.0, %v5959
        %v5961 = vpop.f32.mrf.mxu0
        %v5962 = vadd.f32 0.0, %v5961
        %5963 = vdwg.mxu0
        %v5964 = vadd.f32 %v5751, %v5915
        %v5965 = vadd.f32 %v5752, %v5917
        %v5966 = vadd.f32 %v5753, %v5920
        %v5967 = vadd.f32 %v5754, %v5922
        %v5968 = vadd.f32 %v5755, %v5925
        %v5969 = vadd.f32 %v5756, %v5927
        %v5970 = vadd.f32 %v5757, %v5930
        %v5971 = vadd.f32 %v5758, %v5932
        %v5972 = vadd.f32 %v5759, %v5935
        %v5973 = vadd.f32 %v5760, %v5937
        %v5974 = vadd.f32 %v5761, %v5940
        %v5975 = vadd.f32 %v5762, %v5942
        %v5976 = vadd.f32 %v5763, %v5945
        %v5977 = vadd.f32 %v5764, %v5947
        %v5978 = vadd.f32 %v5765, %v5950
        %v5979 = vadd.f32 %v5766, %v5952
        %v5980 = vadd.f32 %v5767, %v5955
        %v5981 = vadd.f32 %v5768, %v5957
        %v5982 = vadd.f32 %v5769, %v5960
        %v5983 = vadd.f32 %v5770, %v5962
        %v5984 = vld [vmem:[%s5771] sm:$0xf]
        %v5985 = vld [vmem:[%s5771 + $0x4] sm:$0xf]
        %v5986 = vld [vmem:[%s5771 + $0x8] sm:$0x1]
        %v5987 = vld [vmem:[%s5771 + $0xc] sm:$0xf]
        %v5988 = vld [vmem:[%s5771 + $0x10] sm:$0xf]
        %v5989 = vld [vmem:[%s5771 + $0x14] sm:$0x1]
        %v5990 = vld [vmem:[%s5771 + $0x18] sm:$0xf]
        %v5991 = vld [vmem:[%s5771 + $0x1c] sm:$0xf]
        %v5992 = vld [vmem:[%s5771 + $0x20] sm:$0x1]
        %v5993 = vld [vmem:[%s5771 + $0x24] sm:$0xf]
        %v5994 = vld [vmem:[%s5771 + $0x28] sm:$0xf]
        %v5995 = vld [vmem:[%s5771 + $0x2c] sm:$0x1]
        %v5996 = vld [vmem:[%s5771 + $0x30] sm:$0xf]
        %v5997 = vld [vmem:[%s5771 + $0x34] sm:$0xf]
        %v5998 = vld [vmem:[%s5771 + $0x38] sm:$0x1]
        %v5999 = vld [vmem:[%s5771 + $0x3c] sm:$0xf]
        %v6000 = vld [vmem:[%s5771 + $0x40] sm:$0xf]
        %v6001 = vld [vmem:[%s5771 + $0x44] sm:$0x1]
        %v6002 = vld [vmem:[%s5771 + $0x48] sm:$0xf]
        %v6003 = vld [vmem:[%s5771 + $0x4c] sm:$0xf]
        %v6004 = vld [vmem:[%s5771 + $0x50] sm:$0x1]
        %v6005 = vld [vmem:[%s5771 + $0x54] sm:$0xf]
        %v6006 = vld [vmem:[%s5771 + $0x58] sm:$0xf]
        %v6007 = vld [vmem:[%s5771 + $0x5c] sm:$0x1]
        %v6008 = vld [vmem:[%s5771 + $0x60] sm:$0xf]
        %v6009 = vld [vmem:[%s5771 + $0x64] sm:$0xf]
        %v6010 = vld [vmem:[%s5771 + $0x68] sm:$0x1]
        %v6011 = vld [vmem:[%s5771 + $0x6c] sm:$0xf]
        %v6012 = vld [vmem:[%s5771 + $0x70] sm:$0xf]
        %v6013 = vld [vmem:[%s5771 + $0x74] sm:$0x1]
        %v6015 = vshrl.u32 %v5984, 16
        %v6017 = vrot.slane %v6015, 4
        %v6018 = vshll.u32 %v5984, 16
        %v6020 = vrot.slane %v6018, 5
        %v6021 = vor.u32 %v6017, %v6020
        %v6022 = vrot.slane %v6021, 4
        %v6024 = vshll.u32 %v5985, 16
        %v6026 = vrot.slane %v6024, 5
        %v6027 = vsel %vm529, %v6022, %v6026
        %v6028 = vshrl.u32 %v5985, 16
        %v6030 = vrot.slane %v6028, 4
        %v6031 = vor.u32 %v6030, %v6026
        %v6032 = vrot.slane %v6031, 4
        %v6034 = vshll.u32 %v5986, 16
        %v6036 = vrot.slane %v6034, 5
        %v6037 = vsel %vm529, %v6032, %v6036
        %v6039 = vshrl.u32 %v5987, 16
        %v6041 = vrot.slane %v6039, 4
        %v6042 = vshll.u32 %v5987, 16
        %v6044 = vrot.slane %v6042, 5
        %v6045 = vor.u32 %v6041, %v6044
        %v6046 = vrot.slane %v6045, 4
        %v6048 = vshll.u32 %v5988, 16
        %v6050 = vrot.slane %v6048, 5
        %v6051 = vsel %vm529, %v6046, %v6050
        %v6052 = vshrl.u32 %v5988, 16
        %v6054 = vrot.slane %v6052, 4
        %v6055 = vor.u32 %v6054, %v6050
        %v6056 = vrot.slane %v6055, 4
        %v6058 = vshll.u32 %v5989, 16
        %v6060 = vrot.slane %v6058, 5
        %v6061 = vsel %vm529, %v6056, %v6060
        %v6063 = vshrl.u32 %v5990, 16
        %v6065 = vrot.slane %v6063, 4
        %v6066 = vshll.u32 %v5990, 16
        %v6068 = vrot.slane %v6066, 5
        %v6069 = vor.u32 %v6065, %v6068
        %v6070 = vrot.slane %v6069, 4
        %v6072 = vshll.u32 %v5991, 16
        %v6074 = vrot.slane %v6072, 5
        %v6075 = vsel %vm529, %v6070, %v6074
        %v6076 = vshrl.u32 %v5991, 16
        %v6078 = vrot.slane %v6076, 4
        %v6079 = vor.u32 %v6078, %v6074
        %v6080 = vrot.slane %v6079, 4
        %v6082 = vshll.u32 %v5992, 16
        %v6084 = vrot.slane %v6082, 5
        %v6085 = vsel %vm529, %v6080, %v6084
        %v6087 = vshrl.u32 %v5993, 16
        %v6089 = vrot.slane %v6087, 4
        %v6090 = vshll.u32 %v5993, 16
        %v6092 = vrot.slane %v6090, 5
        %v6093 = vor.u32 %v6089, %v6092
        %v6094 = vrot.slane %v6093, 4
        %v6096 = vshll.u32 %v5994, 16
        %v6098 = vrot.slane %v6096, 5
        %v6099 = vsel %vm529, %v6094, %v6098
        %v6100 = vshrl.u32 %v5994, 16
        %v6102 = vrot.slane %v6100, 4
        %v6103 = vor.u32 %v6102, %v6098
        %v6104 = vrot.slane %v6103, 4
        %v6106 = vshll.u32 %v5995, 16
        %v6108 = vrot.slane %v6106, 5
        %v6109 = vsel %vm529, %v6104, %v6108
        %v6111 = vshrl.u32 %v5996, 16
        %v6113 = vrot.slane %v6111, 4
        %v6114 = vshll.u32 %v5996, 16
        %v6116 = vrot.slane %v6114, 5
        %v6117 = vor.u32 %v6113, %v6116
        %v6118 = vrot.slane %v6117, 4
        %v6120 = vshll.u32 %v5997, 16
        %v6122 = vrot.slane %v6120, 5
        %v6123 = vsel %vm529, %v6118, %v6122
        %v6124 = vshrl.u32 %v5997, 16
        %v6126 = vrot.slane %v6124, 4
        %v6127 = vor.u32 %v6126, %v6122
        %v6128 = vrot.slane %v6127, 4
        %v6130 = vshll.u32 %v5998, 16
        %v6132 = vrot.slane %v6130, 5
        %v6133 = vsel %vm529, %v6128, %v6132
        %v6135 = vshrl.u32 %v5999, 16
        %v6137 = vrot.slane %v6135, 4
        %v6138 = vshll.u32 %v5999, 16
        %v6140 = vrot.slane %v6138, 5
        %v6141 = vor.u32 %v6137, %v6140
        %v6142 = vrot.slane %v6141, 4
        %v6144 = vshll.u32 %v6000, 16
        %v6146 = vrot.slane %v6144, 5
        %v6147 = vsel %vm529, %v6142, %v6146
        %v6148 = vshrl.u32 %v6000, 16
        %v6150 = vrot.slane %v6148, 4
        %v6151 = vor.u32 %v6150, %v6146
        %v6152 = vrot.slane %v6151, 4
        %v6154 = vshll.u32 %v6001, 16
        %v6156 = vrot.slane %v6154, 5
        %v6157 = vsel %vm529, %v6152, %v6156
        %v6159 = vshrl.u32 %v6002, 16
        %v6161 = vrot.slane %v6159, 4
        %v6162 = vshll.u32 %v6002, 16
        %v6164 = vrot.slane %v6162, 5
        %v6165 = vor.u32 %v6161, %v6164
        %v6166 = vrot.slane %v6165, 4
        %v6168 = vshll.u32 %v6003, 16
        %v6170 = vrot.slane %v6168, 5
        %v6171 = vsel %vm529, %v6166, %v6170
        %v6172 = vshrl.u32 %v6003, 16
        %v6174 = vrot.slane %v6172, 4
        %v6175 = vor.u32 %v6174, %v6170
        %v6176 = vrot.slane %v6175, 4
        %v6178 = vshll.u32 %v6004, 16
        %v6180 = vrot.slane %v6178, 5
        %v6181 = vsel %vm529, %v6176, %v6180
        %v6183 = vshrl.u32 %v6005, 16
        %v6185 = vrot.slane %v6183, 4
        %v6186 = vshll.u32 %v6005, 16
        %v6188 = vrot.slane %v6186, 5
        %v6189 = vor.u32 %v6185, %v6188
        %v6190 = vrot.slane %v6189, 4
        %v6192 = vshll.u32 %v6006, 16
        %v6194 = vrot.slane %v6192, 5
        %v6195 = vsel %vm529, %v6190, %v6194
        %v6196 = vshrl.u32 %v6006, 16
        %v6198 = vrot.slane %v6196, 4
        %v6199 = vor.u32 %v6198, %v6194
        %v6200 = vrot.slane %v6199, 4
        %v6202 = vshll.u32 %v6007, 16
        %v6204 = vrot.slane %v6202, 5
        %v6205 = vsel %vm529, %v6200, %v6204
        %v6207 = vshrl.u32 %v6008, 16
        %v6209 = vrot.slane %v6207, 4
        %v6210 = vshll.u32 %v6008, 16
        %v6212 = vrot.slane %v6210, 5
        %v6213 = vor.u32 %v6209, %v6212
        %v6214 = vrot.slane %v6213, 4
        %v6216 = vshll.u32 %v6009, 16
        %v6218 = vrot.slane %v6216, 5
        %v6219 = vsel %vm529, %v6214, %v6218
        %v6220 = vshrl.u32 %v6009, 16
        %v6222 = vrot.slane %v6220, 4
        %v6223 = vor.u32 %v6222, %v6218
        %v6224 = vrot.slane %v6223, 4
        %v6226 = vshll.u32 %v6010, 16
        %v6228 = vrot.slane %v6226, 5
        %v6229 = vsel %vm529, %v6224, %v6228
        %v6231 = vshrl.u32 %v6011, 16
        %v6233 = vrot.slane %v6231, 4
        %v6234 = vshll.u32 %v6011, 16
        %v6236 = vrot.slane %v6234, 5
        %v6237 = vor.u32 %v6233, %v6236
        %v6238 = vrot.slane %v6237, 4
        %v6240 = vshll.u32 %v6012, 16
        %v6242 = vrot.slane %v6240, 5
        %v6243 = vsel %vm529, %v6238, %v6242
        %v6244 = vshrl.u32 %v6012, 16
        %v6246 = vrot.slane %v6244, 4
        %v6247 = vor.u32 %v6246, %v6242
        %v6248 = vrot.slane %v6247, 4
        %v6250 = vshll.u32 %v6013, 16
        %v6252 = vrot.slane %v6250, 5
        %v6253 = vsel %vm529, %v6248, %v6252
        %s6254 = scalar_lea.vmem %s3, 224
        %v6255 = vld [vmem:[%s6254] sm:$0xf]
        %v6256 = vld [vmem:[%s6254 + $0x4] sm:$0xf]
        %v6257 = vld [vmem:[%s6254 + $0x8] sm:$0xf]
        %v6258 = vld [vmem:[%s6254 + $0xc] sm:$0xf]
        %v6259 = vld [vmem:[%s6254 + $0x10] sm:$0xf]
        %v6260 = vld [vmem:[%s6254 + $0x14] sm:$0xf]
        %v6261 = vld [vmem:[%s6254 + $0x18] sm:$0xf]
        %v6262 = vld [vmem:[%s6254 + $0x1c] sm:$0xf]
        %v6263 = vunpack.c.l.b16 %v6027
        %v6264 = vunpack.c.l.b16 %v6037
        %v6265 = vunpack.c.l.b16 %v6051
        %v6266 = vunpack.c.l.b16 %v6061
        %v6267 = vunpack.c.l.b16 %v6075
        %v6268 = vunpack.c.l.b16 %v6085
        %v6269 = vunpack.c.l.b16 %v6099
        %v6270 = vunpack.c.l.b16 %v6109
        %v6271 = vunpack.c.l.b16 %v6123
        %v6272 = vunpack.c.l.b16 %v6133
        %v6273 = vunpack.c.l.b16 %v6147
        %v6274 = vunpack.c.l.b16 %v6157
        %v6275 = vunpack.c.l.b16 %v6171
        %v6276 = vunpack.c.l.b16 %v6181
        %v6277 = vunpack.c.l.b16 %v6195
        %v6278 = vunpack.c.l.b16 %v6205
        %v6279 = vunpack.c.l.b16 %v6219
        %v6280 = vunpack.c.l.b16 %v6229
        %v6281 = vunpack.c.l.b16 %v6243
        %v6282 = vunpack.c.l.b16 %v6253
        %v6283 = vpack.c.b16 %v6264, %v6263
        %v6284 = vpack.c.b16 %v6266, %v6265
        %v6285 = vpack.c.b16 %v6268, %v6267
        %v6286 = vpack.c.b16 %v6270, %v6269
        %v6287 = vpack.c.b16 %v6272, %v6271
        %v6288 = vpack.c.b16 %v6274, %v6273
        %v6289 = vpack.c.b16 %v6276, %v6275
        %v6290 = vpack.c.b16 %v6278, %v6277
        %v6291 = vpack.c.b16 %v6280, %v6279
        %v6292 = vpack.c.b16 %v6282, %v6281
        %v6301 = vunpack.c.l.b16 %v6255
        %v6302 = vunpack.c.l.b16 %v6256
        %v6303 = vunpack.c.l.b16 %v6257
        %v6304 = vunpack.c.l.b16 %v6258
        %v6305 = vunpack.c.l.b16 %v6259
        %v6306 = vunpack.c.l.b16 %v6260
        %v6307 = vunpack.c.l.b16 %v6261
        %v6308 = vunpack.c.l.b16 %v6262
        %v6309 = vpack.c.b16 %v6302, %v6301
        %v6310 = vpack.c.b16 %v6304, %v6303
        %v6311 = vpack.c.b16 %v6306, %v6305
        %v6312 = vpack.c.b16 %v6308, %v6307
        %v6318 = vsel %vm4309, %v6283, 0
        %v6321 = vsel %vm4309, %v6284, 0
        %v6324 = vsel %vm4309, %v6285, 0
        %v6327 = vsel %vm4309, %v6286, 0
        %v6330 = vsel %vm4309, %v6287, 0
        %v6333 = vsel %vm4309, %v6288, 0
        %v6336 = vsel %vm4309, %v6289, 0
        %v6339 = vsel %vm4309, %v6290, 0
        %v6342 = vsel %vm4309, %v6291, 0
        %v6345 = vsel %vm4309, %v6292, 0
        %6347 = vmatpush.bf16.msra.mxu0 0
        %6348 = vmatpush.bf16.msra.mxu0 0
        %6349 = vmatpush.bf16.msra.mxu0 0
        %6350 = vmatpush.bf16.msra.mxu0 0
        %6351 = vmatpush.bf16.msra.mxu0 %v6312
        %6352 = vmatpush.bf16.msra.mxu0 %v6311
        %6353 = vmatpush.bf16.msra.mxu0 %v6310
        %6354 = vmatpush.bf16.msra.mxu0 %v6309
        %6355 = vmatmul.bf16.gmra.mxu0 %v6318
        %v6356 = vpop.f32.mrf.mxu0
        %v6357 = vadd.f32 0.0, %v6356
        %v6358 = vpop.f32.mrf.mxu0
        %v6359 = vadd.f32 0.0, %v6358
        %6360 = vmatmul.bf16.gmra.mxu0 %v6321
        %v6361 = vpop.f32.mrf.mxu0
        %v6362 = vadd.f32 0.0, %v6361
        %v6363 = vpop.f32.mrf.mxu0
        %v6364 = vadd.f32 0.0, %v6363
        %6365 = vmatmul.bf16.gmra.mxu0 %v6324
        %v6366 = vpop.f32.mrf.mxu0
        %v6367 = vadd.f32 0.0, %v6366
        %v6368 = vpop.f32.mrf.mxu0
        %v6369 = vadd.f32 0.0, %v6368
        %6370 = vmatmul.bf16.gmra.mxu0 %v6327
        %v6371 = vpop.f32.mrf.mxu0
        %v6372 = vadd.f32 0.0, %v6371
        %v6373 = vpop.f32.mrf.mxu0
        %v6374 = vadd.f32 0.0, %v6373
        %6375 = vmatmul.bf16.gmra.mxu0 %v6330
        %v6376 = vpop.f32.mrf.mxu0
        %v6377 = vadd.f32 0.0, %v6376
        %v6378 = vpop.f32.mrf.mxu0
        %v6379 = vadd.f32 0.0, %v6378
        %6380 = vmatmul.bf16.gmra.mxu0 %v6333
        %v6381 = vpop.f32.mrf.mxu0
        %v6382 = vadd.f32 0.0, %v6381
        %v6383 = vpop.f32.mrf.mxu0
        %v6384 = vadd.f32 0.0, %v6383
        %6385 = vmatmul.bf16.gmra.mxu0 %v6336
        %v6386 = vpop.f32.mrf.mxu0
        %v6387 = vadd.f32 0.0, %v6386
        %v6388 = vpop.f32.mrf.mxu0
        %v6389 = vadd.f32 0.0, %v6388
        %6390 = vmatmul.bf16.gmra.mxu0 %v6339
        %v6391 = vpop.f32.mrf.mxu0
        %v6392 = vadd.f32 0.0, %v6391
        %v6393 = vpop.f32.mrf.mxu0
        %v6394 = vadd.f32 0.0, %v6393
        %6395 = vmatmul.bf16.gmra.mxu0 %v6342
        %v6396 = vpop.f32.mrf.mxu0
        %v6397 = vadd.f32 0.0, %v6396
        %v6398 = vpop.f32.mrf.mxu0
        %v6399 = vadd.f32 0.0, %v6398
        %6400 = vmatmul.bf16.gmra.mxu0 %v6345
        %v6401 = vpop.f32.mrf.mxu0
        %v6402 = vadd.f32 0.0, %v6401
        %v6403 = vpop.f32.mrf.mxu0
        %v6404 = vadd.f32 0.0, %v6403
        %6405 = vdwg.mxu0
        %v6406 = vadd.f32 %v5964, %v6357
        %v6407 = vadd.f32 %v5965, %v6359
        %v6408 = vadd.f32 %v5966, %v6362
        %v6409 = vadd.f32 %v5967, %v6364
        %v6410 = vadd.f32 %v5968, %v6367
        %v6411 = vadd.f32 %v5969, %v6369
        %v6412 = vadd.f32 %v5970, %v6372
        %v6413 = vadd.f32 %v5971, %v6374
        %v6414 = vadd.f32 %v5972, %v6377
        %v6415 = vadd.f32 %v5973, %v6379
        %v6416 = vadd.f32 %v5974, %v6382
        %v6417 = vadd.f32 %v5975, %v6384
        %v6418 = vadd.f32 %v5976, %v6387
        %v6419 = vadd.f32 %v5977, %v6389
        %v6420 = vadd.f32 %v5978, %v6392
        %v6421 = vadd.f32 %v5979, %v6394
        %v6422 = vadd.f32 %v5980, %v6397
        %v6423 = vadd.f32 %v5981, %v6399
        %v6424 = vadd.f32 %v5982, %v6402
        %v6425 = vadd.f32 %v5983, %v6404
        %v6426 = vld [vmem:[%s5771] sm:$0xe]
        %v6427 = vld [vmem:[%s5771 + $0xc] sm:$0xe]
        %v6428 = vld [vmem:[%s5771 + $0x18] sm:$0xe]
        %v6429 = vld [vmem:[%s5771 + $0x24] sm:$0xe]
        %v6430 = vld [vmem:[%s5771 + $0x30] sm:$0xe]
        %v6431 = vld [vmem:[%s5771 + $0x3c] sm:$0xe]
        %v6432 = vld [vmem:[%s5771 + $0x48] sm:$0xe]
        %v6433 = vld [vmem:[%s5771 + $0x54] sm:$0xe]
        %v6434 = vld [vmem:[%s5771 + $0x60] sm:$0xe]
        %v6435 = vld [vmem:[%s5771 + $0x6c] sm:$0xe]
        %v6466 = vrot.slane %v6426, 5
        %v6467 = vrot.slane %v6466, 4
        %v6468 = vrot.slane %v5985, 5
        %v6469 = vsel %vm1175, %v6467, %v6468
        %v6470 = vrot.slane %v6468, 4
        %v6471 = vrot.slane %v5986, 5
        %v6472 = vsel %vm1175, %v6470, %v6471
        %v6473 = vrot.slane %v6427, 5
        %v6474 = vrot.slane %v6473, 4
        %v6475 = vrot.slane %v5988, 5
        %v6476 = vsel %vm1175, %v6474, %v6475
        %v6477 = vrot.slane %v6475, 4
        %v6478 = vrot.slane %v5989, 5
        %v6479 = vsel %vm1175, %v6477, %v6478
        %v6480 = vrot.slane %v6428, 5
        %v6481 = vrot.slane %v6480, 4
        %v6482 = vrot.slane %v5991, 5
        %v6483 = vsel %vm1175, %v6481, %v6482
        %v6484 = vrot.slane %v6482, 4
        %v6485 = vrot.slane %v5992, 5
        %v6486 = vsel %vm1175, %v6484, %v6485
        %v6487 = vrot.slane %v6429, 5
        %v6488 = vrot.slane %v6487, 4
        %v6489 = vrot.slane %v5994, 5
        %v6490 = vsel %vm1175, %v6488, %v6489
        %v6491 = vrot.slane %v6489, 4
        %v6492 = vrot.slane %v5995, 5
        %v6493 = vsel %vm1175, %v6491, %v6492
        %v6494 = vrot.slane %v6430, 5
        %v6495 = vrot.slane %v6494, 4
        %v6496 = vrot.slane %v5997, 5
        %v6497 = vsel %vm1175, %v6495, %v6496
        %v6498 = vrot.slane %v6496, 4
        %v6499 = vrot.slane %v5998, 5
        %v6500 = vsel %vm1175, %v6498, %v6499
        %v6501 = vrot.slane %v6431, 5
        %v6502 = vrot.slane %v6501, 4
        %v6503 = vrot.slane %v6000, 5
        %v6504 = vsel %vm1175, %v6502, %v6503
        %v6505 = vrot.slane %v6503, 4
        %v6506 = vrot.slane %v6001, 5
        %v6507 = vsel %vm1175, %v6505, %v6506
        %v6508 = vrot.slane %v6432, 5
        %v6509 = vrot.slane %v6508, 4
        %v6510 = vrot.slane %v6003, 5
        %v6511 = vsel %vm1175, %v6509, %v6510
        %v6512 = vrot.slane %v6510, 4
        %v6513 = vrot.slane %v6004, 5
        %v6514 = vsel %vm1175, %v6512, %v6513
        %v6515 = vrot.slane %v6433, 5
        %v6516 = vrot.slane %v6515, 4
        %v6517 = vrot.slane %v6006, 5
        %v6518 = vsel %vm1175, %v6516, %v6517
        %v6519 = vrot.slane %v6517, 4
        %v6520 = vrot.slane %v6007, 5
        %v6521 = vsel %vm1175, %v6519, %v6520
        %v6522 = vrot.slane %v6434, 5
        %v6523 = vrot.slane %v6522, 4
        %v6524 = vrot.slane %v6009, 5
        %v6525 = vsel %vm1175, %v6523, %v6524
        %v6526 = vrot.slane %v6524, 4
        %v6527 = vrot.slane %v6010, 5
        %v6528 = vsel %vm1175, %v6526, %v6527
        %v6529 = vrot.slane %v6435, 5
        %v6530 = vrot.slane %v6529, 4
        %v6531 = vrot.slane %v6012, 5
        %v6532 = vsel %vm1175, %v6530, %v6531
        %v6533 = vrot.slane %v6531, 4
        %v6534 = vrot.slane %v6013, 5
        %v6535 = vsel %vm1175, %v6533, %v6534
        %s6536 = scalar_lea.vmem %s3, 256
        %v6537 = vld [vmem:[%s6536] sm:$0xf]
        %v6538 = vld [vmem:[%s6536 + $0x4] sm:$0xf]
        %v6539 = vld [vmem:[%s6536 + $0x8] sm:$0xf]
        %v6540 = vld [vmem:[%s6536 + $0xc] sm:$0xf]
        %v6541 = vld [vmem:[%s6536 + $0x10] sm:$0xf]
        %v6542 = vld [vmem:[%s6536 + $0x14] sm:$0xf]
        %v6543 = vld [vmem:[%s6536 + $0x18] sm:$0xf]
        %v6544 = vld [vmem:[%s6536 + $0x1c] sm:$0xf]
        %v6545 = vunpack.c.l.b16 %v6469
        %v6546 = vunpack.c.l.b16 %v6472
        %v6547 = vunpack.c.l.b16 %v6476
        %v6548 = vunpack.c.l.b16 %v6479
        %v6549 = vunpack.c.l.b16 %v6483
        %v6550 = vunpack.c.l.b16 %v6486
        %v6551 = vunpack.c.l.b16 %v6490
        %v6552 = vunpack.c.l.b16 %v6493
        %v6553 = vunpack.c.l.b16 %v6497
        %v6554 = vunpack.c.l.b16 %v6500
        %v6555 = vunpack.c.l.b16 %v6504
        %v6556 = vunpack.c.l.b16 %v6507
        %v6557 = vunpack.c.l.b16 %v6511
        %v6558 = vunpack.c.l.b16 %v6514
        %v6559 = vunpack.c.l.b16 %v6518
        %v6560 = vunpack.c.l.b16 %v6521
        %v6561 = vunpack.c.l.b16 %v6525
        %v6562 = vunpack.c.l.b16 %v6528
        %v6563 = vunpack.c.l.b16 %v6532
        %v6564 = vunpack.c.l.b16 %v6535
        %v6565 = vpack.c.b16 %v6546, %v6545
        %v6566 = vpack.c.b16 %v6548, %v6547
        %v6567 = vpack.c.b16 %v6550, %v6549
        %v6568 = vpack.c.b16 %v6552, %v6551
        %v6569 = vpack.c.b16 %v6554, %v6553
        %v6570 = vpack.c.b16 %v6556, %v6555
        %v6571 = vpack.c.b16 %v6558, %v6557
        %v6572 = vpack.c.b16 %v6560, %v6559
        %v6573 = vpack.c.b16 %v6562, %v6561
        %v6574 = vpack.c.b16 %v6564, %v6563
        %v6583 = vunpack.c.l.b16 %v6537
        %v6584 = vunpack.c.l.b16 %v6538
        %v6585 = vunpack.c.l.b16 %v6539
        %v6586 = vunpack.c.l.b16 %v6540
        %v6587 = vunpack.c.l.b16 %v6541
        %v6588 = vunpack.c.l.b16 %v6542
        %v6589 = vunpack.c.l.b16 %v6543
        %v6590 = vunpack.c.l.b16 %v6544
        %v6591 = vpack.c.b16 %v6584, %v6583
        %v6592 = vpack.c.b16 %v6586, %v6585
        %v6593 = vpack.c.b16 %v6588, %v6587
        %v6594 = vpack.c.b16 %v6590, %v6589
        %v6600 = vsel %vm4309, %v6565, 0
        %v6603 = vsel %vm4309, %v6566, 0
        %v6606 = vsel %vm4309, %v6567, 0
        %v6609 = vsel %vm4309, %v6568, 0
        %v6612 = vsel %vm4309, %v6569, 0
        %v6615 = vsel %vm4309, %v6570, 0
        %v6618 = vsel %vm4309, %v6571, 0
        %v6621 = vsel %vm4309, %v6572, 0
        %v6624 = vsel %vm4309, %v6573, 0
        %v6627 = vsel %vm4309, %v6574, 0
        %6629 = vmatpush.bf16.msra.mxu0 0
        %6630 = vmatpush.bf16.msra.mxu0 0
        %6631 = vmatpush.bf16.msra.mxu0 0
        %6632 = vmatpush.bf16.msra.mxu0 0
        %6633 = vmatpush.bf16.msra.mxu0 %v6594
        %6634 = vmatpush.bf16.msra.mxu0 %v6593
        %6635 = vmatpush.bf16.msra.mxu0 %v6592
        %6636 = vmatpush.bf16.msra.mxu0 %v6591
        %6637 = vmatmul.bf16.gmra.mxu0 %v6600
        %v6638 = vpop.f32.mrf.mxu0
        %v6639 = vadd.f32 0.0, %v6638
        %v6640 = vpop.f32.mrf.mxu0
        %v6641 = vadd.f32 0.0, %v6640
        %6642 = vmatmul.bf16.gmra.mxu0 %v6603
        %v6643 = vpop.f32.mrf.mxu0
        %v6644 = vadd.f32 0.0, %v6643
        %v6645 = vpop.f32.mrf.mxu0
        %v6646 = vadd.f32 0.0, %v6645
        %6647 = vmatmul.bf16.gmra.mxu0 %v6606
        %v6648 = vpop.f32.mrf.mxu0
        %v6649 = vadd.f32 0.0, %v6648
        %v6650 = vpop.f32.mrf.mxu0
        %v6651 = vadd.f32 0.0, %v6650
        %6652 = vmatmul.bf16.gmra.mxu0 %v6609
        %v6653 = vpop.f32.mrf.mxu0
        %v6654 = vadd.f32 0.0, %v6653
        %v6655 = vpop.f32.mrf.mxu0
        %v6656 = vadd.f32 0.0, %v6655
        %6657 = vmatmul.bf16.gmra.mxu0 %v6612
        %v6658 = vpop.f32.mrf.mxu0
        %v6659 = vadd.f32 0.0, %v6658
        %v6660 = vpop.f32.mrf.mxu0
        %v6661 = vadd.f32 0.0, %v6660
        %6662 = vmatmul.bf16.gmra.mxu0 %v6615
        %v6663 = vpop.f32.mrf.mxu0
        %v6664 = vadd.f32 0.0, %v6663
        %v6665 = vpop.f32.mrf.mxu0
        %v6666 = vadd.f32 0.0, %v6665
        %6667 = vmatmul.bf16.gmra.mxu0 %v6618
        %v6668 = vpop.f32.mrf.mxu0
        %v6669 = vadd.f32 0.0, %v6668
        %v6670 = vpop.f32.mrf.mxu0
        %v6671 = vadd.f32 0.0, %v6670
        %6672 = vmatmul.bf16.gmra.mxu0 %v6621
        %v6673 = vpop.f32.mrf.mxu0
        %v6674 = vadd.f32 0.0, %v6673
        %v6675 = vpop.f32.mrf.mxu0
        %v6676 = vadd.f32 0.0, %v6675
        %6677 = vmatmul.bf16.gmra.mxu0 %v6624
        %v6678 = vpop.f32.mrf.mxu0
        %v6679 = vadd.f32 0.0, %v6678
        %v6680 = vpop.f32.mrf.mxu0
        %v6681 = vadd.f32 0.0, %v6680
        %6682 = vmatmul.bf16.gmra.mxu0 %v6627
        %v6683 = vpop.f32.mrf.mxu0
        %v6684 = vadd.f32 0.0, %v6683
        %v6685 = vpop.f32.mrf.mxu0
        %v6686 = vadd.f32 0.0, %v6685
        %6687 = vdwg.mxu0
        %v6688 = vadd.f32 %v6406, %v6639
        %v6689 = vadd.f32 %v6407, %v6641
        %v6690 = vadd.f32 %v6408, %v6644
        %v6691 = vadd.f32 %v6409, %v6646
        %v6692 = vadd.f32 %v6410, %v6649
        %v6693 = vadd.f32 %v6411, %v6651
        %v6694 = vadd.f32 %v6412, %v6654
        %v6695 = vadd.f32 %v6413, %v6656
        %v6696 = vadd.f32 %v6414, %v6659
        %v6697 = vadd.f32 %v6415, %v6661
        %v6698 = vadd.f32 %v6416, %v6664
        %v6699 = vadd.f32 %v6417, %v6666
        %v6700 = vadd.f32 %v6418, %v6669
        %v6701 = vadd.f32 %v6419, %v6671
        %v6702 = vadd.f32 %v6420, %v6674
        %v6703 = vadd.f32 %v6421, %v6676
        %v6704 = vadd.f32 %v6422, %v6679
        %v6705 = vadd.f32 %v6423, %v6681
        %v6706 = vadd.f32 %v6424, %v6684
        %v6707 = vadd.f32 %v6425, %v6686
        %v6708 = vld [vmem:[#allocation6] sm:$0x1]
        %v6710 = vperm.slane %v6708, 0
        %v6712 = vadd.f32 %v6688, %v6710
        %v6713 = vadd.f32 %v6689, %v6710
        %v6714 = vadd.f32 %v6690, %v6710
        %v6715 = vadd.f32 %v6691, %v6710
        %v6716 = vadd.f32 %v6692, %v6710
        %v6717 = vadd.f32 %v6693, %v6710
        %v6718 = vadd.f32 %v6694, %v6710
        %v6719 = vadd.f32 %v6695, %v6710
        %v6720 = vadd.f32 %v6696, %v6710
        %v6721 = vadd.f32 %v6697, %v6710
        %v6722 = vadd.f32 %v6698, %v6710
        %v6723 = vadd.f32 %v6699, %v6710
        %v6724 = vadd.f32 %v6700, %v6710
        %v6725 = vadd.f32 %v6701, %v6710
        %v6726 = vadd.f32 %v6702, %v6710
        %v6727 = vadd.f32 %v6703, %v6710
        %v6728 = vadd.f32 %v6704, %v6710
        %v6729 = vadd.f32 %v6705, %v6710
        %v6730 = vadd.f32 %v6706, %v6710
        %v6731 = vadd.f32 %v6707, %v6710
        %v6732 = vmax.f32 %v6712, 0.0
        %v6733 = vmax.f32 %v6713, 0.0
        %v6734 = vmax.f32 %v6714, 0.0
        %v6735 = vmax.f32 %v6715, 0.0
        %v6736 = vmax.f32 %v6716, 0.0
        %v6737 = vmax.f32 %v6717, 0.0
        %v6738 = vmax.f32 %v6718, 0.0
        %v6739 = vmax.f32 %v6719, 0.0
        %v6740 = vmax.f32 %v6720, 0.0
        %v6741 = vmax.f32 %v6721, 0.0
        %v6742 = vmax.f32 %v6722, 0.0
        %v6743 = vmax.f32 %v6723, 0.0
        %v6744 = vmax.f32 %v6724, 0.0
        %v6745 = vmax.f32 %v6725, 0.0
        %v6746 = vmax.f32 %v6726, 0.0
        %v6747 = vmax.f32 %v6727, 0.0
        %v6748 = vmax.f32 %v6728, 0.0
        %v6749 = vmax.f32 %v6729, 0.0
        %v6750 = vmax.f32 %v6730, 0.0
        %v6751 = vmax.f32 %v6731, 0.0
        %s6752 = ssub.s32 %s349, 1
        %v6753 = vstv %s6752
        %v6754 = vadd.s32 %v6753, 1
        %v6755 = vadd.s32 %v6753, 2
        %v6756 = vadd.s32 %v6753, 3
        %v6757 = vadd.s32 %v6753, 4
        %v6758 = vadd.s32 %v6753, 5
        %v6759 = vadd.s32 %v6753, 6
        %v6760 = vadd.s32 %v6753, 7
        %v6761 = vadd.s32 %v6753, 8
        %v6762 = vadd.s32 %v6753, 9
        %vm6763 = vcmp.ge.s32.totalorder %v6753, 0
        %vm6764 = vcmp.ge.s32.totalorder %v6754, 0
        %vm6765 = vcmp.ge.s32.totalorder %v6755, 0
        %vm6766 = vcmp.ge.s32.totalorder %v6756, 0
        %vm6767 = vcmp.ge.s32.totalorder %v6757, 0
        %vm6768 = vcmp.ge.s32.totalorder %v6758, 0
        %vm6769 = vcmp.ge.s32.totalorder %v6759, 0
        %vm6770 = vcmp.ge.s32.totalorder %v6760, 0
        %vm6771 = vcmp.ge.s32.totalorder %v6761, 0
        %vm6772 = vcmp.ge.s32.totalorder %v6762, 0
        %vm6773 = vcmp.lt.s32.totalorder %v6753, 16
        %vm6774 = vcmp.lt.s32.totalorder %v6754, 16
        %vm6775 = vcmp.lt.s32.totalorder %v6755, 16
        %vm6776 = vcmp.lt.s32.totalorder %v6756, 16
        %vm6777 = vcmp.lt.s32.totalorder %v6757, 16
        %vm6778 = vcmp.lt.s32.totalorder %v6758, 16
        %vm6779 = vcmp.lt.s32.totalorder %v6759, 16
        %vm6780 = vcmp.lt.s32.totalorder %v6760, 16
        %vm6781 = vcmp.lt.s32.totalorder %v6761, 16
        %vm6782 = vcmp.lt.s32.totalorder %v6762, 16
        %vm6783 = vmand %vm6763, %vm6773
        %vm6784 = vmand %vm6764, %vm6774
        %vm6785 = vmand %vm6765, %vm6775
        %vm6786 = vmand %vm6766, %vm6776
        %vm6787 = vmand %vm6767, %vm6777
        %vm6788 = vmand %vm6768, %vm6778
        %vm6789 = vmand %vm6769, %vm6779
        %vm6790 = vmand %vm6770, %vm6780
        %vm6791 = vmand %vm6771, %vm6781
        %vm6792 = vmand %vm6772, %vm6782
        %v6793 = vsel %vm6783, 1, 0
        %v6794 = vsel %vm6784, 1, 0
        %v6795 = vsel %vm6785, 1, 0
        %v6796 = vsel %vm6786, 1, 0
        %v6797 = vsel %vm6787, 1, 0
        %v6798 = vsel %vm6788, 1, 0
        %v6799 = vsel %vm6789, 1, 0
        %v6800 = vsel %vm6790, 1, 0
        %v6801 = vsel %vm6791, 1, 0
        %v6802 = vsel %vm6792, 1, 0
        %vm6803 = vcmp.eq.s32.totalorder %v6793, 1
        %vm6804 = vcmp.eq.s32.totalorder %v6794, 1
        %vm6805 = vcmp.eq.s32.totalorder %v6795, 1
        %vm6806 = vcmp.eq.s32.totalorder %v6796, 1
        %vm6807 = vcmp.eq.s32.totalorder %v6797, 1
        %vm6808 = vcmp.eq.s32.totalorder %v6798, 1
        %vm6809 = vcmp.eq.s32.totalorder %v6799, 1
        %vm6810 = vcmp.eq.s32.totalorder %v6800, 1
        %vm6811 = vcmp.eq.s32.totalorder %v6801, 1
        %vm6812 = vcmp.eq.s32.totalorder %v6802, 1
        %v6813 = vsel %vm6803, %v6732, 0.0
        %v6814 = vsel %vm6803, %v6733, 0.0
        %v6815 = vsel %vm6804, %v6734, 0.0
        %v6816 = vsel %vm6804, %v6735, 0.0
        %v6817 = vsel %vm6805, %v6736, 0.0
        %v6818 = vsel %vm6805, %v6737, 0.0
        %v6819 = vsel %vm6806, %v6738, 0.0
        %v6820 = vsel %vm6806, %v6739, 0.0
        %v6821 = vsel %vm6807, %v6740, 0.0
        %v6822 = vsel %vm6807, %v6741, 0.0
        %v6823 = vsel %vm6808, %v6742, 0.0
        %v6824 = vsel %vm6808, %v6743, 0.0
        %v6825 = vsel %vm6809, %v6744, 0.0
        %v6826 = vsel %vm6809, %v6745, 0.0
        %v6827 = vsel %vm6810, %v6746, 0.0
        %v6828 = vsel %vm6810, %v6747, 0.0
        %v6829 = vsel %vm6811, %v6748, 0.0
        %v6830 = vsel %vm6811, %v6749, 0.0
        %v6831 = vsel %vm6812, %v6750, 0.0
        %v6832 = vsel %vm6812, %v6751, 0.0
        %v6833 = vpack.c.bf16 %v6813, %v6813
        %v6834 = vpack.c.bf16 %v6814, %v6814
        %v6835 = vpack.c.bf16 %v6815, %v6815
        %v6836 = vpack.c.bf16 %v6816, %v6816
        %v6837 = vpack.c.bf16 %v6817, %v6817
        %v6838 = vpack.c.bf16 %v6818, %v6818
        %v6839 = vpack.c.bf16 %v6819, %v6819
        %v6840 = vpack.c.bf16 %v6820, %v6820
        %v6841 = vpack.c.bf16 %v6821, %v6821
        %v6842 = vpack.c.bf16 %v6822, %v6822
        %v6843 = vpack.c.bf16 %v6823, %v6823
        %v6844 = vpack.c.bf16 %v6824, %v6824
        %v6845 = vpack.c.bf16 %v6825, %v6825
        %v6846 = vpack.c.bf16 %v6826, %v6826
        %v6847 = vpack.c.bf16 %v6827, %v6827
        %v6848 = vpack.c.bf16 %v6828, %v6828
        %v6849 = vpack.c.bf16 %v6829, %v6829
        %v6850 = vpack.c.bf16 %v6830, %v6830
        %v6851 = vpack.c.bf16 %v6831, %v6831
        %v6852 = vpack.c.bf16 %v6832, %v6832
        %v6854 = vshrl.u32 %v6833, 16
        %v6856 = vrot.slane %v6854, 7
        %v6857 = vshll.u32 %v6833, 16
        %v6859 = vor.u32 %v6856, %v6857
        %v6860 = vrot.slane %v6856, 4
        %v6862 = vshrl.u32 %v6834, 16
        %v6864 = vrot.slane %v6862, 7
        %v6865 = vshll.u32 %v6834, 16
        %v6867 = vor.u32 %v6864, %v6865
        %v6868 = vsel %vm3640, %v6860, %v6867
        %v6869 = vrot.slane %v6864, 4
        %v6871 = vshrl.u32 %v6835, 16
        %v6873 = vrot.slane %v6871, 7
        %v6874 = vshll.u32 %v6835, 16
        %v6876 = vor.u32 %v6873, %v6874
        %v6877 = vrot.slane %v6873, 4
        %v6879 = vshrl.u32 %v6836, 16
        %v6881 = vrot.slane %v6879, 7
        %v6882 = vshll.u32 %v6836, 16
        %v6884 = vor.u32 %v6881, %v6882
        %v6885 = vsel %vm3640, %v6877, %v6884
        %v6886 = vrot.slane %v6881, 4
        %v6888 = vshrl.u32 %v6837, 16
        %v6890 = vrot.slane %v6888, 7
        %v6891 = vshll.u32 %v6837, 16
        %v6893 = vor.u32 %v6890, %v6891
        %v6894 = vrot.slane %v6890, 4
        %v6896 = vshrl.u32 %v6838, 16
        %v6898 = vrot.slane %v6896, 7
        %v6899 = vshll.u32 %v6838, 16
        %v6901 = vor.u32 %v6898, %v6899
        %v6902 = vsel %vm3640, %v6894, %v6901
        %v6903 = vrot.slane %v6898, 4
        %v6905 = vshrl.u32 %v6839, 16
        %v6907 = vrot.slane %v6905, 7
        %v6908 = vshll.u32 %v6839, 16
        %v6910 = vor.u32 %v6907, %v6908
        %v6911 = vrot.slane %v6907, 4
        %v6913 = vshrl.u32 %v6840, 16
        %v6915 = vrot.slane %v6913, 7
        %v6916 = vshll.u32 %v6840, 16
        %v6918 = vor.u32 %v6915, %v6916
        %v6919 = vsel %vm3640, %v6911, %v6918
        %v6920 = vrot.slane %v6915, 4
        %v6922 = vshrl.u32 %v6841, 16
        %v6924 = vrot.slane %v6922, 7
        %v6925 = vshll.u32 %v6841, 16
        %v6927 = vor.u32 %v6924, %v6925
        %v6928 = vrot.slane %v6924, 4
        %v6930 = vshrl.u32 %v6842, 16
        %v6932 = vrot.slane %v6930, 7
        %v6933 = vshll.u32 %v6842, 16
        %v6935 = vor.u32 %v6932, %v6933
        %v6936 = vsel %vm3640, %v6928, %v6935
        %v6937 = vrot.slane %v6932, 4
        %v6939 = vshrl.u32 %v6843, 16
        %v6941 = vrot.slane %v6939, 7
        %v6942 = vshll.u32 %v6843, 16
        %v6944 = vor.u32 %v6941, %v6942
        %v6945 = vrot.slane %v6941, 4
        %v6947 = vshrl.u32 %v6844, 16
        %v6949 = vrot.slane %v6947, 7
        %v6950 = vshll.u32 %v6844, 16
        %v6952 = vor.u32 %v6949, %v6950
        %v6953 = vsel %vm3640, %v6945, %v6952
        %v6954 = vrot.slane %v6949, 4
        %v6956 = vshrl.u32 %v6845, 16
        %v6958 = vrot.slane %v6956, 7
        %v6959 = vshll.u32 %v6845, 16
        %v6961 = vor.u32 %v6958, %v6959
        %v6962 = vrot.slane %v6958, 4
        %v6964 = vshrl.u32 %v6846, 16
        %v6966 = vrot.slane %v6964, 7
        %v6967 = vshll.u32 %v6846, 16
        %v6969 = vor.u32 %v6966, %v6967
        %v6970 = vsel %vm3640, %v6962, %v6969
        %v6971 = vrot.slane %v6966, 4
        %v6973 = vshrl.u32 %v6847, 16
        %v6975 = vrot.slane %v6973, 7
        %v6976 = vshll.u32 %v6847, 16
        %v6978 = vor.u32 %v6975, %v6976
        %v6979 = vrot.slane %v6975, 4
        %v6981 = vshrl.u32 %v6848, 16
        %v6983 = vrot.slane %v6981, 7
        %v6984 = vshll.u32 %v6848, 16
        %v6986 = vor.u32 %v6983, %v6984
        %v6987 = vsel %vm3640, %v6979, %v6986
        %v6988 = vrot.slane %v6983, 4
        %v6990 = vshrl.u32 %v6849, 16
        %v6992 = vrot.slane %v6990, 7
        %v6993 = vshll.u32 %v6849, 16
        %v6995 = vor.u32 %v6992, %v6993
        %v6996 = vrot.slane %v6992, 4
        %v6998 = vshrl.u32 %v6850, 16
        %v7000 = vrot.slane %v6998, 7
        %v7001 = vshll.u32 %v6850, 16
        %v7003 = vor.u32 %v7000, %v7001
        %v7004 = vsel %vm3640, %v6996, %v7003
        %v7005 = vrot.slane %v7000, 4
        %v7007 = vshrl.u32 %v6851, 16
        %v7009 = vrot.slane %v7007, 7
        %v7010 = vshll.u32 %v6851, 16
        %v7012 = vor.u32 %v7009, %v7010
        %v7013 = vrot.slane %v7009, 4
        %v7015 = vshrl.u32 %v6852, 16
        %v7017 = vrot.slane %v7015, 7
        %v7018 = vshll.u32 %v6852, 16
        %v7020 = vor.u32 %v7017, %v7018
        %v7021 = vsel %vm3640, %v7013, %v7020
        %v7022 = vrot.slane %v7017, 4
        %v7053 = vld [vmem:[#allocation3] sm:$0xf]
        %v7054 = vsel %vm3882, %v6859, %v7053
        %7055 = vst [vmem:[#allocation3] sm:$0xf] %v7054
        %7056 = vst.msk [vmem:[#allocation3 + $0x4] sm:$0xf] %vm3886, %v6868
        %v7057 = vld [vmem:[#allocation3 + $0x8] sm:$0x1]
        %v7058 = vsel %vm352, %v6869, %v7057
        %7059 = vst [vmem:[#allocation3 + $0x8] sm:$0x1] %v7058
        %v7060 = vld [vmem:[#allocation3 + $0xc] sm:$0xf]
        %v7061 = vsel %vm3882, %v6876, %v7060
        %7062 = vst [vmem:[#allocation3 + $0xc] sm:$0xf] %v7061
        %7063 = vst.msk [vmem:[#allocation3 + $0x10] sm:$0xf] %vm3886, %v6885
        %v7064 = vld [vmem:[#allocation3 + $0x14] sm:$0x1]
        %v7065 = vsel %vm352, %v6886, %v7064
        %7066 = vst [vmem:[#allocation3 + $0x14] sm:$0x1] %v7065
        %v7067 = vld [vmem:[#allocation3 + $0x18] sm:$0xf]
        %v7068 = vsel %vm3882, %v6893, %v7067
        %7069 = vst [vmem:[#allocation3 + $0x18] sm:$0xf] %v7068
        %7070 = vst.msk [vmem:[#allocation3 + $0x1c] sm:$0xf] %vm3886, %v6902
        %v7071 = vld [vmem:[#allocation3 + $0x20] sm:$0x1]
        %v7072 = vsel %vm352, %v6903, %v7071
        %7073 = vst [vmem:[#allocation3 + $0x20] sm:$0x1] %v7072
        %v7074 = vld [vmem:[#allocation3 + $0x24] sm:$0xf]
        %v7075 = vsel %vm3882, %v6910, %v7074
        %7076 = vst [vmem:[#allocation3 + $0x24] sm:$0xf] %v7075
        %7077 = vst.msk [vmem:[#allocation3 + $0x28] sm:$0xf] %vm3886, %v6919
        %v7078 = vld [vmem:[#allocation3 + $0x2c] sm:$0x1]
        %v7079 = vsel %vm352, %v6920, %v7078
        %7080 = vst [vmem:[#allocation3 + $0x2c] sm:$0x1] %v7079
        %v7081 = vld [vmem:[#allocation3 + $0x30] sm:$0xf]
        %v7082 = vsel %vm3882, %v6927, %v7081
        %7083 = vst [vmem:[#allocation3 + $0x30] sm:$0xf] %v7082
        %7084 = vst.msk [vmem:[#allocation3 + $0x34] sm:$0xf] %vm3886, %v6936
        %v7085 = vld [vmem:[#allocation3 + $0x38] sm:$0x1]
        %v7086 = vsel %vm352, %v6937, %v7085
        %7087 = vst [vmem:[#allocation3 + $0x38] sm:$0x1] %v7086
        %v7088 = vld [vmem:[#allocation3 + $0x3c] sm:$0xf]
        %v7089 = vsel %vm3882, %v6944, %v7088
        %7090 = vst [vmem:[#allocation3 + $0x3c] sm:$0xf] %v7089
        %7091 = vst.msk [vmem:[#allocation3 + $0x40] sm:$0xf] %vm3886, %v6953
        %v7092 = vld [vmem:[#allocation3 + $0x44] sm:$0x1]
        %v7093 = vsel %vm352, %v6954, %v7092
        %7094 = vst [vmem:[#allocation3 + $0x44] sm:$0x1] %v7093
        %v7095 = vld [vmem:[#allocation3 + $0x48] sm:$0xf]
        %v7096 = vsel %vm3882, %v6961, %v7095
        %7097 = vst [vmem:[#allocation3 + $0x48] sm:$0xf] %v7096
        %7098 = vst.msk [vmem:[#allocation3 + $0x4c] sm:$0xf] %vm3886, %v6970
        %v7099 = vld [vmem:[#allocation3 + $0x50] sm:$0x1]
        %v7100 = vsel %vm352, %v6971, %v7099
        %7101 = vst [vmem:[#allocation3 + $0x50] sm:$0x1] %v7100
        %v7102 = vld [vmem:[#allocation3 + $0x54] sm:$0xf]
        %v7103 = vsel %vm3882, %v6978, %v7102
        %7104 = vst [vmem:[#allocation3 + $0x54] sm:$0xf] %v7103
        %7105 = vst.msk [vmem:[#allocation3 + $0x58] sm:$0xf] %vm3886, %v6987
        %v7106 = vld [vmem:[#allocation3 + $0x5c] sm:$0x1]
        %v7107 = vsel %vm352, %v6988, %v7106
        %7108 = vst [vmem:[#allocation3 + $0x5c] sm:$0x1] %v7107
        %v7109 = vld [vmem:[#allocation3 + $0x60] sm:$0xf]
        %v7110 = vsel %vm3882, %v6995, %v7109
        %7111 = vst [vmem:[#allocation3 + $0x60] sm:$0xf] %v7110
        %7112 = vst.msk [vmem:[#allocation3 + $0x64] sm:$0xf] %vm3886, %v7004
        %v7113 = vld [vmem:[#allocation3 + $0x68] sm:$0x1]
        %v7114 = vsel %vm352, %v7005, %v7113
        %7115 = vst [vmem:[#allocation3 + $0x68] sm:$0x1] %v7114
        %v7116 = vld [vmem:[#allocation3 + $0x6c] sm:$0xf]
        %v7117 = vsel %vm3882, %v7012, %v7116
        %7118 = vst [vmem:[#allocation3 + $0x6c] sm:$0xf] %v7117
        %7119 = vst.msk [vmem:[#allocation3 + $0x70] sm:$0xf] %vm3886, %v7021
        %v7120 = vld [vmem:[#allocation3 + $0x74] sm:$0x1]
        %v7121 = vsel %vm352, %v7022, %v7120
        %7122 = vst [vmem:[#allocation3 + $0x74] sm:$0x1] %v7121
        %v7123 = vld [vmem:[#allocation3] sm:$0xf]
        %v7124 = vld [vmem:[#allocation3 + $0x4] sm:$0xf]
        %v7125 = vld [vmem:[#allocation3 + $0xc] sm:$0xf]
        %v7126 = vld [vmem:[#allocation3 + $0x10] sm:$0xf]
        %v7127 = vld [vmem:[#allocation3 + $0x18] sm:$0xf]
        %v7128 = vld [vmem:[#allocation3 + $0x1c] sm:$0xf]
        %v7129 = vld [vmem:[#allocation3 + $0x24] sm:$0xf]
        %v7130 = vld [vmem:[#allocation3 + $0x28] sm:$0xf]
        %v7131 = vld [vmem:[#allocation3 + $0x30] sm:$0xf]
        %v7132 = vld [vmem:[#allocation3 + $0x34] sm:$0xf]
        %v7133 = vld [vmem:[#allocation3 + $0x3c] sm:$0xf]
        %v7134 = vld [vmem:[#allocation3 + $0x40] sm:$0xf]
        %v7135 = vld [vmem:[#allocation3 + $0x48] sm:$0xf]
        %v7136 = vld [vmem:[#allocation3 + $0x4c] sm:$0xf]
        %v7137 = vld [vmem:[#allocation3 + $0x54] sm:$0xf]
        %v7138 = vld [vmem:[#allocation3 + $0x58] sm:$0xf]
        %v7139 = vld [vmem:[%s5] sm:$0xf]
        %v7140 = vld [vmem:[%s5 + $0x4] sm:$0xf]
        %v7141 = vld [vmem:[%s5 + $0x8] sm:$0xf]
        %v7142 = vld [vmem:[%s5 + $0xc] sm:$0xf]
        %v7143 = vld [vmem:[%s5 + $0x10] sm:$0xf]
        %v7144 = vld [vmem:[%s5 + $0x14] sm:$0xf]
        %v7145 = vld [vmem:[%s5 + $0x18] sm:$0xf]
        %v7146 = vld [vmem:[%s5 + $0x1c] sm:$0xf]
        %v7147 = vld [vmem:[#allocation3 + $0x8] sm:$0x1]
        %v7148 = vld [vmem:[#allocation3 + $0x14] sm:$0x1]
        %v7149 = vld [vmem:[#allocation3 + $0x20] sm:$0x1]
        %v7150 = vld [vmem:[#allocation3 + $0x2c] sm:$0x1]
        %v7151 = vld [vmem:[#allocation3 + $0x38] sm:$0x1]
        %v7152 = vld [vmem:[#allocation3 + $0x44] sm:$0x1]
        %v7153 = vld [vmem:[#allocation3 + $0x50] sm:$0x1]
        %v7154 = vld [vmem:[#allocation3 + $0x5c] sm:$0x1]
        %v7156 = vshrl.u32 %v7123, 16
        %v7158 = vrot.slane %v7156, 4
        %v7159 = vshll.u32 %v7123, 16
        %v7161 = vrot.slane %v7159, 5
        %v7162 = vor.u32 %v7158, %v7161
        %v7163 = vrot.slane %v7162, 4
        %v7165 = vshll.u32 %v7124, 16
        %v7167 = vrot.slane %v7165, 5
        %v7168 = vsel %vm529, %v7163, %v7167
        %v7169 = vshrl.u32 %v7124, 16
        %v7171 = vrot.slane %v7169, 4
        %v7172 = vor.u32 %v7171, %v7167
        %v7173 = vrot.slane %v7172, 4
        %v7175 = vshll.u32 %v7147, 16
        %v7177 = vrot.slane %v7175, 5
        %v7178 = vsel %vm529, %v7173, %v7177
        %v7180 = vshrl.u32 %v7125, 16
        %v7182 = vrot.slane %v7180, 4
        %v7183 = vshll.u32 %v7125, 16
        %v7185 = vrot.slane %v7183, 5
        %v7186 = vor.u32 %v7182, %v7185
        %v7187 = vrot.slane %v7186, 4
        %v7189 = vshll.u32 %v7126, 16
        %v7191 = vrot.slane %v7189, 5
        %v7192 = vsel %vm529, %v7187, %v7191
        %v7193 = vshrl.u32 %v7126, 16
        %v7195 = vrot.slane %v7193, 4
        %v7196 = vor.u32 %v7195, %v7191
        %v7197 = vrot.slane %v7196, 4
        %v7199 = vshll.u32 %v7148, 16
        %v7201 = vrot.slane %v7199, 5
        %v7202 = vsel %vm529, %v7197, %v7201
        %v7204 = vshrl.u32 %v7127, 16
        %v7206 = vrot.slane %v7204, 4
        %v7207 = vshll.u32 %v7127, 16
        %v7209 = vrot.slane %v7207, 5
        %v7210 = vor.u32 %v7206, %v7209
        %v7211 = vrot.slane %v7210, 4
        %v7213 = vshll.u32 %v7128, 16
        %v7215 = vrot.slane %v7213, 5
        %v7216 = vsel %vm529, %v7211, %v7215
        %v7217 = vshrl.u32 %v7128, 16
        %v7219 = vrot.slane %v7217, 4
        %v7220 = vor.u32 %v7219, %v7215
        %v7221 = vrot.slane %v7220, 4
        %v7223 = vshll.u32 %v7149, 16
        %v7225 = vrot.slane %v7223, 5
        %v7226 = vsel %vm529, %v7221, %v7225
        %v7228 = vshrl.u32 %v7129, 16
        %v7230 = vrot.slane %v7228, 4
        %v7231 = vshll.u32 %v7129, 16
        %v7233 = vrot.slane %v7231, 5
        %v7234 = vor.u32 %v7230, %v7233
        %v7235 = vrot.slane %v7234, 4
        %v7237 = vshll.u32 %v7130, 16
        %v7239 = vrot.slane %v7237, 5
        %v7240 = vsel %vm529, %v7235, %v7239
        %v7241 = vshrl.u32 %v7130, 16
        %v7243 = vrot.slane %v7241, 4
        %v7244 = vor.u32 %v7243, %v7239
        %v7245 = vrot.slane %v7244, 4
        %v7247 = vshll.u32 %v7150, 16
        %v7249 = vrot.slane %v7247, 5
        %v7250 = vsel %vm529, %v7245, %v7249
        %v7252 = vshrl.u32 %v7131, 16
        %v7254 = vrot.slane %v7252, 4
        %v7255 = vshll.u32 %v7131, 16
        %v7257 = vrot.slane %v7255, 5
        %v7258 = vor.u32 %v7254, %v7257
        %v7259 = vrot.slane %v7258, 4
        %v7261 = vshll.u32 %v7132, 16
        %v7263 = vrot.slane %v7261, 5
        %v7264 = vsel %vm529, %v7259, %v7263
        %v7265 = vshrl.u32 %v7132, 16
        %v7267 = vrot.slane %v7265, 4
        %v7268 = vor.u32 %v7267, %v7263
        %v7269 = vrot.slane %v7268, 4
        %v7271 = vshll.u32 %v7151, 16
        %v7273 = vrot.slane %v7271, 5
        %v7274 = vsel %vm529, %v7269, %v7273
        %v7276 = vshrl.u32 %v7133, 16
        %v7278 = vrot.slane %v7276, 4
        %v7279 = vshll.u32 %v7133, 16
        %v7281 = vrot.slane %v7279, 5
        %v7282 = vor.u32 %v7278, %v7281
        %v7283 = vrot.slane %v7282, 4
        %v7285 = vshll.u32 %v7134, 16
        %v7287 = vrot.slane %v7285, 5
        %v7288 = vsel %vm529, %v7283, %v7287
        %v7289 = vshrl.u32 %v7134, 16
        %v7291 = vrot.slane %v7289, 4
        %v7292 = vor.u32 %v7291, %v7287
        %v7293 = vrot.slane %v7292, 4
        %v7295 = vshll.u32 %v7152, 16
        %v7297 = vrot.slane %v7295, 5
        %v7298 = vsel %vm529, %v7293, %v7297
        %v7300 = vshrl.u32 %v7135, 16
        %v7302 = vrot.slane %v7300, 4
        %v7303 = vshll.u32 %v7135, 16
        %v7305 = vrot.slane %v7303, 5
        %v7306 = vor.u32 %v7302, %v7305
        %v7307 = vrot.slane %v7306, 4
        %v7309 = vshll.u32 %v7136, 16
        %v7311 = vrot.slane %v7309, 5
        %v7312 = vsel %vm529, %v7307, %v7311
        %v7313 = vshrl.u32 %v7136, 16
        %v7315 = vrot.slane %v7313, 4
        %v7316 = vor.u32 %v7315, %v7311
        %v7317 = vrot.slane %v7316, 4
        %v7319 = vshll.u32 %v7153, 16
        %v7321 = vrot.slane %v7319, 5
        %v7322 = vsel %vm529, %v7317, %v7321
        %v7324 = vshrl.u32 %v7137, 16
        %v7326 = vrot.slane %v7324, 4
        %v7327 = vshll.u32 %v7137, 16
        %v7329 = vrot.slane %v7327, 5
        %v7330 = vor.u32 %v7326, %v7329
        %v7331 = vrot.slane %v7330, 4
        %v7333 = vshll.u32 %v7138, 16
        %v7335 = vrot.slane %v7333, 5
        %v7336 = vsel %vm529, %v7331, %v7335
        %v7337 = vshrl.u32 %v7138, 16
        %v7339 = vrot.slane %v7337, 4
        %v7340 = vor.u32 %v7339, %v7335
        %v7341 = vrot.slane %v7340, 4
        %v7343 = vshll.u32 %v7154, 16
        %v7345 = vrot.slane %v7343, 5
        %v7346 = vsel %vm529, %v7341, %v7345
        %s7347 = scalar_lea.vmem %s5, 32
        %v7348 = vld [vmem:[%s7347] sm:$0xf]
        %v7349 = vld [vmem:[%s7347 + $0x4] sm:$0xf]
        %v7350 = vld [vmem:[%s7347 + $0x8] sm:$0xf]
        %v7351 = vld [vmem:[%s7347 + $0xc] sm:$0xf]
        %v7352 = vld [vmem:[%s7347 + $0x10] sm:$0xf]
        %v7353 = vld [vmem:[%s7347 + $0x14] sm:$0xf]
        %v7354 = vld [vmem:[%s7347 + $0x18] sm:$0xf]
        %v7355 = vld [vmem:[%s7347 + $0x1c] sm:$0xf]
        %v7356 = vunpack.c.l.b16 %v7168
        %v7357 = vunpack.c.l.b16 %v7178
        %v7358 = vunpack.c.l.b16 %v7192
        %v7359 = vunpack.c.l.b16 %v7202
        %v7360 = vunpack.c.l.b16 %v7216
        %v7361 = vunpack.c.l.b16 %v7226
        %v7362 = vunpack.c.l.b16 %v7240
        %v7363 = vunpack.c.l.b16 %v7250
        %v7364 = vunpack.c.l.b16 %v7264
        %v7365 = vunpack.c.l.b16 %v7274
        %v7366 = vunpack.c.l.b16 %v7288
        %v7367 = vunpack.c.l.b16 %v7298
        %v7368 = vunpack.c.l.b16 %v7312
        %v7369 = vunpack.c.l.b16 %v7322
        %v7370 = vunpack.c.l.b16 %v7336
        %v7371 = vunpack.c.l.b16 %v7346
        %v7372 = vpack.c.b16 %v7357, %v7356
        %v7373 = vpack.c.b16 %v7359, %v7358
        %v7374 = vpack.c.b16 %v7361, %v7360
        %v7375 = vpack.c.b16 %v7363, %v7362
        %v7376 = vpack.c.b16 %v7365, %v7364
        %v7377 = vpack.c.b16 %v7367, %v7366
        %v7378 = vpack.c.b16 %v7369, %v7368
        %v7379 = vpack.c.b16 %v7371, %v7370
        %v7388 = vunpack.c.l.b16 %v7348
        %v7389 = vunpack.c.l.b16 %v7349
        %v7390 = vunpack.c.l.b16 %v7350
        %v7391 = vunpack.c.l.b16 %v7351
        %v7392 = vunpack.c.l.b16 %v7352
        %v7393 = vunpack.c.l.b16 %v7353
        %v7394 = vunpack.c.l.b16 %v7354
        %v7395 = vunpack.c.l.b16 %v7355
        %v7396 = vpack.c.b16 %v7389, %v7388
        %v7397 = vpack.c.b16 %v7391, %v7390
        %v7398 = vpack.c.b16 %v7393, %v7392
        %v7399 = vpack.c.b16 %v7395, %v7394
        %v7405 = vsel %vm4309, %v7372, 0
        %v7408 = vsel %vm4309, %v7373, 0
        %v7411 = vsel %vm4309, %v7374, 0
        %v7414 = vsel %vm4309, %v7375, 0
        %v7417 = vsel %vm4309, %v7376, 0
        %v7420 = vsel %vm4309, %v7377, 0
        %v7423 = vsel %vm4309, %v7378, 0
        %v7426 = vsel %vm4309, %v7379, 0
        %7428 = vmatpush.bf16.msra.mxu0 0
        %7429 = vmatpush.bf16.msra.mxu0 0
        %7430 = vmatpush.bf16.msra.mxu0 0
        %7431 = vmatpush.bf16.msra.mxu0 0
        %7432 = vmatpush.bf16.msra.mxu0 %v7399
        %7433 = vmatpush.bf16.msra.mxu0 %v7398
        %7434 = vmatpush.bf16.msra.mxu0 %v7397
        %7435 = vmatpush.bf16.msra.mxu0 %v7396
        %7436 = vmatmul.bf16.gmra.mxu0 %v7405
        %v7437 = vpop.f32.mrf.mxu0
        %v7438 = vadd.f32 0.0, %v7437
        %v7439 = vpop.f32.mrf.mxu0
        %v7440 = vadd.f32 0.0, %v7439
        %7441 = vmatmul.bf16.gmra.mxu0 %v7408
        %v7442 = vpop.f32.mrf.mxu0
        %v7443 = vadd.f32 0.0, %v7442
        %v7444 = vpop.f32.mrf.mxu0
        %v7445 = vadd.f32 0.0, %v7444
        %7446 = vmatmul.bf16.gmra.mxu0 %v7411
        %v7447 = vpop.f32.mrf.mxu0
        %v7448 = vadd.f32 0.0, %v7447
        %v7449 = vpop.f32.mrf.mxu0
        %v7450 = vadd.f32 0.0, %v7449
        %7451 = vmatmul.bf16.gmra.mxu0 %v7414
        %v7452 = vpop.f32.mrf.mxu0
        %v7453 = vadd.f32 0.0, %v7452
        %v7454 = vpop.f32.mrf.mxu0
        %v7455 = vadd.f32 0.0, %v7454
        %7456 = vmatmul.bf16.gmra.mxu0 %v7417
        %v7457 = vpop.f32.mrf.mxu0
        %v7458 = vadd.f32 0.0, %v7457
        %v7459 = vpop.f32.mrf.mxu0
        %v7460 = vadd.f32 0.0, %v7459
        %7461 = vmatmul.bf16.gmra.mxu0 %v7420
        %v7462 = vpop.f32.mrf.mxu0
        %v7463 = vadd.f32 0.0, %v7462
        %v7464 = vpop.f32.mrf.mxu0
        %v7465 = vadd.f32 0.0, %v7464
        %7466 = vmatmul.bf16.gmra.mxu0 %v7423
        %v7467 = vpop.f32.mrf.mxu0
        %v7468 = vadd.f32 0.0, %v7467
        %v7469 = vpop.f32.mrf.mxu0
        %v7470 = vadd.f32 0.0, %v7469
        %7471 = vmatmul.bf16.gmra.mxu0 %v7426
        %v7472 = vpop.f32.mrf.mxu0
        %v7473 = vadd.f32 0.0, %v7472
        %v7474 = vpop.f32.mrf.mxu0
        %v7475 = vadd.f32 0.0, %v7474
        %7476 = vdwg.mxu0
        %v7493 = vunpack.c.l.b16 %v7123
        %v7494 = vunpack.c.l.b16 %v7124
        %v7495 = vunpack.c.l.b16 %v7125
        %v7496 = vunpack.c.l.b16 %v7126
        %v7497 = vunpack.c.l.b16 %v7127
        %v7498 = vunpack.c.l.b16 %v7128
        %v7499 = vunpack.c.l.b16 %v7129
        %v7500 = vunpack.c.l.b16 %v7130
        %v7501 = vunpack.c.l.b16 %v7131
        %v7502 = vunpack.c.l.b16 %v7132
        %v7503 = vunpack.c.l.b16 %v7133
        %v7504 = vunpack.c.l.b16 %v7134
        %v7505 = vunpack.c.l.b16 %v7135
        %v7506 = vunpack.c.l.b16 %v7136
        %v7507 = vunpack.c.l.b16 %v7137
        %v7508 = vunpack.c.l.b16 %v7138
        %v7509 = vpack.c.b16 %v7494, %v7493
        %v7510 = vpack.c.b16 %v7496, %v7495
        %v7511 = vpack.c.b16 %v7498, %v7497
        %v7512 = vpack.c.b16 %v7500, %v7499
        %v7513 = vpack.c.b16 %v7502, %v7501
        %v7514 = vpack.c.b16 %v7504, %v7503
        %v7515 = vpack.c.b16 %v7506, %v7505
        %v7516 = vpack.c.b16 %v7508, %v7507
        %v7525 = vunpack.c.l.b16 %v7139
        %v7526 = vunpack.c.l.b16 %v7140
        %v7527 = vunpack.c.l.b16 %v7141
        %v7528 = vunpack.c.l.b16 %v7142
        %v7529 = vunpack.c.l.b16 %v7143
        %v7530 = vunpack.c.l.b16 %v7144
        %v7531 = vunpack.c.l.b16 %v7145
        %v7532 = vunpack.c.l.b16 %v7146
        %v7533 = vpack.c.b16 %v7526, %v7525
        %v7534 = vpack.c.b16 %v7528, %v7527
        %v7535 = vpack.c.b16 %v7530, %v7529
        %v7536 = vpack.c.b16 %v7532, %v7531
        %v7542 = vsel %vm4309, %v7509, 0
        %v7545 = vsel %vm4309, %v7510, 0
        %v7548 = vsel %vm4309, %v7511, 0
        %v7551 = vsel %vm4309, %v7512, 0
        %v7554 = vsel %vm4309, %v7513, 0
        %v7557 = vsel %vm4309, %v7514, 0
        %v7560 = vsel %vm4309, %v7515, 0
        %v7563 = vsel %vm4309, %v7516, 0
        %7565 = vmatpush.bf16.msra.mxu0 0
        %7566 = vmatpush.bf16.msra.mxu0 0
        %7567 = vmatpush.bf16.msra.mxu0 0
        %7568 = vmatpush.bf16.msra.mxu0 0
        %7569 = vmatpush.bf16.msra.mxu0 %v7536
        %7570 = vmatpush.bf16.msra.mxu0 %v7535
        %7571 = vmatpush.bf16.msra.mxu0 %v7534
        %7572 = vmatpush.bf16.msra.mxu0 %v7533
        %7573 = vmatmul.bf16.gmra.mxu0 %v7542
        %v7574 = vpop.f32.mrf.mxu0
        %v7575 = vadd.f32 %v7438, %v7574
        %v7576 = vpop.f32.mrf.mxu0
        %v7577 = vadd.f32 %v7440, %v7576
        %7578 = vmatmul.bf16.gmra.mxu0 %v7545
        %v7579 = vpop.f32.mrf.mxu0
        %v7580 = vadd.f32 %v7443, %v7579
        %v7581 = vpop.f32.mrf.mxu0
        %v7582 = vadd.f32 %v7445, %v7581
        %7583 = vmatmul.bf16.gmra.mxu0 %v7548
        %v7584 = vpop.f32.mrf.mxu0
        %v7585 = vadd.f32 %v7448, %v7584
        %v7586 = vpop.f32.mrf.mxu0
        %v7587 = vadd.f32 %v7450, %v7586
        %7588 = vmatmul.bf16.gmra.mxu0 %v7551
        %v7589 = vpop.f32.mrf.mxu0
        %v7590 = vadd.f32 %v7453, %v7589
        %v7591 = vpop.f32.mrf.mxu0
        %v7592 = vadd.f32 %v7455, %v7591
        %7593 = vmatmul.bf16.gmra.mxu0 %v7554
        %v7594 = vpop.f32.mrf.mxu0
        %v7595 = vadd.f32 %v7458, %v7594
        %v7596 = vpop.f32.mrf.mxu0
        %v7597 = vadd.f32 %v7460, %v7596
        %7598 = vmatmul.bf16.gmra.mxu0 %v7557
        %v7599 = vpop.f32.mrf.mxu0
        %v7600 = vadd.f32 %v7463, %v7599
        %v7601 = vpop.f32.mrf.mxu0
        %v7602 = vadd.f32 %v7465, %v7601
        %7603 = vmatmul.bf16.gmra.mxu0 %v7560
        %v7604 = vpop.f32.mrf.mxu0
        %v7605 = vadd.f32 %v7468, %v7604
        %v7606 = vpop.f32.mrf.mxu0
        %v7607 = vadd.f32 %v7470, %v7606
        %7608 = vmatmul.bf16.gmra.mxu0 %v7563
        %v7609 = vpop.f32.mrf.mxu0
        %v7610 = vadd.f32 %v7473, %v7609
        %v7611 = vpop.f32.mrf.mxu0
        %v7612 = vadd.f32 %v7475, %v7611
        %7613 = vdwg.mxu0
        %v7614 = vld [vmem:[#allocation3] sm:$0xe]
        %v7615 = vld [vmem:[#allocation3 + $0xc] sm:$0xe]
        %v7616 = vld [vmem:[#allocation3 + $0x18] sm:$0xe]
        %v7617 = vld [vmem:[#allocation3 + $0x24] sm:$0xe]
        %v7618 = vld [vmem:[#allocation3 + $0x30] sm:$0xe]
        %v7619 = vld [vmem:[#allocation3 + $0x3c] sm:$0xe]
        %v7620 = vld [vmem:[#allocation3 + $0x48] sm:$0xe]
        %v7621 = vld [vmem:[#allocation3 + $0x54] sm:$0xe]
        %v7638 = vrot.slane %v7614, 5
        %v7639 = vrot.slane %v7638, 4
        %v7640 = vrot.slane %v7124, 5
        %v7641 = vsel %vm1175, %v7639, %v7640
        %v7642 = vrot.slane %v7640, 4
        %v7643 = vrot.slane %v7147, 5
        %v7644 = vsel %vm1175, %v7642, %v7643
        %v7645 = vrot.slane %v7615, 5
        %v7646 = vrot.slane %v7645, 4
        %v7647 = vrot.slane %v7126, 5
        %v7648 = vsel %vm1175, %v7646, %v7647
        %v7649 = vrot.slane %v7647, 4
        %v7650 = vrot.slane %v7148, 5
        %v7651 = vsel %vm1175, %v7649, %v7650
        %v7652 = vrot.slane %v7616, 5
        %v7653 = vrot.slane %v7652, 4
        %v7654 = vrot.slane %v7128, 5
        %v7655 = vsel %vm1175, %v7653, %v7654
        %v7656 = vrot.slane %v7654, 4
        %v7657 = vrot.slane %v7149, 5
        %v7658 = vsel %vm1175, %v7656, %v7657
        %v7659 = vrot.slane %v7617, 5
        %v7660 = vrot.slane %v7659, 4
        %v7661 = vrot.slane %v7130, 5
        %v7662 = vsel %vm1175, %v7660, %v7661
        %v7663 = vrot.slane %v7661, 4
        %v7664 = vrot.slane %v7150, 5
        %v7665 = vsel %vm1175, %v7663, %v7664
        %v7666 = vrot.slane %v7618, 5
        %v7667 = vrot.slane %v7666, 4
        %v7668 = vrot.slane %v7132, 5
        %v7669 = vsel %vm1175, %v7667, %v7668
        %v7670 = vrot.slane %v7668, 4
        %v7671 = vrot.slane %v7151, 5
        %v7672 = vsel %vm1175, %v7670, %v7671
        %v7673 = vrot.slane %v7619, 5
        %v7674 = vrot.slane %v7673, 4
        %v7675 = vrot.slane %v7134, 5
        %v7676 = vsel %vm1175, %v7674, %v7675
        %v7677 = vrot.slane %v7675, 4
        %v7678 = vrot.slane %v7152, 5
        %v7679 = vsel %vm1175, %v7677, %v7678
        %v7680 = vrot.slane %v7620, 5
        %v7681 = vrot.slane %v7680, 4
        %v7682 = vrot.slane %v7136, 5
        %v7683 = vsel %vm1175, %v7681, %v7682
        %v7684 = vrot.slane %v7682, 4
        %v7685 = vrot.slane %v7153, 5
        %v7686 = vsel %vm1175, %v7684, %v7685
        %v7687 = vrot.slane %v7621, 5
        %v7688 = vrot.slane %v7687, 4
        %v7689 = vrot.slane %v7138, 5
        %v7690 = vsel %vm1175, %v7688, %v7689
        %v7691 = vrot.slane %v7689, 4
        %v7692 = vrot.slane %v7154, 5
        %v7693 = vsel %vm1175, %v7691, %v7692
        %s7694 = scalar_lea.vmem %s5, 64
        %v7695 = vld [vmem:[%s7694] sm:$0xf]
        %v7696 = vld [vmem:[%s7694 + $0x4] sm:$0xf]
        %v7697 = vld [vmem:[%s7694 + $0x8] sm:$0xf]
        %v7698 = vld [vmem:[%s7694 + $0xc] sm:$0xf]
        %v7699 = vld [vmem:[%s7694 + $0x10] sm:$0xf]
        %v7700 = vld [vmem:[%s7694 + $0x14] sm:$0xf]
        %v7701 = vld [vmem:[%s7694 + $0x18] sm:$0xf]
        %v7702 = vld [vmem:[%s7694 + $0x1c] sm:$0xf]
        %v7703 = vunpack.c.l.b16 %v7641
        %v7704 = vunpack.c.l.b16 %v7644
        %v7705 = vunpack.c.l.b16 %v7648
        %v7706 = vunpack.c.l.b16 %v7651
        %v7707 = vunpack.c.l.b16 %v7655
        %v7708 = vunpack.c.l.b16 %v7658
        %v7709 = vunpack.c.l.b16 %v7662
        %v7710 = vunpack.c.l.b16 %v7665
        %v7711 = vunpack.c.l.b16 %v7669
        %v7712 = vunpack.c.l.b16 %v7672
        %v7713 = vunpack.c.l.b16 %v7676
        %v7714 = vunpack.c.l.b16 %v7679
        %v7715 = vunpack.c.l.b16 %v7683
        %v7716 = vunpack.c.l.b16 %v7686
        %v7717 = vunpack.c.l.b16 %v7690
        %v7718 = vunpack.c.l.b16 %v7693
        %v7719 = vpack.c.b16 %v7704, %v7703
        %v7720 = vpack.c.b16 %v7706, %v7705
        %v7721 = vpack.c.b16 %v7708, %v7707
        %v7722 = vpack.c.b16 %v7710, %v7709
        %v7723 = vpack.c.b16 %v7712, %v7711
        %v7724 = vpack.c.b16 %v7714, %v7713
        %v7725 = vpack.c.b16 %v7716, %v7715
        %v7726 = vpack.c.b16 %v7718, %v7717
        %v7735 = vunpack.c.l.b16 %v7695
        %v7736 = vunpack.c.l.b16 %v7696
        %v7737 = vunpack.c.l.b16 %v7697
        %v7738 = vunpack.c.l.b16 %v7698
        %v7739 = vunpack.c.l.b16 %v7699
        %v7740 = vunpack.c.l.b16 %v7700
        %v7741 = vunpack.c.l.b16 %v7701
        %v7742 = vunpack.c.l.b16 %v7702
        %v7743 = vpack.c.b16 %v7736, %v7735
        %v7744 = vpack.c.b16 %v7738, %v7737
        %v7745 = vpack.c.b16 %v7740, %v7739
        %v7746 = vpack.c.b16 %v7742, %v7741
        %v7752 = vsel %vm4309, %v7719, 0
        %v7755 = vsel %vm4309, %v7720, 0
        %v7758 = vsel %vm4309, %v7721, 0
        %v7761 = vsel %vm4309, %v7722, 0
        %v7764 = vsel %vm4309, %v7723, 0
        %v7767 = vsel %vm4309, %v7724, 0
        %v7770 = vsel %vm4309, %v7725, 0
        %v7773 = vsel %vm4309, %v7726, 0
        %7775 = vmatpush.bf16.msra.mxu0 0
        %7776 = vmatpush.bf16.msra.mxu0 0
        %7777 = vmatpush.bf16.msra.mxu0 0
        %7778 = vmatpush.bf16.msra.mxu0 0
        %7779 = vmatpush.bf16.msra.mxu0 %v7746
        %7780 = vmatpush.bf16.msra.mxu0 %v7745
        %7781 = vmatpush.bf16.msra.mxu0 %v7744
        %7782 = vmatpush.bf16.msra.mxu0 %v7743
        %7783 = vmatmul.bf16.gmra.mxu0 %v7752
        %v7784 = vpop.f32.mrf.mxu0
        %v7785 = vadd.f32 0.0, %v7784
        %v7786 = vpop.f32.mrf.mxu0
        %v7787 = vadd.f32 0.0, %v7786
        %7788 = vmatmul.bf16.gmra.mxu0 %v7755
        %v7789 = vpop.f32.mrf.mxu0
        %v7790 = vadd.f32 0.0, %v7789
        %v7791 = vpop.f32.mrf.mxu0
        %v7792 = vadd.f32 0.0, %v7791
        %7793 = vmatmul.bf16.gmra.mxu0 %v7758
        %v7794 = vpop.f32.mrf.mxu0
        %v7795 = vadd.f32 0.0, %v7794
        %v7796 = vpop.f32.mrf.mxu0
        %v7797 = vadd.f32 0.0, %v7796
        %7798 = vmatmul.bf16.gmra.mxu0 %v7761
        %v7799 = vpop.f32.mrf.mxu0
        %v7800 = vadd.f32 0.0, %v7799
        %v7801 = vpop.f32.mrf.mxu0
        %v7802 = vadd.f32 0.0, %v7801
        %7803 = vmatmul.bf16.gmra.mxu0 %v7764
        %v7804 = vpop.f32.mrf.mxu0
        %v7805 = vadd.f32 0.0, %v7804
        %v7806 = vpop.f32.mrf.mxu0
        %v7807 = vadd.f32 0.0, %v7806
        %7808 = vmatmul.bf16.gmra.mxu0 %v7767
        %v7809 = vpop.f32.mrf.mxu0
        %v7810 = vadd.f32 0.0, %v7809
        %v7811 = vpop.f32.mrf.mxu0
        %v7812 = vadd.f32 0.0, %v7811
        %7813 = vmatmul.bf16.gmra.mxu0 %v7770
        %v7814 = vpop.f32.mrf.mxu0
        %v7815 = vadd.f32 0.0, %v7814
        %v7816 = vpop.f32.mrf.mxu0
        %v7817 = vadd.f32 0.0, %v7816
        %7818 = vmatmul.bf16.gmra.mxu0 %v7773
        %v7819 = vpop.f32.mrf.mxu0
        %v7820 = vadd.f32 0.0, %v7819
        %v7821 = vpop.f32.mrf.mxu0
        %v7822 = vadd.f32 0.0, %v7821
        %7823 = vdwg.mxu0
        %v7824 = vadd.f32 %v7575, %v7785
        %v7825 = vadd.f32 %v7577, %v7787
        %v7826 = vadd.f32 %v7580, %v7790
        %v7827 = vadd.f32 %v7582, %v7792
        %v7828 = vadd.f32 %v7585, %v7795
        %v7829 = vadd.f32 %v7587, %v7797
        %v7830 = vadd.f32 %v7590, %v7800
        %v7831 = vadd.f32 %v7592, %v7802
        %v7832 = vadd.f32 %v7595, %v7805
        %v7833 = vadd.f32 %v7597, %v7807
        %v7834 = vadd.f32 %v7600, %v7810
        %v7835 = vadd.f32 %v7602, %v7812
        %v7836 = vadd.f32 %v7605, %v7815
        %v7837 = vadd.f32 %v7607, %v7817
        %v7838 = vadd.f32 %v7610, %v7820
        %v7839 = vadd.f32 %v7612, %v7822
        %s7840 = scalar_lea.vmem [#allocation3], 12
        %v7841 = vld [vmem:[%s7840] sm:$0xf]
        %v7842 = vld [vmem:[%s7840 + $0x4] sm:$0xf]
        %v7843 = vld [vmem:[%s7840 + $0xc] sm:$0xf]
        %v7844 = vld [vmem:[%s7840 + $0x10] sm:$0xf]
        %v7845 = vld [vmem:[%s7840 + $0x18] sm:$0xf]
        %v7846 = vld [vmem:[%s7840 + $0x1c] sm:$0xf]
        %v7847 = vld [vmem:[%s7840 + $0x24] sm:$0xf]
        %v7848 = vld [vmem:[%s7840 + $0x28] sm:$0xf]
        %v7849 = vld [vmem:[%s7840 + $0x30] sm:$0xf]
        %v7850 = vld [vmem:[%s7840 + $0x34] sm:$0xf]
        %v7851 = vld [vmem:[%s7840 + $0x3c] sm:$0xf]
        %v7852 = vld [vmem:[%s7840 + $0x40] sm:$0xf]
        %v7853 = vld [vmem:[%s7840 + $0x48] sm:$0xf]
        %v7854 = vld [vmem:[%s7840 + $0x4c] sm:$0xf]
        %v7855 = vld [vmem:[%s7840 + $0x54] sm:$0xf]
        %v7856 = vld [vmem:[%s7840 + $0x58] sm:$0xf]
        %s7857 = scalar_lea.vmem %s5, 96
        %v7858 = vld [vmem:[%s7857] sm:$0xf]
        %v7859 = vld [vmem:[%s7857 + $0x4] sm:$0xf]
        %v7860 = vld [vmem:[%s7857 + $0x8] sm:$0xf]
        %v7861 = vld [vmem:[%s7857 + $0xc] sm:$0xf]
        %v7862 = vld [vmem:[%s7857 + $0x10] sm:$0xf]
        %v7863 = vld [vmem:[%s7857 + $0x14] sm:$0xf]
        %v7864 = vld [vmem:[%s7857 + $0x18] sm:$0xf]
        %v7865 = vld [vmem:[%s7857 + $0x1c] sm:$0xf]
        %v7882 = vunpack.c.l.b16 %v7841
        %v7883 = vunpack.c.l.b16 %v7842
        %v7884 = vunpack.c.l.b16 %v7843
        %v7885 = vunpack.c.l.b16 %v7844
        %v7886 = vunpack.c.l.b16 %v7845
        %v7887 = vunpack.c.l.b16 %v7846
        %v7888 = vunpack.c.l.b16 %v7847
        %v7889 = vunpack.c.l.b16 %v7848
        %v7890 = vunpack.c.l.b16 %v7849
        %v7891 = vunpack.c.l.b16 %v7850
        %v7892 = vunpack.c.l.b16 %v7851
        %v7893 = vunpack.c.l.b16 %v7852
        %v7894 = vunpack.c.l.b16 %v7853
        %v7895 = vunpack.c.l.b16 %v7854
        %v7896 = vunpack.c.l.b16 %v7855
        %v7897 = vunpack.c.l.b16 %v7856
        %v7898 = vpack.c.b16 %v7883, %v7882
        %v7899 = vpack.c.b16 %v7885, %v7884
        %v7900 = vpack.c.b16 %v7887, %v7886
        %v7901 = vpack.c.b16 %v7889, %v7888
        %v7902 = vpack.c.b16 %v7891, %v7890
        %v7903 = vpack.c.b16 %v7893, %v7892
        %v7904 = vpack.c.b16 %v7895, %v7894
        %v7905 = vpack.c.b16 %v7897, %v7896
        %v7914 = vunpack.c.l.b16 %v7858
        %v7915 = vunpack.c.l.b16 %v7859
        %v7916 = vunpack.c.l.b16 %v7860
        %v7917 = vunpack.c.l.b16 %v7861
        %v7918 = vunpack.c.l.b16 %v7862
        %v7919 = vunpack.c.l.b16 %v7863
        %v7920 = vunpack.c.l.b16 %v7864
        %v7921 = vunpack.c.l.b16 %v7865
        %v7922 = vpack.c.b16 %v7915, %v7914
        %v7923 = vpack.c.b16 %v7917, %v7916
        %v7924 = vpack.c.b16 %v7919, %v7918
        %v7925 = vpack.c.b16 %v7921, %v7920
        %v7931 = vsel %vm4309, %v7898, 0
        %v7934 = vsel %vm4309, %v7899, 0
        %v7937 = vsel %vm4309, %v7900, 0
        %v7940 = vsel %vm4309, %v7901, 0
        %v7943 = vsel %vm4309, %v7902, 0
        %v7946 = vsel %vm4309, %v7903, 0
        %v7949 = vsel %vm4309, %v7904, 0
        %v7952 = vsel %vm4309, %v7905, 0
        %7954 = vmatpush.bf16.msra.mxu0 0
        %7955 = vmatpush.bf16.msra.mxu0 0
        %7956 = vmatpush.bf16.msra.mxu0 0
        %7957 = vmatpush.bf16.msra.mxu0 0
        %7958 = vmatpush.bf16.msra.mxu0 %v7925
        %7959 = vmatpush.bf16.msra.mxu0 %v7924
        %7960 = vmatpush.bf16.msra.mxu0 %v7923
        %7961 = vmatpush.bf16.msra.mxu0 %v7922
        %7962 = vmatmul.bf16.gmra.mxu0 %v7931
        %v7963 = vpop.f32.mrf.mxu0
        %v7964 = vadd.f32 0.0, %v7963
        %v7965 = vpop.f32.mrf.mxu0
        %v7966 = vadd.f32 0.0, %v7965
        %7967 = vmatmul.bf16.gmra.mxu0 %v7934
        %v7968 = vpop.f32.mrf.mxu0
        %v7969 = vadd.f32 0.0, %v7968
        %v7970 = vpop.f32.mrf.mxu0
        %v7971 = vadd.f32 0.0, %v7970
        %7972 = vmatmul.bf16.gmra.mxu0 %v7937
        %v7973 = vpop.f32.mrf.mxu0
        %v7974 = vadd.f32 0.0, %v7973
        %v7975 = vpop.f32.mrf.mxu0
        %v7976 = vadd.f32 0.0, %v7975
        %7977 = vmatmul.bf16.gmra.mxu0 %v7940
        %v7978 = vpop.f32.mrf.mxu0
        %v7979 = vadd.f32 0.0, %v7978
        %v7980 = vpop.f32.mrf.mxu0
        %v7981 = vadd.f32 0.0, %v7980
        %7982 = vmatmul.bf16.gmra.mxu0 %v7943
        %v7983 = vpop.f32.mrf.mxu0
        %v7984 = vadd.f32 0.0, %v7983
        %v7985 = vpop.f32.mrf.mxu0
        %v7986 = vadd.f32 0.0, %v7985
        %7987 = vmatmul.bf16.gmra.mxu0 %v7946
        %v7988 = vpop.f32.mrf.mxu0
        %v7989 = vadd.f32 0.0, %v7988
        %v7990 = vpop.f32.mrf.mxu0
        %v7991 = vadd.f32 0.0, %v7990
        %7992 = vmatmul.bf16.gmra.mxu0 %v7949
        %v7993 = vpop.f32.mrf.mxu0
        %v7994 = vadd.f32 0.0, %v7993
        %v7995 = vpop.f32.mrf.mxu0
        %v7996 = vadd.f32 0.0, %v7995
        %7997 = vmatmul.bf16.gmra.mxu0 %v7952
        %v7998 = vpop.f32.mrf.mxu0
        %v7999 = vadd.f32 0.0, %v7998
        %v8000 = vpop.f32.mrf.mxu0
        %v8001 = vadd.f32 0.0, %v8000
        %8002 = vdwg.mxu0
        %v8003 = vadd.f32 %v7824, %v7964
        %v8004 = vadd.f32 %v7825, %v7966
        %v8005 = vadd.f32 %v7826, %v7969
        %v8006 = vadd.f32 %v7827, %v7971
        %v8007 = vadd.f32 %v7828, %v7974
        %v8008 = vadd.f32 %v7829, %v7976
        %v8009 = vadd.f32 %v7830, %v7979
        %v8010 = vadd.f32 %v7831, %v7981
        %v8011 = vadd.f32 %v7832, %v7984
        %v8012 = vadd.f32 %v7833, %v7986
        %v8013 = vadd.f32 %v7834, %v7989
        %v8014 = vadd.f32 %v7835, %v7991
        %v8015 = vadd.f32 %v7836, %v7994
        %v8016 = vadd.f32 %v7837, %v7996
        %v8017 = vadd.f32 %v7838, %v7999
        %v8018 = vadd.f32 %v7839, %v8001
        %v8019 = vld [vmem:[%s7840] sm:$0xf]
        %v8020 = vld [vmem:[%s7840 + $0x4] sm:$0xf]
        %v8021 = vld [vmem:[%s7840 + $0x8] sm:$0x1]
        %v8022 = vld [vmem:[%s7840 + $0xc] sm:$0xf]
        %v8023 = vld [vmem:[%s7840 + $0x10] sm:$0xf]
        %v8024 = vld [vmem:[%s7840 + $0x14] sm:$0x1]
        %v8025 = vld [vmem:[%s7840 + $0x18] sm:$0xf]
        %v8026 = vld [vmem:[%s7840 + $0x1c] sm:$0xf]
        %v8027 = vld [vmem:[%s7840 + $0x20] sm:$0x1]
        %v8028 = vld [vmem:[%s7840 + $0x24] sm:$0xf]
        %v8029 = vld [vmem:[%s7840 + $0x28] sm:$0xf]
        %v8030 = vld [vmem:[%s7840 + $0x2c] sm:$0x1]
        %v8031 = vld [vmem:[%s7840 + $0x30] sm:$0xf]
        %v8032 = vld [vmem:[%s7840 + $0x34] sm:$0xf]
        %v8033 = vld [vmem:[%s7840 + $0x38] sm:$0x1]
        %v8034 = vld [vmem:[%s7840 + $0x3c] sm:$0xf]
        %v8035 = vld [vmem:[%s7840 + $0x40] sm:$0xf]
        %v8036 = vld [vmem:[%s7840 + $0x44] sm:$0x1]
        %v8037 = vld [vmem:[%s7840 + $0x48] sm:$0xf]
        %v8038 = vld [vmem:[%s7840 + $0x4c] sm:$0xf]
        %v8039 = vld [vmem:[%s7840 + $0x50] sm:$0x1]
        %v8040 = vld [vmem:[%s7840 + $0x54] sm:$0xf]
        %v8041 = vld [vmem:[%s7840 + $0x58] sm:$0xf]
        %v8042 = vld [vmem:[%s7840 + $0x5c] sm:$0x1]
        %v8044 = vshrl.u32 %v8019, 16
        %v8046 = vrot.slane %v8044, 4
        %v8047 = vshll.u32 %v8019, 16
        %v8049 = vrot.slane %v8047, 5
        %v8050 = vor.u32 %v8046, %v8049
        %v8051 = vrot.slane %v8050, 4
        %v8053 = vshll.u32 %v8020, 16
        %v8055 = vrot.slane %v8053, 5
        %v8056 = vsel %vm529, %v8051, %v8055
        %v8057 = vshrl.u32 %v8020, 16
        %v8059 = vrot.slane %v8057, 4
        %v8060 = vor.u32 %v8059, %v8055
        %v8061 = vrot.slane %v8060, 4
        %v8063 = vshll.u32 %v8021, 16
        %v8065 = vrot.slane %v8063, 5
        %v8066 = vsel %vm529, %v8061, %v8065
        %v8068 = vshrl.u32 %v8022, 16
        %v8070 = vrot.slane %v8068, 4
        %v8071 = vshll.u32 %v8022, 16
        %v8073 = vrot.slane %v8071, 5
        %v8074 = vor.u32 %v8070, %v8073
        %v8075 = vrot.slane %v8074, 4
        %v8077 = vshll.u32 %v8023, 16
        %v8079 = vrot.slane %v8077, 5
        %v8080 = vsel %vm529, %v8075, %v8079
        %v8081 = vshrl.u32 %v8023, 16
        %v8083 = vrot.slane %v8081, 4
        %v8084 = vor.u32 %v8083, %v8079
        %v8085 = vrot.slane %v8084, 4
        %v8087 = vshll.u32 %v8024, 16
        %v8089 = vrot.slane %v8087, 5
        %v8090 = vsel %vm529, %v8085, %v8089
        %v8092 = vshrl.u32 %v8025, 16
        %v8094 = vrot.slane %v8092, 4
        %v8095 = vshll.u32 %v8025, 16
        %v8097 = vrot.slane %v8095, 5
        %v8098 = vor.u32 %v8094, %v8097
        %v8099 = vrot.slane %v8098, 4
        %v8101 = vshll.u32 %v8026, 16
        %v8103 = vrot.slane %v8101, 5
        %v8104 = vsel %vm529, %v8099, %v8103
        %v8105 = vshrl.u32 %v8026, 16
        %v8107 = vrot.slane %v8105, 4
        %v8108 = vor.u32 %v8107, %v8103
        %v8109 = vrot.slane %v8108, 4
        %v8111 = vshll.u32 %v8027, 16
        %v8113 = vrot.slane %v8111, 5
        %v8114 = vsel %vm529, %v8109, %v8113
        %v8116 = vshrl.u32 %v8028, 16
        %v8118 = vrot.slane %v8116, 4
        %v8119 = vshll.u32 %v8028, 16
        %v8121 = vrot.slane %v8119, 5
        %v8122 = vor.u32 %v8118, %v8121
        %v8123 = vrot.slane %v8122, 4
        %v8125 = vshll.u32 %v8029, 16
        %v8127 = vrot.slane %v8125, 5
        %v8128 = vsel %vm529, %v8123, %v8127
        %v8129 = vshrl.u32 %v8029, 16
        %v8131 = vrot.slane %v8129, 4
        %v8132 = vor.u32 %v8131, %v8127
        %v8133 = vrot.slane %v8132, 4
        %v8135 = vshll.u32 %v8030, 16
        %v8137 = vrot.slane %v8135, 5
        %v8138 = vsel %vm529, %v8133, %v8137
        %v8140 = vshrl.u32 %v8031, 16
        %v8142 = vrot.slane %v8140, 4
        %v8143 = vshll.u32 %v8031, 16
        %v8145 = vrot.slane %v8143, 5
        %v8146 = vor.u32 %v8142, %v8145
        %v8147 = vrot.slane %v8146, 4
        %v8149 = vshll.u32 %v8032, 16
        %v8151 = vrot.slane %v8149, 5
        %v8152 = vsel %vm529, %v8147, %v8151
        %v8153 = vshrl.u32 %v8032, 16
        %v8155 = vrot.slane %v8153, 4
        %v8156 = vor.u32 %v8155, %v8151
        %v8157 = vrot.slane %v8156, 4
        %v8159 = vshll.u32 %v8033, 16
        %v8161 = vrot.slane %v8159, 5
        %v8162 = vsel %vm529, %v8157, %v8161
        %v8164 = vshrl.u32 %v8034, 16
        %v8166 = vrot.slane %v8164, 4
        %v8167 = vshll.u32 %v8034, 16
        %v8169 = vrot.slane %v8167, 5
        %v8170 = vor.u32 %v8166, %v8169
        %v8171 = vrot.slane %v8170, 4
        %v8173 = vshll.u32 %v8035, 16
        %v8175 = vrot.slane %v8173, 5
        %v8176 = vsel %vm529, %v8171, %v8175
        %v8177 = vshrl.u32 %v8035, 16
        %v8179 = vrot.slane %v8177, 4
        %v8180 = vor.u32 %v8179, %v8175
        %v8181 = vrot.slane %v8180, 4
        %v8183 = vshll.u32 %v8036, 16
        %v8185 = vrot.slane %v8183, 5
        %v8186 = vsel %vm529, %v8181, %v8185
        %v8188 = vshrl.u32 %v8037, 16
        %v8190 = vrot.slane %v8188, 4
        %v8191 = vshll.u32 %v8037, 16
        %v8193 = vrot.slane %v8191, 5
        %v8194 = vor.u32 %v8190, %v8193
        %v8195 = vrot.slane %v8194, 4
        %v8197 = vshll.u32 %v8038, 16
        %v8199 = vrot.slane %v8197, 5
        %v8200 = vsel %vm529, %v8195, %v8199
        %v8201 = vshrl.u32 %v8038, 16
        %v8203 = vrot.slane %v8201, 4
        %v8204 = vor.u32 %v8203, %v8199
        %v8205 = vrot.slane %v8204, 4
        %v8207 = vshll.u32 %v8039, 16
        %v8209 = vrot.slane %v8207, 5
        %v8210 = vsel %vm529, %v8205, %v8209
        %v8212 = vshrl.u32 %v8040, 16
        %v8214 = vrot.slane %v8212, 4
        %v8215 = vshll.u32 %v8040, 16
        %v8217 = vrot.slane %v8215, 5
        %v8218 = vor.u32 %v8214, %v8217
        %v8219 = vrot.slane %v8218, 4
        %v8221 = vshll.u32 %v8041, 16
        %v8223 = vrot.slane %v8221, 5
        %v8224 = vsel %vm529, %v8219, %v8223
        %v8225 = vshrl.u32 %v8041, 16
        %v8227 = vrot.slane %v8225, 4
        %v8228 = vor.u32 %v8227, %v8223
        %v8229 = vrot.slane %v8228, 4
        %v8231 = vshll.u32 %v8042, 16
        %v8233 = vrot.slane %v8231, 5
        %v8234 = vsel %vm529, %v8229, %v8233
        %s8235 = scalar_lea.vmem %s5, 128
        %v8236 = vld [vmem:[%s8235] sm:$0xf]
        %v8237 = vld [vmem:[%s8235 + $0x4] sm:$0xf]
        %v8238 = vld [vmem:[%s8235 + $0x8] sm:$0xf]
        %v8239 = vld [vmem:[%s8235 + $0xc] sm:$0xf]
        %v8240 = vld [vmem:[%s8235 + $0x10] sm:$0xf]
        %v8241 = vld [vmem:[%s8235 + $0x14] sm:$0xf]
        %v8242 = vld [vmem:[%s8235 + $0x18] sm:$0xf]
        %v8243 = vld [vmem:[%s8235 + $0x1c] sm:$0xf]
        %v8244 = vunpack.c.l.b16 %v8056
        %v8245 = vunpack.c.l.b16 %v8066
        %v8246 = vunpack.c.l.b16 %v8080
        %v8247 = vunpack.c.l.b16 %v8090
        %v8248 = vunpack.c.l.b16 %v8104
        %v8249 = vunpack.c.l.b16 %v8114
        %v8250 = vunpack.c.l.b16 %v8128
        %v8251 = vunpack.c.l.b16 %v8138
        %v8252 = vunpack.c.l.b16 %v8152
        %v8253 = vunpack.c.l.b16 %v8162
        %v8254 = vunpack.c.l.b16 %v8176
        %v8255 = vunpack.c.l.b16 %v8186
        %v8256 = vunpack.c.l.b16 %v8200
        %v8257 = vunpack.c.l.b16 %v8210
        %v8258 = vunpack.c.l.b16 %v8224
        %v8259 = vunpack.c.l.b16 %v8234
        %v8260 = vpack.c.b16 %v8245, %v8244
        %v8261 = vpack.c.b16 %v8247, %v8246
        %v8262 = vpack.c.b16 %v8249, %v8248
        %v8263 = vpack.c.b16 %v8251, %v8250
        %v8264 = vpack.c.b16 %v8253, %v8252
        %v8265 = vpack.c.b16 %v8255, %v8254
        %v8266 = vpack.c.b16 %v8257, %v8256
        %v8267 = vpack.c.b16 %v8259, %v8258
        %v8276 = vunpack.c.l.b16 %v8236
        %v8277 = vunpack.c.l.b16 %v8237
        %v8278 = vunpack.c.l.b16 %v8238
        %v8279 = vunpack.c.l.b16 %v8239
        %v8280 = vunpack.c.l.b16 %v8240
        %v8281 = vunpack.c.l.b16 %v8241
        %v8282 = vunpack.c.l.b16 %v8242
        %v8283 = vunpack.c.l.b16 %v8243
        %v8284 = vpack.c.b16 %v8277, %v8276
        %v8285 = vpack.c.b16 %v8279, %v8278
        %v8286 = vpack.c.b16 %v8281, %v8280
        %v8287 = vpack.c.b16 %v8283, %v8282
        %v8293 = vsel %vm4309, %v8260, 0
        %v8296 = vsel %vm4309, %v8261, 0
        %v8299 = vsel %vm4309, %v8262, 0
        %v8302 = vsel %vm4309, %v8263, 0
        %v8305 = vsel %vm4309, %v8264, 0
        %v8308 = vsel %vm4309, %v8265, 0
        %v8311 = vsel %vm4309, %v8266, 0
        %v8314 = vsel %vm4309, %v8267, 0
        %8316 = vmatpush.bf16.msra.mxu0 0
        %8317 = vmatpush.bf16.msra.mxu0 0
        %8318 = vmatpush.bf16.msra.mxu0 0
        %8319 = vmatpush.bf16.msra.mxu0 0
        %8320 = vmatpush.bf16.msra.mxu0 %v8287
        %8321 = vmatpush.bf16.msra.mxu0 %v8286
        %8322 = vmatpush.bf16.msra.mxu0 %v8285
        %8323 = vmatpush.bf16.msra.mxu0 %v8284
        %8324 = vmatmul.bf16.gmra.mxu0 %v8293
        %v8325 = vpop.f32.mrf.mxu0
        %v8326 = vadd.f32 0.0, %v8325
        %v8327 = vpop.f32.mrf.mxu0
        %v8328 = vadd.f32 0.0, %v8327
        %8329 = vmatmul.bf16.gmra.mxu0 %v8296
        %v8330 = vpop.f32.mrf.mxu0
        %v8331 = vadd.f32 0.0, %v8330
        %v8332 = vpop.f32.mrf.mxu0
        %v8333 = vadd.f32 0.0, %v8332
        %8334 = vmatmul.bf16.gmra.mxu0 %v8299
        %v8335 = vpop.f32.mrf.mxu0
        %v8336 = vadd.f32 0.0, %v8335
        %v8337 = vpop.f32.mrf.mxu0
        %v8338 = vadd.f32 0.0, %v8337
        %8339 = vmatmul.bf16.gmra.mxu0 %v8302
        %v8340 = vpop.f32.mrf.mxu0
        %v8341 = vadd.f32 0.0, %v8340
        %v8342 = vpop.f32.mrf.mxu0
        %v8343 = vadd.f32 0.0, %v8342
        %8344 = vmatmul.bf16.gmra.mxu0 %v8305
        %v8345 = vpop.f32.mrf.mxu0
        %v8346 = vadd.f32 0.0, %v8345
        %v8347 = vpop.f32.mrf.mxu0
        %v8348 = vadd.f32 0.0, %v8347
        %8349 = vmatmul.bf16.gmra.mxu0 %v8308
        %v8350 = vpop.f32.mrf.mxu0
        %v8351 = vadd.f32 0.0, %v8350
        %v8352 = vpop.f32.mrf.mxu0
        %v8353 = vadd.f32 0.0, %v8352
        %8354 = vmatmul.bf16.gmra.mxu0 %v8311
        %v8355 = vpop.f32.mrf.mxu0
        %v8356 = vadd.f32 0.0, %v8355
        %v8357 = vpop.f32.mrf.mxu0
        %v8358 = vadd.f32 0.0, %v8357
        %8359 = vmatmul.bf16.gmra.mxu0 %v8314
        %v8360 = vpop.f32.mrf.mxu0
        %v8361 = vadd.f32 0.0, %v8360
        %v8362 = vpop.f32.mrf.mxu0
        %v8363 = vadd.f32 0.0, %v8362
        %8364 = vdwg.mxu0
        %v8365 = vadd.f32 %v8003, %v8326
        %v8366 = vadd.f32 %v8004, %v8328
        %v8367 = vadd.f32 %v8005, %v8331
        %v8368 = vadd.f32 %v8006, %v8333
        %v8369 = vadd.f32 %v8007, %v8336
        %v8370 = vadd.f32 %v8008, %v8338
        %v8371 = vadd.f32 %v8009, %v8341
        %v8372 = vadd.f32 %v8010, %v8343
        %v8373 = vadd.f32 %v8011, %v8346
        %v8374 = vadd.f32 %v8012, %v8348
        %v8375 = vadd.f32 %v8013, %v8351
        %v8376 = vadd.f32 %v8014, %v8353
        %v8377 = vadd.f32 %v8015, %v8356
        %v8378 = vadd.f32 %v8016, %v8358
        %v8379 = vadd.f32 %v8017, %v8361
        %v8380 = vadd.f32 %v8018, %v8363
        %v8381 = vld [vmem:[%s7840] sm:$0xe]
        %v8382 = vld [vmem:[%s7840 + $0xc] sm:$0xe]
        %v8383 = vld [vmem:[%s7840 + $0x18] sm:$0xe]
        %v8384 = vld [vmem:[%s7840 + $0x24] sm:$0xe]
        %v8385 = vld [vmem:[%s7840 + $0x30] sm:$0xe]
        %v8386 = vld [vmem:[%s7840 + $0x3c] sm:$0xe]
        %v8387 = vld [vmem:[%s7840 + $0x48] sm:$0xe]
        %v8388 = vld [vmem:[%s7840 + $0x54] sm:$0xe]
        %v8413 = vrot.slane %v8381, 5
        %v8414 = vrot.slane %v8413, 4
        %v8415 = vrot.slane %v8020, 5
        %v8416 = vsel %vm1175, %v8414, %v8415
        %v8417 = vrot.slane %v8415, 4
        %v8418 = vrot.slane %v8021, 5
        %v8419 = vsel %vm1175, %v8417, %v8418
        %v8420 = vrot.slane %v8382, 5
        %v8421 = vrot.slane %v8420, 4
        %v8422 = vrot.slane %v8023, 5
        %v8423 = vsel %vm1175, %v8421, %v8422
        %v8424 = vrot.slane %v8422, 4
        %v8425 = vrot.slane %v8024, 5
        %v8426 = vsel %vm1175, %v8424, %v8425
        %v8427 = vrot.slane %v8383, 5
        %v8428 = vrot.slane %v8427, 4
        %v8429 = vrot.slane %v8026, 5
        %v8430 = vsel %vm1175, %v8428, %v8429
        %v8431 = vrot.slane %v8429, 4
        %v8432 = vrot.slane %v8027, 5
        %v8433 = vsel %vm1175, %v8431, %v8432
        %v8434 = vrot.slane %v8384, 5
        %v8435 = vrot.slane %v8434, 4
        %v8436 = vrot.slane %v8029, 5
        %v8437 = vsel %vm1175, %v8435, %v8436
        %v8438 = vrot.slane %v8436, 4
        %v8439 = vrot.slane %v8030, 5
        %v8440 = vsel %vm1175, %v8438, %v8439
        %v8441 = vrot.slane %v8385, 5
        %v8442 = vrot.slane %v8441, 4
        %v8443 = vrot.slane %v8032, 5
        %v8444 = vsel %vm1175, %v8442, %v8443
        %v8445 = vrot.slane %v8443, 4
        %v8446 = vrot.slane %v8033, 5
        %v8447 = vsel %vm1175, %v8445, %v8446
        %v8448 = vrot.slane %v8386, 5
        %v8449 = vrot.slane %v8448, 4
        %v8450 = vrot.slane %v8035, 5
        %v8451 = vsel %vm1175, %v8449, %v8450
        %v8452 = vrot.slane %v8450, 4
        %v8453 = vrot.slane %v8036, 5
        %v8454 = vsel %vm1175, %v8452, %v8453
        %v8455 = vrot.slane %v8387, 5
        %v8456 = vrot.slane %v8455, 4
        %v8457 = vrot.slane %v8038, 5
        %v8458 = vsel %vm1175, %v8456, %v8457
        %v8459 = vrot.slane %v8457, 4
        %v8460 = vrot.slane %v8039, 5
        %v8461 = vsel %vm1175, %v8459, %v8460
        %v8462 = vrot.slane %v8388, 5
        %v8463 = vrot.slane %v8462, 4
        %v8464 = vrot.slane %v8041, 5
        %v8465 = vsel %vm1175, %v8463, %v8464
        %v8466 = vrot.slane %v8464, 4
        %v8467 = vrot.slane %v8042, 5
        %v8468 = vsel %vm1175, %v8466, %v8467
        %s8469 = scalar_lea.vmem %s5, 160
        %v8470 = vld [vmem:[%s8469] sm:$0xf]
        %v8471 = vld [vmem:[%s8469 + $0x4] sm:$0xf]
        %v8472 = vld [vmem:[%s8469 + $0x8] sm:$0xf]
        %v8473 = vld [vmem:[%s8469 + $0xc] sm:$0xf]
        %v8474 = vld [vmem:[%s8469 + $0x10] sm:$0xf]
        %v8475 = vld [vmem:[%s8469 + $0x14] sm:$0xf]
        %v8476 = vld [vmem:[%s8469 + $0x18] sm:$0xf]
        %v8477 = vld [vmem:[%s8469 + $0x1c] sm:$0xf]
        %v8478 = vunpack.c.l.b16 %v8416
        %v8479 = vunpack.c.l.b16 %v8419
        %v8480 = vunpack.c.l.b16 %v8423
        %v8481 = vunpack.c.l.b16 %v8426
        %v8482 = vunpack.c.l.b16 %v8430
        %v8483 = vunpack.c.l.b16 %v8433
        %v8484 = vunpack.c.l.b16 %v8437
        %v8485 = vunpack.c.l.b16 %v8440
        %v8486 = vunpack.c.l.b16 %v8444
        %v8487 = vunpack.c.l.b16 %v8447
        %v8488 = vunpack.c.l.b16 %v8451
        %v8489 = vunpack.c.l.b16 %v8454
        %v8490 = vunpack.c.l.b16 %v8458
        %v8491 = vunpack.c.l.b16 %v8461
        %v8492 = vunpack.c.l.b16 %v8465
        %v8493 = vunpack.c.l.b16 %v8468
        %v8494 = vpack.c.b16 %v8479, %v8478
        %v8495 = vpack.c.b16 %v8481, %v8480
        %v8496 = vpack.c.b16 %v8483, %v8482
        %v8497 = vpack.c.b16 %v8485, %v8484
        %v8498 = vpack.c.b16 %v8487, %v8486
        %v8499 = vpack.c.b16 %v8489, %v8488
        %v8500 = vpack.c.b16 %v8491, %v8490
        %v8501 = vpack.c.b16 %v8493, %v8492
        %v8510 = vunpack.c.l.b16 %v8470
        %v8511 = vunpack.c.l.b16 %v8471
        %v8512 = vunpack.c.l.b16 %v8472
        %v8513 = vunpack.c.l.b16 %v8473
        %v8514 = vunpack.c.l.b16 %v8474
        %v8515 = vunpack.c.l.b16 %v8475
        %v8516 = vunpack.c.l.b16 %v8476
        %v8517 = vunpack.c.l.b16 %v8477
        %v8518 = vpack.c.b16 %v8511, %v8510
        %v8519 = vpack.c.b16 %v8513, %v8512
        %v8520 = vpack.c.b16 %v8515, %v8514
        %v8521 = vpack.c.b16 %v8517, %v8516
        %v8527 = vsel %vm4309, %v8494, 0
        %v8530 = vsel %vm4309, %v8495, 0
        %v8533 = vsel %vm4309, %v8496, 0
        %v8536 = vsel %vm4309, %v8497, 0
        %v8539 = vsel %vm4309, %v8498, 0
        %v8542 = vsel %vm4309, %v8499, 0
        %v8545 = vsel %vm4309, %v8500, 0
        %v8548 = vsel %vm4309, %v8501, 0
        %8550 = vmatpush.bf16.msra.mxu0 0
        %8551 = vmatpush.bf16.msra.mxu0 0
        %8552 = vmatpush.bf16.msra.mxu0 0
        %8553 = vmatpush.bf16.msra.mxu0 0
        %8554 = vmatpush.bf16.msra.mxu0 %v8521
        %8555 = vmatpush.bf16.msra.mxu0 %v8520
        %8556 = vmatpush.bf16.msra.mxu0 %v8519
        %8557 = vmatpush.bf16.msra.mxu0 %v8518
        %8558 = vmatmul.bf16.gmra.mxu0 %v8527
        %v8559 = vpop.f32.mrf.mxu0
        %v8560 = vadd.f32 0.0, %v8559
        %v8561 = vpop.f32.mrf.mxu0
        %v8562 = vadd.f32 0.0, %v8561
        %8563 = vmatmul.bf16.gmra.mxu0 %v8530
        %v8564 = vpop.f32.mrf.mxu0
        %v8565 = vadd.f32 0.0, %v8564
        %v8566 = vpop.f32.mrf.mxu0
        %v8567 = vadd.f32 0.0, %v8566
        %8568 = vmatmul.bf16.gmra.mxu0 %v8533
        %v8569 = vpop.f32.mrf.mxu0
        %v8570 = vadd.f32 0.0, %v8569
        %v8571 = vpop.f32.mrf.mxu0
        %v8572 = vadd.f32 0.0, %v8571
        %8573 = vmatmul.bf16.gmra.mxu0 %v8536
        %v8574 = vpop.f32.mrf.mxu0
        %v8575 = vadd.f32 0.0, %v8574
        %v8576 = vpop.f32.mrf.mxu0
        %v8577 = vadd.f32 0.0, %v8576
        %8578 = vmatmul.bf16.gmra.mxu0 %v8539
        %v8579 = vpop.f32.mrf.mxu0
        %v8580 = vadd.f32 0.0, %v8579
        %v8581 = vpop.f32.mrf.mxu0
        %v8582 = vadd.f32 0.0, %v8581
        %8583 = vmatmul.bf16.gmra.mxu0 %v8542
        %v8584 = vpop.f32.mrf.mxu0
        %v8585 = vadd.f32 0.0, %v8584
        %v8586 = vpop.f32.mrf.mxu0
        %v8587 = vadd.f32 0.0, %v8586
        %8588 = vmatmul.bf16.gmra.mxu0 %v8545
        %v8589 = vpop.f32.mrf.mxu0
        %v8590 = vadd.f32 0.0, %v8589
        %v8591 = vpop.f32.mrf.mxu0
        %v8592 = vadd.f32 0.0, %v8591
        %8593 = vmatmul.bf16.gmra.mxu0 %v8548
        %v8594 = vpop.f32.mrf.mxu0
        %v8595 = vadd.f32 0.0, %v8594
        %v8596 = vpop.f32.mrf.mxu0
        %v8597 = vadd.f32 0.0, %v8596
        %8598 = vdwg.mxu0
        %v8599 = vadd.f32 %v8365, %v8560
        %v8600 = vadd.f32 %v8366, %v8562
        %v8601 = vadd.f32 %v8367, %v8565
        %v8602 = vadd.f32 %v8368, %v8567
        %v8603 = vadd.f32 %v8369, %v8570
        %v8604 = vadd.f32 %v8370, %v8572
        %v8605 = vadd.f32 %v8371, %v8575
        %v8606 = vadd.f32 %v8372, %v8577
        %v8607 = vadd.f32 %v8373, %v8580
        %v8608 = vadd.f32 %v8374, %v8582
        %v8609 = vadd.f32 %v8375, %v8585
        %v8610 = vadd.f32 %v8376, %v8587
        %v8611 = vadd.f32 %v8377, %v8590
        %v8612 = vadd.f32 %v8378, %v8592
        %v8613 = vadd.f32 %v8379, %v8595
        %v8614 = vadd.f32 %v8380, %v8597
        %s8615 = scalar_lea.vmem [#allocation3], 24
        %v8616 = vld [vmem:[%s8615] sm:$0xf]
        %v8617 = vld [vmem:[%s8615 + $0x4] sm:$0xf]
        %v8618 = vld [vmem:[%s8615 + $0xc] sm:$0xf]
        %v8619 = vld [vmem:[%s8615 + $0x10] sm:$0xf]
        %v8620 = vld [vmem:[%s8615 + $0x18] sm:$0xf]
        %v8621 = vld [vmem:[%s8615 + $0x1c] sm:$0xf]
        %v8622 = vld [vmem:[%s8615 + $0x24] sm:$0xf]
        %v8623 = vld [vmem:[%s8615 + $0x28] sm:$0xf]
        %v8624 = vld [vmem:[%s8615 + $0x30] sm:$0xf]
        %v8625 = vld [vmem:[%s8615 + $0x34] sm:$0xf]
        %v8626 = vld [vmem:[%s8615 + $0x3c] sm:$0xf]
        %v8627 = vld [vmem:[%s8615 + $0x40] sm:$0xf]
        %v8628 = vld [vmem:[%s8615 + $0x48] sm:$0xf]
        %v8629 = vld [vmem:[%s8615 + $0x4c] sm:$0xf]
        %v8630 = vld [vmem:[%s8615 + $0x54] sm:$0xf]
        %v8631 = vld [vmem:[%s8615 + $0x58] sm:$0xf]
        %s8632 = scalar_lea.vmem %s5, 192
        %v8633 = vld [vmem:[%s8632] sm:$0xf]
        %v8634 = vld [vmem:[%s8632 + $0x4] sm:$0xf]
        %v8635 = vld [vmem:[%s8632 + $0x8] sm:$0xf]
        %v8636 = vld [vmem:[%s8632 + $0xc] sm:$0xf]
        %v8637 = vld [vmem:[%s8632 + $0x10] sm:$0xf]
        %v8638 = vld [vmem:[%s8632 + $0x14] sm:$0xf]
        %v8639 = vld [vmem:[%s8632 + $0x18] sm:$0xf]
        %v8640 = vld [vmem:[%s8632 + $0x1c] sm:$0xf]
        %v8657 = vunpack.c.l.b16 %v8616
        %v8658 = vunpack.c.l.b16 %v8617
        %v8659 = vunpack.c.l.b16 %v8618
        %v8660 = vunpack.c.l.b16 %v8619
        %v8661 = vunpack.c.l.b16 %v8620
        %v8662 = vunpack.c.l.b16 %v8621
        %v8663 = vunpack.c.l.b16 %v8622
        %v8664 = vunpack.c.l.b16 %v8623
        %v8665 = vunpack.c.l.b16 %v8624
        %v8666 = vunpack.c.l.b16 %v8625
        %v8667 = vunpack.c.l.b16 %v8626
        %v8668 = vunpack.c.l.b16 %v8627
        %v8669 = vunpack.c.l.b16 %v8628
        %v8670 = vunpack.c.l.b16 %v8629
        %v8671 = vunpack.c.l.b16 %v8630
        %v8672 = vunpack.c.l.b16 %v8631
        %v8673 = vpack.c.b16 %v8658, %v8657
        %v8674 = vpack.c.b16 %v8660, %v8659
        %v8675 = vpack.c.b16 %v8662, %v8661
        %v8676 = vpack.c.b16 %v8664, %v8663
        %v8677 = vpack.c.b16 %v8666, %v8665
        %v8678 = vpack.c.b16 %v8668, %v8667
        %v8679 = vpack.c.b16 %v8670, %v8669
        %v8680 = vpack.c.b16 %v8672, %v8671
        %v8689 = vunpack.c.l.b16 %v8633
        %v8690 = vunpack.c.l.b16 %v8634
        %v8691 = vunpack.c.l.b16 %v8635
        %v8692 = vunpack.c.l.b16 %v8636
        %v8693 = vunpack.c.l.b16 %v8637
        %v8694 = vunpack.c.l.b16 %v8638
        %v8695 = vunpack.c.l.b16 %v8639
        %v8696 = vunpack.c.l.b16 %v8640
        %v8697 = vpack.c.b16 %v8690, %v8689
        %v8698 = vpack.c.b16 %v8692, %v8691
        %v8699 = vpack.c.b16 %v8694, %v8693
        %v8700 = vpack.c.b16 %v8696, %v8695
        %v8706 = vsel %vm4309, %v8673, 0
        %v8709 = vsel %vm4309, %v8674, 0
        %v8712 = vsel %vm4309, %v8675, 0
        %v8715 = vsel %vm4309, %v8676, 0
        %v8718 = vsel %vm4309, %v8677, 0
        %v8721 = vsel %vm4309, %v8678, 0
        %v8724 = vsel %vm4309, %v8679, 0
        %v8727 = vsel %vm4309, %v8680, 0
        %8729 = vmatpush.bf16.msra.mxu0 0
        %8730 = vmatpush.bf16.msra.mxu0 0
        %8731 = vmatpush.bf16.msra.mxu0 0
        %8732 = vmatpush.bf16.msra.mxu0 0
        %8733 = vmatpush.bf16.msra.mxu0 %v8700
        %8734 = vmatpush.bf16.msra.mxu0 %v8699
        %8735 = vmatpush.bf16.msra.mxu0 %v8698
        %8736 = vmatpush.bf16.msra.mxu0 %v8697
        %8737 = vmatmul.bf16.gmra.mxu0 %v8706
        %v8738 = vpop.f32.mrf.mxu0
        %v8739 = vadd.f32 0.0, %v8738
        %v8740 = vpop.f32.mrf.mxu0
        %v8741 = vadd.f32 0.0, %v8740
        %8742 = vmatmul.bf16.gmra.mxu0 %v8709
        %v8743 = vpop.f32.mrf.mxu0
        %v8744 = vadd.f32 0.0, %v8743
        %v8745 = vpop.f32.mrf.mxu0
        %v8746 = vadd.f32 0.0, %v8745
        %8747 = vmatmul.bf16.gmra.mxu0 %v8712
        %v8748 = vpop.f32.mrf.mxu0
        %v8749 = vadd.f32 0.0, %v8748
        %v8750 = vpop.f32.mrf.mxu0
        %v8751 = vadd.f32 0.0, %v8750
        %8752 = vmatmul.bf16.gmra.mxu0 %v8715
        %v8753 = vpop.f32.mrf.mxu0
        %v8754 = vadd.f32 0.0, %v8753
        %v8755 = vpop.f32.mrf.mxu0
        %v8756 = vadd.f32 0.0, %v8755
        %8757 = vmatmul.bf16.gmra.mxu0 %v8718
        %v8758 = vpop.f32.mrf.mxu0
        %v8759 = vadd.f32 0.0, %v8758
        %v8760 = vpop.f32.mrf.mxu0
        %v8761 = vadd.f32 0.0, %v8760
        %8762 = vmatmul.bf16.gmra.mxu0 %v8721
        %v8763 = vpop.f32.mrf.mxu0
        %v8764 = vadd.f32 0.0, %v8763
        %v8765 = vpop.f32.mrf.mxu0
        %v8766 = vadd.f32 0.0, %v8765
        %8767 = vmatmul.bf16.gmra.mxu0 %v8724
        %v8768 = vpop.f32.mrf.mxu0
        %v8769 = vadd.f32 0.0, %v8768
        %v8770 = vpop.f32.mrf.mxu0
        %v8771 = vadd.f32 0.0, %v8770
        %8772 = vmatmul.bf16.gmra.mxu0 %v8727
        %v8773 = vpop.f32.mrf.mxu0
        %v8774 = vadd.f32 0.0, %v8773
        %v8775 = vpop.f32.mrf.mxu0
        %v8776 = vadd.f32 0.0, %v8775
        %8777 = vdwg.mxu0
        %v8778 = vadd.f32 %v8599, %v8739
        %v8779 = vadd.f32 %v8600, %v8741
        %v8780 = vadd.f32 %v8601, %v8744
        %v8781 = vadd.f32 %v8602, %v8746
        %v8782 = vadd.f32 %v8603, %v8749
        %v8783 = vadd.f32 %v8604, %v8751
        %v8784 = vadd.f32 %v8605, %v8754
        %v8785 = vadd.f32 %v8606, %v8756
        %v8786 = vadd.f32 %v8607, %v8759
        %v8787 = vadd.f32 %v8608, %v8761
        %v8788 = vadd.f32 %v8609, %v8764
        %v8789 = vadd.f32 %v8610, %v8766
        %v8790 = vadd.f32 %v8611, %v8769
        %v8791 = vadd.f32 %v8612, %v8771
        %v8792 = vadd.f32 %v8613, %v8774
        %v8793 = vadd.f32 %v8614, %v8776
        %v8794 = vld [vmem:[%s8615] sm:$0xf]
        %v8795 = vld [vmem:[%s8615 + $0x4] sm:$0xf]
        %v8796 = vld [vmem:[%s8615 + $0x8] sm:$0x1]
        %v8797 = vld [vmem:[%s8615 + $0xc] sm:$0xf]
        %v8798 = vld [vmem:[%s8615 + $0x10] sm:$0xf]
        %v8799 = vld [vmem:[%s8615 + $0x14] sm:$0x1]
        %v8800 = vld [vmem:[%s8615 + $0x18] sm:$0xf]
        %v8801 = vld [vmem:[%s8615 + $0x1c] sm:$0xf]
        %v8802 = vld [vmem:[%s8615 + $0x20] sm:$0x1]
        %v8803 = vld [vmem:[%s8615 + $0x24] sm:$0xf]
        %v8804 = vld [vmem:[%s8615 + $0x28] sm:$0xf]
        %v8805 = vld [vmem:[%s8615 + $0x2c] sm:$0x1]
        %v8806 = vld [vmem:[%s8615 + $0x30] sm:$0xf]
        %v8807 = vld [vmem:[%s8615 + $0x34] sm:$0xf]
        %v8808 = vld [vmem:[%s8615 + $0x38] sm:$0x1]
        %v8809 = vld [vmem:[%s8615 + $0x3c] sm:$0xf]
        %v8810 = vld [vmem:[%s8615 + $0x40] sm:$0xf]
        %v8811 = vld [vmem:[%s8615 + $0x44] sm:$0x1]
        %v8812 = vld [vmem:[%s8615 + $0x48] sm:$0xf]
        %v8813 = vld [vmem:[%s8615 + $0x4c] sm:$0xf]
        %v8814 = vld [vmem:[%s8615 + $0x50] sm:$0x1]
        %v8815 = vld [vmem:[%s8615 + $0x54] sm:$0xf]
        %v8816 = vld [vmem:[%s8615 + $0x58] sm:$0xf]
        %v8817 = vld [vmem:[%s8615 + $0x5c] sm:$0x1]
        %v8819 = vshrl.u32 %v8794, 16
        %v8821 = vrot.slane %v8819, 4
        %v8822 = vshll.u32 %v8794, 16
        %v8824 = vrot.slane %v8822, 5
        %v8825 = vor.u32 %v8821, %v8824
        %v8826 = vrot.slane %v8825, 4
        %v8828 = vshll.u32 %v8795, 16
        %v8830 = vrot.slane %v8828, 5
        %v8831 = vsel %vm529, %v8826, %v8830
        %v8832 = vshrl.u32 %v8795, 16
        %v8834 = vrot.slane %v8832, 4
        %v8835 = vor.u32 %v8834, %v8830
        %v8836 = vrot.slane %v8835, 4
        %v8838 = vshll.u32 %v8796, 16
        %v8840 = vrot.slane %v8838, 5
        %v8841 = vsel %vm529, %v8836, %v8840
        %v8843 = vshrl.u32 %v8797, 16
        %v8845 = vrot.slane %v8843, 4
        %v8846 = vshll.u32 %v8797, 16
        %v8848 = vrot.slane %v8846, 5
        %v8849 = vor.u32 %v8845, %v8848
        %v8850 = vrot.slane %v8849, 4
        %v8852 = vshll.u32 %v8798, 16
        %v8854 = vrot.slane %v8852, 5
        %v8855 = vsel %vm529, %v8850, %v8854
        %v8856 = vshrl.u32 %v8798, 16
        %v8858 = vrot.slane %v8856, 4
        %v8859 = vor.u32 %v8858, %v8854
        %v8860 = vrot.slane %v8859, 4
        %v8862 = vshll.u32 %v8799, 16
        %v8864 = vrot.slane %v8862, 5
        %v8865 = vsel %vm529, %v8860, %v8864
        %v8867 = vshrl.u32 %v8800, 16
        %v8869 = vrot.slane %v8867, 4
        %v8870 = vshll.u32 %v8800, 16
        %v8872 = vrot.slane %v8870, 5
        %v8873 = vor.u32 %v8869, %v8872
        %v8874 = vrot.slane %v8873, 4
        %v8876 = vshll.u32 %v8801, 16
        %v8878 = vrot.slane %v8876, 5
        %v8879 = vsel %vm529, %v8874, %v8878
        %v8880 = vshrl.u32 %v8801, 16
        %v8882 = vrot.slane %v8880, 4
        %v8883 = vor.u32 %v8882, %v8878
        %v8884 = vrot.slane %v8883, 4
        %v8886 = vshll.u32 %v8802, 16
        %v8888 = vrot.slane %v8886, 5
        %v8889 = vsel %vm529, %v8884, %v8888
        %v8891 = vshrl.u32 %v8803, 16
        %v8893 = vrot.slane %v8891, 4
        %v8894 = vshll.u32 %v8803, 16
        %v8896 = vrot.slane %v8894, 5
        %v8897 = vor.u32 %v8893, %v8896
        %v8898 = vrot.slane %v8897, 4
        %v8900 = vshll.u32 %v8804, 16
        %v8902 = vrot.slane %v8900, 5
        %v8903 = vsel %vm529, %v8898, %v8902
        %v8904 = vshrl.u32 %v8804, 16
        %v8906 = vrot.slane %v8904, 4
        %v8907 = vor.u32 %v8906, %v8902
        %v8908 = vrot.slane %v8907, 4
        %v8910 = vshll.u32 %v8805, 16
        %v8912 = vrot.slane %v8910, 5
        %v8913 = vsel %vm529, %v8908, %v8912
        %v8915 = vshrl.u32 %v8806, 16
        %v8917 = vrot.slane %v8915, 4
        %v8918 = vshll.u32 %v8806, 16
        %v8920 = vrot.slane %v8918, 5
        %v8921 = vor.u32 %v8917, %v8920
        %v8922 = vrot.slane %v8921, 4
        %v8924 = vshll.u32 %v8807, 16
        %v8926 = vrot.slane %v8924, 5
        %v8927 = vsel %vm529, %v8922, %v8926
        %v8928 = vshrl.u32 %v8807, 16
        %v8930 = vrot.slane %v8928, 4
        %v8931 = vor.u32 %v8930, %v8926
        %v8932 = vrot.slane %v8931, 4
        %v8934 = vshll.u32 %v8808, 16
        %v8936 = vrot.slane %v8934, 5
        %v8937 = vsel %vm529, %v8932, %v8936
        %v8939 = vshrl.u32 %v8809, 16
        %v8941 = vrot.slane %v8939, 4
        %v8942 = vshll.u32 %v8809, 16
        %v8944 = vrot.slane %v8942, 5
        %v8945 = vor.u32 %v8941, %v8944
        %v8946 = vrot.slane %v8945, 4
        %v8948 = vshll.u32 %v8810, 16
        %v8950 = vrot.slane %v8948, 5
        %v8951 = vsel %vm529, %v8946, %v8950
        %v8952 = vshrl.u32 %v8810, 16
        %v8954 = vrot.slane %v8952, 4
        %v8955 = vor.u32 %v8954, %v8950
        %v8956 = vrot.slane %v8955, 4
        %v8958 = vshll.u32 %v8811, 16
        %v8960 = vrot.slane %v8958, 5
        %v8961 = vsel %vm529, %v8956, %v8960
        %v8963 = vshrl.u32 %v8812, 16
        %v8965 = vrot.slane %v8963, 4
        %v8966 = vshll.u32 %v8812, 16
        %v8968 = vrot.slane %v8966, 5
        %v8969 = vor.u32 %v8965, %v8968
        %v8970 = vrot.slane %v8969, 4
        %v8972 = vshll.u32 %v8813, 16
        %v8974 = vrot.slane %v8972, 5
        %v8975 = vsel %vm529, %v8970, %v8974
        %v8976 = vshrl.u32 %v8813, 16
        %v8978 = vrot.slane %v8976, 4
        %v8979 = vor.u32 %v8978, %v8974
        %v8980 = vrot.slane %v8979, 4
        %v8982 = vshll.u32 %v8814, 16
        %v8984 = vrot.slane %v8982, 5
        %v8985 = vsel %vm529, %v8980, %v8984
        %v8987 = vshrl.u32 %v8815, 16
        %v8989 = vrot.slane %v8987, 4
        %v8990 = vshll.u32 %v8815, 16
        %v8992 = vrot.slane %v8990, 5
        %v8993 = vor.u32 %v8989, %v8992
        %v8994 = vrot.slane %v8993, 4
        %v8996 = vshll.u32 %v8816, 16
        %v8998 = vrot.slane %v8996, 5
        %v8999 = vsel %vm529, %v8994, %v8998
        %v9000 = vshrl.u32 %v8816, 16
        %v9002 = vrot.slane %v9000, 4
        %v9003 = vor.u32 %v9002, %v8998
        %v9004 = vrot.slane %v9003, 4
        %v9006 = vshll.u32 %v8817, 16
        %v9008 = vrot.slane %v9006, 5
        %v9009 = vsel %vm529, %v9004, %v9008
        %s9010 = scalar_lea.vmem %s5, 224
        %v9011 = vld [vmem:[%s9010] sm:$0xf]
        %v9012 = vld [vmem:[%s9010 + $0x4] sm:$0xf]
        %v9013 = vld [vmem:[%s9010 + $0x8] sm:$0xf]
        %v9014 = vld [vmem:[%s9010 + $0xc] sm:$0xf]
        %v9015 = vld [vmem:[%s9010 + $0x10] sm:$0xf]
        %v9016 = vld [vmem:[%s9010 + $0x14] sm:$0xf]
        %v9017 = vld [vmem:[%s9010 + $0x18] sm:$0xf]
        %v9018 = vld [vmem:[%s9010 + $0x1c] sm:$0xf]
        %v9019 = vunpack.c.l.b16 %v8831
        %v9020 = vunpack.c.l.b16 %v8841
        %v9021 = vunpack.c.l.b16 %v8855
        %v9022 = vunpack.c.l.b16 %v8865
        %v9023 = vunpack.c.l.b16 %v8879
        %v9024 = vunpack.c.l.b16 %v8889
        %v9025 = vunpack.c.l.b16 %v8903
        %v9026 = vunpack.c.l.b16 %v8913
        %v9027 = vunpack.c.l.b16 %v8927
        %v9028 = vunpack.c.l.b16 %v8937
        %v9029 = vunpack.c.l.b16 %v8951
        %v9030 = vunpack.c.l.b16 %v8961
        %v9031 = vunpack.c.l.b16 %v8975
        %v9032 = vunpack.c.l.b16 %v8985
        %v9033 = vunpack.c.l.b16 %v8999
        %v9034 = vunpack.c.l.b16 %v9009
        %v9035 = vpack.c.b16 %v9020, %v9019
        %v9036 = vpack.c.b16 %v9022, %v9021
        %v9037 = vpack.c.b16 %v9024, %v9023
        %v9038 = vpack.c.b16 %v9026, %v9025
        %v9039 = vpack.c.b16 %v9028, %v9027
        %v9040 = vpack.c.b16 %v9030, %v9029
        %v9041 = vpack.c.b16 %v9032, %v9031
        %v9042 = vpack.c.b16 %v9034, %v9033
        %v9051 = vunpack.c.l.b16 %v9011
        %v9052 = vunpack.c.l.b16 %v9012
        %v9053 = vunpack.c.l.b16 %v9013
        %v9054 = vunpack.c.l.b16 %v9014
        %v9055 = vunpack.c.l.b16 %v9015
        %v9056 = vunpack.c.l.b16 %v9016
        %v9057 = vunpack.c.l.b16 %v9017
        %v9058 = vunpack.c.l.b16 %v9018
        %v9059 = vpack.c.b16 %v9052, %v9051
        %v9060 = vpack.c.b16 %v9054, %v9053
        %v9061 = vpack.c.b16 %v9056, %v9055
        %v9062 = vpack.c.b16 %v9058, %v9057
        %v9068 = vsel %vm4309, %v9035, 0
        %v9071 = vsel %vm4309, %v9036, 0
        %v9074 = vsel %vm4309, %v9037, 0
        %v9077 = vsel %vm4309, %v9038, 0
        %v9080 = vsel %vm4309, %v9039, 0
        %v9083 = vsel %vm4309, %v9040, 0
        %v9086 = vsel %vm4309, %v9041, 0
        %v9089 = vsel %vm4309, %v9042, 0
        %9091 = vmatpush.bf16.msra.mxu0 0
        %9092 = vmatpush.bf16.msra.mxu0 0
        %9093 = vmatpush.bf16.msra.mxu0 0
        %9094 = vmatpush.bf16.msra.mxu0 0
        %9095 = vmatpush.bf16.msra.mxu0 %v9062
        %9096 = vmatpush.bf16.msra.mxu0 %v9061
        %9097 = vmatpush.bf16.msra.mxu0 %v9060
        %9098 = vmatpush.bf16.msra.mxu0 %v9059
        %9099 = vmatmul.bf16.gmra.mxu0 %v9068
        %v9100 = vpop.f32.mrf.mxu0
        %v9101 = vadd.f32 0.0, %v9100
        %v9102 = vpop.f32.mrf.mxu0
        %v9103 = vadd.f32 0.0, %v9102
        %9104 = vmatmul.bf16.gmra.mxu0 %v9071
        %v9105 = vpop.f32.mrf.mxu0
        %v9106 = vadd.f32 0.0, %v9105
        %v9107 = vpop.f32.mrf.mxu0
        %v9108 = vadd.f32 0.0, %v9107
        %9109 = vmatmul.bf16.gmra.mxu0 %v9074
        %v9110 = vpop.f32.mrf.mxu0
        %v9111 = vadd.f32 0.0, %v9110
        %v9112 = vpop.f32.mrf.mxu0
        %v9113 = vadd.f32 0.0, %v9112
        %9114 = vmatmul.bf16.gmra.mxu0 %v9077
        %v9115 = vpop.f32.mrf.mxu0
        %v9116 = vadd.f32 0.0, %v9115
        %v9117 = vpop.f32.mrf.mxu0
        %v9118 = vadd.f32 0.0, %v9117
        %9119 = vmatmul.bf16.gmra.mxu0 %v9080
        %v9120 = vpop.f32.mrf.mxu0
        %v9121 = vadd.f32 0.0, %v9120
        %v9122 = vpop.f32.mrf.mxu0
        %v9123 = vadd.f32 0.0, %v9122
        %9124 = vmatmul.bf16.gmra.mxu0 %v9083
        %v9125 = vpop.f32.mrf.mxu0
        %v9126 = vadd.f32 0.0, %v9125
        %v9127 = vpop.f32.mrf.mxu0
        %v9128 = vadd.f32 0.0, %v9127
        %9129 = vmatmul.bf16.gmra.mxu0 %v9086
        %v9130 = vpop.f32.mrf.mxu0
        %v9131 = vadd.f32 0.0, %v9130
        %v9132 = vpop.f32.mrf.mxu0
        %v9133 = vadd.f32 0.0, %v9132
        %9134 = vmatmul.bf16.gmra.mxu0 %v9089
        %v9135 = vpop.f32.mrf.mxu0
        %v9136 = vadd.f32 0.0, %v9135
        %v9137 = vpop.f32.mrf.mxu0
        %v9138 = vadd.f32 0.0, %v9137
        %9139 = vdwg.mxu0
        %v9140 = vadd.f32 %v8778, %v9101
        %v9141 = vadd.f32 %v8779, %v9103
        %v9142 = vadd.f32 %v8780, %v9106
        %v9143 = vadd.f32 %v8781, %v9108
        %v9144 = vadd.f32 %v8782, %v9111
        %v9145 = vadd.f32 %v8783, %v9113
        %v9146 = vadd.f32 %v8784, %v9116
        %v9147 = vadd.f32 %v8785, %v9118
        %v9148 = vadd.f32 %v8786, %v9121
        %v9149 = vadd.f32 %v8787, %v9123
        %v9150 = vadd.f32 %v8788, %v9126
        %v9151 = vadd.f32 %v8789, %v9128
        %v9152 = vadd.f32 %v8790, %v9131
        %v9153 = vadd.f32 %v8791, %v9133
        %v9154 = vadd.f32 %v8792, %v9136
        %v9155 = vadd.f32 %v8793, %v9138
        %v9156 = vld [vmem:[%s8615] sm:$0xe]
        %v9157 = vld [vmem:[%s8615 + $0xc] sm:$0xe]
        %v9158 = vld [vmem:[%s8615 + $0x18] sm:$0xe]
        %v9159 = vld [vmem:[%s8615 + $0x24] sm:$0xe]
        %v9160 = vld [vmem:[%s8615 + $0x30] sm:$0xe]
        %v9161 = vld [vmem:[%s8615 + $0x3c] sm:$0xe]
        %v9162 = vld [vmem:[%s8615 + $0x48] sm:$0xe]
        %v9163 = vld [vmem:[%s8615 + $0x54] sm:$0xe]
        %v9188 = vrot.slane %v9156, 5
        %v9189 = vrot.slane %v9188, 4
        %v9190 = vrot.slane %v8795, 5
        %v9191 = vsel %vm1175, %v9189, %v9190
        %v9192 = vrot.slane %v9190, 4
        %v9193 = vrot.slane %v8796, 5
        %v9194 = vsel %vm1175, %v9192, %v9193
        %v9195 = vrot.slane %v9157, 5
        %v9196 = vrot.slane %v9195, 4
        %v9197 = vrot.slane %v8798, 5
        %v9198 = vsel %vm1175, %v9196, %v9197
        %v9199 = vrot.slane %v9197, 4
        %v9200 = vrot.slane %v8799, 5
        %v9201 = vsel %vm1175, %v9199, %v9200
        %v9202 = vrot.slane %v9158, 5
        %v9203 = vrot.slane %v9202, 4
        %v9204 = vrot.slane %v8801, 5
        %v9205 = vsel %vm1175, %v9203, %v9204
        %v9206 = vrot.slane %v9204, 4
        %v9207 = vrot.slane %v8802, 5
        %v9208 = vsel %vm1175, %v9206, %v9207
        %v9209 = vrot.slane %v9159, 5
        %v9210 = vrot.slane %v9209, 4
        %v9211 = vrot.slane %v8804, 5
        %v9212 = vsel %vm1175, %v9210, %v9211
        %v9213 = vrot.slane %v9211, 4
        %v9214 = vrot.slane %v8805, 5
        %v9215 = vsel %vm1175, %v9213, %v9214
        %v9216 = vrot.slane %v9160, 5
        %v9217 = vrot.slane %v9216, 4
        %v9218 = vrot.slane %v8807, 5
        %v9219 = vsel %vm1175, %v9217, %v9218
        %v9220 = vrot.slane %v9218, 4
        %v9221 = vrot.slane %v8808, 5
        %v9222 = vsel %vm1175, %v9220, %v9221
        %v9223 = vrot.slane %v9161, 5
        %v9224 = vrot.slane %v9223, 4
        %v9225 = vrot.slane %v8810, 5
        %v9226 = vsel %vm1175, %v9224, %v9225
        %v9227 = vrot.slane %v9225, 4
        %v9228 = vrot.slane %v8811, 5
        %v9229 = vsel %vm1175, %v9227, %v9228
        %v9230 = vrot.slane %v9162, 5
        %v9231 = vrot.slane %v9230, 4
        %v9232 = vrot.slane %v8813, 5
        %v9233 = vsel %vm1175, %v9231, %v9232
        %v9234 = vrot.slane %v9232, 4
        %v9235 = vrot.slane %v8814, 5
        %v9236 = vsel %vm1175, %v9234, %v9235
        %v9237 = vrot.slane %v9163, 5
        %v9238 = vrot.slane %v9237, 4
        %v9239 = vrot.slane %v8816, 5
        %v9240 = vsel %vm1175, %v9238, %v9239
        %v9241 = vrot.slane %v9239, 4
        %v9242 = vrot.slane %v8817, 5
        %v9243 = vsel %vm1175, %v9241, %v9242
        %s9244 = scalar_lea.vmem %s5, 256
        %v9245 = vld [vmem:[%s9244] sm:$0xf]
        %v9246 = vld [vmem:[%s9244 + $0x4] sm:$0xf]
        %v9247 = vld [vmem:[%s9244 + $0x8] sm:$0xf]
        %v9248 = vld [vmem:[%s9244 + $0xc] sm:$0xf]
        %v9249 = vld [vmem:[%s9244 + $0x10] sm:$0xf]
        %v9250 = vld [vmem:[%s9244 + $0x14] sm:$0xf]
        %v9251 = vld [vmem:[%s9244 + $0x18] sm:$0xf]
        %v9252 = vld [vmem:[%s9244 + $0x1c] sm:$0xf]
        %v9253 = vunpack.c.l.b16 %v9191
        %v9254 = vunpack.c.l.b16 %v9194
        %v9255 = vunpack.c.l.b16 %v9198
        %v9256 = vunpack.c.l.b16 %v9201
        %v9257 = vunpack.c.l.b16 %v9205
        %v9258 = vunpack.c.l.b16 %v9208
        %v9259 = vunpack.c.l.b16 %v9212
        %v9260 = vunpack.c.l.b16 %v9215
        %v9261 = vunpack.c.l.b16 %v9219
        %v9262 = vunpack.c.l.b16 %v9222
        %v9263 = vunpack.c.l.b16 %v9226
        %v9264 = vunpack.c.l.b16 %v9229
        %v9265 = vunpack.c.l.b16 %v9233
        %v9266 = vunpack.c.l.b16 %v9236
        %v9267 = vunpack.c.l.b16 %v9240
        %v9268 = vunpack.c.l.b16 %v9243
        %v9269 = vpack.c.b16 %v9254, %v9253
        %v9270 = vpack.c.b16 %v9256, %v9255
        %v9271 = vpack.c.b16 %v9258, %v9257
        %v9272 = vpack.c.b16 %v9260, %v9259
        %v9273 = vpack.c.b16 %v9262, %v9261
        %v9274 = vpack.c.b16 %v9264, %v9263
        %v9275 = vpack.c.b16 %v9266, %v9265
        %v9276 = vpack.c.b16 %v9268, %v9267
        %v9285 = vunpack.c.l.b16 %v9245
        %v9286 = vunpack.c.l.b16 %v9246
        %v9287 = vunpack.c.l.b16 %v9247
        %v9288 = vunpack.c.l.b16 %v9248
        %v9289 = vunpack.c.l.b16 %v9249
        %v9290 = vunpack.c.l.b16 %v9250
        %v9291 = vunpack.c.l.b16 %v9251
        %v9292 = vunpack.c.l.b16 %v9252
        %v9293 = vpack.c.b16 %v9286, %v9285
        %v9294 = vpack.c.b16 %v9288, %v9287
        %v9295 = vpack.c.b16 %v9290, %v9289
        %v9296 = vpack.c.b16 %v9292, %v9291
        %v9302 = vsel %vm4309, %v9269, 0
        %v9305 = vsel %vm4309, %v9270, 0
        %v9308 = vsel %vm4309, %v9271, 0
        %v9311 = vsel %vm4309, %v9272, 0
        %v9314 = vsel %vm4309, %v9273, 0
        %v9317 = vsel %vm4309, %v9274, 0
        %v9320 = vsel %vm4309, %v9275, 0
        %v9323 = vsel %vm4309, %v9276, 0
        %9325 = vmatpush.bf16.msra.mxu0 0
        %9326 = vmatpush.bf16.msra.mxu0 0
        %9327 = vmatpush.bf16.msra.mxu0 0
        %9328 = vmatpush.bf16.msra.mxu0 0
        %9329 = vmatpush.bf16.msra.mxu0 %v9296
        %9330 = vmatpush.bf16.msra.mxu0 %v9295
        %9331 = vmatpush.bf16.msra.mxu0 %v9294
        %9332 = vmatpush.bf16.msra.mxu0 %v9293
        %9333 = vmatmul.bf16.gmra.mxu0 %v9302
        %v9334 = vpop.f32.mrf.mxu0
        %v9335 = vadd.f32 0.0, %v9334
        %v9336 = vpop.f32.mrf.mxu0
        %v9337 = vadd.f32 0.0, %v9336
        %9338 = vmatmul.bf16.gmra.mxu0 %v9305
        %v9339 = vpop.f32.mrf.mxu0
        %v9340 = vadd.f32 0.0, %v9339
        %v9341 = vpop.f32.mrf.mxu0
        %v9342 = vadd.f32 0.0, %v9341
        %9343 = vmatmul.bf16.gmra.mxu0 %v9308
        %v9344 = vpop.f32.mrf.mxu0
        %v9345 = vadd.f32 0.0, %v9344
        %v9346 = vpop.f32.mrf.mxu0
        %v9347 = vadd.f32 0.0, %v9346
        %9348 = vmatmul.bf16.gmra.mxu0 %v9311
        %v9349 = vpop.f32.mrf.mxu0
        %v9350 = vadd.f32 0.0, %v9349
        %v9351 = vpop.f32.mrf.mxu0
        %v9352 = vadd.f32 0.0, %v9351
        %9353 = vmatmul.bf16.gmra.mxu0 %v9314
        %v9354 = vpop.f32.mrf.mxu0
        %v9355 = vadd.f32 0.0, %v9354
        %v9356 = vpop.f32.mrf.mxu0
        %v9357 = vadd.f32 0.0, %v9356
        %9358 = vmatmul.bf16.gmra.mxu0 %v9317
        %v9359 = vpop.f32.mrf.mxu0
        %v9360 = vadd.f32 0.0, %v9359
        %v9361 = vpop.f32.mrf.mxu0
        %v9362 = vadd.f32 0.0, %v9361
        %9363 = vmatmul.bf16.gmra.mxu0 %v9320
        %v9364 = vpop.f32.mrf.mxu0
        %v9365 = vadd.f32 0.0, %v9364
        %v9366 = vpop.f32.mrf.mxu0
        %v9367 = vadd.f32 0.0, %v9366
        %9368 = vmatmul.bf16.gmra.mxu0 %v9323
        %v9369 = vpop.f32.mrf.mxu0
        %v9370 = vadd.f32 0.0, %v9369
        %v9371 = vpop.f32.mrf.mxu0
        %v9372 = vadd.f32 0.0, %v9371
        %9373 = vdwg.mxu0
        %v9374 = vadd.f32 %v9140, %v9335
        %v9375 = vadd.f32 %v9141, %v9337
        %v9376 = vadd.f32 %v9142, %v9340
        %v9377 = vadd.f32 %v9143, %v9342
        %v9378 = vadd.f32 %v9144, %v9345
        %v9379 = vadd.f32 %v9145, %v9347
        %v9380 = vadd.f32 %v9146, %v9350
        %v9381 = vadd.f32 %v9147, %v9352
        %v9382 = vadd.f32 %v9148, %v9355
        %v9383 = vadd.f32 %v9149, %v9357
        %v9384 = vadd.f32 %v9150, %v9360
        %v9385 = vadd.f32 %v9151, %v9362
        %v9386 = vadd.f32 %v9152, %v9365
        %v9387 = vadd.f32 %v9153, %v9367
        %v9388 = vadd.f32 %v9154, %v9370
        %v9389 = vadd.f32 %v9155, %v9372
        %v9390 = vld [vmem:[#allocation8] sm:$0x1]
        %v9392 = vperm.slane %v9390, 0
        %v9394 = vadd.f32 %v9374, %v9392
        %v9395 = vadd.f32 %v9375, %v9392
        %v9396 = vadd.f32 %v9376, %v9392
        %v9397 = vadd.f32 %v9377, %v9392
        %v9398 = vadd.f32 %v9378, %v9392
        %v9399 = vadd.f32 %v9379, %v9392
        %v9400 = vadd.f32 %v9380, %v9392
        %v9401 = vadd.f32 %v9381, %v9392
        %v9402 = vadd.f32 %v9382, %v9392
        %v9403 = vadd.f32 %v9383, %v9392
        %v9404 = vadd.f32 %v9384, %v9392
        %v9405 = vadd.f32 %v9385, %v9392
        %v9406 = vadd.f32 %v9386, %v9392
        %v9407 = vadd.f32 %v9387, %v9392
        %v9408 = vadd.f32 %v9388, %v9392
        %v9409 = vadd.f32 %v9389, %v9392
        %vm9410 = vcmask 97280
        %9411 = vst.msk [vmem:[%s346] sm:$0xff] %vm9410, %v9394
        %9412 = vst.msk [vmem:[%s346 + $0x8] sm:$0xff] %vm9410, %v9395
        %9413 = vst.msk [vmem:[%s346 + $0x10] sm:$0xff] %vm9410, %v9396
        %9414 = vst.msk [vmem:[%s346 + $0x18] sm:$0xff] %vm9410, %v9397
        %9415 = vst.msk [vmem:[%s346 + $0x20] sm:$0xff] %vm9410, %v9398
        %9416 = vst.msk [vmem:[%s346 + $0x28] sm:$0xff] %vm9410, %v9399
        %9417 = vst.msk [vmem:[%s346 + $0x30] sm:$0xff] %vm9410, %v9400
        %9418 = vst.msk [vmem:[%s346 + $0x38] sm:$0xff] %vm9410, %v9401
        %9419 = vst.msk [vmem:[%s346 + $0x40] sm:$0xff] %vm9410, %v9402
        %9420 = vst.msk [vmem:[%s346 + $0x48] sm:$0xff] %vm9410, %v9403
        %9421 = vst.msk [vmem:[%s346 + $0x50] sm:$0xff] %vm9410, %v9404
        %9422 = vst.msk [vmem:[%s346 + $0x58] sm:$0xff] %vm9410, %v9405
        %9423 = vst.msk [vmem:[%s346 + $0x60] sm:$0xff] %vm9410, %v9406
        %9424 = vst.msk [vmem:[%s346 + $0x68] sm:$0xff] %vm9410, %v9407
        %9425 = vst.msk [vmem:[%s346 + $0x70] sm:$0xff] %vm9410, %v9408
        %9426 = vst.msk [vmem:[%s346 + $0x78] sm:$0xff] %vm9410, %v9409
        %s9427 = smul.u32 8, %s25
        %p9428 = scmp.lt.s32.totalorder %s24, 1
        %s9429 = scalar_select %p9428, %s24, 1
        %p9430 = scmp.lt.s32.totalorder %s9427, 15
        %s9431 = scalar_select %p9430, %s9427, 15
        %s9432 = smul.addr %s9431, 2
        %s9433 = smul.addr %s9429, 32
        %s9434 = sadd.s32 %s9432, %s9433
        %s9435 = smul.addr %s9434, 8
        %s9436 = scalar_lea.vmem %s7, %s9435
        // Predicated region
        $region61: #{super_resolution_forward.1} parent=47 // pred_check
          %p9437 = pneg %p204
        $region62: #{super_resolution_forward.1} parent=47 // pred_check_branch
          %9439 = sbr.rel (%p9437) target = $region64
        $region63: #{super_resolution_forward.1} parent=47 // pred_region
          %s9440 = smul.u32 8, %s25
        $region64: #{super_resolution_forward.1} parent=47 // pred_fallthru
          _
      $region48: #{super_resolution_forward.1} parent=5 // pred_fallthru
        _
      %p9441 = scmp.le.s32.totalorder 2, %s15
      // Predicated region
      $region65: #{super_resolution_forward.1} parent=5 // pred_check
        %p9442 = pneg %p9441
      $region66: #{super_resolution_forward.1} parent=5 // pred_check_branch
        %9444 = sbr.rel (%p9442) target = $region68
      $region67: #{super_resolution_forward.1} parent=5 // pred_region
        %s9445 = ssub.s32 %s15, 2
        // Predicated region
        $region69: #{super_resolution_forward.1} parent=67 // pred_check
          %p9446 = pneg %p210
        $region70: #{super_resolution_forward.1} parent=67 // pred_check_branch
          %9448 = sbr.rel (%p9446) target = $region72
        $region71: #{super_resolution_forward.1} parent=67 // pred_region
          %s9449 = smul.u32 8, %s27
          %p9450 = scmp.lt.s32.totalorder %s26, 1
          %s9451 = scalar_select %p9450, %s26, 1
          %p9452 = scmp.lt.s32.totalorder %s9449, 15
          %s9453 = scalar_select %p9452, %s9449, 15
          %s9454 = smul.addr %s9453, 2
          %s9455 = smul.addr %s9451, 32
          %s9456 = sadd.s32 %s9454, %s9455
          %s9457 = smul.addr %s9456, 8
          %s9458 = scalar_lea.vmem %s7, %s9457
        $region72: #{super_resolution_forward.1} parent=67 // pred_fallthru
          _
      $region68: #{super_resolution_forward.1} parent=5 // pred_fallthru
        _
    $region6: #{super_resolution_forward.1} parent=1 // loop_footer
      %s19 = sadd.s32 1, %s15
    $region7: #{super_resolution_forward.1} parent=1 // loop_footer_branch
      %14 = sbr.rel target = $region3
    $region8: #{super_resolution_forward.1} parent=1 // loop_exit
      _
    %9459 = vsyncpa [#allocation5], 1
    %s9460 = scalar_lea.sflag [#allocation5], 1
    %9461 = vsyncpa %s9460, 1
    %9462 = vsyncpa [#allocation7], 1

</llo_original>
